<compile_context>
chip_gen: v7x
topology: tpu7x:2x2x1
jax: 0.10.0
libtpu: 0.0.40
codegen_flags: <defaults>
</compile_context>

<pallas_src>
import functools

import numpy as np
import jax
import jax.numpy as jnp
from jax.experimental import pallas as pl
from jax.experimental.pallas import tpu as pltpu

NEG_INF = -1e9      # same constant the PyTorch repo uses in masked_fill
LN_EPS = 1e-6       # attention-is-all-you-need-pytorch uses LayerNorm(eps=1e-6)


# --------------------------------------------------------------------------
# In-kernel math helpers (traced inside the Pallas kernel)
# --------------------------------------------------------------------------
def _layernorm_f(x, g, b, eps):
    mu = jnp.mean(x, axis=-1, keepdims=True)
    var = jnp.mean(jnp.square(x - mu), axis=-1, keepdims=True)
    return (x - mu) * jax.lax.rsqrt(var + eps) * g + b


def _erf_poly(x):
    # Abramowitz & Stegun 7.1.26 rational approximation, |err| <= 1.5e-7 (f32-level).
    a1, a2, a3, a4, a5 = 0.254829592, -0.284496736, 1.421413741, -1.453152027, 1.061405429
    p = 0.3275911
    ax = jnp.abs(x)
    t = 1.0 / (1.0 + p * ax)
    poly = ((((a5 * t + a4) * t + a3) * t + a2) * t + a1) * t
    y = 1.0 - poly * jnp.exp(-ax * ax)
    return jnp.where(x >= 0, y, -y)


def _gelu_f(x):
    # exact (erf-based) GELU, matching torch.nn.GELU() default semantics
    return 0.5 * x * (1.0 + _erf_poly(x * np.float32(1.0 / np.sqrt(2.0))))


def _attn_bias(keep_row, B, L, causal):
    """Additive attention bias over the batch-folded (B*L, B*L) score matrix.

    Encodes: block-diagonal batch structure, key-side pad mask, and (optionally) the causal
    mask.  Built from int32 iotas converted to f32 (exact for these sizes), avoiding vector
    integer div/mod.
    """
    N = B * L
    i = jax.lax.broadcasted_iota(jnp.int32, (N, N), 0).astype(jnp.float32)
    j = jax.lax.broadcasted_iota(jnp.int32, (N, N), 1).astype(jnp.float32)
    bi = jnp.floor(i * np.float32(1.0 / L))
    bj = jnp.floor(j * np.float32(1.0 / L))
    ok = (bi == bj) & (keep_row > 0.0)              # same batch & key not padding
    if causal:
        pi = i - bi * np.float32(L)
        pj = j - bj * np.float32(L)
        ok = ok & (pj <= pi)                        # subsequent mask within the batch block
    return jnp.where(ok, jnp.float32(0.0), jnp.float32(NEG_INF))


def _mha(x, bias, wqkv, wo, n_head, d_k, d_v):
    """Fused multi-head self-attention on batch-folded rows; returns concat(heads) @ Wo."""
    qkv = jnp.dot(x, wqkv, preferred_element_type=jnp.float32)        # (N, H*(2dk+dv))
    nq = n_head * d_k
    nk = 2 * n_head * d_k
    out = None
    for h in range(n_head):                                           # static unrolled loop
        q = qkv[:, h * d_k:(h + 1) * d_k]                             # 1/sqrt(d_k) folded in W_q
        k = qkv[:, nq + h * d_k: nq + (h + 1) * d_k]
        v = qkv[:, nk + h * d_v: nk + (h + 1) * d_v]
        s = jax.lax.dot_general(q, k, (((1,), (1,)), ((), ())),
                                preferred_element_type=jnp.float32) + bias   # (N, N)
        s = s - jnp.max(s, axis=-1, keepdims=True)
        p = jnp.exp(s)
        o = jnp.dot(p, v, preferred_element_type=jnp.float32)
        o = o / jnp.sum(p, axis=-1, keepdims=True)                    # exact softmax division
        # concat(heads) @ Wo == sum_h o_h @ Wo[h*dv:(h+1)*dv, :]
        contrib = jnp.dot(o, wo[h * d_v:(h + 1) * d_v, :], preferred_element_type=jnp.float32)
        out = contrib if out is None else out + contrib
    return out


# --------------------------------------------------------------------------
# Single fused kernel: embed-LN -> encoder stack -> VAE -> decoder stack -> proj+log_softmax
# --------------------------------------------------------------------------
def _fused_vt_kernel(src_x_ref, trg_x_ref, src_keep_ref, trg_keep_ref, prior_ref,
                     emb_ln_ref,
                     enc_wqkv_ref, enc_wo_ref, enc_w1_ref, enc_b1_ref, enc_w2_ref, enc_vec_ref,
                     dec_wqkv_ref, dec_wo_ref, dec_wv_ref, dec_woc_ref,
                     dec_w1_ref, dec_b1_ref, dec_w2_ref, dec_vec_ref,
                     ve_w_ref, ve_b_ref, m_w_ref, m_b_ref, s_w_ref, s_b_ref,
                     d1_w_ref, d1_b_ref, d2_w_ref, d2_b_ref,
                     prj_w_ref, prj_b_ref,
                     hidden_ref, dec_out_ref, logp_ref,
                     *, n_layers, n_head, d_k, d_v, B, Ls, Lt, eps):
    D = src_x_ref.shape[-1]
    emb_ln = emb_ln_ref[...]                                           # (4, D)

    # ---------------- encoder (rows = B*Ls) ----------------
    src_bias = _attn_bias(src_keep_ref[...], B, Ls, causal=False)
    x = _layernorm_f(src_x_ref[...], emb_ln[0:1], emb_ln[1:2], eps)    # (B*Ls, D)
    for l in range(n_layers):                                          # static layer loop
        vec = enc_vec_ref[l]                                           # (5, D)
        a = _mha(x, src_bias, enc_wqkv_ref[l], enc_wo_ref[l], n_head, d_k, d_k)
        y = _layernorm_f(a + x, vec[0:1], vec[1:2], eps)
        h = jnp.maximum(jnp.dot(y, enc_w1_ref[l], preferred_element_type=jnp.float32)
                        + enc_b1_ref[l], 0.0)
        h = jnp.dot(h, enc_w2_ref[l], preferred_element_type=jnp.float32) + vec[2:3]
        x = _layernorm_f(h + y, vec[3:4], vec[4:5], eps)
    hidden_ref[...] = x.astype(hidden_ref.dtype)

    # ---------------- VAE bottleneck ----------------
    # cls tokens = row 0 of each batch block of the folded activations
    cls = jnp.concatenate([x[b * Ls:b * Ls + 1, :] for b in range(B)], axis=0)      # (B, D)
    latent = _gelu_f(jnp.dot(cls, ve_w_ref[...], preferred_element_type=jnp.float32)
                     + ve_b_ref[...])
    mean = jnp.dot(latent, m_w_ref[...], preferred_element_type=jnp.float32) + m_b_ref[...]
    std = jnp.dot(latent, s_w_ref[...], preferred_element_type=jnp.float32) + s_b_ref[...]
    z = prior_ref[...] * jnp.exp(0.5 * std) + mean                      # reparameterize
    hzd = _gelu_f(jnp.dot(z, d1_w_ref[...], preferred_element_type=jnp.float32) + d1_b_ref[...])
    to_dec = _gelu_f(jnp.dot(hzd, d2_w_ref[...], preferred_element_type=jnp.float32)
                     + d2_b_ref[...])                                    # (B, D)
    # decoder "memory" rows are identical copies of to_dec[b]; broadcast once to (B*Lt, D)
    mem = jnp.concatenate([jnp.broadcast_to(to_dec[b:b + 1, :], (Lt, D)) for b in range(B)],
                          axis=0)

    # ---------------- decoder (rows = B*Lt) ----------------
    trg_bias = _attn_bias(trg_keep_ref[...], B, Lt, causal=True)
    y = _layernorm_f(trg_x_ref[...], emb_ln[2:3], emb_ln[3:4], eps)
    for l in range(n_layers):
        vec = dec_vec_ref[l]                                            # (7, D)
        a = _mha(y, trg_bias, dec_wqkv_ref[l], dec_wo_ref[l], n_head, d_k, d_v)
        y1 = _layernorm_f(a + y, vec[0:1], vec[1:2], eps)
        # cross-attention: uniform weights over identical memory rows + src_mask=None ->
        # output == value projection of the memory vector (q/k projections cancel exactly).
        cross = jnp.dot(jnp.dot(mem, dec_wv_ref[l], preferred_element_type=jnp.float32),
                        dec_woc_ref[l], preferred_element_type=jnp.float32)
        y2 = _layernorm_f(y1 + cross, vec[2:3], vec[3:4], eps)
        h = jnp.maximum(jnp.dot(y2, dec_w1_ref[l], preferred_element_type=jnp.float32)
                        + dec_b1_ref[l], 0.0)
        h = jnp.dot(h, dec_w2_ref[l], preferred_element_type=jnp.float32) + vec[4:5]
        y = _layernorm_f(h + y2, vec[5:6], vec[6:7], eps)
    dec_out_ref[...] = y.astype(dec_out_ref.dtype)

    # ---------------- projection + log_softmax (lane-dense, vocab padded to 128) ----------
    # padded columns carry bias NEG_INF (weights 0) -> vanish from max / logsumexp
    logits = jnp.dot(y, prj_w_ref[...], preferred_element_type=jnp.float32) + prj_b_ref[...]
    s = logits - jnp.max(logits, axis=-1, keepdims=True)
    lse = jnp.log(jnp.sum(jnp.exp(s), axis=-1, keepdims=True))
    logp_ref[...] = (s - lse).astype(logp_ref.dtype)


# --------------------------------------------------------------------------
# Forward pass wrapper (single pallas_call, no grid: everything resident in VMEM)
# --------------------------------------------------------------------------
def variational_transformer_forward(params, src_seq, trg_seq, prior, cfg):
    B, Ls = src_seq.shape
    _, Lt = trg_seq.shape
    D = cfg["d_model"]
    V = cfg["vocab"]
    pad = cfg["pad_idx"]
    Vpad = params["prj_w_pad"].shape[1]

    # embedding gather + positional add stay in XLA (fused with jnp.take); LN is in-kernel
    src_x = (jnp.take(params["enc_emb"], src_seq, axis=0)
             + params["pos_table"][:Ls]).reshape(B * Ls, D)
    trg_x = (jnp.take(params["dec_emb"], trg_seq, axis=0)
             + params["pos_table"][:Lt]).reshape(B * Lt, D)

    # compact pad-keep rows; full (B,L,L) masks are built inside the kernel
    src_keep = (src_seq != pad).astype(jnp.float32).reshape(1, B * Ls)
    trg_keep = (trg_seq != pad).astype(jnp.float32).reshape(1, B * Lt)

    args = (src_x, trg_x, src_keep, trg_keep, prior,
            params["emb_ln"],
            params["enc_wqkv"], params["enc_wo"], params["enc_w1"], params["enc_b1"],
            params["enc_w2"], params["enc_vec"],
            params["dec_wqkv"], params["dec_wo"], params["dec_wv"], params["dec_woc"],
            params["dec_w1"], params["dec_b1"], params["dec_w2"], params["dec_vec"],
            params["ve_w"], params["ve_b"], params["m_w"], params["m_b"],
            params["s_w"], params["s_b"], params["d1_w"], params["d1_b"],
            params["d2_w"], params["d2_b"],
            params["prj_w_pad"], params["prj_b_pad"])

    hidden_flat, dec_flat, logp_pad = pl.pallas_call(
        functools.partial(_fused_vt_kernel,
                          n_layers=cfg["n_layers"], n_head=cfg["n_head"],
                          d_k=cfg["d_k"], d_v=cfg["d_v"],
                          B=B, Ls=Ls, Lt=Lt, eps=LN_EPS),
        out_shape=(jax.ShapeDtypeStruct((B * Ls, D), jnp.float32),
                   jax.ShapeDtypeStruct((B * Lt, D), jnp.float32),
                   jax.ShapeDtypeStruct((B * Lt, Vpad), jnp.float32)),
    )(*args)

    hidden = hidden_flat.reshape(B, Ls, D)
    dec_output = dec_flat.reshape(B, Lt, D)
    logp = logp_pad[:, :V]                       # drop lane padding of the vocab dimension
    return dec_output, hidden, logp


# --------------------------------------------------------------------------
# Deterministic parameter construction (stacked per-layer weights, packed vectors)
# --------------------------------------------------------------------------
def sinusoid_table(n_position, d_hid):
    pos = np.arange(n_position)[:, None].astype(np.float64)
    hid = np.arange(d_hid)[None, :]
    angle = pos / np.power(10000.0, 2 * (hid // 2) / d_hid)
    table = np.zeros((n_position, d_hid), dtype=np.float64)
    table[:, 0::2] = np.sin(angle[:, 0::2])
    table[:, 1::2] = np.cos(angle[:, 1::2])
    return jnp.asarray(table, dtype=jnp.float32)


def init_params(key, cfg):
    V, D = cfg["vocab"], cfg["d_model"]
    H, dk, dv, di = cfg["n_head"], cfg["d_k"], cfg["d_v"], cfg["d_inner"]
    Z, NL, n_pos = cfg["latent"], cfg["n_layers"], cfg["n_position"]
    pad_idx = cfg["pad_idx"]
    keys = iter(jax.random.split(key, 512))

    def w(shape, scale=0.05):
        return (scale * jax.random.normal(next(keys), shape)).astype(jnp.float32)

    zeros = lambda s: jnp.zeros(s, jnp.float32)
    ones = lambda s: jnp.ones(s, jnp.float32)
    q_scale = jnp.float32(1.0 / np.sqrt(dk))

    def stack(fn):
        return jnp.stack([fn() for _ in range(NL)], axis=0)

    # encoder self-attention uses d_v = d_k (reference passes d_v=d_k to the Encoder)
    def enc_wqkv():   # softmax temperature 1/sqrt(d_k) folded into the Q columns
        return jnp.concatenate([w((D, H * dk)) * q_scale, w((D, H * dk)), w((D, H * dk))], axis=1)

    def dec_wqkv():
        return jnp.concatenate([w((D, H * dk)) * q_scale, w((D, H * dk)), w((D, H * dv))], axis=1)

    def enc_vec():    # rows: ln1_g, ln1_b, ffn_b2, ln2_g, ln2_b
        return jnp.stack([ones((D,)), zeros((D,)), zeros((D,)), ones((D,)), zeros((D,))], axis=0)

    def dec_vec():    # rows: ln1_g, ln1_b, ln2_g, ln2_b, ffn_b2, ln3_g, ln3_b
        return jnp.stack([ones((D,)), zeros((D,)), ones((D,)), zeros((D,)),
                          zeros((D,)), ones((D,)), zeros((D,))], axis=0)

    def emb():        # nn.Embedding(padding_idx=pad_idx): pad row zeroed
        return w((V, D), 0.1).at[pad_idx].set(0.0)

    # vocab projection padded to a lane-dense multiple of 128; padded logits masked via bias
    Vpad = max(128, ((V + 127) // 128) * 128)
    prj_w = w((D, V))
    prj_b = zeros((V,))
    prj_w_pad = jnp.zeros((D, Vpad), jnp.float32).at[:, :V].set(prj_w)
    prj_b_pad = jnp.full((1, Vpad), NEG_INF, jnp.float32).at[0, :V].set(prj_b)

    return {
        "enc_emb": emb(), "dec_emb": emb(), "pos_table": sinusoid_table(n_pos, D),
        # embed-LN pack: enc_g, enc_b, dec_g, dec_b
        "emb_ln": jnp.stack([ones((D,)), zeros((D,)), ones((D,)), zeros((D,))], axis=0),
        # encoder stack
        "enc_wqkv": stack(enc_wqkv), "enc_wo": stack(lambda: w((H * dk, D))),
        "enc_w1": stack(lambda: w((D, di))), "enc_b1": stack(lambda: zeros((1, di))),
        "enc_w2": stack(lambda: w((di, D))), "enc_vec": stack(enc_vec),
        # decoder stack (cross-attn q/k projections omitted: they cancel exactly for the
        # identical-row memory with src_mask=None)
        "dec_wqkv": stack(dec_wqkv), "dec_wo": stack(lambda: w((H * dv, D))),
        "dec_wv": stack(lambda: w((D, H * dv))), "dec_woc": stack(lambda: w((H * dv, D))),
        "dec_w1": stack(lambda: w((D, di))), "dec_b1": stack(lambda: zeros((1, di))),
        "dec_w2": stack(lambda: w((di, D))), "dec_vec": stack(dec_vec),
        # VAE bottleneck
        "ve_w": w((D, D // 2)), "ve_b": zeros((1, D // 2)),
        "m_w": w((D // 2, Z)), "m_b": zeros((1, Z)),
        "s_w": w((D // 2, Z)), "s_b": zeros((1, Z)),
        "d1_w": w((Z, D // 2)), "d1_b": zeros((1, D // 2)),
        "d2_w": w((D // 2, D)), "d2_b": zeros((1, D)),
        # output projection (lane-dense padded)
        "prj_w_pad": prj_w_pad, "prj_b_pad": prj_b_pad,
    }


# --------------------------------------------------------------------------
if __name__ == "__main__":
    cfg = dict(vocab=40, d_model=32, d_k=16, d_v=16, d_inner=64,
               n_layers=2, n_head=2, latent=16, n_position=64,
               max_seq_len=8, pad_idx=0)
    B, Ls, Lt = 2, 8, 8

    key = jax.random.PRNGKey(0)
    k_src, k_trg, k_prior, k_par = jax.random.split(key, 4)
    src_seq = jax.random.randint(k_src, (B, Ls), 4, cfg["vocab"], dtype=jnp.int32)
    trg_seq = jax.random.randint(k_trg, (B, Lt), 4, cfg["vocab"], dtype=jnp.int32)
    # inject some padding to exercise the masks
    src_seq = src_seq.at[0, -2:].set(cfg["pad_idx"])
    trg_seq = trg_seq.at[1, -1:].set(cfg["pad_idx"])
    prior = jax.random.normal(k_prior, (B, cfg["latent"]), jnp.float32)

    params = init_params(k_par, cfg)

    fwd = jax.jit(lambda p, s, t, pr: variational_transformer_forward(p, s, t, pr, cfg))
    dec_output, hidden, logp = fwd(params, src_seq, trg_seq, prior)
    jax.block_until_ready((dec_output, hidden, logp))

    assert dec_output.shape == (B, Lt, cfg["d_model"])
    assert hidden.shape == (B, Ls, cfg["d_model"])
    assert logp.shape == (B * Lt, cfg["vocab"])
    assert bool(jnp.all(jnp.isfinite(dec_output)))
    assert bool(jnp.all(jnp.isfinite(hidden)))
    assert bool(jnp.all(jnp.isfinite(logp)))
    print("KERNEL_OK")
</pallas_src>

<mosaic_0001>
module attributes {stable_mosaic.version = 11 : i64} {
  func.func @_fused_vt_kernel(%arg0: memref<16x32xf32, #tpu.memory_space<vmem>>, %arg1: memref<16x32xf32, #tpu.memory_space<vmem>>, %arg2: memref<1x16xf32, #tpu.memory_space<vmem>>, %arg3: memref<1x16xf32, #tpu.memory_space<vmem>>, %arg4: memref<2x16xf32, #tpu.memory_space<vmem>>, %arg5: memref<4x32xf32, #tpu.memory_space<vmem>>, %arg6: memref<2x32x96xf32, #tpu.memory_space<vmem>>, %arg7: memref<2x32x32xf32, #tpu.memory_space<vmem>>, %arg8: memref<2x32x64xf32, #tpu.memory_space<vmem>>, %arg9: memref<2x1x64xf32, #tpu.memory_space<vmem>>, %arg10: memref<2x64x32xf32, #tpu.memory_space<vmem>>, %arg11: memref<2x5x32xf32, #tpu.memory_space<vmem>>, %arg12: memref<2x32x96xf32, #tpu.memory_space<vmem>>, %arg13: memref<2x32x32xf32, #tpu.memory_space<vmem>>, %arg14: memref<2x32x32xf32, #tpu.memory_space<vmem>>, %arg15: memref<2x32x32xf32, #tpu.memory_space<vmem>>, %arg16: memref<2x32x64xf32, #tpu.memory_space<vmem>>, %arg17: memref<2x1x64xf32, #tpu.memory_space<vmem>>, %arg18: memref<2x64x32xf32, #tpu.memory_space<vmem>>, %arg19: memref<2x7x32xf32, #tpu.memory_space<vmem>>, %arg20: memref<32x16xf32, #tpu.memory_space<vmem>>, %arg21: memref<1x16xf32, #tpu.memory_space<vmem>>, %arg22: memref<16x16xf32, #tpu.memory_space<vmem>>, %arg23: memref<1x16xf32, #tpu.memory_space<vmem>>, %arg24: memref<16x16xf32, #tpu.memory_space<vmem>>, %arg25: memref<1x16xf32, #tpu.memory_space<vmem>>, %arg26: memref<16x16xf32, #tpu.memory_space<vmem>>, %arg27: memref<1x16xf32, #tpu.memory_space<vmem>>, %arg28: memref<16x32xf32, #tpu.memory_space<vmem>>, %arg29: memref<1x32xf32, #tpu.memory_space<vmem>>, %arg30: memref<32x128xf32, #tpu.memory_space<vmem>>, %arg31: memref<1x128xf32, #tpu.memory_space<vmem>>, %arg32: memref<16x32xf32, #tpu.memory_space<vmem>>, %arg33: memref<16x32xf32, #tpu.memory_space<vmem>>, %arg34: memref<16x128xf32, #tpu.memory_space<vmem>>) attributes {dimension_semantics = [], scalar_prefetch = 0 : i64, scratch_operands = 0 : i64, tpu.core_type = #tpu.core_type<tc>} {
    %c0 = arith.constant 0 : index
    %c0_0 = arith.constant 0 : index
    %0 = vector.load %arg5[%c0, %c0_0] : memref<4x32xf32, #tpu.memory_space<vmem>>, vector<4x32xf32>
    %c0_1 = arith.constant 0 : index
    %c0_2 = arith.constant 0 : index
    %1 = vector.load %arg2[%c0_1, %c0_2] : memref<1x16xf32, #tpu.memory_space<vmem>>, vector<1x16xf32>
    %2 = tpu.iota {dimensions = array<i32: 0>} : vector<16x16xi32>
    %3 = arith.sitofp %2 : vector<16x16xi32> to vector<16x16xf32>
    %4 = tpu.iota {dimensions = array<i32: 1>} : vector<16x16xi32>
    %5 = arith.sitofp %4 : vector<16x16xi32> to vector<16x16xf32>
    %cst = arith.constant 1.250000e-01 : f32
    %6 = vector.broadcast %cst : f32 to vector<16x16xf32>
    %7 = arith.mulf %3, %6 : vector<16x16xf32>
    %8 = math.floor %7 : vector<16x16xf32>
    %cst_3 = arith.constant 1.250000e-01 : f32
    %9 = vector.broadcast %cst_3 : f32 to vector<16x16xf32>
    %10 = arith.mulf %5, %9 : vector<16x16xf32>
    %11 = math.floor %10 : vector<16x16xf32>
    %12 = arith.cmpf oeq, %8, %11 : vector<16x16xf32>
    %cst_4 = arith.constant 0.000000e+00 : f32
    %13 = vector.broadcast %cst_4 : f32 to vector<1x16xf32>
    %14 = arith.cmpf ogt, %1, %13 : vector<1x16xf32>
    %15 = vector.broadcast %14 : vector<1x16xi1> to vector<16x16xi1>
    %16 = arith.andi %12, %15 : vector<16x16xi1>
    %cst_5 = arith.constant 0.000000e+00 : f32
    %cst_6 = arith.constant -1.000000e+09 : f32
    %17 = vector.broadcast %cst_5 : f32 to vector<16x16xf32>
    %18 = vector.broadcast %cst_6 : f32 to vector<16x16xf32>
    %19 = arith.select %16, %17, %18 : vector<16x16xi1>, vector<16x16xf32>
    %c0_7 = arith.constant 0 : index
    %c0_8 = arith.constant 0 : index
    %20 = vector.load %arg0[%c0_7, %c0_8] : memref<16x32xf32, #tpu.memory_space<vmem>>, vector<16x32xf32>
    %21 = vector.extract_strided_slice %0 {offsets = [0, 0], sizes = [1, 32], strides = [1, 1]} : vector<4x32xf32> to vector<1x32xf32>
    %22 = vector.extract_strided_slice %0 {offsets = [1, 0], sizes = [1, 32], strides = [1, 1]} : vector<4x32xf32> to vector<1x32xf32>
    %cst_9 = arith.constant dense<0.000000e+00> : vector<16xf32>
    %23 = vector.multi_reduction <add>, %20, %cst_9 [1] : vector<16x32xf32> to vector<16xf32>
    %24 = vector.shape_cast %23 : vector<16xf32> to vector<16x1xf32>
    %cst_10 = arith.constant 3.200000e+01 : f32
    %25 = vector.broadcast %cst_10 : f32 to vector<16x1xf32>
    %26 = arith.divf %24, %25 : vector<16x1xf32>
    %27 = vector.broadcast %26 : vector<16x1xf32> to vector<16x32xf32>
    %28 = arith.subf %20, %27 : vector<16x32xf32>
    %29 = arith.mulf %28, %28 : vector<16x32xf32>
    %cst_11 = arith.constant dense<0.000000e+00> : vector<16xf32>
    %30 = vector.multi_reduction <add>, %29, %cst_11 [1] : vector<16x32xf32> to vector<16xf32>
    %31 = vector.shape_cast %30 : vector<16xf32> to vector<16x1xf32>
    %cst_12 = arith.constant 3.200000e+01 : f32
    %32 = vector.broadcast %cst_12 : f32 to vector<16x1xf32>
    %33 = arith.divf %31, %32 : vector<16x1xf32>
    %34 = vector.broadcast %26 : vector<16x1xf32> to vector<16x32xf32>
    %35 = arith.subf %20, %34 : vector<16x32xf32>
    %cst_13 = arith.constant 9.99999997E-7 : f32
    %36 = vector.broadcast %cst_13 : f32 to vector<16x1xf32>
    %37 = arith.addf %33, %36 : vector<16x1xf32>
    %38 = math.rsqrt %37 : vector<16x1xf32>
    %39 = vector.broadcast %38 : vector<16x1xf32> to vector<16x32xf32>
    %40 = arith.mulf %35, %39 : vector<16x32xf32>
    %41 = vector.broadcast %21 : vector<1x32xf32> to vector<16x32xf32>
    %42 = arith.mulf %40, %41 : vector<16x32xf32>
    %43 = vector.broadcast %22 : vector<1x32xf32> to vector<16x32xf32>
    %44 = arith.addf %42, %43 : vector<16x32xf32>
    %c0_14 = arith.constant 0 : index
    %c0_15 = arith.constant 0 : index
    %c0_16 = arith.constant 0 : index
    %45 = vector.load %arg11[%c0_14, %c0_15, %c0_16] : memref<2x5x32xf32, #tpu.memory_space<vmem>>, vector<1x5x32xf32>
    %46 = vector.shape_cast %45 : vector<1x5x32xf32> to vector<5x32xf32>
    %c0_17 = arith.constant 0 : index
    %c0_18 = arith.constant 0 : index
    %c0_19 = arith.constant 0 : index
    %47 = vector.load %arg6[%c0_17, %c0_18, %c0_19] : memref<2x32x96xf32, #tpu.memory_space<vmem>>, vector<1x32x96xf32>
    %48 = vector.shape_cast %47 : vector<1x32x96xf32> to vector<32x96xf32>
    %c0_20 = arith.constant 0 : index
    %c0_21 = arith.constant 0 : index
    %c0_22 = arith.constant 0 : index
    %49 = vector.load %arg7[%c0_20, %c0_21, %c0_22] : memref<2x32x32xf32, #tpu.memory_space<vmem>>, vector<1x32x32xf32>
    %50 = vector.shape_cast %49 : vector<1x32x32xf32> to vector<32x32xf32>
    %cst_23 = arith.constant dense<0.000000e+00> : vector<16x96xf32>
    %51 = tpu.matmul %44, %48, %cst_23 {dimension_numbers = #tpu.dot_dimension_numbers<[1], [0], [0], [1], [0, 0, 1, 1], [], []>} : vector<16x32xf32>, vector<32x96xf32>, vector<16x96xf32> -> vector<16x96xf32>
    %52 = vector.extract_strided_slice %51 {offsets = [0, 0], sizes = [16, 16], strides = [1, 1]} : vector<16x96xf32> to vector<16x16xf32>
    %53 = vector.extract_strided_slice %51 {offsets = [0, 32], sizes = [16, 16], strides = [1, 1]} : vector<16x96xf32> to vector<16x16xf32>
    %54 = vector.extract_strided_slice %51 {offsets = [0, 64], sizes = [16, 16], strides = [1, 1]} : vector<16x96xf32> to vector<16x16xf32>
    %cst_24 = arith.constant dense<0.000000e+00> : vector<16x16xf32>
    %55 = tpu.matmul %52, %53, %cst_24 {dimension_numbers = #tpu.dot_dimension_numbers<[1], [1], [0], [0], [0, 0, 1, 0], [], []>} : vector<16x16xf32>, vector<16x16xf32>, vector<16x16xf32> -> vector<16x16xf32>
    %56 = arith.addf %55, %19 : vector<16x16xf32>
    %cst_25 = arith.constant dense<0xFF800000> : vector<16xf32>
    %57 = vector.multi_reduction <maximumf>, %56, %cst_25 [1] : vector<16x16xf32> to vector<16xf32>
    %58 = vector.shape_cast %57 : vector<16xf32> to vector<16x1xf32>
    %59 = vector.broadcast %58 : vector<16x1xf32> to vector<16x16xf32>
    %60 = arith.subf %56, %59 : vector<16x16xf32>
    %61 = math.exp %60 : vector<16x16xf32>
    %cst_26 = arith.constant dense<0.000000e+00> : vector<16x16xf32>
    %62 = tpu.matmul %61, %54, %cst_26 {dimension_numbers = #tpu.dot_dimension_numbers<[1], [0], [0], [1], [0, 0, 1, 1], [], []>} : vector<16x16xf32>, vector<16x16xf32>, vector<16x16xf32> -> vector<16x16xf32>
    %cst_27 = arith.constant dense<0.000000e+00> : vector<16xf32>
    %63 = vector.multi_reduction <add>, %61, %cst_27 [1] : vector<16x16xf32> to vector<16xf32>
    %64 = vector.shape_cast %63 : vector<16xf32> to vector<16x1xf32>
    %65 = vector.broadcast %64 : vector<16x1xf32> to vector<16x16xf32>
    %66 = arith.divf %62, %65 : vector<16x16xf32>
    %67 = vector.extract_strided_slice %50 {offsets = [0, 0], sizes = [16, 32], strides = [1, 1]} : vector<32x32xf32> to vector<16x32xf32>
    %cst_28 = arith.constant dense<0.000000e+00> : vector<16x32xf32>
    %68 = tpu.matmul %66, %67, %cst_28 {dimension_numbers = #tpu.dot_dimension_numbers<[1], [0], [0], [1], [0, 0, 1, 1], [], []>} : vector<16x16xf32>, vector<16x32xf32>, vector<16x32xf32> -> vector<16x32xf32>
    %69 = vector.extract_strided_slice %51 {offsets = [0, 16], sizes = [16, 16], strides = [1, 1]} : vector<16x96xf32> to vector<16x16xf32>
    %70 = vector.extract_strided_slice %51 {offsets = [0, 48], sizes = [16, 16], strides = [1, 1]} : vector<16x96xf32> to vector<16x16xf32>
    %71 = vector.extract_strided_slice %51 {offsets = [0, 80], sizes = [16, 16], strides = [1, 1]} : vector<16x96xf32> to vector<16x16xf32>
    %cst_29 = arith.constant dense<0.000000e+00> : vector<16x16xf32>
    %72 = tpu.matmul %69, %70, %cst_29 {dimension_numbers = #tpu.dot_dimension_numbers<[1], [1], [0], [0], [0, 0, 1, 0], [], []>} : vector<16x16xf32>, vector<16x16xf32>, vector<16x16xf32> -> vector<16x16xf32>
    %73 = arith.addf %72, %19 : vector<16x16xf32>
    %cst_30 = arith.constant dense<0xFF800000> : vector<16xf32>
    %74 = vector.multi_reduction <maximumf>, %73, %cst_30 [1] : vector<16x16xf32> to vector<16xf32>
    %75 = vector.shape_cast %74 : vector<16xf32> to vector<16x1xf32>
    %76 = vector.broadcast %75 : vector<16x1xf32> to vector<16x16xf32>
    %77 = arith.subf %73, %76 : vector<16x16xf32>
    %78 = math.exp %77 : vector<16x16xf32>
    %cst_31 = arith.constant dense<0.000000e+00> : vector<16x16xf32>
    %79 = tpu.matmul %78, %71, %cst_31 {dimension_numbers = #tpu.dot_dimension_numbers<[1], [0], [0], [1], [0, 0, 1, 1], [], []>} : vector<16x16xf32>, vector<16x16xf32>, vector<16x16xf32> -> vector<16x16xf32>
    %cst_32 = arith.constant dense<0.000000e+00> : vector<16xf32>
    %80 = vector.multi_reduction <add>, %78, %cst_32 [1] : vector<16x16xf32> to vector<16xf32>
    %81 = vector.shape_cast %80 : vector<16xf32> to vector<16x1xf32>
    %82 = vector.broadcast %81 : vector<16x1xf32> to vector<16x16xf32>
    %83 = arith.divf %79, %82 : vector<16x16xf32>
    %84 = vector.extract_strided_slice %50 {offsets = [16, 0], sizes = [16, 32], strides = [1, 1]} : vector<32x32xf32> to vector<16x32xf32>
    %cst_33 = arith.constant dense<0.000000e+00> : vector<16x32xf32>
    %85 = tpu.matmul %83, %84, %cst_33 {dimension_numbers = #tpu.dot_dimension_numbers<[1], [0], [0], [1], [0, 0, 1, 1], [], []>} : vector<16x16xf32>, vector<16x32xf32>, vector<16x32xf32> -> vector<16x32xf32>
    %86 = arith.addf %68, %85 : vector<16x32xf32>
    %87 = arith.addf %86, %44 : vector<16x32xf32>
    %88 = vector.extract_strided_slice %46 {offsets = [0, 0], sizes = [1, 32], strides = [1, 1]} : vector<5x32xf32> to vector<1x32xf32>
    %89 = vector.extract_strided_slice %46 {offsets = [1, 0], sizes = [1, 32], strides = [1, 1]} : vector<5x32xf32> to vector<1x32xf32>
    %cst_34 = arith.constant dense<0.000000e+00> : vector<16xf32>
    %90 = vector.multi_reduction <add>, %87, %cst_34 [1] : vector<16x32xf32> to vector<16xf32>
    %91 = vector.shape_cast %90 : vector<16xf32> to vector<16x1xf32>
    %cst_35 = arith.constant 3.200000e+01 : f32
    %92 = vector.broadcast %cst_35 : f32 to vector<16x1xf32>
    %93 = arith.divf %91, %92 : vector<16x1xf32>
    %94 = vector.broadcast %93 : vector<16x1xf32> to vector<16x32xf32>
    %95 = arith.subf %87, %94 : vector<16x32xf32>
    %96 = arith.mulf %95, %95 : vector<16x32xf32>
    %cst_36 = arith.constant dense<0.000000e+00> : vector<16xf32>
    %97 = vector.multi_reduction <add>, %96, %cst_36 [1] : vector<16x32xf32> to vector<16xf32>
    %98 = vector.shape_cast %97 : vector<16xf32> to vector<16x1xf32>
    %cst_37 = arith.constant 3.200000e+01 : f32
    %99 = vector.broadcast %cst_37 : f32 to vector<16x1xf32>
    %100 = arith.divf %98, %99 : vector<16x1xf32>
    %101 = vector.broadcast %93 : vector<16x1xf32> to vector<16x32xf32>
    %102 = arith.subf %87, %101 : vector<16x32xf32>
    %cst_38 = arith.constant 9.99999997E-7 : f32
    %103 = vector.broadcast %cst_38 : f32 to vector<16x1xf32>
    %104 = arith.addf %100, %103 : vector<16x1xf32>
    %105 = math.rsqrt %104 : vector<16x1xf32>
    %106 = vector.broadcast %105 : vector<16x1xf32> to vector<16x32xf32>
    %107 = arith.mulf %102, %106 : vector<16x32xf32>
    %108 = vector.broadcast %88 : vector<1x32xf32> to vector<16x32xf32>
    %109 = arith.mulf %107, %108 : vector<16x32xf32>
    %110 = vector.broadcast %89 : vector<1x32xf32> to vector<16x32xf32>
    %111 = arith.addf %109, %110 : vector<16x32xf32>
    %c0_39 = arith.constant 0 : index
    %c0_40 = arith.constant 0 : index
    %c0_41 = arith.constant 0 : index
    %112 = vector.load %arg8[%c0_39, %c0_40, %c0_41] : memref<2x32x64xf32, #tpu.memory_space<vmem>>, vector<1x32x64xf32>
    %113 = vector.shape_cast %112 : vector<1x32x64xf32> to vector<32x64xf32>
    %cst_42 = arith.constant dense<0.000000e+00> : vector<16x64xf32>
    %114 = tpu.matmul %111, %113, %cst_42 {dimension_numbers = #tpu.dot_dimension_numbers<[1], [0], [0], [1], [0, 0, 1, 1], [], []>} : vector<16x32xf32>, vector<32x64xf32>, vector<16x64xf32> -> vector<16x64xf32>
    %c0_43 = arith.constant 0 : index
    %c0_44 = arith.constant 0 : index
    %c0_45 = arith.constant 0 : index
    %115 = vector.load %arg9[%c0_43, %c0_44, %c0_45] : memref<2x1x64xf32, #tpu.memory_space<vmem>>, vector<1x1x64xf32>
    %116 = vector.shape_cast %115 : vector<1x1x64xf32> to vector<1x64xf32>
    %117 = vector.broadcast %116 : vector<1x64xf32> to vector<16x64xf32>
    %118 = arith.addf %114, %117 : vector<16x64xf32>
    %cst_46 = arith.constant 0.000000e+00 : f32
    %119 = vector.broadcast %cst_46 : f32 to vector<16x64xf32>
    %120 = arith.maximumf %118, %119 : vector<16x64xf32>
    %c0_47 = arith.constant 0 : index
    %c0_48 = arith.constant 0 : index
    %c0_49 = arith.constant 0 : index
    %121 = vector.load %arg10[%c0_47, %c0_48, %c0_49] : memref<2x64x32xf32, #tpu.memory_space<vmem>>, vector<1x64x32xf32>
    %122 = vector.shape_cast %121 : vector<1x64x32xf32> to vector<64x32xf32>
    %cst_50 = arith.constant dense<0.000000e+00> : vector<16x32xf32>
    %123 = tpu.matmul %120, %122, %cst_50 {dimension_numbers = #tpu.dot_dimension_numbers<[1], [0], [0], [1], [0, 0, 1, 1], [], []>} : vector<16x64xf32>, vector<64x32xf32>, vector<16x32xf32> -> vector<16x32xf32>
    %124 = vector.extract_strided_slice %46 {offsets = [2, 0], sizes = [1, 32], strides = [1, 1]} : vector<5x32xf32> to vector<1x32xf32>
    %125 = vector.broadcast %124 : vector<1x32xf32> to vector<16x32xf32>
    %126 = arith.addf %123, %125 : vector<16x32xf32>
    %127 = arith.addf %126, %111 : vector<16x32xf32>
    %128 = vector.extract_strided_slice %46 {offsets = [3, 0], sizes = [1, 32], strides = [1, 1]} : vector<5x32xf32> to vector<1x32xf32>
    %129 = vector.extract_strided_slice %46 {offsets = [4, 0], sizes = [1, 32], strides = [1, 1]} : vector<5x32xf32> to vector<1x32xf32>
    %cst_51 = arith.constant dense<0.000000e+00> : vector<16xf32>
    %130 = vector.multi_reduction <add>, %127, %cst_51 [1] : vector<16x32xf32> to vector<16xf32>
    %131 = vector.shape_cast %130 : vector<16xf32> to vector<16x1xf32>
    %cst_52 = arith.constant 3.200000e+01 : f32
    %132 = vector.broadcast %cst_52 : f32 to vector<16x1xf32>
    %133 = arith.divf %131, %132 : vector<16x1xf32>
    %134 = vector.broadcast %133 : vector<16x1xf32> to vector<16x32xf32>
    %135 = arith.subf %127, %134 : vector<16x32xf32>
    %136 = arith.mulf %135, %135 : vector<16x32xf32>
    %cst_53 = arith.constant dense<0.000000e+00> : vector<16xf32>
    %137 = vector.multi_reduction <add>, %136, %cst_53 [1] : vector<16x32xf32> to vector<16xf32>
    %138 = vector.shape_cast %137 : vector<16xf32> to vector<16x1xf32>
    %cst_54 = arith.constant 3.200000e+01 : f32
    %139 = vector.broadcast %cst_54 : f32 to vector<16x1xf32>
    %140 = arith.divf %138, %139 : vector<16x1xf32>
    %141 = vector.broadcast %133 : vector<16x1xf32> to vector<16x32xf32>
    %142 = arith.subf %127, %141 : vector<16x32xf32>
    %cst_55 = arith.constant 9.99999997E-7 : f32
    %143 = vector.broadcast %cst_55 : f32 to vector<16x1xf32>
    %144 = arith.addf %140, %143 : vector<16x1xf32>
    %145 = math.rsqrt %144 : vector<16x1xf32>
    %146 = vector.broadcast %145 : vector<16x1xf32> to vector<16x32xf32>
    %147 = arith.mulf %142, %146 : vector<16x32xf32>
    %148 = vector.broadcast %128 : vector<1x32xf32> to vector<16x32xf32>
    %149 = arith.mulf %147, %148 : vector<16x32xf32>
    %150 = vector.broadcast %129 : vector<1x32xf32> to vector<16x32xf32>
    %151 = arith.addf %149, %150 : vector<16x32xf32>
    %c1 = arith.constant 1 : index
    %c0_56 = arith.constant 0 : index
    %c0_57 = arith.constant 0 : index
    %152 = vector.load %arg11[%c1, %c0_56, %c0_57] : memref<2x5x32xf32, #tpu.memory_space<vmem>>, vector<1x5x32xf32>
    %153 = vector.shape_cast %152 : vector<1x5x32xf32> to vector<5x32xf32>
    %c1_58 = arith.constant 1 : index
    %c0_59 = arith.constant 0 : index
    %c0_60 = arith.constant 0 : index
    %154 = vector.load %arg6[%c1_58, %c0_59, %c0_60] : memref<2x32x96xf32, #tpu.memory_space<vmem>>, vector<1x32x96xf32>
    %155 = vector.shape_cast %154 : vector<1x32x96xf32> to vector<32x96xf32>
    %c1_61 = arith.constant 1 : index
    %c0_62 = arith.constant 0 : index
    %c0_63 = arith.constant 0 : index
    %156 = vector.load %arg7[%c1_61, %c0_62, %c0_63] : memref<2x32x32xf32, #tpu.memory_space<vmem>>, vector<1x32x32xf32>
    %157 = vector.shape_cast %156 : vector<1x32x32xf32> to vector<32x32xf32>
    %cst_64 = arith.constant dense<0.000000e+00> : vector<16x96xf32>
    %158 = tpu.matmul %151, %155, %cst_64 {dimension_numbers = #tpu.dot_dimension_numbers<[1], [0], [0], [1], [0, 0, 1, 1], [], []>} : vector<16x32xf32>, vector<32x96xf32>, vector<16x96xf32> -> vector<16x96xf32>
    %159 = vector.extract_strided_slice %158 {offsets = [0, 0], sizes = [16, 16], strides = [1, 1]} : vector<16x96xf32> to vector<16x16xf32>
    %160 = vector.extract_strided_slice %158 {offsets = [0, 32], sizes = [16, 16], strides = [1, 1]} : vector<16x96xf32> to vector<16x16xf32>
    %161 = vector.extract_strided_slice %158 {offsets = [0, 64], sizes = [16, 16], strides = [1, 1]} : vector<16x96xf32> to vector<16x16xf32>
    %cst_65 = arith.constant dense<0.000000e+00> : vector<16x16xf32>
    %162 = tpu.matmul %159, %160, %cst_65 {dimension_numbers = #tpu.dot_dimension_numbers<[1], [1], [0], [0], [0, 0, 1, 0], [], []>} : vector<16x16xf32>, vector<16x16xf32>, vector<16x16xf32> -> vector<16x16xf32>
    %163 = arith.addf %162, %19 : vector<16x16xf32>
    %cst_66 = arith.constant dense<0xFF800000> : vector<16xf32>
    %164 = vector.multi_reduction <maximumf>, %163, %cst_66 [1] : vector<16x16xf32> to vector<16xf32>
    %165 = vector.shape_cast %164 : vector<16xf32> to vector<16x1xf32>
    %166 = vector.broadcast %165 : vector<16x1xf32> to vector<16x16xf32>
    %167 = arith.subf %163, %166 : vector<16x16xf32>
    %168 = math.exp %167 : vector<16x16xf32>
    %cst_67 = arith.constant dense<0.000000e+00> : vector<16x16xf32>
    %169 = tpu.matmul %168, %161, %cst_67 {dimension_numbers = #tpu.dot_dimension_numbers<[1], [0], [0], [1], [0, 0, 1, 1], [], []>} : vector<16x16xf32>, vector<16x16xf32>, vector<16x16xf32> -> vector<16x16xf32>
    %cst_68 = arith.constant dense<0.000000e+00> : vector<16xf32>
    %170 = vector.multi_reduction <add>, %168, %cst_68 [1] : vector<16x16xf32> to vector<16xf32>
    %171 = vector.shape_cast %170 : vector<16xf32> to vector<16x1xf32>
    %172 = vector.broadcast %171 : vector<16x1xf32> to vector<16x16xf32>
    %173 = arith.divf %169, %172 : vector<16x16xf32>
    %174 = vector.extract_strided_slice %157 {offsets = [0, 0], sizes = [16, 32], strides = [1, 1]} : vector<32x32xf32> to vector<16x32xf32>
    %cst_69 = arith.constant dense<0.000000e+00> : vector<16x32xf32>
    %175 = tpu.matmul %173, %174, %cst_69 {dimension_numbers = #tpu.dot_dimension_numbers<[1], [0], [0], [1], [0, 0, 1, 1], [], []>} : vector<16x16xf32>, vector<16x32xf32>, vector<16x32xf32> -> vector<16x32xf32>
    %176 = vector.extract_strided_slice %158 {offsets = [0, 16], sizes = [16, 16], strides = [1, 1]} : vector<16x96xf32> to vector<16x16xf32>
    %177 = vector.extract_strided_slice %158 {offsets = [0, 48], sizes = [16, 16], strides = [1, 1]} : vector<16x96xf32> to vector<16x16xf32>
    %178 = vector.extract_strided_slice %158 {offsets = [0, 80], sizes = [16, 16], strides = [1, 1]} : vector<16x96xf32> to vector<16x16xf32>
    %cst_70 = arith.constant dense<0.000000e+00> : vector<16x16xf32>
    %179 = tpu.matmul %176, %177, %cst_70 {dimension_numbers = #tpu.dot_dimension_numbers<[1], [1], [0], [0], [0, 0, 1, 0], [], []>} : vector<16x16xf32>, vector<16x16xf32>, vector<16x16xf32> -> vector<16x16xf32>
    %180 = arith.addf %179, %19 : vector<16x16xf32>
    %cst_71 = arith.constant dense<0xFF800000> : vector<16xf32>
    %181 = vector.multi_reduction <maximumf>, %180, %cst_71 [1] : vector<16x16xf32> to vector<16xf32>
    %182 = vector.shape_cast %181 : vector<16xf32> to vector<16x1xf32>
    %183 = vector.broadcast %182 : vector<16x1xf32> to vector<16x16xf32>
    %184 = arith.subf %180, %183 : vector<16x16xf32>
    %185 = math.exp %184 : vector<16x16xf32>
    %cst_72 = arith.constant dense<0.000000e+00> : vector<16x16xf32>
    %186 = tpu.matmul %185, %178, %cst_72 {dimension_numbers = #tpu.dot_dimension_numbers<[1], [0], [0], [1], [0, 0, 1, 1], [], []>} : vector<16x16xf32>, vector<16x16xf32>, vector<16x16xf32> -> vector<16x16xf32>
    %cst_73 = arith.constant dense<0.000000e+00> : vector<16xf32>
    %187 = vector.multi_reduction <add>, %185, %cst_73 [1] : vector<16x16xf32> to vector<16xf32>
    %188 = vector.shape_cast %187 : vector<16xf32> to vector<16x1xf32>
    %189 = vector.broadcast %188 : vector<16x1xf32> to vector<16x16xf32>
    %190 = arith.divf %186, %189 : vector<16x16xf32>
    %191 = vector.extract_strided_slice %157 {offsets = [16, 0], sizes = [16, 32], strides = [1, 1]} : vector<32x32xf32> to vector<16x32xf32>
    %cst_74 = arith.constant dense<0.000000e+00> : vector<16x32xf32>
    %192 = tpu.matmul %190, %191, %cst_74 {dimension_numbers = #tpu.dot_dimension_numbers<[1], [0], [0], [1], [0, 0, 1, 1], [], []>} : vector<16x16xf32>, vector<16x32xf32>, vector<16x32xf32> -> vector<16x32xf32>
    %193 = arith.addf %175, %192 : vector<16x32xf32>
    %194 = arith.addf %193, %151 : vector<16x32xf32>
    %195 = vector.extract_strided_slice %153 {offsets = [0, 0], sizes = [1, 32], strides = [1, 1]} : vector<5x32xf32> to vector<1x32xf32>
    %196 = vector.extract_strided_slice %153 {offsets = [1, 0], sizes = [1, 32], strides = [1, 1]} : vector<5x32xf32> to vector<1x32xf32>
    %cst_75 = arith.constant dense<0.000000e+00> : vector<16xf32>
    %197 = vector.multi_reduction <add>, %194, %cst_75 [1] : vector<16x32xf32> to vector<16xf32>
    %198 = vector.shape_cast %197 : vector<16xf32> to vector<16x1xf32>
    %cst_76 = arith.constant 3.200000e+01 : f32
    %199 = vector.broadcast %cst_76 : f32 to vector<16x1xf32>
    %200 = arith.divf %198, %199 : vector<16x1xf32>
    %201 = vector.broadcast %200 : vector<16x1xf32> to vector<16x32xf32>
    %202 = arith.subf %194, %201 : vector<16x32xf32>
    %203 = arith.mulf %202, %202 : vector<16x32xf32>
    %cst_77 = arith.constant dense<0.000000e+00> : vector<16xf32>
    %204 = vector.multi_reduction <add>, %203, %cst_77 [1] : vector<16x32xf32> to vector<16xf32>
    %205 = vector.shape_cast %204 : vector<16xf32> to vector<16x1xf32>
    %cst_78 = arith.constant 3.200000e+01 : f32
    %206 = vector.broadcast %cst_78 : f32 to vector<16x1xf32>
    %207 = arith.divf %205, %206 : vector<16x1xf32>
    %208 = vector.broadcast %200 : vector<16x1xf32> to vector<16x32xf32>
    %209 = arith.subf %194, %208 : vector<16x32xf32>
    %cst_79 = arith.constant 9.99999997E-7 : f32
    %210 = vector.broadcast %cst_79 : f32 to vector<16x1xf32>
    %211 = arith.addf %207, %210 : vector<16x1xf32>
    %212 = math.rsqrt %211 : vector<16x1xf32>
    %213 = vector.broadcast %212 : vector<16x1xf32> to vector<16x32xf32>
    %214 = arith.mulf %209, %213 : vector<16x32xf32>
    %215 = vector.broadcast %195 : vector<1x32xf32> to vector<16x32xf32>
    %216 = arith.mulf %214, %215 : vector<16x32xf32>
    %217 = vector.broadcast %196 : vector<1x32xf32> to vector<16x32xf32>
    %218 = arith.addf %216, %217 : vector<16x32xf32>
    %c1_80 = arith.constant 1 : index
    %c0_81 = arith.constant 0 : index
    %c0_82 = arith.constant 0 : index
    %219 = vector.load %arg8[%c1_80, %c0_81, %c0_82] : memref<2x32x64xf32, #tpu.memory_space<vmem>>, vector<1x32x64xf32>
    %220 = vector.shape_cast %219 : vector<1x32x64xf32> to vector<32x64xf32>
    %cst_83 = arith.constant dense<0.000000e+00> : vector<16x64xf32>
    %221 = tpu.matmul %218, %220, %cst_83 {dimension_numbers = #tpu.dot_dimension_numbers<[1], [0], [0], [1], [0, 0, 1, 1], [], []>} : vector<16x32xf32>, vector<32x64xf32>, vector<16x64xf32> -> vector<16x64xf32>
    %c1_84 = arith.constant 1 : index
    %c0_85 = arith.constant 0 : index
    %c0_86 = arith.constant 0 : index
    %222 = vector.load %arg9[%c1_84, %c0_85, %c0_86] : memref<2x1x64xf32, #tpu.memory_space<vmem>>, vector<1x1x64xf32>
    %223 = vector.shape_cast %222 : vector<1x1x64xf32> to vector<1x64xf32>
    %224 = vector.broadcast %223 : vector<1x64xf32> to vector<16x64xf32>
    %225 = arith.addf %221, %224 : vector<16x64xf32>
    %cst_87 = arith.constant 0.000000e+00 : f32
    %226 = vector.broadcast %cst_87 : f32 to vector<16x64xf32>
    %227 = arith.maximumf %225, %226 : vector<16x64xf32>
    %c1_88 = arith.constant 1 : index
    %c0_89 = arith.constant 0 : index
    %c0_90 = arith.constant 0 : index
    %228 = vector.load %arg10[%c1_88, %c0_89, %c0_90] : memref<2x64x32xf32, #tpu.memory_space<vmem>>, vector<1x64x32xf32>
    %229 = vector.shape_cast %228 : vector<1x64x32xf32> to vector<64x32xf32>
    %cst_91 = arith.constant dense<0.000000e+00> : vector<16x32xf32>
    %230 = tpu.matmul %227, %229, %cst_91 {dimension_numbers = #tpu.dot_dimension_numbers<[1], [0], [0], [1], [0, 0, 1, 1], [], []>} : vector<16x64xf32>, vector<64x32xf32>, vector<16x32xf32> -> vector<16x32xf32>
    %231 = vector.extract_strided_slice %153 {offsets = [2, 0], sizes = [1, 32], strides = [1, 1]} : vector<5x32xf32> to vector<1x32xf32>
    %232 = vector.broadcast %231 : vector<1x32xf32> to vector<16x32xf32>
    %233 = arith.addf %230, %232 : vector<16x32xf32>
    %234 = arith.addf %233, %218 : vector<16x32xf32>
    %235 = vector.extract_strided_slice %153 {offsets = [3, 0], sizes = [1, 32], strides = [1, 1]} : vector<5x32xf32> to vector<1x32xf32>
    %236 = vector.extract_strided_slice %153 {offsets = [4, 0], sizes = [1, 32], strides = [1, 1]} : vector<5x32xf32> to vector<1x32xf32>
    %cst_92 = arith.constant dense<0.000000e+00> : vector<16xf32>
    %237 = vector.multi_reduction <add>, %234, %cst_92 [1] : vector<16x32xf32> to vector<16xf32>
    %238 = vector.shape_cast %237 : vector<16xf32> to vector<16x1xf32>
    %cst_93 = arith.constant 3.200000e+01 : f32
    %239 = vector.broadcast %cst_93 : f32 to vector<16x1xf32>
    %240 = arith.divf %238, %239 : vector<16x1xf32>
    %241 = vector.broadcast %240 : vector<16x1xf32> to vector<16x32xf32>
    %242 = arith.subf %234, %241 : vector<16x32xf32>
    %243 = arith.mulf %242, %242 : vector<16x32xf32>
    %cst_94 = arith.constant dense<0.000000e+00> : vector<16xf32>
    %244 = vector.multi_reduction <add>, %243, %cst_94 [1] : vector<16x32xf32> to vector<16xf32>
    %245 = vector.shape_cast %244 : vector<16xf32> to vector<16x1xf32>
    %cst_95 = arith.constant 3.200000e+01 : f32
    %246 = vector.broadcast %cst_95 : f32 to vector<16x1xf32>
    %247 = arith.divf %245, %246 : vector<16x1xf32>
    %248 = vector.broadcast %240 : vector<16x1xf32> to vector<16x32xf32>
    %249 = arith.subf %234, %248 : vector<16x32xf32>
    %cst_96 = arith.constant 9.99999997E-7 : f32
    %250 = vector.broadcast %cst_96 : f32 to vector<16x1xf32>
    %251 = arith.addf %247, %250 : vector<16x1xf32>
    %252 = math.rsqrt %251 : vector<16x1xf32>
    %253 = vector.broadcast %252 : vector<16x1xf32> to vector<16x32xf32>
    %254 = arith.mulf %249, %253 : vector<16x32xf32>
    %255 = vector.broadcast %235 : vector<1x32xf32> to vector<16x32xf32>
    %256 = arith.mulf %254, %255 : vector<16x32xf32>
    %257 = vector.broadcast %236 : vector<1x32xf32> to vector<16x32xf32>
    %258 = arith.addf %256, %257 : vector<16x32xf32>
    %c0_97 = arith.constant 0 : index
    %c0_98 = arith.constant 0 : index
    %259 = vector.load %arg32[%c0_97, %c0_98] : memref<16x32xf32, #tpu.memory_space<vmem>>, vector<16x32xf32>
    tpu.vector_store %arg32[%c0_97, %c0_98], %258 {strides = array<i32>} : memref<16x32xf32, #tpu.memory_space<vmem>>, vector<16x32xf32>,
    %260 = vector.extract_strided_slice %258 {offsets = [0, 0], sizes = [1, 32], strides = [1, 1]} : vector<16x32xf32> to vector<1x32xf32>
    %261 = vector.extract_strided_slice %258 {offsets = [8, 0], sizes = [1, 32], strides = [1, 1]} : vector<16x32xf32> to vector<1x32xf32>
    %262 = tpu.concatenate %260, %261 in 0 : vector<1x32xf32>, vector<1x32xf32> -> vector<2x32xf32>
    %c0_99 = arith.constant 0 : index
    %c0_100 = arith.constant 0 : index
    %263 = vector.load %arg20[%c0_99, %c0_100] : memref<32x16xf32, #tpu.memory_space<vmem>>, vector<32x16xf32>
    %cst_101 = arith.constant dense<0.000000e+00> : vector<2x16xf32>
    %264 = tpu.matmul %262, %263, %cst_101 {dimension_numbers = #tpu.dot_dimension_numbers<[1], [0], [0], [1], [0, 0, 1, 1], [], []>} : vector<2x32xf32>, vector<32x16xf32>, vector<2x16xf32> -> vector<2x16xf32>
    %c0_102 = arith.constant 0 : index
    %c0_103 = arith.constant 0 : index
    %265 = vector.load %arg21[%c0_102, %c0_103] : memref<1x16xf32, #tpu.memory_space<vmem>>, vector<1x16xf32>
    %266 = vector.broadcast %265 : vector<1x16xf32> to vector<2x16xf32>
    %267 = arith.addf %264, %266 : vector<2x16xf32>
    %cst_104 = arith.constant 5.000000e-01 : f32
    %268 = vector.broadcast %cst_104 : f32 to vector<2x16xf32>
    %269 = arith.mulf %268, %267 : vector<2x16xf32>
    %cst_105 = arith.constant 0.707106769 : f32
    %270 = vector.broadcast %cst_105 : f32 to vector<2x16xf32>
    %271 = arith.mulf %267, %270 : vector<2x16xf32>
    %272 = math.absf %271 : vector<2x16xf32>
    %cst_106 = arith.constant 0.327591091 : f32
    %273 = vector.broadcast %cst_106 : f32 to vector<2x16xf32>
    %274 = arith.mulf %273, %272 : vector<2x16xf32>
    %cst_107 = arith.constant 1.000000e+00 : f32
    %275 = vector.broadcast %cst_107 : f32 to vector<2x16xf32>
    %276 = arith.addf %275, %274 : vector<2x16xf32>
    %cst_108 = arith.constant 1.000000e+00 : f32
    %277 = vector.broadcast %cst_108 : f32 to vector<2x16xf32>
    %278 = arith.divf %277, %276 : vector<2x16xf32>
    %cst_109 = arith.constant 1.06140542 : f32
    %279 = vector.broadcast %cst_109 : f32 to vector<2x16xf32>
    %280 = arith.mulf %279, %278 : vector<2x16xf32>
    %cst_110 = arith.constant -1.45315206 : f32
    %281 = vector.broadcast %cst_110 : f32 to vector<2x16xf32>
    %282 = arith.addf %280, %281 : vector<2x16xf32>
    %283 = arith.mulf %282, %278 : vector<2x16xf32>
    %cst_111 = arith.constant 1.42141378 : f32
    %284 = vector.broadcast %cst_111 : f32 to vector<2x16xf32>
    %285 = arith.addf %283, %284 : vector<2x16xf32>
    %286 = arith.mulf %285, %278 : vector<2x16xf32>
    %cst_112 = arith.constant -0.284496725 : f32
    %287 = vector.broadcast %cst_112 : f32 to vector<2x16xf32>
    %288 = arith.addf %286, %287 : vector<2x16xf32>
    %289 = arith.mulf %288, %278 : vector<2x16xf32>
    %cst_113 = arith.constant 0.254829586 : f32
    %290 = vector.broadcast %cst_113 : f32 to vector<2x16xf32>
    %291 = arith.addf %289, %290 : vector<2x16xf32>
    %292 = arith.mulf %291, %278 : vector<2x16xf32>
    %cst_114 = arith.constant 0.000000e+00 : f32
    %293 = vector.broadcast %cst_114 : f32 to vector<2x16xf32>
    %294 = arith.subf %293, %272 : vector<2x16xf32>
    %295 = arith.mulf %294, %272 : vector<2x16xf32>
    %296 = math.exp %295 : vector<2x16xf32>
    %297 = arith.mulf %292, %296 : vector<2x16xf32>
    %cst_115 = arith.constant 1.000000e+00 : f32
    %298 = vector.broadcast %cst_115 : f32 to vector<2x16xf32>
    %299 = arith.subf %298, %297 : vector<2x16xf32>
    %cst_116 = arith.constant 0.000000e+00 : f32
    %300 = vector.broadcast %cst_116 : f32 to vector<2x16xf32>
    %301 = arith.cmpf oge, %271, %300 : vector<2x16xf32>
    %cst_117 = arith.constant 0.000000e+00 : f32
    %302 = vector.broadcast %cst_117 : f32 to vector<2x16xf32>
    %303 = arith.subf %302, %299 : vector<2x16xf32>
    %304 = arith.select %301, %299, %303 : vector<2x16xi1>, vector<2x16xf32>
    %cst_118 = arith.constant 1.000000e+00 : f32
    %305 = vector.broadcast %cst_118 : f32 to vector<2x16xf32>
    %306 = arith.addf %305, %304 : vector<2x16xf32>
    %307 = arith.mulf %269, %306 : vector<2x16xf32>
    %c0_119 = arith.constant 0 : index
    %c0_120 = arith.constant 0 : index
    %308 = vector.load %arg22[%c0_119, %c0_120] : memref<16x16xf32, #tpu.memory_space<vmem>>, vector<16x16xf32>
    %cst_121 = arith.constant dense<0.000000e+00> : vector<2x16xf32>
    %309 = tpu.matmul %307, %308, %cst_121 {dimension_numbers = #tpu.dot_dimension_numbers<[1], [0], [0], [1], [0, 0, 1, 1], [], []>} : vector<2x16xf32>, vector<16x16xf32>, vector<2x16xf32> -> vector<2x16xf32>
    %c0_122 = arith.constant 0 : index
    %c0_123 = arith.constant 0 : index
    %310 = vector.load %arg23[%c0_122, %c0_123] : memref<1x16xf32, #tpu.memory_space<vmem>>, vector<1x16xf32>
    %311 = vector.broadcast %310 : vector<1x16xf32> to vector<2x16xf32>
    %312 = arith.addf %309, %311 : vector<2x16xf32>
    %c0_124 = arith.constant 0 : index
    %c0_125 = arith.constant 0 : index
    %313 = vector.load %arg24[%c0_124, %c0_125] : memref<16x16xf32, #tpu.memory_space<vmem>>, vector<16x16xf32>
    %cst_126 = arith.constant dense<0.000000e+00> : vector<2x16xf32>
    %314 = tpu.matmul %307, %313, %cst_126 {dimension_numbers = #tpu.dot_dimension_numbers<[1], [0], [0], [1], [0, 0, 1, 1], [], []>} : vector<2x16xf32>, vector<16x16xf32>, vector<2x16xf32> -> vector<2x16xf32>
    %c0_127 = arith.constant 0 : index
    %c0_128 = arith.constant 0 : index
    %315 = vector.load %arg25[%c0_127, %c0_128] : memref<1x16xf32, #tpu.memory_space<vmem>>, vector<1x16xf32>
    %316 = vector.broadcast %315 : vector<1x16xf32> to vector<2x16xf32>
    %317 = arith.addf %314, %316 : vector<2x16xf32>
    %c0_129 = arith.constant 0 : index
    %c0_130 = arith.constant 0 : index
    %318 = vector.load %arg4[%c0_129, %c0_130] : memref<2x16xf32, #tpu.memory_space<vmem>>, vector<2x16xf32>
    %cst_131 = arith.constant 5.000000e-01 : f32
    %319 = vector.broadcast %cst_131 : f32 to vector<2x16xf32>
    %320 = arith.mulf %319, %317 : vector<2x16xf32>
    %321 = math.exp %320 : vector<2x16xf32>
    %322 = arith.mulf %318, %321 : vector<2x16xf32>
    %323 = arith.addf %322, %312 : vector<2x16xf32>
    %c0_132 = arith.constant 0 : index
    %c0_133 = arith.constant 0 : index
    %324 = vector.load %arg26[%c0_132, %c0_133] : memref<16x16xf32, #tpu.memory_space<vmem>>, vector<16x16xf32>
    %cst_134 = arith.constant dense<0.000000e+00> : vector<2x16xf32>
    %325 = tpu.matmul %323, %324, %cst_134 {dimension_numbers = #tpu.dot_dimension_numbers<[1], [0], [0], [1], [0, 0, 1, 1], [], []>} : vector<2x16xf32>, vector<16x16xf32>, vector<2x16xf32> -> vector<2x16xf32>
    %c0_135 = arith.constant 0 : index
    %c0_136 = arith.constant 0 : index
    %326 = vector.load %arg27[%c0_135, %c0_136] : memref<1x16xf32, #tpu.memory_space<vmem>>, vector<1x16xf32>
    %327 = vector.broadcast %326 : vector<1x16xf32> to vector<2x16xf32>
    %328 = arith.addf %325, %327 : vector<2x16xf32>
    %cst_137 = arith.constant 5.000000e-01 : f32
    %329 = vector.broadcast %cst_137 : f32 to vector<2x16xf32>
    %330 = arith.mulf %329, %328 : vector<2x16xf32>
    %cst_138 = arith.constant 0.707106769 : f32
    %331 = vector.broadcast %cst_138 : f32 to vector<2x16xf32>
    %332 = arith.mulf %328, %331 : vector<2x16xf32>
    %333 = math.absf %332 : vector<2x16xf32>
    %cst_139 = arith.constant 0.327591091 : f32
    %334 = vector.broadcast %cst_139 : f32 to vector<2x16xf32>
    %335 = arith.mulf %334, %333 : vector<2x16xf32>
    %cst_140 = arith.constant 1.000000e+00 : f32
    %336 = vector.broadcast %cst_140 : f32 to vector<2x16xf32>
    %337 = arith.addf %336, %335 : vector<2x16xf32>
    %cst_141 = arith.constant 1.000000e+00 : f32
    %338 = vector.broadcast %cst_141 : f32 to vector<2x16xf32>
    %339 = arith.divf %338, %337 : vector<2x16xf32>
    %cst_142 = arith.constant 1.06140542 : f32
    %340 = vector.broadcast %cst_142 : f32 to vector<2x16xf32>
    %341 = arith.mulf %340, %339 : vector<2x16xf32>
    %cst_143 = arith.constant -1.45315206 : f32
    %342 = vector.broadcast %cst_143 : f32 to vector<2x16xf32>
    %343 = arith.addf %341, %342 : vector<2x16xf32>
    %344 = arith.mulf %343, %339 : vector<2x16xf32>
    %cst_144 = arith.constant 1.42141378 : f32
    %345 = vector.broadcast %cst_144 : f32 to vector<2x16xf32>
    %346 = arith.addf %344, %345 : vector<2x16xf32>
    %347 = arith.mulf %346, %339 : vector<2x16xf32>
    %cst_145 = arith.constant -0.284496725 : f32
    %348 = vector.broadcast %cst_145 : f32 to vector<2x16xf32>
    %349 = arith.addf %347, %348 : vector<2x16xf32>
    %350 = arith.mulf %349, %339 : vector<2x16xf32>
    %cst_146 = arith.constant 0.254829586 : f32
    %351 = vector.broadcast %cst_146 : f32 to vector<2x16xf32>
    %352 = arith.addf %350, %351 : vector<2x16xf32>
    %353 = arith.mulf %352, %339 : vector<2x16xf32>
    %cst_147 = arith.constant 0.000000e+00 : f32
    %354 = vector.broadcast %cst_147 : f32 to vector<2x16xf32>
    %355 = arith.subf %354, %333 : vector<2x16xf32>
    %356 = arith.mulf %355, %333 : vector<2x16xf32>
    %357 = math.exp %356 : vector<2x16xf32>
    %358 = arith.mulf %353, %357 : vector<2x16xf32>
    %cst_148 = arith.constant 1.000000e+00 : f32
    %359 = vector.broadcast %cst_148 : f32 to vector<2x16xf32>
    %360 = arith.subf %359, %358 : vector<2x16xf32>
    %cst_149 = arith.constant 0.000000e+00 : f32
    %361 = vector.broadcast %cst_149 : f32 to vector<2x16xf32>
    %362 = arith.cmpf oge, %332, %361 : vector<2x16xf32>
    %cst_150 = arith.constant 0.000000e+00 : f32
    %363 = vector.broadcast %cst_150 : f32 to vector<2x16xf32>
    %364 = arith.subf %363, %360 : vector<2x16xf32>
    %365 = arith.select %362, %360, %364 : vector<2x16xi1>, vector<2x16xf32>
    %cst_151 = arith.constant 1.000000e+00 : f32
    %366 = vector.broadcast %cst_151 : f32 to vector<2x16xf32>
    %367 = arith.addf %366, %365 : vector<2x16xf32>
    %368 = arith.mulf %330, %367 : vector<2x16xf32>
    %c0_152 = arith.constant 0 : index
    %c0_153 = arith.constant 0 : index
    %369 = vector.load %arg28[%c0_152, %c0_153] : memref<16x32xf32, #tpu.memory_space<vmem>>, vector<16x32xf32>
    %cst_154 = arith.constant dense<0.000000e+00> : vector<2x32xf32>
    %370 = tpu.matmul %368, %369, %cst_154 {dimension_numbers = #tpu.dot_dimension_numbers<[1], [0], [0], [1], [0, 0, 1, 1], [], []>} : vector<2x16xf32>, vector<16x32xf32>, vector<2x32xf32> -> vector<2x32xf32>
    %c0_155 = arith.constant 0 : index
    %c0_156 = arith.constant 0 : index
    %371 = vector.load %arg29[%c0_155, %c0_156] : memref<1x32xf32, #tpu.memory_space<vmem>>, vector<1x32xf32>
    %372 = vector.broadcast %371 : vector<1x32xf32> to vector<2x32xf32>
    %373 = arith.addf %370, %372 : vector<2x32xf32>
    %cst_157 = arith.constant 5.000000e-01 : f32
    %374 = vector.broadcast %cst_157 : f32 to vector<2x32xf32>
    %375 = arith.mulf %374, %373 : vector<2x32xf32>
    %cst_158 = arith.constant 0.707106769 : f32
    %376 = vector.broadcast %cst_158 : f32 to vector<2x32xf32>
    %377 = arith.mulf %373, %376 : vector<2x32xf32>
    %378 = math.absf %377 : vector<2x32xf32>
    %cst_159 = arith.constant 0.327591091 : f32
    %379 = vector.broadcast %cst_159 : f32 to vector<2x32xf32>
    %380 = arith.mulf %379, %378 : vector<2x32xf32>
    %cst_160 = arith.constant 1.000000e+00 : f32
    %381 = vector.broadcast %cst_160 : f32 to vector<2x32xf32>
    %382 = arith.addf %381, %380 : vector<2x32xf32>
    %cst_161 = arith.constant 1.000000e+00 : f32
    %383 = vector.broadcast %cst_161 : f32 to vector<2x32xf32>
    %384 = arith.divf %383, %382 : vector<2x32xf32>
    %cst_162 = arith.constant 1.06140542 : f32
    %385 = vector.broadcast %cst_162 : f32 to vector<2x32xf32>
    %386 = arith.mulf %385, %384 : vector<2x32xf32>
    %cst_163 = arith.constant -1.45315206 : f32
    %387 = vector.broadcast %cst_163 : f32 to vector<2x32xf32>
    %388 = arith.addf %386, %387 : vector<2x32xf32>
    %389 = arith.mulf %388, %384 : vector<2x32xf32>
    %cst_164 = arith.constant 1.42141378 : f32
    %390 = vector.broadcast %cst_164 : f32 to vector<2x32xf32>
    %391 = arith.addf %389, %390 : vector<2x32xf32>
    %392 = arith.mulf %391, %384 : vector<2x32xf32>
    %cst_165 = arith.constant -0.284496725 : f32
    %393 = vector.broadcast %cst_165 : f32 to vector<2x32xf32>
    %394 = arith.addf %392, %393 : vector<2x32xf32>
    %395 = arith.mulf %394, %384 : vector<2x32xf32>
    %cst_166 = arith.constant 0.254829586 : f32
    %396 = vector.broadcast %cst_166 : f32 to vector<2x32xf32>
    %397 = arith.addf %395, %396 : vector<2x32xf32>
    %398 = arith.mulf %397, %384 : vector<2x32xf32>
    %cst_167 = arith.constant 0.000000e+00 : f32
    %399 = vector.broadcast %cst_167 : f32 to vector<2x32xf32>
    %400 = arith.subf %399, %378 : vector<2x32xf32>
    %401 = arith.mulf %400, %378 : vector<2x32xf32>
    %402 = math.exp %401 : vector<2x32xf32>
    %403 = arith.mulf %398, %402 : vector<2x32xf32>
    %cst_168 = arith.constant 1.000000e+00 : f32
    %404 = vector.broadcast %cst_168 : f32 to vector<2x32xf32>
    %405 = arith.subf %404, %403 : vector<2x32xf32>
    %cst_169 = arith.constant 0.000000e+00 : f32
    %406 = vector.broadcast %cst_169 : f32 to vector<2x32xf32>
    %407 = arith.cmpf oge, %377, %406 : vector<2x32xf32>
    %cst_170 = arith.constant 0.000000e+00 : f32
    %408 = vector.broadcast %cst_170 : f32 to vector<2x32xf32>
    %409 = arith.subf %408, %405 : vector<2x32xf32>
    %410 = arith.select %407, %405, %409 : vector<2x32xi1>, vector<2x32xf32>
    %cst_171 = arith.constant 1.000000e+00 : f32
    %411 = vector.broadcast %cst_171 : f32 to vector<2x32xf32>
    %412 = arith.addf %411, %410 : vector<2x32xf32>
    %413 = arith.mulf %375, %412 : vector<2x32xf32>
    %414 = vector.extract_strided_slice %413 {offsets = [0, 0], sizes = [1, 32], strides = [1, 1]} : vector<2x32xf32> to vector<1x32xf32>
    %415 = vector.shape_cast %414 : vector<1x32xf32> to vector<1x32xf32>
    %416 = vector.broadcast %415 : vector<1x32xf32> to vector<8x32xf32>
    %417 = vector.extract_strided_slice %413 {offsets = [1, 0], sizes = [1, 32], strides = [1, 1]} : vector<2x32xf32> to vector<1x32xf32>
    %418 = vector.shape_cast %417 : vector<1x32xf32> to vector<1x32xf32>
    %419 = vector.broadcast %418 : vector<1x32xf32> to vector<8x32xf32>
    %420 = tpu.concatenate %416, %419 in 0 : vector<8x32xf32>, vector<8x32xf32> -> vector<16x32xf32>
    %c0_172 = arith.constant 0 : index
    %c0_173 = arith.constant 0 : index
    %421 = vector.load %arg3[%c0_172, %c0_173] : memref<1x16xf32, #tpu.memory_space<vmem>>, vector<1x16xf32>
    %422 = tpu.iota {dimensions = array<i32: 0>} : vector<16x16xi32>
    %423 = arith.sitofp %422 : vector<16x16xi32> to vector<16x16xf32>
    %424 = tpu.iota {dimensions = array<i32: 1>} : vector<16x16xi32>
    %425 = arith.sitofp %424 : vector<16x16xi32> to vector<16x16xf32>
    %cst_174 = arith.constant 1.250000e-01 : f32
    %426 = vector.broadcast %cst_174 : f32 to vector<16x16xf32>
    %427 = arith.mulf %423, %426 : vector<16x16xf32>
    %428 = math.floor %427 : vector<16x16xf32>
    %cst_175 = arith.constant 1.250000e-01 : f32
    %429 = vector.broadcast %cst_175 : f32 to vector<16x16xf32>
    %430 = arith.mulf %425, %429 : vector<16x16xf32>
    %431 = math.floor %430 : vector<16x16xf32>
    %432 = arith.cmpf oeq, %428, %431 : vector<16x16xf32>
    %cst_176 = arith.constant 0.000000e+00 : f32
    %433 = vector.broadcast %cst_176 : f32 to vector<1x16xf32>
    %434 = arith.cmpf ogt, %421, %433 : vector<1x16xf32>
    %435 = vector.broadcast %434 : vector<1x16xi1> to vector<16x16xi1>
    %436 = arith.andi %432, %435 : vector<16x16xi1>
    %cst_177 = arith.constant 8.000000e+00 : f32
    %437 = vector.broadcast %cst_177 : f32 to vector<16x16xf32>
    %438 = arith.mulf %428, %437 : vector<16x16xf32>
    %439 = arith.subf %423, %438 : vector<16x16xf32>
    %cst_178 = arith.constant 8.000000e+00 : f32
    %440 = vector.broadcast %cst_178 : f32 to vector<16x16xf32>
    %441 = arith.mulf %431, %440 : vector<16x16xf32>
    %442 = arith.subf %425, %441 : vector<16x16xf32>
    %443 = arith.cmpf ole, %442, %439 : vector<16x16xf32>
    %444 = arith.andi %436, %443 : vector<16x16xi1>
    %cst_179 = arith.constant 0.000000e+00 : f32
    %cst_180 = arith.constant -1.000000e+09 : f32
    %445 = vector.broadcast %cst_179 : f32 to vector<16x16xf32>
    %446 = vector.broadcast %cst_180 : f32 to vector<16x16xf32>
    %447 = arith.select %444, %445, %446 : vector<16x16xi1>, vector<16x16xf32>
    %c0_181 = arith.constant 0 : index
    %c0_182 = arith.constant 0 : index
    %448 = vector.load %arg1[%c0_181, %c0_182] : memref<16x32xf32, #tpu.memory_space<vmem>>, vector<16x32xf32>
    %449 = vector.extract_strided_slice %0 {offsets = [2, 0], sizes = [1, 32], strides = [1, 1]} : vector<4x32xf32> to vector<1x32xf32>
    %450 = vector.extract_strided_slice %0 {offsets = [3, 0], sizes = [1, 32], strides = [1, 1]} : vector<4x32xf32> to vector<1x32xf32>
    %cst_183 = arith.constant dense<0.000000e+00> : vector<16xf32>
    %451 = vector.multi_reduction <add>, %448, %cst_183 [1] : vector<16x32xf32> to vector<16xf32>
    %452 = vector.shape_cast %451 : vector<16xf32> to vector<16x1xf32>
    %cst_184 = arith.constant 3.200000e+01 : f32
    %453 = vector.broadcast %cst_184 : f32 to vector<16x1xf32>
    %454 = arith.divf %452, %453 : vector<16x1xf32>
    %455 = vector.broadcast %454 : vector<16x1xf32> to vector<16x32xf32>
    %456 = arith.subf %448, %455 : vector<16x32xf32>
    %457 = arith.mulf %456, %456 : vector<16x32xf32>
    %cst_185 = arith.constant dense<0.000000e+00> : vector<16xf32>
    %458 = vector.multi_reduction <add>, %457, %cst_185 [1] : vector<16x32xf32> to vector<16xf32>
    %459 = vector.shape_cast %458 : vector<16xf32> to vector<16x1xf32>
    %cst_186 = arith.constant 3.200000e+01 : f32
    %460 = vector.broadcast %cst_186 : f32 to vector<16x1xf32>
    %461 = arith.divf %459, %460 : vector<16x1xf32>
    %462 = vector.broadcast %454 : vector<16x1xf32> to vector<16x32xf32>
    %463 = arith.subf %448, %462 : vector<16x32xf32>
    %cst_187 = arith.constant 9.99999997E-7 : f32
    %464 = vector.broadcast %cst_187 : f32 to vector<16x1xf32>
    %465 = arith.addf %461, %464 : vector<16x1xf32>
    %466 = math.rsqrt %465 : vector<16x1xf32>
    %467 = vector.broadcast %466 : vector<16x1xf32> to vector<16x32xf32>
    %468 = arith.mulf %463, %467 : vector<16x32xf32>
    %469 = vector.broadcast %449 : vector<1x32xf32> to vector<16x32xf32>
    %470 = arith.mulf %468, %469 : vector<16x32xf32>
    %471 = vector.broadcast %450 : vector<1x32xf32> to vector<16x32xf32>
    %472 = arith.addf %470, %471 : vector<16x32xf32>
    %c0_188 = arith.constant 0 : index
    %c0_189 = arith.constant 0 : index
    %c0_190 = arith.constant 0 : index
    %473 = vector.load %arg19[%c0_188, %c0_189, %c0_190] : memref<2x7x32xf32, #tpu.memory_space<vmem>>, vector<1x7x32xf32>
    %474 = vector.shape_cast %473 : vector<1x7x32xf32> to vector<7x32xf32>
    %c0_191 = arith.constant 0 : index
    %c0_192 = arith.constant 0 : index
    %c0_193 = arith.constant 0 : index
    %475 = vector.load %arg12[%c0_191, %c0_192, %c0_193] : memref<2x32x96xf32, #tpu.memory_space<vmem>>, vector<1x32x96xf32>
    %476 = vector.shape_cast %475 : vector<1x32x96xf32> to vector<32x96xf32>
    %c0_194 = arith.constant 0 : index
    %c0_195 = arith.constant 0 : index
    %c0_196 = arith.constant 0 : index
    %477 = vector.load %arg13[%c0_194, %c0_195, %c0_196] : memref<2x32x32xf32, #tpu.memory_space<vmem>>, vector<1x32x32xf32>
    %478 = vector.shape_cast %477 : vector<1x32x32xf32> to vector<32x32xf32>
    %cst_197 = arith.constant dense<0.000000e+00> : vector<16x96xf32>
    %479 = tpu.matmul %472, %476, %cst_197 {dimension_numbers = #tpu.dot_dimension_numbers<[1], [0], [0], [1], [0, 0, 1, 1], [], []>} : vector<16x32xf32>, vector<32x96xf32>, vector<16x96xf32> -> vector<16x96xf32>
    %480 = vector.extract_strided_slice %479 {offsets = [0, 0], sizes = [16, 16], strides = [1, 1]} : vector<16x96xf32> to vector<16x16xf32>
    %481 = vector.extract_strided_slice %479 {offsets = [0, 32], sizes = [16, 16], strides = [1, 1]} : vector<16x96xf32> to vector<16x16xf32>
    %482 = vector.extract_strided_slice %479 {offsets = [0, 64], sizes = [16, 16], strides = [1, 1]} : vector<16x96xf32> to vector<16x16xf32>
    %cst_198 = arith.constant dense<0.000000e+00> : vector<16x16xf32>
    %483 = tpu.matmul %480, %481, %cst_198 {dimension_numbers = #tpu.dot_dimension_numbers<[1], [1], [0], [0], [0, 0, 1, 0], [], []>} : vector<16x16xf32>, vector<16x16xf32>, vector<16x16xf32> -> vector<16x16xf32>
    %484 = arith.addf %483, %447 : vector<16x16xf32>
    %cst_199 = arith.constant dense<0xFF800000> : vector<16xf32>
    %485 = vector.multi_reduction <maximumf>, %484, %cst_199 [1] : vector<16x16xf32> to vector<16xf32>
    %486 = vector.shape_cast %485 : vector<16xf32> to vector<16x1xf32>
    %487 = vector.broadcast %486 : vector<16x1xf32> to vector<16x16xf32>
    %488 = arith.subf %484, %487 : vector<16x16xf32>
    %489 = math.exp %488 : vector<16x16xf32>
    %cst_200 = arith.constant dense<0.000000e+00> : vector<16x16xf32>
    %490 = tpu.matmul %489, %482, %cst_200 {dimension_numbers = #tpu.dot_dimension_numbers<[1], [0], [0], [1], [0, 0, 1, 1], [], []>} : vector<16x16xf32>, vector<16x16xf32>, vector<16x16xf32> -> vector<16x16xf32>
    %cst_201 = arith.constant dense<0.000000e+00> : vector<16xf32>
    %491 = vector.multi_reduction <add>, %489, %cst_201 [1] : vector<16x16xf32> to vector<16xf32>
    %492 = vector.shape_cast %491 : vector<16xf32> to vector<16x1xf32>
    %493 = vector.broadcast %492 : vector<16x1xf32> to vector<16x16xf32>
    %494 = arith.divf %490, %493 : vector<16x16xf32>
    %495 = vector.extract_strided_slice %478 {offsets = [0, 0], sizes = [16, 32], strides = [1, 1]} : vector<32x32xf32> to vector<16x32xf32>
    %cst_202 = arith.constant dense<0.000000e+00> : vector<16x32xf32>
    %496 = tpu.matmul %494, %495, %cst_202 {dimension_numbers = #tpu.dot_dimension_numbers<[1], [0], [0], [1], [0, 0, 1, 1], [], []>} : vector<16x16xf32>, vector<16x32xf32>, vector<16x32xf32> -> vector<16x32xf32>
    %497 = vector.extract_strided_slice %479 {offsets = [0, 16], sizes = [16, 16], strides = [1, 1]} : vector<16x96xf32> to vector<16x16xf32>
    %498 = vector.extract_strided_slice %479 {offsets = [0, 48], sizes = [16, 16], strides = [1, 1]} : vector<16x96xf32> to vector<16x16xf32>
    %499 = vector.extract_strided_slice %479 {offsets = [0, 80], sizes = [16, 16], strides = [1, 1]} : vector<16x96xf32> to vector<16x16xf32>
    %cst_203 = arith.constant dense<0.000000e+00> : vector<16x16xf32>
    %500 = tpu.matmul %497, %498, %cst_203 {dimension_numbers = #tpu.dot_dimension_numbers<[1], [1], [0], [0], [0, 0, 1, 0], [], []>} : vector<16x16xf32>, vector<16x16xf32>, vector<16x16xf32> -> vector<16x16xf32>
    %501 = arith.addf %500, %447 : vector<16x16xf32>
    %cst_204 = arith.constant dense<0xFF800000> : vector<16xf32>
    %502 = vector.multi_reduction <maximumf>, %501, %cst_204 [1] : vector<16x16xf32> to vector<16xf32>
    %503 = vector.shape_cast %502 : vector<16xf32> to vector<16x1xf32>
    %504 = vector.broadcast %503 : vector<16x1xf32> to vector<16x16xf32>
    %505 = arith.subf %501, %504 : vector<16x16xf32>
    %506 = math.exp %505 : vector<16x16xf32>
    %cst_205 = arith.constant dense<0.000000e+00> : vector<16x16xf32>
    %507 = tpu.matmul %506, %499, %cst_205 {dimension_numbers = #tpu.dot_dimension_numbers<[1], [0], [0], [1], [0, 0, 1, 1], [], []>} : vector<16x16xf32>, vector<16x16xf32>, vector<16x16xf32> -> vector<16x16xf32>
    %cst_206 = arith.constant dense<0.000000e+00> : vector<16xf32>
    %508 = vector.multi_reduction <add>, %506, %cst_206 [1] : vector<16x16xf32> to vector<16xf32>
    %509 = vector.shape_cast %508 : vector<16xf32> to vector<16x1xf32>
    %510 = vector.broadcast %509 : vector<16x1xf32> to vector<16x16xf32>
    %511 = arith.divf %507, %510 : vector<16x16xf32>
    %512 = vector.extract_strided_slice %478 {offsets = [16, 0], sizes = [16, 32], strides = [1, 1]} : vector<32x32xf32> to vector<16x32xf32>
    %cst_207 = arith.constant dense<0.000000e+00> : vector<16x32xf32>
    %513 = tpu.matmul %511, %512, %cst_207 {dimension_numbers = #tpu.dot_dimension_numbers<[1], [0], [0], [1], [0, 0, 1, 1], [], []>} : vector<16x16xf32>, vector<16x32xf32>, vector<16x32xf32> -> vector<16x32xf32>
    %514 = arith.addf %496, %513 : vector<16x32xf32>
    %515 = arith.addf %514, %472 : vector<16x32xf32>
    %516 = vector.extract_strided_slice %474 {offsets = [0, 0], sizes = [1, 32], strides = [1, 1]} : vector<7x32xf32> to vector<1x32xf32>
    %517 = vector.extract_strided_slice %474 {offsets = [1, 0], sizes = [1, 32], strides = [1, 1]} : vector<7x32xf32> to vector<1x32xf32>
    %cst_208 = arith.constant dense<0.000000e+00> : vector<16xf32>
    %518 = vector.multi_reduction <add>, %515, %cst_208 [1] : vector<16x32xf32> to vector<16xf32>
    %519 = vector.shape_cast %518 : vector<16xf32> to vector<16x1xf32>
    %cst_209 = arith.constant 3.200000e+01 : f32
    %520 = vector.broadcast %cst_209 : f32 to vector<16x1xf32>
    %521 = arith.divf %519, %520 : vector<16x1xf32>
    %522 = vector.broadcast %521 : vector<16x1xf32> to vector<16x32xf32>
    %523 = arith.subf %515, %522 : vector<16x32xf32>
    %524 = arith.mulf %523, %523 : vector<16x32xf32>
    %cst_210 = arith.constant dense<0.000000e+00> : vector<16xf32>
    %525 = vector.multi_reduction <add>, %524, %cst_210 [1] : vector<16x32xf32> to vector<16xf32>
    %526 = vector.shape_cast %525 : vector<16xf32> to vector<16x1xf32>
    %cst_211 = arith.constant 3.200000e+01 : f32
    %527 = vector.broadcast %cst_211 : f32 to vector<16x1xf32>
    %528 = arith.divf %526, %527 : vector<16x1xf32>
    %529 = vector.broadcast %521 : vector<16x1xf32> to vector<16x32xf32>
    %530 = arith.subf %515, %529 : vector<16x32xf32>
    %cst_212 = arith.constant 9.99999997E-7 : f32
    %531 = vector.broadcast %cst_212 : f32 to vector<16x1xf32>
    %532 = arith.addf %528, %531 : vector<16x1xf32>
    %533 = math.rsqrt %532 : vector<16x1xf32>
    %534 = vector.broadcast %533 : vector<16x1xf32> to vector<16x32xf32>
    %535 = arith.mulf %530, %534 : vector<16x32xf32>
    %536 = vector.broadcast %516 : vector<1x32xf32> to vector<16x32xf32>
    %537 = arith.mulf %535, %536 : vector<16x32xf32>
    %538 = vector.broadcast %517 : vector<1x32xf32> to vector<16x32xf32>
    %539 = arith.addf %537, %538 : vector<16x32xf32>
    %c0_213 = arith.constant 0 : index
    %c0_214 = arith.constant 0 : index
    %c0_215 = arith.constant 0 : index
    %540 = vector.load %arg14[%c0_213, %c0_214, %c0_215] : memref<2x32x32xf32, #tpu.memory_space<vmem>>, vector<1x32x32xf32>
    %541 = vector.shape_cast %540 : vector<1x32x32xf32> to vector<32x32xf32>
    %cst_216 = arith.constant dense<0.000000e+00> : vector<16x32xf32>
    %542 = tpu.matmul %420, %541, %cst_216 {dimension_numbers = #tpu.dot_dimension_numbers<[1], [0], [0], [1], [0, 0, 1, 1], [], []>} : vector<16x32xf32>, vector<32x32xf32>, vector<16x32xf32> -> vector<16x32xf32>
    %c0_217 = arith.constant 0 : index
    %c0_218 = arith.constant 0 : index
    %c0_219 = arith.constant 0 : index
    %543 = vector.load %arg15[%c0_217, %c0_218, %c0_219] : memref<2x32x32xf32, #tpu.memory_space<vmem>>, vector<1x32x32xf32>
    %544 = vector.shape_cast %543 : vector<1x32x32xf32> to vector<32x32xf32>
    %cst_220 = arith.constant dense<0.000000e+00> : vector<16x32xf32>
    %545 = tpu.matmul %542, %544, %cst_220 {dimension_numbers = #tpu.dot_dimension_numbers<[1], [0], [0], [1], [0, 0, 1, 1], [], []>} : vector<16x32xf32>, vector<32x32xf32>, vector<16x32xf32> -> vector<16x32xf32>
    %546 = arith.addf %539, %545 : vector<16x32xf32>
    %547 = vector.extract_strided_slice %474 {offsets = [2, 0], sizes = [1, 32], strides = [1, 1]} : vector<7x32xf32> to vector<1x32xf32>
    %548 = vector.extract_strided_slice %474 {offsets = [3, 0], sizes = [1, 32], strides = [1, 1]} : vector<7x32xf32> to vector<1x32xf32>
    %cst_221 = arith.constant dense<0.000000e+00> : vector<16xf32>
    %549 = vector.multi_reduction <add>, %546, %cst_221 [1] : vector<16x32xf32> to vector<16xf32>
    %550 = vector.shape_cast %549 : vector<16xf32> to vector<16x1xf32>
    %cst_222 = arith.constant 3.200000e+01 : f32
    %551 = vector.broadcast %cst_222 : f32 to vector<16x1xf32>
    %552 = arith.divf %550, %551 : vector<16x1xf32>
    %553 = vector.broadcast %552 : vector<16x1xf32> to vector<16x32xf32>
    %554 = arith.subf %546, %553 : vector<16x32xf32>
    %555 = arith.mulf %554, %554 : vector<16x32xf32>
    %cst_223 = arith.constant dense<0.000000e+00> : vector<16xf32>
    %556 = vector.multi_reduction <add>, %555, %cst_223 [1] : vector<16x32xf32> to vector<16xf32>
    %557 = vector.shape_cast %556 : vector<16xf32> to vector<16x1xf32>
    %cst_224 = arith.constant 3.200000e+01 : f32
    %558 = vector.broadcast %cst_224 : f32 to vector<16x1xf32>
    %559 = arith.divf %557, %558 : vector<16x1xf32>
    %560 = vector.broadcast %552 : vector<16x1xf32> to vector<16x32xf32>
    %561 = arith.subf %546, %560 : vector<16x32xf32>
    %cst_225 = arith.constant 9.99999997E-7 : f32
    %562 = vector.broadcast %cst_225 : f32 to vector<16x1xf32>
    %563 = arith.addf %559, %562 : vector<16x1xf32>
    %564 = math.rsqrt %563 : vector<16x1xf32>
    %565 = vector.broadcast %564 : vector<16x1xf32> to vector<16x32xf32>
    %566 = arith.mulf %561, %565 : vector<16x32xf32>
    %567 = vector.broadcast %547 : vector<1x32xf32> to vector<16x32xf32>
    %568 = arith.mulf %566, %567 : vector<16x32xf32>
    %569 = vector.broadcast %548 : vector<1x32xf32> to vector<16x32xf32>
    %570 = arith.addf %568, %569 : vector<16x32xf32>
    %c0_226 = arith.constant 0 : index
    %c0_227 = arith.constant 0 : index
    %c0_228 = arith.constant 0 : index
    %571 = vector.load %arg16[%c0_226, %c0_227, %c0_228] : memref<2x32x64xf32, #tpu.memory_space<vmem>>, vector<1x32x64xf32>
    %572 = vector.shape_cast %571 : vector<1x32x64xf32> to vector<32x64xf32>
    %cst_229 = arith.constant dense<0.000000e+00> : vector<16x64xf32>
    %573 = tpu.matmul %570, %572, %cst_229 {dimension_numbers = #tpu.dot_dimension_numbers<[1], [0], [0], [1], [0, 0, 1, 1], [], []>} : vector<16x32xf32>, vector<32x64xf32>, vector<16x64xf32> -> vector<16x64xf32>
    %c0_230 = arith.constant 0 : index
    %c0_231 = arith.constant 0 : index
    %c0_232 = arith.constant 0 : index
    %574 = vector.load %arg17[%c0_230, %c0_231, %c0_232] : memref<2x1x64xf32, #tpu.memory_space<vmem>>, vector<1x1x64xf32>
    %575 = vector.shape_cast %574 : vector<1x1x64xf32> to vector<1x64xf32>
    %576 = vector.broadcast %575 : vector<1x64xf32> to vector<16x64xf32>
    %577 = arith.addf %573, %576 : vector<16x64xf32>
    %cst_233 = arith.constant 0.000000e+00 : f32
    %578 = vector.broadcast %cst_233 : f32 to vector<16x64xf32>
    %579 = arith.maximumf %577, %578 : vector<16x64xf32>
    %c0_234 = arith.constant 0 : index
    %c0_235 = arith.constant 0 : index
    %c0_236 = arith.constant 0 : index
    %580 = vector.load %arg18[%c0_234, %c0_235, %c0_236] : memref<2x64x32xf32, #tpu.memory_space<vmem>>, vector<1x64x32xf32>
    %581 = vector.shape_cast %580 : vector<1x64x32xf32> to vector<64x32xf32>
    %cst_237 = arith.constant dense<0.000000e+00> : vector<16x32xf32>
    %582 = tpu.matmul %579, %581, %cst_237 {dimension_numbers = #tpu.dot_dimension_numbers<[1], [0], [0], [1], [0, 0, 1, 1], [], []>} : vector<16x64xf32>, vector<64x32xf32>, vector<16x32xf32> -> vector<16x32xf32>
    %583 = vector.extract_strided_slice %474 {offsets = [4, 0], sizes = [1, 32], strides = [1, 1]} : vector<7x32xf32> to vector<1x32xf32>
    %584 = vector.broadcast %583 : vector<1x32xf32> to vector<16x32xf32>
    %585 = arith.addf %582, %584 : vector<16x32xf32>
    %586 = arith.addf %585, %570 : vector<16x32xf32>
    %587 = vector.extract_strided_slice %474 {offsets = [5, 0], sizes = [1, 32], strides = [1, 1]} : vector<7x32xf32> to vector<1x32xf32>
    %588 = vector.extract_strided_slice %474 {offsets = [6, 0], sizes = [1, 32], strides = [1, 1]} : vector<7x32xf32> to vector<1x32xf32>
    %cst_238 = arith.constant dense<0.000000e+00> : vector<16xf32>
    %589 = vector.multi_reduction <add>, %586, %cst_238 [1] : vector<16x32xf32> to vector<16xf32>
    %590 = vector.shape_cast %589 : vector<16xf32> to vector<16x1xf32>
    %cst_239 = arith.constant 3.200000e+01 : f32
    %591 = vector.broadcast %cst_239 : f32 to vector<16x1xf32>
    %592 = arith.divf %590, %591 : vector<16x1xf32>
    %593 = vector.broadcast %592 : vector<16x1xf32> to vector<16x32xf32>
    %594 = arith.subf %586, %593 : vector<16x32xf32>
    %595 = arith.mulf %594, %594 : vector<16x32xf32>
    %cst_240 = arith.constant dense<0.000000e+00> : vector<16xf32>
    %596 = vector.multi_reduction <add>, %595, %cst_240 [1] : vector<16x32xf32> to vector<16xf32>
    %597 = vector.shape_cast %596 : vector<16xf32> to vector<16x1xf32>
    %cst_241 = arith.constant 3.200000e+01 : f32
    %598 = vector.broadcast %cst_241 : f32 to vector<16x1xf32>
    %599 = arith.divf %597, %598 : vector<16x1xf32>
    %600 = vector.broadcast %592 : vector<16x1xf32> to vector<16x32xf32>
    %601 = arith.subf %586, %600 : vector<16x32xf32>
    %cst_242 = arith.constant 9.99999997E-7 : f32
    %602 = vector.broadcast %cst_242 : f32 to vector<16x1xf32>
    %603 = arith.addf %599, %602 : vector<16x1xf32>
    %604 = math.rsqrt %603 : vector<16x1xf32>
    %605 = vector.broadcast %604 : vector<16x1xf32> to vector<16x32xf32>
    %606 = arith.mulf %601, %605 : vector<16x32xf32>
    %607 = vector.broadcast %587 : vector<1x32xf32> to vector<16x32xf32>
    %608 = arith.mulf %606, %607 : vector<16x32xf32>
    %609 = vector.broadcast %588 : vector<1x32xf32> to vector<16x32xf32>
    %610 = arith.addf %608, %609 : vector<16x32xf32>
    %c1_243 = arith.constant 1 : index
    %c0_244 = arith.constant 0 : index
    %c0_245 = arith.constant 0 : index
    %611 = vector.load %arg19[%c1_243, %c0_244, %c0_245] : memref<2x7x32xf32, #tpu.memory_space<vmem>>, vector<1x7x32xf32>
    %612 = vector.shape_cast %611 : vector<1x7x32xf32> to vector<7x32xf32>
    %c1_246 = arith.constant 1 : index
    %c0_247 = arith.constant 0 : index
    %c0_248 = arith.constant 0 : index
    %613 = vector.load %arg12[%c1_246, %c0_247, %c0_248] : memref<2x32x96xf32, #tpu.memory_space<vmem>>, vector<1x32x96xf32>
    %614 = vector.shape_cast %613 : vector<1x32x96xf32> to vector<32x96xf32>
    %c1_249 = arith.constant 1 : index
    %c0_250 = arith.constant 0 : index
    %c0_251 = arith.constant 0 : index
    %615 = vector.load %arg13[%c1_249, %c0_250, %c0_251] : memref<2x32x32xf32, #tpu.memory_space<vmem>>, vector<1x32x32xf32>
    %616 = vector.shape_cast %615 : vector<1x32x32xf32> to vector<32x32xf32>
    %cst_252 = arith.constant dense<0.000000e+00> : vector<16x96xf32>
    %617 = tpu.matmul %610, %614, %cst_252 {dimension_numbers = #tpu.dot_dimension_numbers<[1], [0], [0], [1], [0, 0, 1, 1], [], []>} : vector<16x32xf32>, vector<32x96xf32>, vector<16x96xf32> -> vector<16x96xf32>
    %618 = vector.extract_strided_slice %617 {offsets = [0, 0], sizes = [16, 16], strides = [1, 1]} : vector<16x96xf32> to vector<16x16xf32>
    %619 = vector.extract_strided_slice %617 {offsets = [0, 32], sizes = [16, 16], strides = [1, 1]} : vector<16x96xf32> to vector<16x16xf32>
    %620 = vector.extract_strided_slice %617 {offsets = [0, 64], sizes = [16, 16], strides = [1, 1]} : vector<16x96xf32> to vector<16x16xf32>
    %cst_253 = arith.constant dense<0.000000e+00> : vector<16x16xf32>
    %621 = tpu.matmul %618, %619, %cst_253 {dimension_numbers = #tpu.dot_dimension_numbers<[1], [1], [0], [0], [0, 0, 1, 0], [], []>} : vector<16x16xf32>, vector<16x16xf32>, vector<16x16xf32> -> vector<16x16xf32>
    %622 = arith.addf %621, %447 : vector<16x16xf32>
    %cst_254 = arith.constant dense<0xFF800000> : vector<16xf32>
    %623 = vector.multi_reduction <maximumf>, %622, %cst_254 [1] : vector<16x16xf32> to vector<16xf32>
    %624 = vector.shape_cast %623 : vector<16xf32> to vector<16x1xf32>
    %625 = vector.broadcast %624 : vector<16x1xf32> to vector<16x16xf32>
    %626 = arith.subf %622, %625 : vector<16x16xf32>
    %627 = math.exp %626 : vector<16x16xf32>
    %cst_255 = arith.constant dense<0.000000e+00> : vector<16x16xf32>
    %628 = tpu.matmul %627, %620, %cst_255 {dimension_numbers = #tpu.dot_dimension_numbers<[1], [0], [0], [1], [0, 0, 1, 1], [], []>} : vector<16x16xf32>, vector<16x16xf32>, vector<16x16xf32> -> vector<16x16xf32>
    %cst_256 = arith.constant dense<0.000000e+00> : vector<16xf32>
    %629 = vector.multi_reduction <add>, %627, %cst_256 [1] : vector<16x16xf32> to vector<16xf32>
    %630 = vector.shape_cast %629 : vector<16xf32> to vector<16x1xf32>
    %631 = vector.broadcast %630 : vector<16x1xf32> to vector<16x16xf32>
    %632 = arith.divf %628, %631 : vector<16x16xf32>
    %633 = vector.extract_strided_slice %616 {offsets = [0, 0], sizes = [16, 32], strides = [1, 1]} : vector<32x32xf32> to vector<16x32xf32>
    %cst_257 = arith.constant dense<0.000000e+00> : vector<16x32xf32>
    %634 = tpu.matmul %632, %633, %cst_257 {dimension_numbers = #tpu.dot_dimension_numbers<[1], [0], [0], [1], [0, 0, 1, 1], [], []>} : vector<16x16xf32>, vector<16x32xf32>, vector<16x32xf32> -> vector<16x32xf32>
    %635 = vector.extract_strided_slice %617 {offsets = [0, 16], sizes = [16, 16], strides = [1, 1]} : vector<16x96xf32> to vector<16x16xf32>
    %636 = vector.extract_strided_slice %617 {offsets = [0, 48], sizes = [16, 16], strides = [1, 1]} : vector<16x96xf32> to vector<16x16xf32>
    %637 = vector.extract_strided_slice %617 {offsets = [0, 80], sizes = [16, 16], strides = [1, 1]} : vector<16x96xf32> to vector<16x16xf32>
    %cst_258 = arith.constant dense<0.000000e+00> : vector<16x16xf32>
    %638 = tpu.matmul %635, %636, %cst_258 {dimension_numbers = #tpu.dot_dimension_numbers<[1], [1], [0], [0], [0, 0, 1, 0], [], []>} : vector<16x16xf32>, vector<16x16xf32>, vector<16x16xf32> -> vector<16x16xf32>
    %639 = arith.addf %638, %447 : vector<16x16xf32>
    %cst_259 = arith.constant dense<0xFF800000> : vector<16xf32>
    %640 = vector.multi_reduction <maximumf>, %639, %cst_259 [1] : vector<16x16xf32> to vector<16xf32>
    %641 = vector.shape_cast %640 : vector<16xf32> to vector<16x1xf32>
    %642 = vector.broadcast %641 : vector<16x1xf32> to vector<16x16xf32>
    %643 = arith.subf %639, %642 : vector<16x16xf32>
    %644 = math.exp %643 : vector<16x16xf32>
    %cst_260 = arith.constant dense<0.000000e+00> : vector<16x16xf32>
    %645 = tpu.matmul %644, %637, %cst_260 {dimension_numbers = #tpu.dot_dimension_numbers<[1], [0], [0], [1], [0, 0, 1, 1], [], []>} : vector<16x16xf32>, vector<16x16xf32>, vector<16x16xf32> -> vector<16x16xf32>
    %cst_261 = arith.constant dense<0.000000e+00> : vector<16xf32>
    %646 = vector.multi_reduction <add>, %644, %cst_261 [1] : vector<16x16xf32> to vector<16xf32>
    %647 = vector.shape_cast %646 : vector<16xf32> to vector<16x1xf32>
    %648 = vector.broadcast %647 : vector<16x1xf32> to vector<16x16xf32>
    %649 = arith.divf %645, %648 : vector<16x16xf32>
    %650 = vector.extract_strided_slice %616 {offsets = [16, 0], sizes = [16, 32], strides = [1, 1]} : vector<32x32xf32> to vector<16x32xf32>
    %cst_262 = arith.constant dense<0.000000e+00> : vector<16x32xf32>
    %651 = tpu.matmul %649, %650, %cst_262 {dimension_numbers = #tpu.dot_dimension_numbers<[1], [0], [0], [1], [0, 0, 1, 1], [], []>} : vector<16x16xf32>, vector<16x32xf32>, vector<16x32xf32> -> vector<16x32xf32>
    %652 = arith.addf %634, %651 : vector<16x32xf32>
    %653 = arith.addf %652, %610 : vector<16x32xf32>
    %654 = vector.extract_strided_slice %612 {offsets = [0, 0], sizes = [1, 32], strides = [1, 1]} : vector<7x32xf32> to vector<1x32xf32>
    %655 = vector.extract_strided_slice %612 {offsets = [1, 0], sizes = [1, 32], strides = [1, 1]} : vector<7x32xf32> to vector<1x32xf32>
    %cst_263 = arith.constant dense<0.000000e+00> : vector<16xf32>
    %656 = vector.multi_reduction <add>, %653, %cst_263 [1] : vector<16x32xf32> to vector<16xf32>
    %657 = vector.shape_cast %656 : vector<16xf32> to vector<16x1xf32>
    %cst_264 = arith.constant 3.200000e+01 : f32
    %658 = vector.broadcast %cst_264 : f32 to vector<16x1xf32>
    %659 = arith.divf %657, %658 : vector<16x1xf32>
    %660 = vector.broadcast %659 : vector<16x1xf32> to vector<16x32xf32>
    %661 = arith.subf %653, %660 : vector<16x32xf32>
    %662 = arith.mulf %661, %661 : vector<16x32xf32>
    %cst_265 = arith.constant dense<0.000000e+00> : vector<16xf32>
    %663 = vector.multi_reduction <add>, %662, %cst_265 [1] : vector<16x32xf32> to vector<16xf32>
    %664 = vector.shape_cast %663 : vector<16xf32> to vector<16x1xf32>
    %cst_266 = arith.constant 3.200000e+01 : f32
    %665 = vector.broadcast %cst_266 : f32 to vector<16x1xf32>
    %666 = arith.divf %664, %665 : vector<16x1xf32>
    %667 = vector.broadcast %659 : vector<16x1xf32> to vector<16x32xf32>
    %668 = arith.subf %653, %667 : vector<16x32xf32>
    %cst_267 = arith.constant 9.99999997E-7 : f32
    %669 = vector.broadcast %cst_267 : f32 to vector<16x1xf32>
    %670 = arith.addf %666, %669 : vector<16x1xf32>
    %671 = math.rsqrt %670 : vector<16x1xf32>
    %672 = vector.broadcast %671 : vector<16x1xf32> to vector<16x32xf32>
    %673 = arith.mulf %668, %672 : vector<16x32xf32>
    %674 = vector.broadcast %654 : vector<1x32xf32> to vector<16x32xf32>
    %675 = arith.mulf %673, %674 : vector<16x32xf32>
    %676 = vector.broadcast %655 : vector<1x32xf32> to vector<16x32xf32>
    %677 = arith.addf %675, %676 : vector<16x32xf32>
    %c1_268 = arith.constant 1 : index
    %c0_269 = arith.constant 0 : index
    %c0_270 = arith.constant 0 : index
    %678 = vector.load %arg14[%c1_268, %c0_269, %c0_270] : memref<2x32x32xf32, #tpu.memory_space<vmem>>, vector<1x32x32xf32>
    %679 = vector.shape_cast %678 : vector<1x32x32xf32> to vector<32x32xf32>
    %cst_271 = arith.constant dense<0.000000e+00> : vector<16x32xf32>
    %680 = tpu.matmul %420, %679, %cst_271 {dimension_numbers = #tpu.dot_dimension_numbers<[1], [0], [0], [1], [0, 0, 1, 1], [], []>} : vector<16x32xf32>, vector<32x32xf32>, vector<16x32xf32> -> vector<16x32xf32>
    %c1_272 = arith.constant 1 : index
    %c0_273 = arith.constant 0 : index
    %c0_274 = arith.constant 0 : index
    %681 = vector.load %arg15[%c1_272, %c0_273, %c0_274] : memref<2x32x32xf32, #tpu.memory_space<vmem>>, vector<1x32x32xf32>
    %682 = vector.shape_cast %681 : vector<1x32x32xf32> to vector<32x32xf32>
    %cst_275 = arith.constant dense<0.000000e+00> : vector<16x32xf32>
    %683 = tpu.matmul %680, %682, %cst_275 {dimension_numbers = #tpu.dot_dimension_numbers<[1], [0], [0], [1], [0, 0, 1, 1], [], []>} : vector<16x32xf32>, vector<32x32xf32>, vector<16x32xf32> -> vector<16x32xf32>
    %684 = arith.addf %677, %683 : vector<16x32xf32>
    %685 = vector.extract_strided_slice %612 {offsets = [2, 0], sizes = [1, 32], strides = [1, 1]} : vector<7x32xf32> to vector<1x32xf32>
    %686 = vector.extract_strided_slice %612 {offsets = [3, 0], sizes = [1, 32], strides = [1, 1]} : vector<7x32xf32> to vector<1x32xf32>
    %cst_276 = arith.constant dense<0.000000e+00> : vector<16xf32>
    %687 = vector.multi_reduction <add>, %684, %cst_276 [1] : vector<16x32xf32> to vector<16xf32>
    %688 = vector.shape_cast %687 : vector<16xf32> to vector<16x1xf32>
    %cst_277 = arith.constant 3.200000e+01 : f32
    %689 = vector.broadcast %cst_277 : f32 to vector<16x1xf32>
    %690 = arith.divf %688, %689 : vector<16x1xf32>
    %691 = vector.broadcast %690 : vector<16x1xf32> to vector<16x32xf32>
    %692 = arith.subf %684, %691 : vector<16x32xf32>
    %693 = arith.mulf %692, %692 : vector<16x32xf32>
    %cst_278 = arith.constant dense<0.000000e+00> : vector<16xf32>
    %694 = vector.multi_reduction <add>, %693, %cst_278 [1] : vector<16x32xf32> to vector<16xf32>
    %695 = vector.shape_cast %694 : vector<16xf32> to vector<16x1xf32>
    %cst_279 = arith.constant 3.200000e+01 : f32
    %696 = vector.broadcast %cst_279 : f32 to vector<16x1xf32>
    %697 = arith.divf %695, %696 : vector<16x1xf32>
    %698 = vector.broadcast %690 : vector<16x1xf32> to vector<16x32xf32>
    %699 = arith.subf %684, %698 : vector<16x32xf32>
    %cst_280 = arith.constant 9.99999997E-7 : f32
    %700 = vector.broadcast %cst_280 : f32 to vector<16x1xf32>
    %701 = arith.addf %697, %700 : vector<16x1xf32>
    %702 = math.rsqrt %701 : vector<16x1xf32>
    %703 = vector.broadcast %702 : vector<16x1xf32> to vector<16x32xf32>
    %704 = arith.mulf %699, %703 : vector<16x32xf32>
    %705 = vector.broadcast %685 : vector<1x32xf32> to vector<16x32xf32>
    %706 = arith.mulf %704, %705 : vector<16x32xf32>
    %707 = vector.broadcast %686 : vector<1x32xf32> to vector<16x32xf32>
    %708 = arith.addf %706, %707 : vector<16x32xf32>
    %c1_281 = arith.constant 1 : index
    %c0_282 = arith.constant 0 : index
    %c0_283 = arith.constant 0 : index
    %709 = vector.load %arg16[%c1_281, %c0_282, %c0_283] : memref<2x32x64xf32, #tpu.memory_space<vmem>>, vector<1x32x64xf32>
    %710 = vector.shape_cast %709 : vector<1x32x64xf32> to vector<32x64xf32>
    %cst_284 = arith.constant dense<0.000000e+00> : vector<16x64xf32>
    %711 = tpu.matmul %708, %710, %cst_284 {dimension_numbers = #tpu.dot_dimension_numbers<[1], [0], [0], [1], [0, 0, 1, 1], [], []>} : vector<16x32xf32>, vector<32x64xf32>, vector<16x64xf32> -> vector<16x64xf32>
    %c1_285 = arith.constant 1 : index
    %c0_286 = arith.constant 0 : index
    %c0_287 = arith.constant 0 : index
    %712 = vector.load %arg17[%c1_285, %c0_286, %c0_287] : memref<2x1x64xf32, #tpu.memory_space<vmem>>, vector<1x1x64xf32>
    %713 = vector.shape_cast %712 : vector<1x1x64xf32> to vector<1x64xf32>
    %714 = vector.broadcast %713 : vector<1x64xf32> to vector<16x64xf32>
    %715 = arith.addf %711, %714 : vector<16x64xf32>
    %cst_288 = arith.constant 0.000000e+00 : f32
    %716 = vector.broadcast %cst_288 : f32 to vector<16x64xf32>
    %717 = arith.maximumf %715, %716 : vector<16x64xf32>
    %c1_289 = arith.constant 1 : index
    %c0_290 = arith.constant 0 : index
    %c0_291 = arith.constant 0 : index
    %718 = vector.load %arg18[%c1_289, %c0_290, %c0_291] : memref<2x64x32xf32, #tpu.memory_space<vmem>>, vector<1x64x32xf32>
    %719 = vector.shape_cast %718 : vector<1x64x32xf32> to vector<64x32xf32>
    %cst_292 = arith.constant dense<0.000000e+00> : vector<16x32xf32>
    %720 = tpu.matmul %717, %719, %cst_292 {dimension_numbers = #tpu.dot_dimension_numbers<[1], [0], [0], [1], [0, 0, 1, 1], [], []>} : vector<16x64xf32>, vector<64x32xf32>, vector<16x32xf32> -> vector<16x32xf32>
    %721 = vector.extract_strided_slice %612 {offsets = [4, 0], sizes = [1, 32], strides = [1, 1]} : vector<7x32xf32> to vector<1x32xf32>
    %722 = vector.broadcast %721 : vector<1x32xf32> to vector<16x32xf32>
    %723 = arith.addf %720, %722 : vector<16x32xf32>
    %724 = arith.addf %723, %708 : vector<16x32xf32>
    %725 = vector.extract_strided_slice %612 {offsets = [5, 0], sizes = [1, 32], strides = [1, 1]} : vector<7x32xf32> to vector<1x32xf32>
    %726 = vector.extract_strided_slice %612 {offsets = [6, 0], sizes = [1, 32], strides = [1, 1]} : vector<7x32xf32> to vector<1x32xf32>
    %cst_293 = arith.constant dense<0.000000e+00> : vector<16xf32>
    %727 = vector.multi_reduction <add>, %724, %cst_293 [1] : vector<16x32xf32> to vector<16xf32>
    %728 = vector.shape_cast %727 : vector<16xf32> to vector<16x1xf32>
    %cst_294 = arith.constant 3.200000e+01 : f32
    %729 = vector.broadcast %cst_294 : f32 to vector<16x1xf32>
    %730 = arith.divf %728, %729 : vector<16x1xf32>
    %731 = vector.broadcast %730 : vector<16x1xf32> to vector<16x32xf32>
    %732 = arith.subf %724, %731 : vector<16x32xf32>
    %733 = arith.mulf %732, %732 : vector<16x32xf32>
    %cst_295 = arith.constant dense<0.000000e+00> : vector<16xf32>
    %734 = vector.multi_reduction <add>, %733, %cst_295 [1] : vector<16x32xf32> to vector<16xf32>
    %735 = vector.shape_cast %734 : vector<16xf32> to vector<16x1xf32>
    %cst_296 = arith.constant 3.200000e+01 : f32
    %736 = vector.broadcast %cst_296 : f32 to vector<16x1xf32>
    %737 = arith.divf %735, %736 : vector<16x1xf32>
    %738 = vector.broadcast %730 : vector<16x1xf32> to vector<16x32xf32>
    %739 = arith.subf %724, %738 : vector<16x32xf32>
    %cst_297 = arith.constant 9.99999997E-7 : f32
    %740 = vector.broadcast %cst_297 : f32 to vector<16x1xf32>
    %741 = arith.addf %737, %740 : vector<16x1xf32>
    %742 = math.rsqrt %741 : vector<16x1xf32>
    %743 = vector.broadcast %742 : vector<16x1xf32> to vector<16x32xf32>
    %744 = arith.mulf %739, %743 : vector<16x32xf32>
    %745 = vector.broadcast %725 : vector<1x32xf32> to vector<16x32xf32>
    %746 = arith.mulf %744, %745 : vector<16x32xf32>
    %747 = vector.broadcast %726 : vector<1x32xf32> to vector<16x32xf32>
    %748 = arith.addf %746, %747 : vector<16x32xf32>
    %c0_298 = arith.constant 0 : index
    %c0_299 = arith.constant 0 : index
    %749 = vector.load %arg33[%c0_298, %c0_299] : memref<16x32xf32, #tpu.memory_space<vmem>>, vector<16x32xf32>
    tpu.vector_store %arg33[%c0_298, %c0_299], %748 {strides = array<i32>} : memref<16x32xf32, #tpu.memory_space<vmem>>, vector<16x32xf32>,
    %c0_300 = arith.constant 0 : index
    %c0_301 = arith.constant 0 : index
    %750 = vector.load %arg30[%c0_300, %c0_301] : memref<32x128xf32, #tpu.memory_space<vmem>>, vector<32x128xf32>
    %cst_302 = arith.constant dense<0.000000e+00> : vector<16x128xf32>
    %751 = tpu.matmul %748, %750, %cst_302 {dimension_numbers = #tpu.dot_dimension_numbers<[1], [0], [0], [1], [0, 0, 1, 1], [], []>} : vector<16x32xf32>, vector<32x128xf32>, vector<16x128xf32> -> vector<16x128xf32>
    %c0_303 = arith.constant 0 : index
    %c0_304 = arith.constant 0 : index
    %752 = vector.load %arg31[%c0_303, %c0_304] : memref<1x128xf32, #tpu.memory_space<vmem>>, vector<1x128xf32>
    %753 = vector.broadcast %752 : vector<1x128xf32> to vector<16x128xf32>
    %754 = arith.addf %751, %753 : vector<16x128xf32>
    %cst_305 = arith.constant dense<0xFF800000> : vector<16xf32>
    %755 = vector.multi_reduction <maximumf>, %754, %cst_305 [1] : vector<16x128xf32> to vector<16xf32>
    %756 = vector.shape_cast %755 : vector<16xf32> to vector<16x1xf32>
    %757 = vector.broadcast %756 : vector<16x1xf32> to vector<16x128xf32>
    %758 = arith.subf %754, %757 : vector<16x128xf32>
    %759 = math.exp %758 : vector<16x128xf32>
    %cst_306 = arith.constant dense<0.000000e+00> : vector<16xf32>
    %760 = vector.multi_reduction <add>, %759, %cst_306 [1] : vector<16x128xf32> to vector<16xf32>
    %761 = vector.shape_cast %760 : vector<16xf32> to vector<16x1xf32>
    %762 = math.log %761 : vector<16x1xf32>
    %763 = vector.broadcast %762 : vector<16x1xf32> to vector<16x128xf32>
    %764 = arith.subf %758, %763 : vector<16x128xf32>
    %c0_307 = arith.constant 0 : index
    %c0_308 = arith.constant 0 : index
    %765 = vector.load %arg34[%c0_307, %c0_308] : memref<16x128xf32, #tpu.memory_space<vmem>>, vector<16x128xf32>
    tpu.vector_store %arg34[%c0_307, %c0_308], %764 {strides = array<i32>} : memref<16x128xf32, #tpu.memory_space<vmem>>, vector<16x128xf32>,
    return
  }
}

</mosaic_0001>

<llo_original>
// kernel: _lambda_.1
$region0: #{_lambda_.1}
  #allocation0 [shape = 'u32[]', space=smem, size = 0x4, offset = 0x4, fixed_abs, tag = 'smem constant byte address 0x4 - core index']
  #allocation1 [shape = 'u32[144,128]{1,0:T(1,128)}', space=vmem, size = 0x12000, scoped, tag = 'internal scratch']
  %s0 = inlined_call_operand.smem [shape: u32[35], index: -1, kind: input, shape index: {}]
  %s1 = sld [smem:[%s0]]
  %s2 = scalar_lea.smem %s0, 1
  %s3 = sld [smem:[%s2]]
  %s4 = scalar_lea.smem %s0, 2
  %s5 = sld [smem:[%s4]]
  %s6 = scalar_lea.smem %s0, 3
  %s7 = sld [smem:[%s6]]
  %s8 = scalar_lea.smem %s0, 4
  %s9 = sld [smem:[%s8]]
  %s10 = scalar_lea.smem %s0, 5
  %s11 = sld [smem:[%s10]]
  %s12 = scalar_lea.smem %s0, 6
  %s13 = sld [smem:[%s12]]
  %s14 = scalar_lea.smem %s0, 7
  %s15 = sld [smem:[%s14]]
  %s16 = scalar_lea.smem %s0, 8
  %s17 = sld [smem:[%s16]]
  %s18 = scalar_lea.smem %s0, 9
  %s19 = sld [smem:[%s18]]
  %s20 = scalar_lea.smem %s0, 10
  %s21 = sld [smem:[%s20]]
  %s22 = scalar_lea.smem %s0, 11
  %s23 = sld [smem:[%s22]]
  %s24 = scalar_lea.smem %s0, 12
  %s25 = sld [smem:[%s24]]
  %s26 = scalar_lea.smem %s0, 13
  %s27 = sld [smem:[%s26]]
  %s28 = scalar_lea.smem %s0, 14
  %s29 = sld [smem:[%s28]]
  %s30 = scalar_lea.smem %s0, 15
  %s31 = sld [smem:[%s30]]
  %s32 = scalar_lea.smem %s0, 16
  %s33 = sld [smem:[%s32]]
  %s34 = scalar_lea.smem %s0, 17
  %s35 = sld [smem:[%s34]]
  %s36 = scalar_lea.smem %s0, 18
  %s37 = sld [smem:[%s36]]
  %s38 = scalar_lea.smem %s0, 19
  %s39 = sld [smem:[%s38]]
  %s40 = scalar_lea.smem %s0, 20
  %s41 = sld [smem:[%s40]]
  %s42 = scalar_lea.smem %s0, 21
  %s43 = sld [smem:[%s42]]
  %s44 = scalar_lea.smem %s0, 22
  %s45 = sld [smem:[%s44]]
  %s46 = scalar_lea.smem %s0, 23
  %s47 = sld [smem:[%s46]]
  %s48 = scalar_lea.smem %s0, 24
  %s49 = sld [smem:[%s48]]
  %s50 = scalar_lea.smem %s0, 25
  %s51 = sld [smem:[%s50]]
  %s52 = scalar_lea.smem %s0, 26
  %s53 = sld [smem:[%s52]]
  %s54 = scalar_lea.smem %s0, 27
  %s55 = sld [smem:[%s54]]
  %s56 = scalar_lea.smem %s0, 28
  %s57 = sld [smem:[%s56]]
  %s58 = scalar_lea.smem %s0, 29
  %s59 = sld [smem:[%s58]]
  %s60 = scalar_lea.smem %s0, 30
  %s61 = sld [smem:[%s60]]
  %s62 = scalar_lea.smem %s0, 31
  %s63 = sld [smem:[%s62]]
  %s64 = scalar_lea.smem %s0, 32
  %s65 = sld [smem:[%s64]]
  %s66 = scalar_lea.smem %s0, 33
  %s67 = sld [smem:[%s66]]
  %s68 = scalar_lea.smem %s0, 34
  %s69 = sld [smem:[%s68]]
  %70 = xla_tuple %s65, %s67, %s69
  %s71 = sld [smem:[#allocation0]]
  $region154: #{_lambda_.1} parent=0
    _
  %s73 = ssub.s32 1, %s71
  %s74 = scalar_select 0, %s73, %s71
  $region1: #{_lambda_.1} parent=0
    #allocation2 [shape = 'u8[8192]{0}', space=vmem, size = 0x2000, scoped, tag = 'output window, operand 0, single buffered']
    #allocation3 [shape = 's32[1]{0}', space=sflag, size = 0x4, scoped, tag = 'scoped memory for _lambda_.1']
    #allocation4 [shape = 'u8[8192]{0}', space=vmem, size = 0x2000, scoped, tag = 'output window, operand 1, single buffered']
    #allocation5 [shape = 's32[1]{0}', space=sflag, size = 0x4, scoped, tag = 'scoped memory for _lambda_.1']
    #allocation6 [shape = 'u8[8192]{0}', space=vmem, size = 0x2000, scoped, tag = 'output window, operand 2, single buffered']
    %75 = vsyncpa [#allocation3], 0
    %76 = vsyncpa [#allocation5], 0
    // Predicated region
    $region2: #{_lambda_.1} parent=1 // pred_check
      _
    $region3: #{_lambda_.1} parent=1 // pred_check_branch
      %78 = sbr.rel (0) target = $region5
    $region4: #{_lambda_.1} parent=1 // pred_region
      _
    $region5: #{_lambda_.1} parent=1 // pred_fallthru
      _
    // Predicated region
    $region6: #{_lambda_.1} parent=1 // pred_check
      _
    $region7: #{_lambda_.1} parent=1 // pred_check_branch
      %80 = sbr.rel (0) target = $region9
    $region8: #{_lambda_.1} parent=1 // pred_region
      _
    $region9: #{_lambda_.1} parent=1 // pred_fallthru
      _
    // Predicated region
    $region10: #{_lambda_.1} parent=1 // pred_check
      _
    $region11: #{_lambda_.1} parent=1 // pred_check_branch
      %82 = sbr.rel (0) target = $region13
    $region12: #{_lambda_.1} parent=1 // pred_region
      _
    $region13: #{_lambda_.1} parent=1 // pred_fallthru
      _
    // Predicated region
    $region14: #{_lambda_.1} parent=1 // pred_check
      _
    $region15: #{_lambda_.1} parent=1 // pred_check_branch
      %84 = sbr.rel (0) target = $region17
    $region16: #{_lambda_.1} parent=1 // pred_region
      _
    $region17: #{_lambda_.1} parent=1 // pred_fallthru
      _
    // Predicated region
    $region18: #{_lambda_.1} parent=1 // pred_check
      _
    $region19: #{_lambda_.1} parent=1 // pred_check_branch
      %86 = sbr.rel (0) target = $region21
    $region20: #{_lambda_.1} parent=1 // pred_region
      _
    $region21: #{_lambda_.1} parent=1 // pred_fallthru
      _
    // Predicated region
    $region22: #{_lambda_.1} parent=1 // pred_check
      _
    $region23: #{_lambda_.1} parent=1 // pred_check_branch
      %88 = sbr.rel (0) target = $region25
    $region24: #{_lambda_.1} parent=1 // pred_region
      _
    $region25: #{_lambda_.1} parent=1 // pred_fallthru
      _
    // Predicated region
    $region26: #{_lambda_.1} parent=1 // pred_check
      _
    $region27: #{_lambda_.1} parent=1 // pred_check_branch
      %90 = sbr.rel (0) target = $region29
    $region28: #{_lambda_.1} parent=1 // pred_region
      _
    $region29: #{_lambda_.1} parent=1 // pred_fallthru
      _
    // Predicated region
    $region30: #{_lambda_.1} parent=1 // pred_check
      _
    $region31: #{_lambda_.1} parent=1 // pred_check_branch
      %92 = sbr.rel (0) target = $region33
    $region32: #{_lambda_.1} parent=1 // pred_region
      _
    $region33: #{_lambda_.1} parent=1 // pred_fallthru
      _
    // Predicated region
    $region34: #{_lambda_.1} parent=1 // pred_check
      _
    $region35: #{_lambda_.1} parent=1 // pred_check_branch
      %94 = sbr.rel (0) target = $region37
    $region36: #{_lambda_.1} parent=1 // pred_region
      _
    $region37: #{_lambda_.1} parent=1 // pred_fallthru
      _
    // Predicated region
    $region38: #{_lambda_.1} parent=1 // pred_check
      _
    $region39: #{_lambda_.1} parent=1 // pred_check_branch
      %96 = sbr.rel (0) target = $region41
    $region40: #{_lambda_.1} parent=1 // pred_region
      _
    $region41: #{_lambda_.1} parent=1 // pred_fallthru
      _
    // Predicated region
    $region42: #{_lambda_.1} parent=1 // pred_check
      _
    $region43: #{_lambda_.1} parent=1 // pred_check_branch
      %98 = sbr.rel (0) target = $region45
    $region44: #{_lambda_.1} parent=1 // pred_region
      _
    $region45: #{_lambda_.1} parent=1 // pred_fallthru
      _
    // Predicated region
    $region46: #{_lambda_.1} parent=1 // pred_check
      _
    $region47: #{_lambda_.1} parent=1 // pred_check_branch
      %100 = sbr.rel (0) target = $region49
    $region48: #{_lambda_.1} parent=1 // pred_region
      _
    $region49: #{_lambda_.1} parent=1 // pred_fallthru
      _
    // Predicated region
    $region50: #{_lambda_.1} parent=1 // pred_check
      _
    $region51: #{_lambda_.1} parent=1 // pred_check_branch
      %102 = sbr.rel (0) target = $region53
    $region52: #{_lambda_.1} parent=1 // pred_region
      _
    $region53: #{_lambda_.1} parent=1 // pred_fallthru
      _
    // Predicated region
    $region54: #{_lambda_.1} parent=1 // pred_check
      _
    $region55: #{_lambda_.1} parent=1 // pred_check_branch
      %104 = sbr.rel (0) target = $region57
    $region56: #{_lambda_.1} parent=1 // pred_region
      _
    $region57: #{_lambda_.1} parent=1 // pred_fallthru
      _
    // Predicated region
    $region58: #{_lambda_.1} parent=1 // pred_check
      _
    $region59: #{_lambda_.1} parent=1 // pred_check_branch
      %106 = sbr.rel (0) target = $region61
    $region60: #{_lambda_.1} parent=1 // pred_region
      _
    $region61: #{_lambda_.1} parent=1 // pred_fallthru
      _
    // Predicated region
    $region62: #{_lambda_.1} parent=1 // pred_check
      _
    $region63: #{_lambda_.1} parent=1 // pred_check_branch
      %108 = sbr.rel (0) target = $region65
    $region64: #{_lambda_.1} parent=1 // pred_region
      _
    $region65: #{_lambda_.1} parent=1 // pred_fallthru
      _
    // Predicated region
    $region66: #{_lambda_.1} parent=1 // pred_check
      _
    $region67: #{_lambda_.1} parent=1 // pred_check_branch
      %110 = sbr.rel (0) target = $region69
    $region68: #{_lambda_.1} parent=1 // pred_region
      _
    $region69: #{_lambda_.1} parent=1 // pred_fallthru
      _
    // Predicated region
    $region70: #{_lambda_.1} parent=1 // pred_check
      _
    $region71: #{_lambda_.1} parent=1 // pred_check_branch
      %112 = sbr.rel (0) target = $region73
    $region72: #{_lambda_.1} parent=1 // pred_region
      _
    $region73: #{_lambda_.1} parent=1 // pred_fallthru
      _
    // Predicated region
    $region74: #{_lambda_.1} parent=1 // pred_check
      _
    $region75: #{_lambda_.1} parent=1 // pred_check_branch
      %114 = sbr.rel (0) target = $region77
    $region76: #{_lambda_.1} parent=1 // pred_region
      _
    $region77: #{_lambda_.1} parent=1 // pred_fallthru
      _
    // Predicated region
    $region78: #{_lambda_.1} parent=1 // pred_check
      _
    $region79: #{_lambda_.1} parent=1 // pred_check_branch
      %116 = sbr.rel (0) target = $region81
    $region80: #{_lambda_.1} parent=1 // pred_region
      _
    $region81: #{_lambda_.1} parent=1 // pred_fallthru
      _
    // Predicated region
    $region82: #{_lambda_.1} parent=1 // pred_check
      _
    $region83: #{_lambda_.1} parent=1 // pred_check_branch
      %118 = sbr.rel (0) target = $region85
    $region84: #{_lambda_.1} parent=1 // pred_region
      _
    $region85: #{_lambda_.1} parent=1 // pred_fallthru
      _
    // Predicated region
    $region86: #{_lambda_.1} parent=1 // pred_check
      _
    $region87: #{_lambda_.1} parent=1 // pred_check_branch
      %120 = sbr.rel (0) target = $region89
    $region88: #{_lambda_.1} parent=1 // pred_region
      _
    $region89: #{_lambda_.1} parent=1 // pred_fallthru
      _
    // Predicated region
    $region90: #{_lambda_.1} parent=1 // pred_check
      _
    $region91: #{_lambda_.1} parent=1 // pred_check_branch
      %122 = sbr.rel (0) target = $region93
    $region92: #{_lambda_.1} parent=1 // pred_region
      _
    $region93: #{_lambda_.1} parent=1 // pred_fallthru
      _
    // Predicated region
    $region94: #{_lambda_.1} parent=1 // pred_check
      _
    $region95: #{_lambda_.1} parent=1 // pred_check_branch
      %124 = sbr.rel (0) target = $region97
    $region96: #{_lambda_.1} parent=1 // pred_region
      _
    $region97: #{_lambda_.1} parent=1 // pred_fallthru
      _
    // Predicated region
    $region98: #{_lambda_.1} parent=1 // pred_check
      _
    $region99: #{_lambda_.1} parent=1 // pred_check_branch
      %126 = sbr.rel (0) target = $region101
    $region100: #{_lambda_.1} parent=1 // pred_region
      _
    $region101: #{_lambda_.1} parent=1 // pred_fallthru
      _
    // Predicated region
    $region102: #{_lambda_.1} parent=1 // pred_check
      _
    $region103: #{_lambda_.1} parent=1 // pred_check_branch
      %128 = sbr.rel (0) target = $region105
    $region104: #{_lambda_.1} parent=1 // pred_region
      _
    $region105: #{_lambda_.1} parent=1 // pred_fallthru
      _
    // Predicated region
    $region106: #{_lambda_.1} parent=1 // pred_check
      _
    $region107: #{_lambda_.1} parent=1 // pred_check_branch
      %130 = sbr.rel (0) target = $region109
    $region108: #{_lambda_.1} parent=1 // pred_region
      _
    $region109: #{_lambda_.1} parent=1 // pred_fallthru
      _
    // Predicated region
    $region110: #{_lambda_.1} parent=1 // pred_check
      _
    $region111: #{_lambda_.1} parent=1 // pred_check_branch
      %132 = sbr.rel (0) target = $region113
    $region112: #{_lambda_.1} parent=1 // pred_region
      _
    $region113: #{_lambda_.1} parent=1 // pred_fallthru
      _
    // Predicated region
    $region114: #{_lambda_.1} parent=1 // pred_check
      _
    $region115: #{_lambda_.1} parent=1 // pred_check_branch
      %134 = sbr.rel (0) target = $region117
    $region116: #{_lambda_.1} parent=1 // pred_region
      _
    $region117: #{_lambda_.1} parent=1 // pred_fallthru
      _
    // Predicated region
    $region118: #{_lambda_.1} parent=1 // pred_check
      _
    $region119: #{_lambda_.1} parent=1 // pred_check_branch
      %136 = sbr.rel (0) target = $region121
    $region120: #{_lambda_.1} parent=1 // pred_region
      _
    $region121: #{_lambda_.1} parent=1 // pred_fallthru
      _
    // Predicated region
    $region122: #{_lambda_.1} parent=1 // pred_check
      _
    $region123: #{_lambda_.1} parent=1 // pred_check_branch
      %138 = sbr.rel (0) target = $region125
    $region124: #{_lambda_.1} parent=1 // pred_region
      _
    $region125: #{_lambda_.1} parent=1 // pred_fallthru
      _
    // Predicated region
    $region126: #{_lambda_.1} parent=1 // pred_check
      _
    $region127: #{_lambda_.1} parent=1 // pred_check_branch
      %140 = sbr.rel (0) target = $region129
    $region128: #{_lambda_.1} parent=1 // pred_region
      _
    $region129: #{_lambda_.1} parent=1 // pred_fallthru
      _
    %v141 = vld [vmem:[%s11] sm:$0xf]
    %v142 = vld [vmem:[%s5] sm:$0x1]
    %v143 = vlaneseq
    %v144 = vshrl.u32 %v143, 7
    %v145 = vadd.s32 %v144, 8
    %v146 = vcvt.s32.f32 %v144
    %v147 = vcvt.s32.f32 %v145
    %v148 = vlaneseq
    %v149 = vand.u32 %v148, 127
    %v150 = vcvt.s32.f32 %v149
    %v151 = vmul.f32 %v146, 0.125
    %v152 = vmul.f32 %v147, 0.125
    %v153 = vfloor.f32 %v151
    %v154 = vfloor.f32 %v152
    %v155 = vmul.f32 %v150, 0.125
    %v156 = vfloor.f32 %v155
    %vm157 = vcmp.eq.f32.partialorder %v153, %v156
    %vm158 = vcmp.eq.f32.partialorder %v154, %v156
    %vm159 = vcmp.gt.f32.partialorder %v142, 0.0
    %v160 = vsel %vm159, 1, 0
    %v161 = vlaneseq
    %v162 = vshrl.u32 %v161, 7
    %v163 = vsub.s32 0, %v162
    %v164 = vrot.slane %v160, %v163
    %vm165 = vcmp.eq.s32.totalorder %v164, 1
    %vm166 = vmand %vm157, %vm165
    %vm167 = vmand %vm158, %vm165
    %v168 = vsel %vm166, 0.0, -1e+09
    %v169 = vsel %vm167, 0.0, -1e+09
    %v170 = vld [vmem:[%s1] sm:$0xff]
    %v171 = vld [vmem:[%s1 + $0x8] sm:$0xff]
    %vm172 = vcmask 261120
    %v173 = vsel %vm172, %v170, 0.0
    %174 = vadd.xlane.f32.xlu0 %v173
    %v175 = vpop.xlane.xlu0 %174
    %v176 = vsel %vm172, %v171, 0.0
    %177 = vadd.xlane.f32.xlu0 %v176
    %v178 = vpop.xlane.xlu0 %177
    %v179 = vrcp.pop 32.0
    %v180 = vmul.f32 %v175, %v179
    %v181 = vmul.f32 %v178, %v179
    %v182 = vsub.f32 %v170, %v180
    %v183 = vsub.f32 %v171, %v181
    %v184 = vmul.f32 %v182, %v182
    %v185 = vmul.f32 %v183, %v183
    %v186 = vsel %vm172, %v184, 0.0
    %187 = vadd.xlane.f32.xlu0 %v186
    %v188 = vpop.xlane.xlu0 %187
    %v189 = vsel %vm172, %v185, 0.0
    %190 = vadd.xlane.f32.xlu0 %v189
    %v191 = vpop.xlane.xlu0 %190
    %v192 = vmul.f32 %v188, %v179
    %v193 = vmul.f32 %v191, %v179
    %v194 = vadd.f32 %v192, 1e-06
    %v195 = vadd.f32 %v193, 1e-06
    %v196 = vrsqrt.pop %v194
    %v197 = vrsqrt.pop %v195
    %v198 = vmul.f32 %v182, %v196
    %v199 = vmul.f32 %v183, %v197
    %v200 = vlaneseq
    %v201 = vshrl.u32 %v200, 7
    %v202 = vsub.s32 0, %v201
    %v203 = vrot.slane %v141, %v202
    %v204 = vmul.f32 %v198, %v203
    %v205 = vmul.f32 %v199, %v203
    %v206 = vlaneseq
    %v207 = vshrl.u32 %v206, 7
    %v208 = vsub.s32 1, %v207
    %v209 = vrot.slane %v141, %v208
    %v210 = vadd.f32 %v204, %v209
    %v211 = vadd.f32 %v205, %v209
    %v212 = vld [vmem:[%s23] sm:$0x1f]
    %v213 = vld [vmem:[%s13] sm:$0xff]
    %v214 = vld [vmem:[%s13 + $0x8] sm:$0xff]
    %v215 = vld [vmem:[%s13 + $0x10] sm:$0xff]
    %v216 = vld [vmem:[%s13 + $0x18] sm:$0xff]
    %v217 = vld [vmem:[%s15] sm:$0xff]
    %v218 = vld [vmem:[%s15 + $0x8] sm:$0xff]
    %v219 = vld [vmem:[%s15 + $0x10] sm:$0xff]
    %v220 = vld [vmem:[%s15 + $0x18] sm:$0xff]
    %v222 = vsel %vm172, %v210, 0
    %v225 = vsel %vm172, %v211, 0
    %227 = vmatprep.subr.mxu0 0.0
    %228 = vmatpush1.msra.mxu0 %v213
    %229 = vmatprep.subr.mxu0 0.0
    %230 = vmatpush1.msra.mxu0 %v214
    %231 = vmatprep.subr.mxu0 0.0
    %232 = vmatpush1.msra.mxu0 %v215
    %233 = vmatprep.subr.mxu0 0.0
    %234 = vmatpush1.msra.mxu0 %v216
    %235 = vmatprep.subr.mxu0 0.0
    %236 = vmatpush1.msra.mxu0 0.0
    %237 = vmatprep.subr.mxu0 0.0
    %238 = vmatpush1.msra.mxu0 0.0
    %239 = vmatprep.subr.mxu0 0.0
    %240 = vmatpush1.msra.mxu0 0.0
    %241 = vmatprep.subr.mxu0 0.0
    %242 = vmatpush1.msra.mxu0 0.0
    %243 = vmatprep.subr.mxu0 0.0
    %244 = vmatpush1.msra.mxu0 0.0
    %245 = vmatprep.subr.mxu0 0.0
    %246 = vmatpush1.msra.mxu0 0.0
    %247 = vmatprep.subr.mxu0 0.0
    %248 = vmatpush1.msra.mxu0 0.0
    %249 = vmatprep.subr.mxu0 0.0
    %250 = vmatpush1.msra.mxu0 0.0
    %251 = vmatprep.subr.mxu0 0.0
    %252 = vmatpush1.msra.mxu0 0.0
    %253 = vmatprep.subr.mxu0 0.0
    %254 = vmatpush1.msra.mxu0 0.0
    %255 = vmatprep.subr.mxu0 0.0
    %256 = vmatpush1.msra.mxu0 0.0
    %257 = vmatprep.subr.mxu0 0.0
    %258 = vmatpush1.msra.mxu0 0.0
    %259 = vmatprep.subr.mxu0 0.0
    %260 = vmatpush1.msra.mxu0 0.0
    %261 = vmatprep.subr.mxu0 0.0
    %262 = vmatpush1.msra.mxu0 0.0
    %263 = vmatprep.subr.mxu0 0.0
    %264 = vmatpush1.msra.mxu0 0.0
    %265 = vmatprep.subr.mxu0 0.0
    %266 = vmatpush1.msra.mxu0 0.0
    %267 = vmatprep.subr.mxu0 0.0
    %268 = vmatpush1.msra.mxu0 0.0
    %269 = vmatprep.subr.mxu0 0.0
    %270 = vmatpush1.msra.mxu0 0.0
    %271 = vmatprep.subr.mxu0 0.0
    %272 = vmatpush1.msra.mxu0 0.0
    %273 = vmatprep.subr.mxu0 0.0
    %274 = vmatpush1.msra.mxu0 0.0
    %275 = vmatprep.subr.mxu0 0.0
    %276 = vmatpush1.msra.mxu0 0.0
    %277 = vmatprep.subr.mxu0 0.0
    %278 = vmatpush1.msra.mxu0 0.0
    %279 = vmatprep.subr.mxu0 0.0
    %280 = vmatpush1.msra.mxu0 0.0
    %281 = vmatprep.subr.mxu0 0.0
    %282 = vmatpush1.msra.mxu0 0.0
    %283 = vmatprep.subr.mxu0 0.0
    %284 = vmatpush1.msra.mxu0 0.0
    %285 = vmatprep.subr.mxu0 0.0
    %286 = vmatpush1.msra.mxu0 0.0
    %287 = vmatprep.subr.mxu0 0.0
    %288 = vmatpush1.msra.mxu0 0.0
    %289 = vmatprep.subr.mxu0 0.0
    %290 = vmatpush1.msra.mxu0 0.0
    %291 = vmatprep.mubr.f32.mxu0 0.0
    %292 = vmatmul.mubr.f32.gmra.mrb[0].mxu0 %v222
    %v293 = vpop.f32.mrb[0].mxu0
    %v294 = vadd.f32 0.0, %v293
    %v295 = vpop.f32.mrb[0].mxu0
    %296 = vmatprep.mubr.f32.mxu0 0.0
    %297 = vmatmul.mubr.f32.gmra.mrb[0].mxu0 %v225
    %v298 = vpop.f32.mrb[0].mxu0
    %v299 = vadd.f32 0.0, %v298
    %v300 = vpop.f32.mrb[0].mxu0
    %301 = vdwg.mxu0
    %304 = vrot.lane.b32.xlu0 %v294, 96
    %v305 = vpop.permute.xlu0 %304
    %306 = vrot.lane.b32.xlu0 %v299, 96
    %v307 = vpop.permute.xlu0 %306
    %vm308 = vcmask 130048
    %v309 = vsel %vm308, %v294, 0
    %v311 = vsel %vm308, %v299, 0
    %v313 = vsel %vm308, %v305, 0
    %v315 = vsel %vm308, %v307, 0
    %317 = vmatprep.subr.mxu0 0.0
    %318 = vmatpush1.xpose.msra.mxu0 %v313
    %319 = vmatprep.subr.mxu0 0.0
    %320 = vmatpush1.xpose.msra.mxu0 %v315
    %321 = vmatprep.subr.mxu0 0.0
    %322 = vmatpush1.xpose.msra.mxu0 0.0
    %323 = vmatprep.subr.mxu0 0.0
    %324 = vmatpush1.xpose.msra.mxu0 0.0
    %325 = vmatprep.subr.mxu0 0.0
    %326 = vmatpush1.xpose.msra.mxu0 0.0
    %327 = vmatprep.subr.mxu0 0.0
    %328 = vmatpush1.xpose.msra.mxu0 0.0
    %329 = vmatprep.subr.mxu0 0.0
    %330 = vmatpush1.xpose.msra.mxu0 0.0
    %331 = vmatprep.subr.mxu0 0.0
    %332 = vmatpush1.xpose.msra.mxu0 0.0
    %333 = vmatprep.subr.mxu0 0.0
    %334 = vmatpush1.xpose.msra.mxu0 0.0
    %335 = vmatprep.subr.mxu0 0.0
    %336 = vmatpush1.xpose.msra.mxu0 0.0
    %337 = vmatprep.subr.mxu0 0.0
    %338 = vmatpush1.xpose.msra.mxu0 0.0
    %339 = vmatprep.subr.mxu0 0.0
    %340 = vmatpush1.xpose.msra.mxu0 0.0
    %341 = vmatprep.subr.mxu0 0.0
    %342 = vmatpush1.xpose.msra.mxu0 0.0
    %343 = vmatprep.subr.mxu0 0.0
    %344 = vmatpush1.xpose.msra.mxu0 0.0
    %345 = vmatprep.subr.mxu0 0.0
    %346 = vmatpush1.xpose.msra.mxu0 0.0
    %347 = vmatprep.subr.mxu0 0.0
    %348 = vmatpush1.xpose.msra.mxu0 0.0
    %349 = vmatprep.subr.mxu0 0.0
    %350 = vmatpush1.xpose.msra.mxu0 0.0
    %351 = vmatprep.subr.mxu0 0.0
    %352 = vmatpush1.xpose.msra.mxu0 0.0
    %353 = vmatprep.subr.mxu0 0.0
    %354 = vmatpush1.xpose.msra.mxu0 0.0
    %355 = vmatprep.subr.mxu0 0.0
    %356 = vmatpush1.xpose.msra.mxu0 0.0
    %357 = vmatprep.subr.mxu0 0.0
    %358 = vmatpush1.xpose.msra.mxu0 0.0
    %359 = vmatprep.subr.mxu0 0.0
    %360 = vmatpush1.xpose.msra.mxu0 0.0
    %361 = vmatprep.subr.mxu0 0.0
    %362 = vmatpush1.xpose.msra.mxu0 0.0
    %363 = vmatprep.subr.mxu0 0.0
    %364 = vmatpush1.xpose.msra.mxu0 0.0
    %365 = vmatprep.subr.mxu0 0.0
    %366 = vmatpush1.xpose.msra.mxu0 0.0
    %367 = vmatprep.subr.mxu0 0.0
    %368 = vmatpush1.xpose.msra.mxu0 0.0
    %369 = vmatprep.subr.mxu0 0.0
    %370 = vmatpush1.xpose.msra.mxu0 0.0
    %371 = vmatprep.subr.mxu0 0.0
    %372 = vmatpush1.xpose.msra.mxu0 0.0
    %373 = vmatprep.subr.mxu0 0.0
    %374 = vmatpush1.xpose.msra.mxu0 0.0
    %375 = vmatprep.subr.mxu0 0.0
    %376 = vmatpush1.xpose.msra.mxu0 0.0
    %377 = vmatprep.subr.mxu0 0.0
    %378 = vmatpush1.xpose.msra.mxu0 0.0
    %379 = vmatprep.subr.mxu0 0.0
    %380 = vmatpush1.xpose.msra.mxu0 0.0
    %381 = vmatprep.mubr.f32.mxu0 0.0
    %382 = vmatmul.mubr.f32.gmra.mrb[0].mxu0 %v309
    %v383 = vpop.f32.mrb[0].mxu0
    %v384 = vadd.f32 %v168, %v383
    %v385 = vpop.f32.mrb[0].mxu0
    %386 = vmatprep.mubr.f32.mxu0 0.0
    %387 = vmatmul.mubr.f32.gmra.mrb[0].mxu0 %v311
    %v388 = vpop.f32.mrb[0].mxu0
    %v389 = vadd.f32 %v169, %v388
    %v390 = vpop.f32.mrb[0].mxu0
    %391 = vdwg.mxu0
    %v392 = vsel %vm308, %v384, -inf
    %393 = vmax.xlane.f32.xlu0 %v392
    %v394 = vpop.xlane.xlu0 %393
    %v395 = vsel %vm308, %v389, -inf
    %396 = vmax.xlane.f32.xlu0 %v395
    %v397 = vpop.xlane.xlu0 %396
    %v398 = vsub.f32 %v384, %v394
    %v399 = vsub.f32 %v389, %v397
    %v400 = vmul.f32 %v398, 1.442695
    %v401 = vpow.pop %v400
    %v402 = vmul.f32 %v399, 1.442695
    %v403 = vpow.pop %v402
    %404 = vrot.lane.b32.xlu0 %v294, 64
    %v405 = vpop.permute.xlu0 %404
    %406 = vrot.lane.b32.xlu0 %v299, 64
    %v407 = vpop.permute.xlu0 %406
    %v411 = vsel %vm308, %v401, 0
    %v414 = vsel %vm308, %v403, 0
    %416 = vmatprep.subr.mxu0 0.0
    %417 = vmatpush1.msra.mxu0 %v405
    %418 = vmatprep.subr.mxu0 0.0
    %419 = vmatpush1.msra.mxu0 %v407
    %420 = vmatprep.subr.mxu0 0.0
    %421 = vmatpush1.msra.mxu0 0.0
    %422 = vmatprep.subr.mxu0 0.0
    %423 = vmatpush1.msra.mxu0 0.0
    %424 = vmatprep.subr.mxu0 0.0
    %425 = vmatpush1.msra.mxu0 0.0
    %426 = vmatprep.subr.mxu0 0.0
    %427 = vmatpush1.msra.mxu0 0.0
    %428 = vmatprep.subr.mxu0 0.0
    %429 = vmatpush1.msra.mxu0 0.0
    %430 = vmatprep.subr.mxu0 0.0
    %431 = vmatpush1.msra.mxu0 0.0
    %432 = vmatprep.subr.mxu0 0.0
    %433 = vmatpush1.msra.mxu0 0.0
    %434 = vmatprep.subr.mxu0 0.0
    %435 = vmatpush1.msra.mxu0 0.0
    %436 = vmatprep.subr.mxu0 0.0
    %437 = vmatpush1.msra.mxu0 0.0
    %438 = vmatprep.subr.mxu0 0.0
    %439 = vmatpush1.msra.mxu0 0.0
    %440 = vmatprep.subr.mxu0 0.0
    %441 = vmatpush1.msra.mxu0 0.0
    %442 = vmatprep.subr.mxu0 0.0
    %443 = vmatpush1.msra.mxu0 0.0
    %444 = vmatprep.subr.mxu0 0.0
    %445 = vmatpush1.msra.mxu0 0.0
    %446 = vmatprep.subr.mxu0 0.0
    %447 = vmatpush1.msra.mxu0 0.0
    %448 = vmatprep.subr.mxu0 0.0
    %449 = vmatpush1.msra.mxu0 0.0
    %450 = vmatprep.subr.mxu0 0.0
    %451 = vmatpush1.msra.mxu0 0.0
    %452 = vmatprep.subr.mxu0 0.0
    %453 = vmatpush1.msra.mxu0 0.0
    %454 = vmatprep.subr.mxu0 0.0
    %455 = vmatpush1.msra.mxu0 0.0
    %456 = vmatprep.subr.mxu0 0.0
    %457 = vmatpush1.msra.mxu0 0.0
    %458 = vmatprep.subr.mxu0 0.0
    %459 = vmatpush1.msra.mxu0 0.0
    %460 = vmatprep.subr.mxu0 0.0
    %461 = vmatpush1.msra.mxu0 0.0
    %462 = vmatprep.subr.mxu0 0.0
    %463 = vmatpush1.msra.mxu0 0.0
    %464 = vmatprep.subr.mxu0 0.0
    %465 = vmatpush1.msra.mxu0 0.0
    %466 = vmatprep.subr.mxu0 0.0
    %467 = vmatpush1.msra.mxu0 0.0
    %468 = vmatprep.subr.mxu0 0.0
    %469 = vmatpush1.msra.mxu0 0.0
    %470 = vmatprep.subr.mxu0 0.0
    %471 = vmatpush1.msra.mxu0 0.0
    %472 = vmatprep.subr.mxu0 0.0
    %473 = vmatpush1.msra.mxu0 0.0
    %474 = vmatprep.subr.mxu0 0.0
    %475 = vmatpush1.msra.mxu0 0.0
    %476 = vmatprep.subr.mxu0 0.0
    %477 = vmatpush1.msra.mxu0 0.0
    %478 = vmatprep.subr.mxu0 0.0
    %479 = vmatpush1.msra.mxu0 0.0
    %480 = vmatprep.mubr.f32.mxu0 0.0
    %481 = vmatmul.mubr.f32.gmra.mrb[0].mxu0 %v411
    %v482 = vpop.f32.mrb[0].mxu0
    %v483 = vadd.f32 0.0, %v482
    %v484 = vpop.f32.mrb[0].mxu0
    %485 = vmatprep.mubr.f32.mxu0 0.0
    %486 = vmatmul.mubr.f32.gmra.mrb[0].mxu0 %v414
    %v487 = vpop.f32.mrb[0].mxu0
    %v488 = vadd.f32 0.0, %v487
    %v489 = vpop.f32.mrb[0].mxu0
    %490 = vdwg.mxu0
    %v491 = vsel %vm308, %v401, 0.0
    %492 = vadd.xlane.f32.xlu0 %v491
    %v493 = vpop.xlane.xlu0 %492
    %v494 = vsel %vm308, %v403, 0.0
    %495 = vadd.xlane.f32.xlu0 %v494
    %v496 = vpop.xlane.xlu0 %495
    %v497 = vrcp.pop %v493
    %v498 = vmul.f32 %v483, %v497
    %v499 = vrcp.pop %v496
    %v500 = vmul.f32 %v488, %v499
    %501 = vrot.lane.b32.xlu0 %v294, 112
    %v502 = vpop.permute.xlu0 %501
    %503 = vrot.lane.b32.xlu0 %v299, 112
    %v504 = vpop.permute.xlu0 %503
    %505 = vrot.lane.b32.xlu0 %v294, 80
    %v506 = vpop.permute.xlu0 %505
    %507 = vrot.lane.b32.xlu0 %v299, 80
    %v508 = vpop.permute.xlu0 %507
    %v509 = vsel %vm308, %v502, 0
    %v511 = vsel %vm308, %v504, 0
    %v513 = vsel %vm308, %v506, 0
    %v515 = vsel %vm308, %v508, 0
    %517 = vmatprep.subr.mxu0 0.0
    %518 = vmatpush1.xpose.msra.mxu0 %v513
    %519 = vmatprep.subr.mxu0 0.0
    %520 = vmatpush1.xpose.msra.mxu0 %v515
    %521 = vmatprep.subr.mxu0 0.0
    %522 = vmatpush1.xpose.msra.mxu0 0.0
    %523 = vmatprep.subr.mxu0 0.0
    %524 = vmatpush1.xpose.msra.mxu0 0.0
    %525 = vmatprep.subr.mxu0 0.0
    %526 = vmatpush1.xpose.msra.mxu0 0.0
    %527 = vmatprep.subr.mxu0 0.0
    %528 = vmatpush1.xpose.msra.mxu0 0.0
    %529 = vmatprep.subr.mxu0 0.0
    %530 = vmatpush1.xpose.msra.mxu0 0.0
    %531 = vmatprep.subr.mxu0 0.0
    %532 = vmatpush1.xpose.msra.mxu0 0.0
    %533 = vmatprep.subr.mxu0 0.0
    %534 = vmatpush1.xpose.msra.mxu0 0.0
    %535 = vmatprep.subr.mxu0 0.0
    %536 = vmatpush1.xpose.msra.mxu0 0.0
    %537 = vmatprep.subr.mxu0 0.0
    %538 = vmatpush1.xpose.msra.mxu0 0.0
    %539 = vmatprep.subr.mxu0 0.0
    %540 = vmatpush1.xpose.msra.mxu0 0.0
    %541 = vmatprep.subr.mxu0 0.0
    %542 = vmatpush1.xpose.msra.mxu0 0.0
    %543 = vmatprep.subr.mxu0 0.0
    %544 = vmatpush1.xpose.msra.mxu0 0.0
    %545 = vmatprep.subr.mxu0 0.0
    %546 = vmatpush1.xpose.msra.mxu0 0.0
    %547 = vmatprep.subr.mxu0 0.0
    %548 = vmatpush1.xpose.msra.mxu0 0.0
    %549 = vmatprep.subr.mxu0 0.0
    %550 = vmatpush1.xpose.msra.mxu0 0.0
    %551 = vmatprep.subr.mxu0 0.0
    %552 = vmatpush1.xpose.msra.mxu0 0.0
    %553 = vmatprep.subr.mxu0 0.0
    %554 = vmatpush1.xpose.msra.mxu0 0.0
    %555 = vmatprep.subr.mxu0 0.0
    %556 = vmatpush1.xpose.msra.mxu0 0.0
    %557 = vmatprep.subr.mxu0 0.0
    %558 = vmatpush1.xpose.msra.mxu0 0.0
    %559 = vmatprep.subr.mxu0 0.0
    %560 = vmatpush1.xpose.msra.mxu0 0.0
    %561 = vmatprep.subr.mxu0 0.0
    %562 = vmatpush1.xpose.msra.mxu0 0.0
    %563 = vmatprep.subr.mxu0 0.0
    %564 = vmatpush1.xpose.msra.mxu0 0.0
    %565 = vmatprep.subr.mxu0 0.0
    %566 = vmatpush1.xpose.msra.mxu0 0.0
    %567 = vmatprep.subr.mxu0 0.0
    %568 = vmatpush1.xpose.msra.mxu0 0.0
    %569 = vmatprep.subr.mxu0 0.0
    %570 = vmatpush1.xpose.msra.mxu0 0.0
    %571 = vmatprep.subr.mxu0 0.0
    %572 = vmatpush1.xpose.msra.mxu0 0.0
    %573 = vmatprep.subr.mxu0 0.0
    %574 = vmatpush1.xpose.msra.mxu0 0.0
    %575 = vmatprep.subr.mxu0 0.0
    %576 = vmatpush1.xpose.msra.mxu0 0.0
    %577 = vmatprep.subr.mxu0 0.0
    %578 = vmatpush1.xpose.msra.mxu0 0.0
    %579 = vmatprep.subr.mxu0 0.0
    %580 = vmatpush1.xpose.msra.mxu0 0.0
    %581 = vmatprep.mubr.f32.mxu0 0.0
    %582 = vmatmul.mubr.f32.gmra.mrb[0].mxu0 %v509
    %v583 = vpop.f32.mrb[0].mxu0
    %v584 = vadd.f32 %v168, %v583
    %v585 = vpop.f32.mrb[0].mxu0
    %586 = vmatprep.mubr.f32.mxu0 0.0
    %587 = vmatmul.mubr.f32.gmra.mrb[0].mxu0 %v511
    %v588 = vpop.f32.mrb[0].mxu0
    %v589 = vadd.f32 %v169, %v588
    %v590 = vpop.f32.mrb[0].mxu0
    %591 = vdwg.mxu0
    %v592 = vsel %vm308, %v584, -inf
    %593 = vmax.xlane.f32.xlu0 %v592
    %v594 = vpop.xlane.xlu0 %593
    %v595 = vsel %vm308, %v589, -inf
    %596 = vmax.xlane.f32.xlu0 %v595
    %v597 = vpop.xlane.xlu0 %596
    %v598 = vsub.f32 %v584, %v594
    %v599 = vsub.f32 %v589, %v597
    %v600 = vmul.f32 %v598, 1.442695
    %v601 = vpow.pop %v600
    %v602 = vmul.f32 %v599, 1.442695
    %v603 = vpow.pop %v602
    %604 = vrot.lane.b32.xlu0 %v294, 48
    %v605 = vpop.permute.xlu0 %604
    %606 = vrot.lane.b32.xlu0 %v299, 48
    %v607 = vpop.permute.xlu0 %606
    %v611 = vsel %vm308, %v601, 0
    %v614 = vsel %vm308, %v603, 0
    %616 = vmatprep.subr.mxu0 0.0
    %617 = vmatpush1.msra.mxu0 %v605
    %618 = vmatprep.subr.mxu0 0.0
    %619 = vmatpush1.msra.mxu0 %v607
    %620 = vmatprep.subr.mxu0 0.0
    %621 = vmatpush1.msra.mxu0 0.0
    %622 = vmatprep.subr.mxu0 0.0
    %623 = vmatpush1.msra.mxu0 0.0
    %624 = vmatprep.subr.mxu0 0.0
    %625 = vmatpush1.msra.mxu0 0.0
    %626 = vmatprep.subr.mxu0 0.0
    %627 = vmatpush1.msra.mxu0 0.0
    %628 = vmatprep.subr.mxu0 0.0
    %629 = vmatpush1.msra.mxu0 0.0
    %630 = vmatprep.subr.mxu0 0.0
    %631 = vmatpush1.msra.mxu0 0.0
    %632 = vmatprep.subr.mxu0 0.0
    %633 = vmatpush1.msra.mxu0 0.0
    %634 = vmatprep.subr.mxu0 0.0
    %635 = vmatpush1.msra.mxu0 0.0
    %636 = vmatprep.subr.mxu0 0.0
    %637 = vmatpush1.msra.mxu0 0.0
    %638 = vmatprep.subr.mxu0 0.0
    %639 = vmatpush1.msra.mxu0 0.0
    %640 = vmatprep.subr.mxu0 0.0
    %641 = vmatpush1.msra.mxu0 0.0
    %642 = vmatprep.subr.mxu0 0.0
    %643 = vmatpush1.msra.mxu0 0.0
    %644 = vmatprep.subr.mxu0 0.0
    %645 = vmatpush1.msra.mxu0 0.0
    %646 = vmatprep.subr.mxu0 0.0
    %647 = vmatpush1.msra.mxu0 0.0
    %648 = vmatprep.subr.mxu0 0.0
    %649 = vmatpush1.msra.mxu0 0.0
    %650 = vmatprep.subr.mxu0 0.0
    %651 = vmatpush1.msra.mxu0 0.0
    %652 = vmatprep.subr.mxu0 0.0
    %653 = vmatpush1.msra.mxu0 0.0
    %654 = vmatprep.subr.mxu0 0.0
    %655 = vmatpush1.msra.mxu0 0.0
    %656 = vmatprep.subr.mxu0 0.0
    %657 = vmatpush1.msra.mxu0 0.0
    %658 = vmatprep.subr.mxu0 0.0
    %659 = vmatpush1.msra.mxu0 0.0
    %660 = vmatprep.subr.mxu0 0.0
    %661 = vmatpush1.msra.mxu0 0.0
    %662 = vmatprep.subr.mxu0 0.0
    %663 = vmatpush1.msra.mxu0 0.0
    %664 = vmatprep.subr.mxu0 0.0
    %665 = vmatpush1.msra.mxu0 0.0
    %666 = vmatprep.subr.mxu0 0.0
    %667 = vmatpush1.msra.mxu0 0.0
    %668 = vmatprep.subr.mxu0 0.0
    %669 = vmatpush1.msra.mxu0 0.0
    %670 = vmatprep.subr.mxu0 0.0
    %671 = vmatpush1.msra.mxu0 0.0
    %672 = vmatprep.subr.mxu0 0.0
    %673 = vmatpush1.msra.mxu0 0.0
    %674 = vmatprep.subr.mxu0 0.0
    %675 = vmatpush1.msra.mxu0 0.0
    %676 = vmatprep.subr.mxu0 0.0
    %677 = vmatpush1.msra.mxu0 0.0
    %678 = vmatprep.subr.mxu0 0.0
    %679 = vmatpush1.msra.mxu0 0.0
    %680 = vmatprep.mubr.f32.mxu0 0.0
    %681 = vmatmul.mubr.f32.gmra.mrb[0].mxu0 %v611
    %v682 = vpop.f32.mrb[0].mxu0
    %v683 = vadd.f32 0.0, %v682
    %v684 = vpop.f32.mrb[0].mxu0
    %685 = vmatprep.mubr.f32.mxu0 0.0
    %686 = vmatmul.mubr.f32.gmra.mrb[0].mxu0 %v614
    %v687 = vpop.f32.mrb[0].mxu0
    %v688 = vadd.f32 0.0, %v687
    %v689 = vpop.f32.mrb[0].mxu0
    %690 = vdwg.mxu0
    %v691 = vsel %vm308, %v601, 0.0
    %692 = vadd.xlane.f32.xlu0 %v691
    %v693 = vpop.xlane.xlu0 %692
    %v694 = vsel %vm308, %v603, 0.0
    %695 = vadd.xlane.f32.xlu0 %v694
    %v696 = vpop.xlane.xlu0 %695
    %v697 = vrcp.pop %v693
    %v698 = vmul.f32 %v683, %v697
    %v699 = vrcp.pop %v696
    %v700 = vmul.f32 %v688, %v699
    %v702 = vsel %vm308, %v698, 0
    %v705 = vsel %vm308, %v700, 0
    %707 = vmatprep.subr.mxu0 0.0
    %708 = vmatpush1.msra.mxu0 %v219
    %709 = vmatprep.subr.mxu0 0.0
    %710 = vmatpush1.msra.mxu0 %v220
    %711 = vmatprep.subr.mxu0 0.0
    %712 = vmatpush1.msra.mxu0 0.0
    %713 = vmatprep.subr.mxu0 0.0
    %714 = vmatpush1.msra.mxu0 0.0
    %715 = vmatprep.subr.mxu0 0.0
    %716 = vmatpush1.msra.mxu0 0.0
    %717 = vmatprep.subr.mxu0 0.0
    %718 = vmatpush1.msra.mxu0 0.0
    %719 = vmatprep.subr.mxu0 0.0
    %720 = vmatpush1.msra.mxu0 0.0
    %721 = vmatprep.subr.mxu0 0.0
    %722 = vmatpush1.msra.mxu0 0.0
    %723 = vmatprep.subr.mxu0 0.0
    %724 = vmatpush1.msra.mxu0 0.0
    %725 = vmatprep.subr.mxu0 0.0
    %726 = vmatpush1.msra.mxu0 0.0
    %727 = vmatprep.subr.mxu0 0.0
    %728 = vmatpush1.msra.mxu0 0.0
    %729 = vmatprep.subr.mxu0 0.0
    %730 = vmatpush1.msra.mxu0 0.0
    %731 = vmatprep.subr.mxu0 0.0
    %732 = vmatpush1.msra.mxu0 0.0
    %733 = vmatprep.subr.mxu0 0.0
    %734 = vmatpush1.msra.mxu0 0.0
    %735 = vmatprep.subr.mxu0 0.0
    %736 = vmatpush1.msra.mxu0 0.0
    %737 = vmatprep.subr.mxu0 0.0
    %738 = vmatpush1.msra.mxu0 0.0
    %739 = vmatprep.subr.mxu0 0.0
    %740 = vmatpush1.msra.mxu0 0.0
    %741 = vmatprep.subr.mxu0 0.0
    %742 = vmatpush1.msra.mxu0 0.0
    %743 = vmatprep.subr.mxu0 0.0
    %744 = vmatpush1.msra.mxu0 0.0
    %745 = vmatprep.subr.mxu0 0.0
    %746 = vmatpush1.msra.mxu0 0.0
    %747 = vmatprep.subr.mxu0 0.0
    %748 = vmatpush1.msra.mxu0 0.0
    %749 = vmatprep.subr.mxu0 0.0
    %750 = vmatpush1.msra.mxu0 0.0
    %751 = vmatprep.subr.mxu0 0.0
    %752 = vmatpush1.msra.mxu0 0.0
    %753 = vmatprep.subr.mxu0 0.0
    %754 = vmatpush1.msra.mxu0 0.0
    %755 = vmatprep.subr.mxu0 0.0
    %756 = vmatpush1.msra.mxu0 0.0
    %757 = vmatprep.subr.mxu0 0.0
    %758 = vmatpush1.msra.mxu0 0.0
    %759 = vmatprep.subr.mxu0 0.0
    %760 = vmatpush1.msra.mxu0 0.0
    %761 = vmatprep.subr.mxu0 0.0
    %762 = vmatpush1.msra.mxu0 0.0
    %763 = vmatprep.subr.mxu0 0.0
    %764 = vmatpush1.msra.mxu0 0.0
    %765 = vmatprep.subr.mxu0 0.0
    %766 = vmatpush1.msra.mxu0 0.0
    %767 = vmatprep.subr.mxu0 0.0
    %768 = vmatpush1.msra.mxu0 0.0
    %769 = vmatprep.subr.mxu0 0.0
    %770 = vmatpush1.msra.mxu0 0.0
    %771 = vmatprep.mubr.f32.mxu0 0.0
    %772 = vmatmul.mubr.f32.gmra.mrb[0].mxu0 %v702
    %v773 = vpop.f32.mrb[0].mxu0
    %v774 = vadd.f32 0.0, %v773
    %v775 = vpop.f32.mrb[0].mxu0
    %776 = vmatprep.mubr.f32.mxu0 0.0
    %777 = vmatmul.mubr.f32.gmra.mrb[0].mxu0 %v705
    %v778 = vpop.f32.mrb[0].mxu0
    %v779 = vadd.f32 0.0, %v778
    %v780 = vpop.f32.mrb[0].mxu0
    %781 = vdwg.mxu0
    %v783 = vsel %vm308, %v498, 0
    %v786 = vsel %vm308, %v500, 0
    %788 = vmatprep.subr.mxu0 0.0
    %789 = vmatpush1.msra.mxu0 %v217
    %790 = vmatprep.subr.mxu0 0.0
    %791 = vmatpush1.msra.mxu0 %v218
    %792 = vmatprep.subr.mxu0 0.0
    %793 = vmatpush1.msra.mxu0 0.0
    %794 = vmatprep.subr.mxu0 0.0
    %795 = vmatpush1.msra.mxu0 0.0
    %796 = vmatprep.subr.mxu0 0.0
    %797 = vmatpush1.msra.mxu0 0.0
    %798 = vmatprep.subr.mxu0 0.0
    %799 = vmatpush1.msra.mxu0 0.0
    %800 = vmatprep.subr.mxu0 0.0
    %801 = vmatpush1.msra.mxu0 0.0
    %802 = vmatprep.subr.mxu0 0.0
    %803 = vmatpush1.msra.mxu0 0.0
    %804 = vmatprep.subr.mxu0 0.0
    %805 = vmatpush1.msra.mxu0 0.0
    %806 = vmatprep.subr.mxu0 0.0
    %807 = vmatpush1.msra.mxu0 0.0
    %808 = vmatprep.subr.mxu0 0.0
    %809 = vmatpush1.msra.mxu0 0.0
    %810 = vmatprep.subr.mxu0 0.0
    %811 = vmatpush1.msra.mxu0 0.0
    %812 = vmatprep.subr.mxu0 0.0
    %813 = vmatpush1.msra.mxu0 0.0
    %814 = vmatprep.subr.mxu0 0.0
    %815 = vmatpush1.msra.mxu0 0.0
    %816 = vmatprep.subr.mxu0 0.0
    %817 = vmatpush1.msra.mxu0 0.0
    %818 = vmatprep.subr.mxu0 0.0
    %819 = vmatpush1.msra.mxu0 0.0
    %820 = vmatprep.subr.mxu0 0.0
    %821 = vmatpush1.msra.mxu0 0.0
    %822 = vmatprep.subr.mxu0 0.0
    %823 = vmatpush1.msra.mxu0 0.0
    %824 = vmatprep.subr.mxu0 0.0
    %825 = vmatpush1.msra.mxu0 0.0
    %826 = vmatprep.subr.mxu0 0.0
    %827 = vmatpush1.msra.mxu0 0.0
    %828 = vmatprep.subr.mxu0 0.0
    %829 = vmatpush1.msra.mxu0 0.0
    %830 = vmatprep.subr.mxu0 0.0
    %831 = vmatpush1.msra.mxu0 0.0
    %832 = vmatprep.subr.mxu0 0.0
    %833 = vmatpush1.msra.mxu0 0.0
    %834 = vmatprep.subr.mxu0 0.0
    %835 = vmatpush1.msra.mxu0 0.0
    %836 = vmatprep.subr.mxu0 0.0
    %837 = vmatpush1.msra.mxu0 0.0
    %838 = vmatprep.subr.mxu0 0.0
    %839 = vmatpush1.msra.mxu0 0.0
    %840 = vmatprep.subr.mxu0 0.0
    %841 = vmatpush1.msra.mxu0 0.0
    %842 = vmatprep.subr.mxu0 0.0
    %843 = vmatpush1.msra.mxu0 0.0
    %844 = vmatprep.subr.mxu0 0.0
    %845 = vmatpush1.msra.mxu0 0.0
    %846 = vmatprep.subr.mxu0 0.0
    %847 = vmatpush1.msra.mxu0 0.0
    %848 = vmatprep.subr.mxu0 0.0
    %849 = vmatpush1.msra.mxu0 0.0
    %850 = vmatprep.subr.mxu0 0.0
    %851 = vmatpush1.msra.mxu0 0.0
    %852 = vmatprep.mubr.f32.mxu0 0.0
    %853 = vmatmul.mubr.f32.gmra.mrb[0].mxu0 %v783
    %v854 = vpop.f32.mrb[0].mxu0
    %v855 = vadd.f32 %v774, %v854
    %v856 = vpop.f32.mrb[0].mxu0
    %857 = vmatprep.mubr.f32.mxu0 0.0
    %858 = vmatmul.mubr.f32.gmra.mrb[0].mxu0 %v786
    %v859 = vpop.f32.mrb[0].mxu0
    %v860 = vadd.f32 %v779, %v859
    %v861 = vpop.f32.mrb[0].mxu0
    %862 = vdwg.mxu0
    %v863 = vadd.f32 %v855, %v210
    %v864 = vadd.f32 %v860, %v211
    %v865 = vsel %vm172, %v863, 0.0
    %866 = vadd.xlane.f32.xlu0 %v865
    %v867 = vpop.xlane.xlu0 %866
    %v868 = vsel %vm172, %v864, 0.0
    %869 = vadd.xlane.f32.xlu0 %v868
    %v870 = vpop.xlane.xlu0 %869
    %v871 = vmul.f32 %v867, %v179
    %v872 = vmul.f32 %v870, %v179
    %v873 = vsub.f32 %v863, %v871
    %v874 = vsub.f32 %v864, %v872
    %v875 = vmul.f32 %v873, %v873
    %v876 = vmul.f32 %v874, %v874
    %v877 = vsel %vm172, %v875, 0.0
    %878 = vadd.xlane.f32.xlu0 %v877
    %v879 = vpop.xlane.xlu0 %878
    %v880 = vsel %vm172, %v876, 0.0
    %881 = vadd.xlane.f32.xlu0 %v880
    %v882 = vpop.xlane.xlu0 %881
    %v883 = vmul.f32 %v879, %v179
    %v884 = vmul.f32 %v882, %v179
    %v885 = vadd.f32 %v883, 1e-06
    %v886 = vadd.f32 %v884, 1e-06
    %v887 = vrsqrt.pop %v885
    %v888 = vrsqrt.pop %v886
    %v889 = vmul.f32 %v873, %v887
    %v890 = vmul.f32 %v874, %v888
    %v891 = vlaneseq
    %v892 = vshrl.u32 %v891, 7
    %v893 = vsub.s32 0, %v892
    %v894 = vrot.slane %v212, %v893
    %v895 = vmul.f32 %v889, %v894
    %v896 = vmul.f32 %v890, %v894
    %v897 = vlaneseq
    %v898 = vshrl.u32 %v897, 7
    %v899 = vsub.s32 1, %v898
    %v900 = vrot.slane %v212, %v899
    %v901 = vadd.f32 %v895, %v900
    %v902 = vadd.f32 %v896, %v900
    %v903 = vld [vmem:[%s17] sm:$0xff]
    %v904 = vld [vmem:[%s17 + $0x8] sm:$0xff]
    %v905 = vld [vmem:[%s17 + $0x10] sm:$0xff]
    %v906 = vld [vmem:[%s17 + $0x18] sm:$0xff]
    %v907 = vld [vmem:[%s19] sm:$0x1]
    %v909 = vlaneseq
    %v910 = vshrl.u32 %v909, 7
    %v911 = vsub.s32 0, %v910
    %v912 = vrot.slane %v907, %v911
    %v915 = vsel %vm172, %v901, 0
    %v918 = vsel %vm172, %v902, 0
    %920 = vmatprep.subr.mxu0 0.0
    %921 = vmatpush1.msra.mxu0 %v903
    %922 = vmatprep.subr.mxu0 0.0
    %923 = vmatpush1.msra.mxu0 %v904
    %924 = vmatprep.subr.mxu0 0.0
    %925 = vmatpush1.msra.mxu0 %v905
    %926 = vmatprep.subr.mxu0 0.0
    %927 = vmatpush1.msra.mxu0 %v906
    %928 = vmatprep.subr.mxu0 0.0
    %929 = vmatpush1.msra.mxu0 0.0
    %930 = vmatprep.subr.mxu0 0.0
    %931 = vmatpush1.msra.mxu0 0.0
    %932 = vmatprep.subr.mxu0 0.0
    %933 = vmatpush1.msra.mxu0 0.0
    %934 = vmatprep.subr.mxu0 0.0
    %935 = vmatpush1.msra.mxu0 0.0
    %936 = vmatprep.subr.mxu0 0.0
    %937 = vmatpush1.msra.mxu0 0.0
    %938 = vmatprep.subr.mxu0 0.0
    %939 = vmatpush1.msra.mxu0 0.0
    %940 = vmatprep.subr.mxu0 0.0
    %941 = vmatpush1.msra.mxu0 0.0
    %942 = vmatprep.subr.mxu0 0.0
    %943 = vmatpush1.msra.mxu0 0.0
    %944 = vmatprep.subr.mxu0 0.0
    %945 = vmatpush1.msra.mxu0 0.0
    %946 = vmatprep.subr.mxu0 0.0
    %947 = vmatpush1.msra.mxu0 0.0
    %948 = vmatprep.subr.mxu0 0.0
    %949 = vmatpush1.msra.mxu0 0.0
    %950 = vmatprep.subr.mxu0 0.0
    %951 = vmatpush1.msra.mxu0 0.0
    %952 = vmatprep.subr.mxu0 0.0
    %953 = vmatpush1.msra.mxu0 0.0
    %954 = vmatprep.subr.mxu0 0.0
    %955 = vmatpush1.msra.mxu0 0.0
    %956 = vmatprep.subr.mxu0 0.0
    %957 = vmatpush1.msra.mxu0 0.0
    %958 = vmatprep.subr.mxu0 0.0
    %959 = vmatpush1.msra.mxu0 0.0
    %960 = vmatprep.subr.mxu0 0.0
    %961 = vmatpush1.msra.mxu0 0.0
    %962 = vmatprep.subr.mxu0 0.0
    %963 = vmatpush1.msra.mxu0 0.0
    %964 = vmatprep.subr.mxu0 0.0
    %965 = vmatpush1.msra.mxu0 0.0
    %966 = vmatprep.subr.mxu0 0.0
    %967 = vmatpush1.msra.mxu0 0.0
    %968 = vmatprep.subr.mxu0 0.0
    %969 = vmatpush1.msra.mxu0 0.0
    %970 = vmatprep.subr.mxu0 0.0
    %971 = vmatpush1.msra.mxu0 0.0
    %972 = vmatprep.subr.mxu0 0.0
    %973 = vmatpush1.msra.mxu0 0.0
    %974 = vmatprep.subr.mxu0 0.0
    %975 = vmatpush1.msra.mxu0 0.0
    %976 = vmatprep.subr.mxu0 0.0
    %977 = vmatpush1.msra.mxu0 0.0
    %978 = vmatprep.subr.mxu0 0.0
    %979 = vmatpush1.msra.mxu0 0.0
    %980 = vmatprep.subr.mxu0 0.0
    %981 = vmatpush1.msra.mxu0 0.0
    %982 = vmatprep.subr.mxu0 0.0
    %983 = vmatpush1.msra.mxu0 0.0
    %984 = vmatprep.mubr.f32.mxu0 0.0
    %985 = vmatmul.mubr.f32.gmra.mrb[0].mxu0 %v915
    %v986 = vpop.f32.mrb[0].mxu0
    %v987 = vadd.f32 %v912, %v986
    %v988 = vpop.f32.mrb[0].mxu0
    %989 = vmatprep.mubr.f32.mxu0 0.0
    %990 = vmatmul.mubr.f32.gmra.mrb[0].mxu0 %v918
    %v991 = vpop.f32.mrb[0].mxu0
    %v992 = vadd.f32 %v912, %v991
    %v993 = vpop.f32.mrb[0].mxu0
    %994 = vdwg.mxu0
    %v995 = vmax.f32 %v987, 0.0
    %v996 = vmax.f32 %v992, 0.0
    %v997 = vld [vmem:[%s21] sm:$0xff]
    %v998 = vld [vmem:[%s21 + $0x8] sm:$0xff]
    %v999 = vld [vmem:[%s21 + $0x10] sm:$0xff]
    %v1000 = vld [vmem:[%s21 + $0x18] sm:$0xff]
    %v1001 = vld [vmem:[%s21 + $0x20] sm:$0xff]
    %v1002 = vld [vmem:[%s21 + $0x28] sm:$0xff]
    %v1003 = vld [vmem:[%s21 + $0x30] sm:$0xff]
    %v1004 = vld [vmem:[%s21 + $0x38] sm:$0xff]
    %v1005 = vlaneseq
    %v1006 = vshrl.u32 %v1005, 7
    %v1007 = vsub.s32 2, %v1006
    %v1008 = vrot.slane %v212, %v1007
    %vm1009 = vcmask 523264
    %v1011 = vsel %vm1009, %v995, 0
    %v1014 = vsel %vm1009, %v996, 0
    %1016 = vmatprep.subr.mxu0 0.0
    %1017 = vmatpush1.msra.mxu0 %v997
    %1018 = vmatprep.subr.mxu0 0.0
    %1019 = vmatpush1.msra.mxu0 %v998
    %1020 = vmatprep.subr.mxu0 0.0
    %1021 = vmatpush1.msra.mxu0 %v999
    %1022 = vmatprep.subr.mxu0 0.0
    %1023 = vmatpush1.msra.mxu0 %v1000
    %1024 = vmatprep.subr.mxu0 0.0
    %1025 = vmatpush1.msra.mxu0 %v1001
    %1026 = vmatprep.subr.mxu0 0.0
    %1027 = vmatpush1.msra.mxu0 %v1002
    %1028 = vmatprep.subr.mxu0 0.0
    %1029 = vmatpush1.msra.mxu0 %v1003
    %1030 = vmatprep.subr.mxu0 0.0
    %1031 = vmatpush1.msra.mxu0 %v1004
    %1032 = vmatprep.subr.mxu0 0.0
    %1033 = vmatpush1.msra.mxu0 0.0
    %1034 = vmatprep.subr.mxu0 0.0
    %1035 = vmatpush1.msra.mxu0 0.0
    %1036 = vmatprep.subr.mxu0 0.0
    %1037 = vmatpush1.msra.mxu0 0.0
    %1038 = vmatprep.subr.mxu0 0.0
    %1039 = vmatpush1.msra.mxu0 0.0
    %1040 = vmatprep.subr.mxu0 0.0
    %1041 = vmatpush1.msra.mxu0 0.0
    %1042 = vmatprep.subr.mxu0 0.0
    %1043 = vmatpush1.msra.mxu0 0.0
    %1044 = vmatprep.subr.mxu0 0.0
    %1045 = vmatpush1.msra.mxu0 0.0
    %1046 = vmatprep.subr.mxu0 0.0
    %1047 = vmatpush1.msra.mxu0 0.0
    %1048 = vmatprep.subr.mxu0 0.0
    %1049 = vmatpush1.msra.mxu0 0.0
    %1050 = vmatprep.subr.mxu0 0.0
    %1051 = vmatpush1.msra.mxu0 0.0
    %1052 = vmatprep.subr.mxu0 0.0
    %1053 = vmatpush1.msra.mxu0 0.0
    %1054 = vmatprep.subr.mxu0 0.0
    %1055 = vmatpush1.msra.mxu0 0.0
    %1056 = vmatprep.subr.mxu0 0.0
    %1057 = vmatpush1.msra.mxu0 0.0
    %1058 = vmatprep.subr.mxu0 0.0
    %1059 = vmatpush1.msra.mxu0 0.0
    %1060 = vmatprep.subr.mxu0 0.0
    %1061 = vmatpush1.msra.mxu0 0.0
    %1062 = vmatprep.subr.mxu0 0.0
    %1063 = vmatpush1.msra.mxu0 0.0
    %1064 = vmatprep.subr.mxu0 0.0
    %1065 = vmatpush1.msra.mxu0 0.0
    %1066 = vmatprep.subr.mxu0 0.0
    %1067 = vmatpush1.msra.mxu0 0.0
    %1068 = vmatprep.subr.mxu0 0.0
    %1069 = vmatpush1.msra.mxu0 0.0
    %1070 = vmatprep.subr.mxu0 0.0
    %1071 = vmatpush1.msra.mxu0 0.0
    %1072 = vmatprep.subr.mxu0 0.0
    %1073 = vmatpush1.msra.mxu0 0.0
    %1074 = vmatprep.subr.mxu0 0.0
    %1075 = vmatpush1.msra.mxu0 0.0
    %1076 = vmatprep.subr.mxu0 0.0
    %1077 = vmatpush1.msra.mxu0 0.0
    %1078 = vmatprep.subr.mxu0 0.0
    %1079 = vmatpush1.msra.mxu0 0.0
    %1080 = vmatprep.mubr.f32.mxu0 0.0
    %1081 = vmatmul.mubr.f32.gmra.mrb[0].mxu0 %v1011
    %v1082 = vpop.f32.mrb[0].mxu0
    %v1083 = vadd.f32 %v1008, %v1082
    %v1084 = vpop.f32.mrb[0].mxu0
    %1085 = vmatprep.mubr.f32.mxu0 0.0
    %1086 = vmatmul.mubr.f32.gmra.mrb[0].mxu0 %v1014
    %v1087 = vpop.f32.mrb[0].mxu0
    %v1088 = vadd.f32 %v1008, %v1087
    %v1089 = vpop.f32.mrb[0].mxu0
    %1090 = vdwg.mxu0
    %v1091 = vadd.f32 %v1083, %v901
    %v1092 = vadd.f32 %v1088, %v902
    %v1093 = vsel %vm172, %v1091, 0.0
    %1094 = vadd.xlane.f32.xlu0 %v1093
    %v1095 = vpop.xlane.xlu0 %1094
    %v1096 = vsel %vm172, %v1092, 0.0
    %1097 = vadd.xlane.f32.xlu0 %v1096
    %v1098 = vpop.xlane.xlu0 %1097
    %v1099 = vmul.f32 %v1095, %v179
    %v1100 = vmul.f32 %v1098, %v179
    %v1101 = vsub.f32 %v1091, %v1099
    %v1102 = vsub.f32 %v1092, %v1100
    %v1103 = vmul.f32 %v1101, %v1101
    %v1104 = vmul.f32 %v1102, %v1102
    %v1105 = vsel %vm172, %v1103, 0.0
    %1106 = vadd.xlane.f32.xlu0 %v1105
    %v1107 = vpop.xlane.xlu0 %1106
    %v1108 = vsel %vm172, %v1104, 0.0
    %1109 = vadd.xlane.f32.xlu0 %v1108
    %v1110 = vpop.xlane.xlu0 %1109
    %v1111 = vmul.f32 %v1107, %v179
    %v1112 = vmul.f32 %v1110, %v179
    %v1113 = vadd.f32 %v1111, 1e-06
    %v1114 = vadd.f32 %v1112, 1e-06
    %v1115 = vrsqrt.pop %v1113
    %v1116 = vrsqrt.pop %v1114
    %v1117 = vmul.f32 %v1101, %v1115
    %v1118 = vmul.f32 %v1102, %v1116
    %v1119 = vlaneseq
    %v1120 = vshrl.u32 %v1119, 7
    %v1121 = vsub.s32 3, %v1120
    %v1122 = vrot.slane %v212, %v1121
    %v1123 = vmul.f32 %v1117, %v1122
    %v1124 = vmul.f32 %v1118, %v1122
    %v1125 = vlaneseq
    %v1126 = vshrl.u32 %v1125, 7
    %v1127 = vsub.s32 4, %v1126
    %v1128 = vrot.slane %v212, %v1127
    %v1129 = vadd.f32 %v1123, %v1128
    %v1130 = vadd.f32 %v1124, %v1128
    %s1131 = scalar_lea.vmem %s23, 8
    %v1132 = vld [vmem:[%s1131] sm:$0x1f]
    %s1133 = scalar_lea.vmem %s13, 32
    %v1134 = vld [vmem:[%s1133] sm:$0xff]
    %v1135 = vld [vmem:[%s1133 + $0x8] sm:$0xff]
    %v1136 = vld [vmem:[%s1133 + $0x10] sm:$0xff]
    %v1137 = vld [vmem:[%s1133 + $0x18] sm:$0xff]
    %s1138 = scalar_lea.vmem %s15, 32
    %v1139 = vld [vmem:[%s1138] sm:$0xff]
    %v1140 = vld [vmem:[%s1138 + $0x8] sm:$0xff]
    %v1141 = vld [vmem:[%s1138 + $0x10] sm:$0xff]
    %v1142 = vld [vmem:[%s1138 + $0x18] sm:$0xff]
    %v1144 = vsel %vm172, %v1129, 0
    %v1147 = vsel %vm172, %v1130, 0
    %1149 = vmatprep.subr.mxu0 0.0
    %1150 = vmatpush1.msra.mxu0 %v1134
    %1151 = vmatprep.subr.mxu0 0.0
    %1152 = vmatpush1.msra.mxu0 %v1135
    %1153 = vmatprep.subr.mxu0 0.0
    %1154 = vmatpush1.msra.mxu0 %v1136
    %1155 = vmatprep.subr.mxu0 0.0
    %1156 = vmatpush1.msra.mxu0 %v1137
    %1157 = vmatprep.subr.mxu0 0.0
    %1158 = vmatpush1.msra.mxu0 0.0
    %1159 = vmatprep.subr.mxu0 0.0
    %1160 = vmatpush1.msra.mxu0 0.0
    %1161 = vmatprep.subr.mxu0 0.0
    %1162 = vmatpush1.msra.mxu0 0.0
    %1163 = vmatprep.subr.mxu0 0.0
    %1164 = vmatpush1.msra.mxu0 0.0
    %1165 = vmatprep.subr.mxu0 0.0
    %1166 = vmatpush1.msra.mxu0 0.0
    %1167 = vmatprep.subr.mxu0 0.0
    %1168 = vmatpush1.msra.mxu0 0.0
    %1169 = vmatprep.subr.mxu0 0.0
    %1170 = vmatpush1.msra.mxu0 0.0
    %1171 = vmatprep.subr.mxu0 0.0
    %1172 = vmatpush1.msra.mxu0 0.0
    %1173 = vmatprep.subr.mxu0 0.0
    %1174 = vmatpush1.msra.mxu0 0.0
    %1175 = vmatprep.subr.mxu0 0.0
    %1176 = vmatpush1.msra.mxu0 0.0
    %1177 = vmatprep.subr.mxu0 0.0
    %1178 = vmatpush1.msra.mxu0 0.0
    %1179 = vmatprep.subr.mxu0 0.0
    %1180 = vmatpush1.msra.mxu0 0.0
    %1181 = vmatprep.subr.mxu0 0.0
    %1182 = vmatpush1.msra.mxu0 0.0
    %1183 = vmatprep.subr.mxu0 0.0
    %1184 = vmatpush1.msra.mxu0 0.0
    %1185 = vmatprep.subr.mxu0 0.0
    %1186 = vmatpush1.msra.mxu0 0.0
    %1187 = vmatprep.subr.mxu0 0.0
    %1188 = vmatpush1.msra.mxu0 0.0
    %1189 = vmatprep.subr.mxu0 0.0
    %1190 = vmatpush1.msra.mxu0 0.0
    %1191 = vmatprep.subr.mxu0 0.0
    %1192 = vmatpush1.msra.mxu0 0.0
    %1193 = vmatprep.subr.mxu0 0.0
    %1194 = vmatpush1.msra.mxu0 0.0
    %1195 = vmatprep.subr.mxu0 0.0
    %1196 = vmatpush1.msra.mxu0 0.0
    %1197 = vmatprep.subr.mxu0 0.0
    %1198 = vmatpush1.msra.mxu0 0.0
    %1199 = vmatprep.subr.mxu0 0.0
    %1200 = vmatpush1.msra.mxu0 0.0
    %1201 = vmatprep.subr.mxu0 0.0
    %1202 = vmatpush1.msra.mxu0 0.0
    %1203 = vmatprep.subr.mxu0 0.0
    %1204 = vmatpush1.msra.mxu0 0.0
    %1205 = vmatprep.subr.mxu0 0.0
    %1206 = vmatpush1.msra.mxu0 0.0
    %1207 = vmatprep.subr.mxu0 0.0
    %1208 = vmatpush1.msra.mxu0 0.0
    %1209 = vmatprep.subr.mxu0 0.0
    %1210 = vmatpush1.msra.mxu0 0.0
    %1211 = vmatprep.subr.mxu0 0.0
    %1212 = vmatpush1.msra.mxu0 0.0
    %1213 = vmatprep.mubr.f32.mxu0 0.0
    %1214 = vmatmul.mubr.f32.gmra.mrb[0].mxu0 %v1144
    %v1215 = vpop.f32.mrb[0].mxu0
    %v1216 = vadd.f32 0.0, %v1215
    %v1217 = vpop.f32.mrb[0].mxu0
    %1218 = vmatprep.mubr.f32.mxu0 0.0
    %1219 = vmatmul.mubr.f32.gmra.mrb[0].mxu0 %v1147
    %v1220 = vpop.f32.mrb[0].mxu0
    %v1221 = vadd.f32 0.0, %v1220
    %v1222 = vpop.f32.mrb[0].mxu0
    %1223 = vdwg.mxu0
    %1226 = vrot.lane.b32.xlu0 %v1216, 96
    %v1227 = vpop.permute.xlu0 %1226
    %1228 = vrot.lane.b32.xlu0 %v1221, 96
    %v1229 = vpop.permute.xlu0 %1228
    %v1230 = vsel %vm308, %v1216, 0
    %v1232 = vsel %vm308, %v1221, 0
    %v1234 = vsel %vm308, %v1227, 0
    %v1236 = vsel %vm308, %v1229, 0
    %1238 = vmatprep.subr.mxu0 0.0
    %1239 = vmatpush1.xpose.msra.mxu0 %v1234
    %1240 = vmatprep.subr.mxu0 0.0
    %1241 = vmatpush1.xpose.msra.mxu0 %v1236
    %1242 = vmatprep.subr.mxu0 0.0
    %1243 = vmatpush1.xpose.msra.mxu0 0.0
    %1244 = vmatprep.subr.mxu0 0.0
    %1245 = vmatpush1.xpose.msra.mxu0 0.0
    %1246 = vmatprep.subr.mxu0 0.0
    %1247 = vmatpush1.xpose.msra.mxu0 0.0
    %1248 = vmatprep.subr.mxu0 0.0
    %1249 = vmatpush1.xpose.msra.mxu0 0.0
    %1250 = vmatprep.subr.mxu0 0.0
    %1251 = vmatpush1.xpose.msra.mxu0 0.0
    %1252 = vmatprep.subr.mxu0 0.0
    %1253 = vmatpush1.xpose.msra.mxu0 0.0
    %1254 = vmatprep.subr.mxu0 0.0
    %1255 = vmatpush1.xpose.msra.mxu0 0.0
    %1256 = vmatprep.subr.mxu0 0.0
    %1257 = vmatpush1.xpose.msra.mxu0 0.0
    %1258 = vmatprep.subr.mxu0 0.0
    %1259 = vmatpush1.xpose.msra.mxu0 0.0
    %1260 = vmatprep.subr.mxu0 0.0
    %1261 = vmatpush1.xpose.msra.mxu0 0.0
    %1262 = vmatprep.subr.mxu0 0.0
    %1263 = vmatpush1.xpose.msra.mxu0 0.0
    %1264 = vmatprep.subr.mxu0 0.0
    %1265 = vmatpush1.xpose.msra.mxu0 0.0
    %1266 = vmatprep.subr.mxu0 0.0
    %1267 = vmatpush1.xpose.msra.mxu0 0.0
    %1268 = vmatprep.subr.mxu0 0.0
    %1269 = vmatpush1.xpose.msra.mxu0 0.0
    %1270 = vmatprep.subr.mxu0 0.0
    %1271 = vmatpush1.xpose.msra.mxu0 0.0
    %1272 = vmatprep.subr.mxu0 0.0
    %1273 = vmatpush1.xpose.msra.mxu0 0.0
    %1274 = vmatprep.subr.mxu0 0.0
    %1275 = vmatpush1.xpose.msra.mxu0 0.0
    %1276 = vmatprep.subr.mxu0 0.0
    %1277 = vmatpush1.xpose.msra.mxu0 0.0
    %1278 = vmatprep.subr.mxu0 0.0
    %1279 = vmatpush1.xpose.msra.mxu0 0.0
    %1280 = vmatprep.subr.mxu0 0.0
    %1281 = vmatpush1.xpose.msra.mxu0 0.0
    %1282 = vmatprep.subr.mxu0 0.0
    %1283 = vmatpush1.xpose.msra.mxu0 0.0
    %1284 = vmatprep.subr.mxu0 0.0
    %1285 = vmatpush1.xpose.msra.mxu0 0.0
    %1286 = vmatprep.subr.mxu0 0.0
    %1287 = vmatpush1.xpose.msra.mxu0 0.0
    %1288 = vmatprep.subr.mxu0 0.0
    %1289 = vmatpush1.xpose.msra.mxu0 0.0
    %1290 = vmatprep.subr.mxu0 0.0
    %1291 = vmatpush1.xpose.msra.mxu0 0.0
    %1292 = vmatprep.subr.mxu0 0.0
    %1293 = vmatpush1.xpose.msra.mxu0 0.0
    %1294 = vmatprep.subr.mxu0 0.0
    %1295 = vmatpush1.xpose.msra.mxu0 0.0
    %1296 = vmatprep.subr.mxu0 0.0
    %1297 = vmatpush1.xpose.msra.mxu0 0.0
    %1298 = vmatprep.subr.mxu0 0.0
    %1299 = vmatpush1.xpose.msra.mxu0 0.0
    %1300 = vmatprep.subr.mxu0 0.0
    %1301 = vmatpush1.xpose.msra.mxu0 0.0
    %1302 = vmatprep.mubr.f32.mxu0 0.0
    %1303 = vmatmul.mubr.f32.gmra.mrb[0].mxu0 %v1230
    %v1304 = vpop.f32.mrb[0].mxu0
    %v1305 = vadd.f32 %v168, %v1304
    %v1306 = vpop.f32.mrb[0].mxu0
    %1307 = vmatprep.mubr.f32.mxu0 0.0
    %1308 = vmatmul.mubr.f32.gmra.mrb[0].mxu0 %v1232
    %v1309 = vpop.f32.mrb[0].mxu0
    %v1310 = vadd.f32 %v169, %v1309
    %v1311 = vpop.f32.mrb[0].mxu0
    %1312 = vdwg.mxu0
    %v1313 = vsel %vm308, %v1305, -inf
    %1314 = vmax.xlane.f32.xlu0 %v1313
    %v1315 = vpop.xlane.xlu0 %1314
    %v1316 = vsel %vm308, %v1310, -inf
    %1317 = vmax.xlane.f32.xlu0 %v1316
    %v1318 = vpop.xlane.xlu0 %1317
    %v1319 = vsub.f32 %v1305, %v1315
    %v1320 = vsub.f32 %v1310, %v1318
    %v1321 = vmul.f32 %v1319, 1.442695
    %v1322 = vpow.pop %v1321
    %v1323 = vmul.f32 %v1320, 1.442695
    %v1324 = vpow.pop %v1323
    %1325 = vrot.lane.b32.xlu0 %v1216, 64
    %v1326 = vpop.permute.xlu0 %1325
    %1327 = vrot.lane.b32.xlu0 %v1221, 64
    %v1328 = vpop.permute.xlu0 %1327
    %v1332 = vsel %vm308, %v1322, 0
    %v1335 = vsel %vm308, %v1324, 0
    %1337 = vmatprep.subr.mxu0 0.0
    %1338 = vmatpush1.msra.mxu0 %v1326
    %1339 = vmatprep.subr.mxu0 0.0
    %1340 = vmatpush1.msra.mxu0 %v1328
    %1341 = vmatprep.subr.mxu0 0.0
    %1342 = vmatpush1.msra.mxu0 0.0
    %1343 = vmatprep.subr.mxu0 0.0
    %1344 = vmatpush1.msra.mxu0 0.0
    %1345 = vmatprep.subr.mxu0 0.0
    %1346 = vmatpush1.msra.mxu0 0.0
    %1347 = vmatprep.subr.mxu0 0.0
    %1348 = vmatpush1.msra.mxu0 0.0
    %1349 = vmatprep.subr.mxu0 0.0
    %1350 = vmatpush1.msra.mxu0 0.0
    %1351 = vmatprep.subr.mxu0 0.0
    %1352 = vmatpush1.msra.mxu0 0.0
    %1353 = vmatprep.subr.mxu0 0.0
    %1354 = vmatpush1.msra.mxu0 0.0
    %1355 = vmatprep.subr.mxu0 0.0
    %1356 = vmatpush1.msra.mxu0 0.0
    %1357 = vmatprep.subr.mxu0 0.0
    %1358 = vmatpush1.msra.mxu0 0.0
    %1359 = vmatprep.subr.mxu0 0.0
    %1360 = vmatpush1.msra.mxu0 0.0
    %1361 = vmatprep.subr.mxu0 0.0
    %1362 = vmatpush1.msra.mxu0 0.0
    %1363 = vmatprep.subr.mxu0 0.0
    %1364 = vmatpush1.msra.mxu0 0.0
    %1365 = vmatprep.subr.mxu0 0.0
    %1366 = vmatpush1.msra.mxu0 0.0
    %1367 = vmatprep.subr.mxu0 0.0
    %1368 = vmatpush1.msra.mxu0 0.0
    %1369 = vmatprep.subr.mxu0 0.0
    %1370 = vmatpush1.msra.mxu0 0.0
    %1371 = vmatprep.subr.mxu0 0.0
    %1372 = vmatpush1.msra.mxu0 0.0
    %1373 = vmatprep.subr.mxu0 0.0
    %1374 = vmatpush1.msra.mxu0 0.0
    %1375 = vmatprep.subr.mxu0 0.0
    %1376 = vmatpush1.msra.mxu0 0.0
    %1377 = vmatprep.subr.mxu0 0.0
    %1378 = vmatpush1.msra.mxu0 0.0
    %1379 = vmatprep.subr.mxu0 0.0
    %1380 = vmatpush1.msra.mxu0 0.0
    %1381 = vmatprep.subr.mxu0 0.0
    %1382 = vmatpush1.msra.mxu0 0.0
    %1383 = vmatprep.subr.mxu0 0.0
    %1384 = vmatpush1.msra.mxu0 0.0
    %1385 = vmatprep.subr.mxu0 0.0
    %1386 = vmatpush1.msra.mxu0 0.0
    %1387 = vmatprep.subr.mxu0 0.0
    %1388 = vmatpush1.msra.mxu0 0.0
    %1389 = vmatprep.subr.mxu0 0.0
    %1390 = vmatpush1.msra.mxu0 0.0
    %1391 = vmatprep.subr.mxu0 0.0
    %1392 = vmatpush1.msra.mxu0 0.0
    %1393 = vmatprep.subr.mxu0 0.0
    %1394 = vmatpush1.msra.mxu0 0.0
    %1395 = vmatprep.subr.mxu0 0.0
    %1396 = vmatpush1.msra.mxu0 0.0
    %1397 = vmatprep.subr.mxu0 0.0
    %1398 = vmatpush1.msra.mxu0 0.0
    %1399 = vmatprep.subr.mxu0 0.0
    %1400 = vmatpush1.msra.mxu0 0.0
    %1401 = vmatprep.mubr.f32.mxu0 0.0
    %1402 = vmatmul.mubr.f32.gmra.mrb[0].mxu0 %v1332
    %v1403 = vpop.f32.mrb[0].mxu0
    %v1404 = vadd.f32 0.0, %v1403
    %v1405 = vpop.f32.mrb[0].mxu0
    %1406 = vmatprep.mubr.f32.mxu0 0.0
    %1407 = vmatmul.mubr.f32.gmra.mrb[0].mxu0 %v1335
    %v1408 = vpop.f32.mrb[0].mxu0
    %v1409 = vadd.f32 0.0, %v1408
    %v1410 = vpop.f32.mrb[0].mxu0
    %1411 = vdwg.mxu0
    %v1412 = vsel %vm308, %v1322, 0.0
    %1413 = vadd.xlane.f32.xlu0 %v1412
    %v1414 = vpop.xlane.xlu0 %1413
    %v1415 = vsel %vm308, %v1324, 0.0
    %1416 = vadd.xlane.f32.xlu0 %v1415
    %v1417 = vpop.xlane.xlu0 %1416
    %v1418 = vrcp.pop %v1414
    %v1419 = vmul.f32 %v1404, %v1418
    %v1420 = vrcp.pop %v1417
    %v1421 = vmul.f32 %v1409, %v1420
    %1422 = vrot.lane.b32.xlu0 %v1216, 112
    %v1423 = vpop.permute.xlu0 %1422
    %1424 = vrot.lane.b32.xlu0 %v1221, 112
    %v1425 = vpop.permute.xlu0 %1424
    %1426 = vrot.lane.b32.xlu0 %v1216, 80
    %v1427 = vpop.permute.xlu0 %1426
    %1428 = vrot.lane.b32.xlu0 %v1221, 80
    %v1429 = vpop.permute.xlu0 %1428
    %v1430 = vsel %vm308, %v1423, 0
    %v1432 = vsel %vm308, %v1425, 0
    %v1434 = vsel %vm308, %v1427, 0
    %v1436 = vsel %vm308, %v1429, 0
    %1438 = vmatprep.subr.mxu0 0.0
    %1439 = vmatpush1.xpose.msra.mxu0 %v1434
    %1440 = vmatprep.subr.mxu0 0.0
    %1441 = vmatpush1.xpose.msra.mxu0 %v1436
    %1442 = vmatprep.subr.mxu0 0.0
    %1443 = vmatpush1.xpose.msra.mxu0 0.0
    %1444 = vmatprep.subr.mxu0 0.0
    %1445 = vmatpush1.xpose.msra.mxu0 0.0
    %1446 = vmatprep.subr.mxu0 0.0
    %1447 = vmatpush1.xpose.msra.mxu0 0.0
    %1448 = vmatprep.subr.mxu0 0.0
    %1449 = vmatpush1.xpose.msra.mxu0 0.0
    %1450 = vmatprep.subr.mxu0 0.0
    %1451 = vmatpush1.xpose.msra.mxu0 0.0
    %1452 = vmatprep.subr.mxu0 0.0
    %1453 = vmatpush1.xpose.msra.mxu0 0.0
    %1454 = vmatprep.subr.mxu0 0.0
    %1455 = vmatpush1.xpose.msra.mxu0 0.0
    %1456 = vmatprep.subr.mxu0 0.0
    %1457 = vmatpush1.xpose.msra.mxu0 0.0
    %1458 = vmatprep.subr.mxu0 0.0
    %1459 = vmatpush1.xpose.msra.mxu0 0.0
    %1460 = vmatprep.subr.mxu0 0.0
    %1461 = vmatpush1.xpose.msra.mxu0 0.0
    %1462 = vmatprep.subr.mxu0 0.0
    %1463 = vmatpush1.xpose.msra.mxu0 0.0
    %1464 = vmatprep.subr.mxu0 0.0
    %1465 = vmatpush1.xpose.msra.mxu0 0.0
    %1466 = vmatprep.subr.mxu0 0.0
    %1467 = vmatpush1.xpose.msra.mxu0 0.0
    %1468 = vmatprep.subr.mxu0 0.0
    %1469 = vmatpush1.xpose.msra.mxu0 0.0
    %1470 = vmatprep.subr.mxu0 0.0
    %1471 = vmatpush1.xpose.msra.mxu0 0.0
    %1472 = vmatprep.subr.mxu0 0.0
    %1473 = vmatpush1.xpose.msra.mxu0 0.0
    %1474 = vmatprep.subr.mxu0 0.0
    %1475 = vmatpush1.xpose.msra.mxu0 0.0
    %1476 = vmatprep.subr.mxu0 0.0
    %1477 = vmatpush1.xpose.msra.mxu0 0.0
    %1478 = vmatprep.subr.mxu0 0.0
    %1479 = vmatpush1.xpose.msra.mxu0 0.0
    %1480 = vmatprep.subr.mxu0 0.0
    %1481 = vmatpush1.xpose.msra.mxu0 0.0
    %1482 = vmatprep.subr.mxu0 0.0
    %1483 = vmatpush1.xpose.msra.mxu0 0.0
    %1484 = vmatprep.subr.mxu0 0.0
    %1485 = vmatpush1.xpose.msra.mxu0 0.0
    %1486 = vmatprep.subr.mxu0 0.0
    %1487 = vmatpush1.xpose.msra.mxu0 0.0
    %1488 = vmatprep.subr.mxu0 0.0
    %1489 = vmatpush1.xpose.msra.mxu0 0.0
    %1490 = vmatprep.subr.mxu0 0.0
    %1491 = vmatpush1.xpose.msra.mxu0 0.0
    %1492 = vmatprep.subr.mxu0 0.0
    %1493 = vmatpush1.xpose.msra.mxu0 0.0
    %1494 = vmatprep.subr.mxu0 0.0
    %1495 = vmatpush1.xpose.msra.mxu0 0.0
    %1496 = vmatprep.subr.mxu0 0.0
    %1497 = vmatpush1.xpose.msra.mxu0 0.0
    %1498 = vmatprep.subr.mxu0 0.0
    %1499 = vmatpush1.xpose.msra.mxu0 0.0
    %1500 = vmatprep.subr.mxu0 0.0
    %1501 = vmatpush1.xpose.msra.mxu0 0.0
    %1502 = vmatprep.mubr.f32.mxu0 0.0
    %1503 = vmatmul.mubr.f32.gmra.mrb[0].mxu0 %v1430
    %v1504 = vpop.f32.mrb[0].mxu0
    %v1505 = vadd.f32 %v168, %v1504
    %v1506 = vpop.f32.mrb[0].mxu0
    %1507 = vmatprep.mubr.f32.mxu0 0.0
    %1508 = vmatmul.mubr.f32.gmra.mrb[0].mxu0 %v1432
    %v1509 = vpop.f32.mrb[0].mxu0
    %v1510 = vadd.f32 %v169, %v1509
    %v1511 = vpop.f32.mrb[0].mxu0
    %1512 = vdwg.mxu0
    %v1513 = vsel %vm308, %v1505, -inf
    %1514 = vmax.xlane.f32.xlu0 %v1513
    %v1515 = vpop.xlane.xlu0 %1514
    %v1516 = vsel %vm308, %v1510, -inf
    %1517 = vmax.xlane.f32.xlu0 %v1516
    %v1518 = vpop.xlane.xlu0 %1517
    %v1519 = vsub.f32 %v1505, %v1515
    %v1520 = vsub.f32 %v1510, %v1518
    %v1521 = vmul.f32 %v1519, 1.442695
    %v1522 = vpow.pop %v1521
    %v1523 = vmul.f32 %v1520, 1.442695
    %v1524 = vpow.pop %v1523
    %1525 = vrot.lane.b32.xlu0 %v1216, 48
    %v1526 = vpop.permute.xlu0 %1525
    %1527 = vrot.lane.b32.xlu0 %v1221, 48
    %v1528 = vpop.permute.xlu0 %1527
    %v1532 = vsel %vm308, %v1522, 0
    %v1535 = vsel %vm308, %v1524, 0
    %1537 = vmatprep.subr.mxu0 0.0
    %1538 = vmatpush1.msra.mxu0 %v1526
    %1539 = vmatprep.subr.mxu0 0.0
    %1540 = vmatpush1.msra.mxu0 %v1528
    %1541 = vmatprep.subr.mxu0 0.0
    %1542 = vmatpush1.msra.mxu0 0.0
    %1543 = vmatprep.subr.mxu0 0.0
    %1544 = vmatpush1.msra.mxu0 0.0
    %1545 = vmatprep.subr.mxu0 0.0
    %1546 = vmatpush1.msra.mxu0 0.0
    %1547 = vmatprep.subr.mxu0 0.0
    %1548 = vmatpush1.msra.mxu0 0.0
    %1549 = vmatprep.subr.mxu0 0.0
    %1550 = vmatpush1.msra.mxu0 0.0
    %1551 = vmatprep.subr.mxu0 0.0
    %1552 = vmatpush1.msra.mxu0 0.0
    %1553 = vmatprep.subr.mxu0 0.0
    %1554 = vmatpush1.msra.mxu0 0.0
    %1555 = vmatprep.subr.mxu0 0.0
    %1556 = vmatpush1.msra.mxu0 0.0
    %1557 = vmatprep.subr.mxu0 0.0
    %1558 = vmatpush1.msra.mxu0 0.0
    %1559 = vmatprep.subr.mxu0 0.0
    %1560 = vmatpush1.msra.mxu0 0.0
    %1561 = vmatprep.subr.mxu0 0.0
    %1562 = vmatpush1.msra.mxu0 0.0
    %1563 = vmatprep.subr.mxu0 0.0
    %1564 = vmatpush1.msra.mxu0 0.0
    %1565 = vmatprep.subr.mxu0 0.0
    %1566 = vmatpush1.msra.mxu0 0.0
    %1567 = vmatprep.subr.mxu0 0.0
    %1568 = vmatpush1.msra.mxu0 0.0
    %1569 = vmatprep.subr.mxu0 0.0
    %1570 = vmatpush1.msra.mxu0 0.0
    %1571 = vmatprep.subr.mxu0 0.0
    %1572 = vmatpush1.msra.mxu0 0.0
    %1573 = vmatprep.subr.mxu0 0.0
    %1574 = vmatpush1.msra.mxu0 0.0
    %1575 = vmatprep.subr.mxu0 0.0
    %1576 = vmatpush1.msra.mxu0 0.0
    %1577 = vmatprep.subr.mxu0 0.0
    %1578 = vmatpush1.msra.mxu0 0.0
    %1579 = vmatprep.subr.mxu0 0.0
    %1580 = vmatpush1.msra.mxu0 0.0
    %1581 = vmatprep.subr.mxu0 0.0
    %1582 = vmatpush1.msra.mxu0 0.0
    %1583 = vmatprep.subr.mxu0 0.0
    %1584 = vmatpush1.msra.mxu0 0.0
    %1585 = vmatprep.subr.mxu0 0.0
    %1586 = vmatpush1.msra.mxu0 0.0
    %1587 = vmatprep.subr.mxu0 0.0
    %1588 = vmatpush1.msra.mxu0 0.0
    %1589 = vmatprep.subr.mxu0 0.0
    %1590 = vmatpush1.msra.mxu0 0.0
    %1591 = vmatprep.subr.mxu0 0.0
    %1592 = vmatpush1.msra.mxu0 0.0
    %1593 = vmatprep.subr.mxu0 0.0
    %1594 = vmatpush1.msra.mxu0 0.0
    %1595 = vmatprep.subr.mxu0 0.0
    %1596 = vmatpush1.msra.mxu0 0.0
    %1597 = vmatprep.subr.mxu0 0.0
    %1598 = vmatpush1.msra.mxu0 0.0
    %1599 = vmatprep.subr.mxu0 0.0
    %1600 = vmatpush1.msra.mxu0 0.0
    %1601 = vmatprep.mubr.f32.mxu0 0.0
    %1602 = vmatmul.mubr.f32.gmra.mrb[0].mxu0 %v1532
    %v1603 = vpop.f32.mrb[0].mxu0
    %v1604 = vadd.f32 0.0, %v1603
    %v1605 = vpop.f32.mrb[0].mxu0
    %1606 = vmatprep.mubr.f32.mxu0 0.0
    %1607 = vmatmul.mubr.f32.gmra.mrb[0].mxu0 %v1535
    %v1608 = vpop.f32.mrb[0].mxu0
    %v1609 = vadd.f32 0.0, %v1608
    %v1610 = vpop.f32.mrb[0].mxu0
    %1611 = vdwg.mxu0
    %v1612 = vsel %vm308, %v1522, 0.0
    %1613 = vadd.xlane.f32.xlu0 %v1612
    %v1614 = vpop.xlane.xlu0 %1613
    %v1615 = vsel %vm308, %v1524, 0.0
    %1616 = vadd.xlane.f32.xlu0 %v1615
    %v1617 = vpop.xlane.xlu0 %1616
    %v1618 = vrcp.pop %v1614
    %v1619 = vmul.f32 %v1604, %v1618
    %v1620 = vrcp.pop %v1617
    %v1621 = vmul.f32 %v1609, %v1620
    %v1623 = vsel %vm308, %v1619, 0
    %v1626 = vsel %vm308, %v1621, 0
    %1628 = vmatprep.subr.mxu0 0.0
    %1629 = vmatpush1.msra.mxu0 %v1141
    %1630 = vmatprep.subr.mxu0 0.0
    %1631 = vmatpush1.msra.mxu0 %v1142
    %1632 = vmatprep.subr.mxu0 0.0
    %1633 = vmatpush1.msra.mxu0 0.0
    %1634 = vmatprep.subr.mxu0 0.0
    %1635 = vmatpush1.msra.mxu0 0.0
    %1636 = vmatprep.subr.mxu0 0.0
    %1637 = vmatpush1.msra.mxu0 0.0
    %1638 = vmatprep.subr.mxu0 0.0
    %1639 = vmatpush1.msra.mxu0 0.0
    %1640 = vmatprep.subr.mxu0 0.0
    %1641 = vmatpush1.msra.mxu0 0.0
    %1642 = vmatprep.subr.mxu0 0.0
    %1643 = vmatpush1.msra.mxu0 0.0
    %1644 = vmatprep.subr.mxu0 0.0
    %1645 = vmatpush1.msra.mxu0 0.0
    %1646 = vmatprep.subr.mxu0 0.0
    %1647 = vmatpush1.msra.mxu0 0.0
    %1648 = vmatprep.subr.mxu0 0.0
    %1649 = vmatpush1.msra.mxu0 0.0
    %1650 = vmatprep.subr.mxu0 0.0
    %1651 = vmatpush1.msra.mxu0 0.0
    %1652 = vmatprep.subr.mxu0 0.0
    %1653 = vmatpush1.msra.mxu0 0.0
    %1654 = vmatprep.subr.mxu0 0.0
    %1655 = vmatpush1.msra.mxu0 0.0
    %1656 = vmatprep.subr.mxu0 0.0
    %1657 = vmatpush1.msra.mxu0 0.0
    %1658 = vmatprep.subr.mxu0 0.0
    %1659 = vmatpush1.msra.mxu0 0.0
    %1660 = vmatprep.subr.mxu0 0.0
    %1661 = vmatpush1.msra.mxu0 0.0
    %1662 = vmatprep.subr.mxu0 0.0
    %1663 = vmatpush1.msra.mxu0 0.0
    %1664 = vmatprep.subr.mxu0 0.0
    %1665 = vmatpush1.msra.mxu0 0.0
    %1666 = vmatprep.subr.mxu0 0.0
    %1667 = vmatpush1.msra.mxu0 0.0
    %1668 = vmatprep.subr.mxu0 0.0
    %1669 = vmatpush1.msra.mxu0 0.0
    %1670 = vmatprep.subr.mxu0 0.0
    %1671 = vmatpush1.msra.mxu0 0.0
    %1672 = vmatprep.subr.mxu0 0.0
    %1673 = vmatpush1.msra.mxu0 0.0
    %1674 = vmatprep.subr.mxu0 0.0
    %1675 = vmatpush1.msra.mxu0 0.0
    %1676 = vmatprep.subr.mxu0 0.0
    %1677 = vmatpush1.msra.mxu0 0.0
    %1678 = vmatprep.subr.mxu0 0.0
    %1679 = vmatpush1.msra.mxu0 0.0
    %1680 = vmatprep.subr.mxu0 0.0
    %1681 = vmatpush1.msra.mxu0 0.0
    %1682 = vmatprep.subr.mxu0 0.0
    %1683 = vmatpush1.msra.mxu0 0.0
    %1684 = vmatprep.subr.mxu0 0.0
    %1685 = vmatpush1.msra.mxu0 0.0
    %1686 = vmatprep.subr.mxu0 0.0
    %1687 = vmatpush1.msra.mxu0 0.0
    %1688 = vmatprep.subr.mxu0 0.0
    %1689 = vmatpush1.msra.mxu0 0.0
    %1690 = vmatprep.subr.mxu0 0.0
    %1691 = vmatpush1.msra.mxu0 0.0
    %1692 = vmatprep.mubr.f32.mxu0 0.0
    %1693 = vmatmul.mubr.f32.gmra.mrb[0].mxu0 %v1623
    %v1694 = vpop.f32.mrb[0].mxu0
    %v1695 = vadd.f32 0.0, %v1694
    %v1696 = vpop.f32.mrb[0].mxu0
    %1697 = vmatprep.mubr.f32.mxu0 0.0
    %1698 = vmatmul.mubr.f32.gmra.mrb[0].mxu0 %v1626
    %v1699 = vpop.f32.mrb[0].mxu0
    %v1700 = vadd.f32 0.0, %v1699
    %v1701 = vpop.f32.mrb[0].mxu0
    %1702 = vdwg.mxu0
    %v1704 = vsel %vm308, %v1419, 0
    %v1707 = vsel %vm308, %v1421, 0
    %1709 = vmatprep.subr.mxu0 0.0
    %1710 = vmatpush1.msra.mxu0 %v1139
    %1711 = vmatprep.subr.mxu0 0.0
    %1712 = vmatpush1.msra.mxu0 %v1140
    %1713 = vmatprep.subr.mxu0 0.0
    %1714 = vmatpush1.msra.mxu0 0.0
    %1715 = vmatprep.subr.mxu0 0.0
    %1716 = vmatpush1.msra.mxu0 0.0
    %1717 = vmatprep.subr.mxu0 0.0
    %1718 = vmatpush1.msra.mxu0 0.0
    %1719 = vmatprep.subr.mxu0 0.0
    %1720 = vmatpush1.msra.mxu0 0.0
    %1721 = vmatprep.subr.mxu0 0.0
    %1722 = vmatpush1.msra.mxu0 0.0
    %1723 = vmatprep.subr.mxu0 0.0
    %1724 = vmatpush1.msra.mxu0 0.0
    %1725 = vmatprep.subr.mxu0 0.0
    %1726 = vmatpush1.msra.mxu0 0.0
    %1727 = vmatprep.subr.mxu0 0.0
    %1728 = vmatpush1.msra.mxu0 0.0
    %1729 = vmatprep.subr.mxu0 0.0
    %1730 = vmatpush1.msra.mxu0 0.0
    %1731 = vmatprep.subr.mxu0 0.0
    %1732 = vmatpush1.msra.mxu0 0.0
    %1733 = vmatprep.subr.mxu0 0.0
    %1734 = vmatpush1.msra.mxu0 0.0
    %1735 = vmatprep.subr.mxu0 0.0
    %1736 = vmatpush1.msra.mxu0 0.0
    %1737 = vmatprep.subr.mxu0 0.0
    %1738 = vmatpush1.msra.mxu0 0.0
    %1739 = vmatprep.subr.mxu0 0.0
    %1740 = vmatpush1.msra.mxu0 0.0
    %1741 = vmatprep.subr.mxu0 0.0
    %1742 = vmatpush1.msra.mxu0 0.0
    %1743 = vmatprep.subr.mxu0 0.0
    %1744 = vmatpush1.msra.mxu0 0.0
    %1745 = vmatprep.subr.mxu0 0.0
    %1746 = vmatpush1.msra.mxu0 0.0
    %1747 = vmatprep.subr.mxu0 0.0
    %1748 = vmatpush1.msra.mxu0 0.0
    %1749 = vmatprep.subr.mxu0 0.0
    %1750 = vmatpush1.msra.mxu0 0.0
    %1751 = vmatprep.subr.mxu0 0.0
    %1752 = vmatpush1.msra.mxu0 0.0
    %1753 = vmatprep.subr.mxu0 0.0
    %1754 = vmatpush1.msra.mxu0 0.0
    %1755 = vmatprep.subr.mxu0 0.0
    %1756 = vmatpush1.msra.mxu0 0.0
    %1757 = vmatprep.subr.mxu0 0.0
    %1758 = vmatpush1.msra.mxu0 0.0
    %1759 = vmatprep.subr.mxu0 0.0
    %1760 = vmatpush1.msra.mxu0 0.0
    %1761 = vmatprep.subr.mxu0 0.0
    %1762 = vmatpush1.msra.mxu0 0.0
    %1763 = vmatprep.subr.mxu0 0.0
    %1764 = vmatpush1.msra.mxu0 0.0
    %1765 = vmatprep.subr.mxu0 0.0
    %1766 = vmatpush1.msra.mxu0 0.0
    %1767 = vmatprep.subr.mxu0 0.0
    %1768 = vmatpush1.msra.mxu0 0.0
    %1769 = vmatprep.subr.mxu0 0.0
    %1770 = vmatpush1.msra.mxu0 0.0
    %1771 = vmatprep.subr.mxu0 0.0
    %1772 = vmatpush1.msra.mxu0 0.0
    %1773 = vmatprep.mubr.f32.mxu0 0.0
    %1774 = vmatmul.mubr.f32.gmra.mrb[0].mxu0 %v1704
    %v1775 = vpop.f32.mrb[0].mxu0
    %v1776 = vadd.f32 %v1695, %v1775
    %v1777 = vpop.f32.mrb[0].mxu0
    %1778 = vmatprep.mubr.f32.mxu0 0.0
    %1779 = vmatmul.mubr.f32.gmra.mrb[0].mxu0 %v1707
    %v1780 = vpop.f32.mrb[0].mxu0
    %v1781 = vadd.f32 %v1700, %v1780
    %v1782 = vpop.f32.mrb[0].mxu0
    %1783 = vdwg.mxu0
    %v1784 = vadd.f32 %v1776, %v1129
    %v1785 = vadd.f32 %v1781, %v1130
    %v1786 = vsel %vm172, %v1784, 0.0
    %1787 = vadd.xlane.f32.xlu0 %v1786
    %v1788 = vpop.xlane.xlu0 %1787
    %v1789 = vsel %vm172, %v1785, 0.0
    %1790 = vadd.xlane.f32.xlu0 %v1789
    %v1791 = vpop.xlane.xlu0 %1790
    %v1792 = vmul.f32 %v1788, %v179
    %v1793 = vmul.f32 %v1791, %v179
    %v1794 = vsub.f32 %v1784, %v1792
    %v1795 = vsub.f32 %v1785, %v1793
    %v1796 = vmul.f32 %v1794, %v1794
    %v1797 = vmul.f32 %v1795, %v1795
    %v1798 = vsel %vm172, %v1796, 0.0
    %1799 = vadd.xlane.f32.xlu0 %v1798
    %v1800 = vpop.xlane.xlu0 %1799
    %v1801 = vsel %vm172, %v1797, 0.0
    %1802 = vadd.xlane.f32.xlu0 %v1801
    %v1803 = vpop.xlane.xlu0 %1802
    %v1804 = vmul.f32 %v1800, %v179
    %v1805 = vmul.f32 %v1803, %v179
    %v1806 = vadd.f32 %v1804, 1e-06
    %v1807 = vadd.f32 %v1805, 1e-06
    %v1808 = vrsqrt.pop %v1806
    %v1809 = vrsqrt.pop %v1807
    %v1810 = vmul.f32 %v1794, %v1808
    %v1811 = vmul.f32 %v1795, %v1809
    %v1812 = vlaneseq
    %v1813 = vshrl.u32 %v1812, 7
    %v1814 = vsub.s32 0, %v1813
    %v1815 = vrot.slane %v1132, %v1814
    %v1816 = vmul.f32 %v1810, %v1815
    %v1817 = vmul.f32 %v1811, %v1815
    %v1818 = vlaneseq
    %v1819 = vshrl.u32 %v1818, 7
    %v1820 = vsub.s32 1, %v1819
    %v1821 = vrot.slane %v1132, %v1820
    %v1822 = vadd.f32 %v1816, %v1821
    %v1823 = vadd.f32 %v1817, %v1821
    %s1824 = scalar_lea.vmem %s17, 32
    %v1825 = vld [vmem:[%s1824] sm:$0xff]
    %v1826 = vld [vmem:[%s1824 + $0x8] sm:$0xff]
    %v1827 = vld [vmem:[%s1824 + $0x10] sm:$0xff]
    %v1828 = vld [vmem:[%s1824 + $0x18] sm:$0xff]
    %s1829 = scalar_lea.vmem %s19, 1
    %v1830 = vld [vmem:[%s1829] sm:$0x1]
    %v1832 = vlaneseq
    %v1833 = vshrl.u32 %v1832, 7
    %v1834 = vsub.s32 0, %v1833
    %v1835 = vrot.slane %v1830, %v1834
    %v1838 = vsel %vm172, %v1822, 0
    %v1841 = vsel %vm172, %v1823, 0
    %1843 = vmatprep.subr.mxu0 0.0
    %1844 = vmatpush1.msra.mxu0 %v1825
    %1845 = vmatprep.subr.mxu0 0.0
    %1846 = vmatpush1.msra.mxu0 %v1826
    %1847 = vmatprep.subr.mxu0 0.0
    %1848 = vmatpush1.msra.mxu0 %v1827
    %1849 = vmatprep.subr.mxu0 0.0
    %1850 = vmatpush1.msra.mxu0 %v1828
    %1851 = vmatprep.subr.mxu0 0.0
    %1852 = vmatpush1.msra.mxu0 0.0
    %1853 = vmatprep.subr.mxu0 0.0
    %1854 = vmatpush1.msra.mxu0 0.0
    %1855 = vmatprep.subr.mxu0 0.0
    %1856 = vmatpush1.msra.mxu0 0.0
    %1857 = vmatprep.subr.mxu0 0.0
    %1858 = vmatpush1.msra.mxu0 0.0
    %1859 = vmatprep.subr.mxu0 0.0
    %1860 = vmatpush1.msra.mxu0 0.0
    %1861 = vmatprep.subr.mxu0 0.0
    %1862 = vmatpush1.msra.mxu0 0.0
    %1863 = vmatprep.subr.mxu0 0.0
    %1864 = vmatpush1.msra.mxu0 0.0
    %1865 = vmatprep.subr.mxu0 0.0
    %1866 = vmatpush1.msra.mxu0 0.0
    %1867 = vmatprep.subr.mxu0 0.0
    %1868 = vmatpush1.msra.mxu0 0.0
    %1869 = vmatprep.subr.mxu0 0.0
    %1870 = vmatpush1.msra.mxu0 0.0
    %1871 = vmatprep.subr.mxu0 0.0
    %1872 = vmatpush1.msra.mxu0 0.0
    %1873 = vmatprep.subr.mxu0 0.0
    %1874 = vmatpush1.msra.mxu0 0.0
    %1875 = vmatprep.subr.mxu0 0.0
    %1876 = vmatpush1.msra.mxu0 0.0
    %1877 = vmatprep.subr.mxu0 0.0
    %1878 = vmatpush1.msra.mxu0 0.0
    %1879 = vmatprep.subr.mxu0 0.0
    %1880 = vmatpush1.msra.mxu0 0.0
    %1881 = vmatprep.subr.mxu0 0.0
    %1882 = vmatpush1.msra.mxu0 0.0
    %1883 = vmatprep.subr.mxu0 0.0
    %1884 = vmatpush1.msra.mxu0 0.0
    %1885 = vmatprep.subr.mxu0 0.0
    %1886 = vmatpush1.msra.mxu0 0.0
    %1887 = vmatprep.subr.mxu0 0.0
    %1888 = vmatpush1.msra.mxu0 0.0
    %1889 = vmatprep.subr.mxu0 0.0
    %1890 = vmatpush1.msra.mxu0 0.0
    %1891 = vmatprep.subr.mxu0 0.0
    %1892 = vmatpush1.msra.mxu0 0.0
    %1893 = vmatprep.subr.mxu0 0.0
    %1894 = vmatpush1.msra.mxu0 0.0
    %1895 = vmatprep.subr.mxu0 0.0
    %1896 = vmatpush1.msra.mxu0 0.0
    %1897 = vmatprep.subr.mxu0 0.0
    %1898 = vmatpush1.msra.mxu0 0.0
    %1899 = vmatprep.subr.mxu0 0.0
    %1900 = vmatpush1.msra.mxu0 0.0
    %1901 = vmatprep.subr.mxu0 0.0
    %1902 = vmatpush1.msra.mxu0 0.0
    %1903 = vmatprep.subr.mxu0 0.0
    %1904 = vmatpush1.msra.mxu0 0.0
    %1905 = vmatprep.subr.mxu0 0.0
    %1906 = vmatpush1.msra.mxu0 0.0
    %1907 = vmatprep.mubr.f32.mxu0 0.0
    %1908 = vmatmul.mubr.f32.gmra.mrb[0].mxu0 %v1838
    %v1909 = vpop.f32.mrb[0].mxu0
    %v1910 = vadd.f32 %v1835, %v1909
    %v1911 = vpop.f32.mrb[0].mxu0
    %1912 = vmatprep.mubr.f32.mxu0 0.0
    %1913 = vmatmul.mubr.f32.gmra.mrb[0].mxu0 %v1841
    %v1914 = vpop.f32.mrb[0].mxu0
    %v1915 = vadd.f32 %v1835, %v1914
    %v1916 = vpop.f32.mrb[0].mxu0
    %1917 = vdwg.mxu0
    %v1918 = vmax.f32 %v1910, 0.0
    %v1919 = vmax.f32 %v1915, 0.0
    %s1920 = scalar_lea.vmem %s21, 64
    %v1921 = vld [vmem:[%s1920] sm:$0xff]
    %v1922 = vld [vmem:[%s1920 + $0x8] sm:$0xff]
    %v1923 = vld [vmem:[%s1920 + $0x10] sm:$0xff]
    %v1924 = vld [vmem:[%s1920 + $0x18] sm:$0xff]
    %v1925 = vld [vmem:[%s1920 + $0x20] sm:$0xff]
    %v1926 = vld [vmem:[%s1920 + $0x28] sm:$0xff]
    %v1927 = vld [vmem:[%s1920 + $0x30] sm:$0xff]
    %v1928 = vld [vmem:[%s1920 + $0x38] sm:$0xff]
    %v1929 = vlaneseq
    %v1930 = vshrl.u32 %v1929, 7
    %v1931 = vsub.s32 2, %v1930
    %v1932 = vrot.slane %v1132, %v1931
    %v1934 = vsel %vm1009, %v1918, 0
    %v1937 = vsel %vm1009, %v1919, 0
    %1939 = vmatprep.subr.mxu0 0.0
    %1940 = vmatpush1.msra.mxu0 %v1921
    %1941 = vmatprep.subr.mxu0 0.0
    %1942 = vmatpush1.msra.mxu0 %v1922
    %1943 = vmatprep.subr.mxu0 0.0
    %1944 = vmatpush1.msra.mxu0 %v1923
    %1945 = vmatprep.subr.mxu0 0.0
    %1946 = vmatpush1.msra.mxu0 %v1924
    %1947 = vmatprep.subr.mxu0 0.0
    %1948 = vmatpush1.msra.mxu0 %v1925
    %1949 = vmatprep.subr.mxu0 0.0
    %1950 = vmatpush1.msra.mxu0 %v1926
    %1951 = vmatprep.subr.mxu0 0.0
    %1952 = vmatpush1.msra.mxu0 %v1927
    %1953 = vmatprep.subr.mxu0 0.0
    %1954 = vmatpush1.msra.mxu0 %v1928
    %1955 = vmatprep.subr.mxu0 0.0
    %1956 = vmatpush1.msra.mxu0 0.0
    %1957 = vmatprep.subr.mxu0 0.0
    %1958 = vmatpush1.msra.mxu0 0.0
    %1959 = vmatprep.subr.mxu0 0.0
    %1960 = vmatpush1.msra.mxu0 0.0
    %1961 = vmatprep.subr.mxu0 0.0
    %1962 = vmatpush1.msra.mxu0 0.0
    %1963 = vmatprep.subr.mxu0 0.0
    %1964 = vmatpush1.msra.mxu0 0.0
    %1965 = vmatprep.subr.mxu0 0.0
    %1966 = vmatpush1.msra.mxu0 0.0
    %1967 = vmatprep.subr.mxu0 0.0
    %1968 = vmatpush1.msra.mxu0 0.0
    %1969 = vmatprep.subr.mxu0 0.0
    %1970 = vmatpush1.msra.mxu0 0.0
    %1971 = vmatprep.subr.mxu0 0.0
    %1972 = vmatpush1.msra.mxu0 0.0
    %1973 = vmatprep.subr.mxu0 0.0
    %1974 = vmatpush1.msra.mxu0 0.0
    %1975 = vmatprep.subr.mxu0 0.0
    %1976 = vmatpush1.msra.mxu0 0.0
    %1977 = vmatprep.subr.mxu0 0.0
    %1978 = vmatpush1.msra.mxu0 0.0
    %1979 = vmatprep.subr.mxu0 0.0
    %1980 = vmatpush1.msra.mxu0 0.0
    %1981 = vmatprep.subr.mxu0 0.0
    %1982 = vmatpush1.msra.mxu0 0.0
    %1983 = vmatprep.subr.mxu0 0.0
    %1984 = vmatpush1.msra.mxu0 0.0
    %1985 = vmatprep.subr.mxu0 0.0
    %1986 = vmatpush1.msra.mxu0 0.0
    %1987 = vmatprep.subr.mxu0 0.0
    %1988 = vmatpush1.msra.mxu0 0.0
    %1989 = vmatprep.subr.mxu0 0.0
    %1990 = vmatpush1.msra.mxu0 0.0
    %1991 = vmatprep.subr.mxu0 0.0
    %1992 = vmatpush1.msra.mxu0 0.0
    %1993 = vmatprep.subr.mxu0 0.0
    %1994 = vmatpush1.msra.mxu0 0.0
    %1995 = vmatprep.subr.mxu0 0.0
    %1996 = vmatpush1.msra.mxu0 0.0
    %1997 = vmatprep.subr.mxu0 0.0
    %1998 = vmatpush1.msra.mxu0 0.0
    %1999 = vmatprep.subr.mxu0 0.0
    %2000 = vmatpush1.msra.mxu0 0.0
    %2001 = vmatprep.subr.mxu0 0.0
    %2002 = vmatpush1.msra.mxu0 0.0
    %2003 = vmatprep.mubr.f32.mxu0 0.0
    %2004 = vmatmul.mubr.f32.gmra.mrb[0].mxu0 %v1934
    %v2005 = vpop.f32.mrb[0].mxu0
    %v2006 = vadd.f32 %v1932, %v2005
    %v2007 = vpop.f32.mrb[0].mxu0
    %2008 = vmatprep.mubr.f32.mxu0 0.0
    %2009 = vmatmul.mubr.f32.gmra.mrb[0].mxu0 %v1937
    %v2010 = vpop.f32.mrb[0].mxu0
    %v2011 = vadd.f32 %v1932, %v2010
    %v2012 = vpop.f32.mrb[0].mxu0
    %2013 = vdwg.mxu0
    %v2014 = vadd.f32 %v2006, %v1822
    %v2015 = vadd.f32 %v2011, %v1823
    %v2016 = vsel %vm172, %v2014, 0.0
    %2017 = vadd.xlane.f32.xlu0 %v2016
    %v2018 = vpop.xlane.xlu0 %2017
    %v2019 = vsel %vm172, %v2015, 0.0
    %2020 = vadd.xlane.f32.xlu0 %v2019
    %v2021 = vpop.xlane.xlu0 %2020
    %v2022 = vmul.f32 %v2018, %v179
    %v2023 = vmul.f32 %v2021, %v179
    %v2024 = vsub.f32 %v2014, %v2022
    %v2025 = vsub.f32 %v2015, %v2023
    %v2026 = vmul.f32 %v2024, %v2024
    %v2027 = vmul.f32 %v2025, %v2025
    %v2028 = vsel %vm172, %v2026, 0.0
    %2029 = vadd.xlane.f32.xlu0 %v2028
    %v2030 = vpop.xlane.xlu0 %2029
    %v2031 = vsel %vm172, %v2027, 0.0
    %2032 = vadd.xlane.f32.xlu0 %v2031
    %v2033 = vpop.xlane.xlu0 %2032
    %v2034 = vmul.f32 %v2030, %v179
    %v2035 = vmul.f32 %v2033, %v179
    %v2036 = vadd.f32 %v2034, 1e-06
    %v2037 = vadd.f32 %v2035, 1e-06
    %v2038 = vrsqrt.pop %v2036
    %v2039 = vrsqrt.pop %v2037
    %v2040 = vmul.f32 %v2024, %v2038
    %v2041 = vmul.f32 %v2025, %v2039
    %v2042 = vlaneseq
    %v2043 = vshrl.u32 %v2042, 7
    %v2044 = vsub.s32 3, %v2043
    %v2045 = vrot.slane %v1132, %v2044
    %v2046 = vmul.f32 %v2040, %v2045
    %v2047 = vmul.f32 %v2041, %v2045
    %v2048 = vlaneseq
    %v2049 = vshrl.u32 %v2048, 7
    %v2050 = vsub.s32 4, %v2049
    %v2051 = vrot.slane %v1132, %v2050
    %v2052 = vadd.f32 %v2046, %v2051
    %v2053 = vadd.f32 %v2047, %v2051
    %2054 = vst.msk [vmem:[#allocation2] sm:$0xff] %vm172, %v2052
    %2055 = vst.msk [vmem:[#allocation2 + $0x8] sm:$0xff] %vm172, %v2053
    %v2057 = vrot.slane %v2053, 7
    %vm2059 = vcmask 1040384
    %v2060 = vsel %vm2059, %v2052, %v2057
    %v2061 = vld [vmem:[%s41] sm:$0xff]
    %v2062 = vld [vmem:[%s41 + $0x8] sm:$0xff]
    %v2063 = vld [vmem:[%s41 + $0x10] sm:$0xff]
    %v2064 = vld [vmem:[%s41 + $0x18] sm:$0xff]
    %v2065 = vld [vmem:[%s43] sm:$0x1]
    %v2067 = vlaneseq
    %v2068 = vshrl.u32 %v2067, 7
    %v2069 = vsub.s32 0, %v2068
    %v2070 = vrot.slane %v2065, %v2069
    %v2073 = vsel %vm172, %v2060, 0
    %2075 = vmatprep.subr.mxu0 0.0
    %2076 = vmatpush1.msra.mxu0 %v2061
    %2077 = vmatprep.subr.mxu0 0.0
    %2078 = vmatpush1.msra.mxu0 %v2062
    %2079 = vmatprep.subr.mxu0 0.0
    %2080 = vmatpush1.msra.mxu0 %v2063
    %2081 = vmatprep.subr.mxu0 0.0
    %2082 = vmatpush1.msra.mxu0 %v2064
    %2083 = vmatprep.subr.mxu0 0.0
    %2084 = vmatpush1.msra.mxu0 0.0
    %2085 = vmatprep.subr.mxu0 0.0
    %2086 = vmatpush1.msra.mxu0 0.0
    %2087 = vmatprep.subr.mxu0 0.0
    %2088 = vmatpush1.msra.mxu0 0.0
    %2089 = vmatprep.subr.mxu0 0.0
    %2090 = vmatpush1.msra.mxu0 0.0
    %2091 = vmatprep.subr.mxu0 0.0
    %2092 = vmatpush1.msra.mxu0 0.0
    %2093 = vmatprep.subr.mxu0 0.0
    %2094 = vmatpush1.msra.mxu0 0.0
    %2095 = vmatprep.subr.mxu0 0.0
    %2096 = vmatpush1.msra.mxu0 0.0
    %2097 = vmatprep.subr.mxu0 0.0
    %2098 = vmatpush1.msra.mxu0 0.0
    %2099 = vmatprep.subr.mxu0 0.0
    %2100 = vmatpush1.msra.mxu0 0.0
    %2101 = vmatprep.subr.mxu0 0.0
    %2102 = vmatpush1.msra.mxu0 0.0
    %2103 = vmatprep.subr.mxu0 0.0
    %2104 = vmatpush1.msra.mxu0 0.0
    %2105 = vmatprep.subr.mxu0 0.0
    %2106 = vmatpush1.msra.mxu0 0.0
    %2107 = vmatprep.subr.mxu0 0.0
    %2108 = vmatpush1.msra.mxu0 0.0
    %2109 = vmatprep.subr.mxu0 0.0
    %2110 = vmatpush1.msra.mxu0 0.0
    %2111 = vmatprep.subr.mxu0 0.0
    %2112 = vmatpush1.msra.mxu0 0.0
    %2113 = vmatprep.subr.mxu0 0.0
    %2114 = vmatpush1.msra.mxu0 0.0
    %2115 = vmatprep.subr.mxu0 0.0
    %2116 = vmatpush1.msra.mxu0 0.0
    %2117 = vmatprep.subr.mxu0 0.0
    %2118 = vmatpush1.msra.mxu0 0.0
    %2119 = vmatprep.subr.mxu0 0.0
    %2120 = vmatpush1.msra.mxu0 0.0
    %2121 = vmatprep.subr.mxu0 0.0
    %2122 = vmatpush1.msra.mxu0 0.0
    %2123 = vmatprep.subr.mxu0 0.0
    %2124 = vmatpush1.msra.mxu0 0.0
    %2125 = vmatprep.subr.mxu0 0.0
    %2126 = vmatpush1.msra.mxu0 0.0
    %2127 = vmatprep.subr.mxu0 0.0
    %2128 = vmatpush1.msra.mxu0 0.0
    %2129 = vmatprep.subr.mxu0 0.0
    %2130 = vmatpush1.msra.mxu0 0.0
    %2131 = vmatprep.subr.mxu0 0.0
    %2132 = vmatpush1.msra.mxu0 0.0
    %2133 = vmatprep.subr.mxu0 0.0
    %2134 = vmatpush1.msra.mxu0 0.0
    %2135 = vmatprep.subr.mxu0 0.0
    %2136 = vmatpush1.msra.mxu0 0.0
    %2137 = vmatprep.subr.mxu0 0.0
    %2138 = vmatpush1.msra.mxu0 0.0
    %2139 = vmatprep.mubr.f32.mxu0 0.0
    %2140 = vmatmul.mubr.f32.gmra.mrb[0].mxu0 %v2073
    %v2141 = vpop.f32.mrb[0].mxu0
    %v2142 = vadd.f32 %v2070, %v2141
    %v2143 = vpop.f32.mrb[0].mxu0
    %2144 = vdwg.mxu0
    %v2145 = vmul.f32 %v2142, 0.5
    %v2146 = vmul.f32 %v2142, 0.70710677
    %v2147 = vand.u32 2147483647, %v2146
    %v2148 = vmul.f32 %v2147, 0.3275911
    %v2149 = vadd.f32 %v2148, 1.0
    %v2150 = vrcp.pop %v2149
    %v2151 = vmul.f32 1.0, %v2150
    %v2152 = vmul.f32 %v2151, 1.0614054
    %v2153 = vadd.f32 %v2152, -1.4531521
    %v2154 = vmul.f32 %v2153, %v2151
    %v2155 = vadd.f32 %v2154, 1.4214138
    %v2156 = vmul.f32 %v2155, %v2151
    %v2157 = vadd.f32 %v2156, -0.28449672
    %v2158 = vmul.f32 %v2157, %v2151
    %v2159 = vadd.f32 %v2158, 0.2548296
    %v2160 = vmul.f32 %v2159, %v2151
    %v2161 = vsub.f32 0.0, %v2147
    %v2162 = vmul.f32 %v2161, %v2147
    %v2163 = vmul.f32 %v2162, 1.442695
    %v2164 = vpow.pop %v2163
    %v2165 = vmul.f32 %v2160, %v2164
    %v2166 = vsub.f32 1.0, %v2165
    %vm2167 = vcmp.ge.f32.partialorder %v2146, 0.0
    %v2168 = vsub.f32 0.0, %v2166
    %v2169 = vsel %vm2167, %v2166, %v2168
    %v2170 = vadd.f32 %v2169, 1.0
    %v2171 = vmul.f32 %v2145, %v2170
    %v2172 = vld [vmem:[%s45] sm:$0xff]
    %v2173 = vld [vmem:[%s45 + $0x8] sm:$0xff]
    %v2174 = vld [vmem:[%s47] sm:$0x1]
    %v2176 = vlaneseq
    %v2177 = vshrl.u32 %v2176, 7
    %v2178 = vsub.s32 0, %v2177
    %v2179 = vrot.slane %v2174, %v2178
    %v2182 = vsel %vm308, %v2171, 0
    %2184 = vmatprep.subr.mxu0 0.0
    %2185 = vmatpush1.msra.mxu0 %v2172
    %2186 = vmatprep.subr.mxu0 0.0
    %2187 = vmatpush1.msra.mxu0 %v2173
    %2188 = vmatprep.subr.mxu0 0.0
    %2189 = vmatpush1.msra.mxu0 0.0
    %2190 = vmatprep.subr.mxu0 0.0
    %2191 = vmatpush1.msra.mxu0 0.0
    %2192 = vmatprep.subr.mxu0 0.0
    %2193 = vmatpush1.msra.mxu0 0.0
    %2194 = vmatprep.subr.mxu0 0.0
    %2195 = vmatpush1.msra.mxu0 0.0
    %2196 = vmatprep.subr.mxu0 0.0
    %2197 = vmatpush1.msra.mxu0 0.0
    %2198 = vmatprep.subr.mxu0 0.0
    %2199 = vmatpush1.msra.mxu0 0.0
    %2200 = vmatprep.subr.mxu0 0.0
    %2201 = vmatpush1.msra.mxu0 0.0
    %2202 = vmatprep.subr.mxu0 0.0
    %2203 = vmatpush1.msra.mxu0 0.0
    %2204 = vmatprep.subr.mxu0 0.0
    %2205 = vmatpush1.msra.mxu0 0.0
    %2206 = vmatprep.subr.mxu0 0.0
    %2207 = vmatpush1.msra.mxu0 0.0
    %2208 = vmatprep.subr.mxu0 0.0
    %2209 = vmatpush1.msra.mxu0 0.0
    %2210 = vmatprep.subr.mxu0 0.0
    %2211 = vmatpush1.msra.mxu0 0.0
    %2212 = vmatprep.subr.mxu0 0.0
    %2213 = vmatpush1.msra.mxu0 0.0
    %2214 = vmatprep.subr.mxu0 0.0
    %2215 = vmatpush1.msra.mxu0 0.0
    %2216 = vmatprep.subr.mxu0 0.0
    %2217 = vmatpush1.msra.mxu0 0.0
    %2218 = vmatprep.subr.mxu0 0.0
    %2219 = vmatpush1.msra.mxu0 0.0
    %2220 = vmatprep.subr.mxu0 0.0
    %2221 = vmatpush1.msra.mxu0 0.0
    %2222 = vmatprep.subr.mxu0 0.0
    %2223 = vmatpush1.msra.mxu0 0.0
    %2224 = vmatprep.subr.mxu0 0.0
    %2225 = vmatpush1.msra.mxu0 0.0
    %2226 = vmatprep.subr.mxu0 0.0
    %2227 = vmatpush1.msra.mxu0 0.0
    %2228 = vmatprep.subr.mxu0 0.0
    %2229 = vmatpush1.msra.mxu0 0.0
    %2230 = vmatprep.subr.mxu0 0.0
    %2231 = vmatpush1.msra.mxu0 0.0
    %2232 = vmatprep.subr.mxu0 0.0
    %2233 = vmatpush1.msra.mxu0 0.0
    %2234 = vmatprep.subr.mxu0 0.0
    %2235 = vmatpush1.msra.mxu0 0.0
    %2236 = vmatprep.subr.mxu0 0.0
    %2237 = vmatpush1.msra.mxu0 0.0
    %2238 = vmatprep.subr.mxu0 0.0
    %2239 = vmatpush1.msra.mxu0 0.0
    %2240 = vmatprep.subr.mxu0 0.0
    %2241 = vmatpush1.msra.mxu0 0.0
    %2242 = vmatprep.subr.mxu0 0.0
    %2243 = vmatpush1.msra.mxu0 0.0
    %2244 = vmatprep.subr.mxu0 0.0
    %2245 = vmatpush1.msra.mxu0 0.0
    %2246 = vmatprep.subr.mxu0 0.0
    %2247 = vmatpush1.msra.mxu0 0.0
    %2248 = vmatprep.mubr.f32.mxu0 0.0
    %2249 = vmatmul.mubr.f32.gmra.mrb[0].mxu0 %v2182
    %v2250 = vpop.f32.mrb[0].mxu0
    %v2251 = vadd.f32 %v2179, %v2250
    %v2252 = vpop.f32.mrb[0].mxu0
    %2253 = vdwg.mxu0
    %v2254 = vld [vmem:[%s49] sm:$0xff]
    %v2255 = vld [vmem:[%s49 + $0x8] sm:$0xff]
    %v2256 = vld [vmem:[%s51] sm:$0x1]
    %v2258 = vlaneseq
    %v2259 = vshrl.u32 %v2258, 7
    %v2260 = vsub.s32 0, %v2259
    %v2261 = vrot.slane %v2256, %v2260
    %2263 = vmatprep.subr.mxu0 0.0
    %2264 = vmatpush1.msra.mxu0 %v2254
    %2265 = vmatprep.subr.mxu0 0.0
    %2266 = vmatpush1.msra.mxu0 %v2255
    %2267 = vmatprep.subr.mxu0 0.0
    %2268 = vmatpush1.msra.mxu0 0.0
    %2269 = vmatprep.subr.mxu0 0.0
    %2270 = vmatpush1.msra.mxu0 0.0
    %2271 = vmatprep.subr.mxu0 0.0
    %2272 = vmatpush1.msra.mxu0 0.0
    %2273 = vmatprep.subr.mxu0 0.0
    %2274 = vmatpush1.msra.mxu0 0.0
    %2275 = vmatprep.subr.mxu0 0.0
    %2276 = vmatpush1.msra.mxu0 0.0
    %2277 = vmatprep.subr.mxu0 0.0
    %2278 = vmatpush1.msra.mxu0 0.0
    %2279 = vmatprep.subr.mxu0 0.0
    %2280 = vmatpush1.msra.mxu0 0.0
    %2281 = vmatprep.subr.mxu0 0.0
    %2282 = vmatpush1.msra.mxu0 0.0
    %2283 = vmatprep.subr.mxu0 0.0
    %2284 = vmatpush1.msra.mxu0 0.0
    %2285 = vmatprep.subr.mxu0 0.0
    %2286 = vmatpush1.msra.mxu0 0.0
    %2287 = vmatprep.subr.mxu0 0.0
    %2288 = vmatpush1.msra.mxu0 0.0
    %2289 = vmatprep.subr.mxu0 0.0
    %2290 = vmatpush1.msra.mxu0 0.0
    %2291 = vmatprep.subr.mxu0 0.0
    %2292 = vmatpush1.msra.mxu0 0.0
    %2293 = vmatprep.subr.mxu0 0.0
    %2294 = vmatpush1.msra.mxu0 0.0
    %2295 = vmatprep.subr.mxu0 0.0
    %2296 = vmatpush1.msra.mxu0 0.0
    %2297 = vmatprep.subr.mxu0 0.0
    %2298 = vmatpush1.msra.mxu0 0.0
    %2299 = vmatprep.subr.mxu0 0.0
    %2300 = vmatpush1.msra.mxu0 0.0
    %2301 = vmatprep.subr.mxu0 0.0
    %2302 = vmatpush1.msra.mxu0 0.0
    %2303 = vmatprep.subr.mxu0 0.0
    %2304 = vmatpush1.msra.mxu0 0.0
    %2305 = vmatprep.subr.mxu0 0.0
    %2306 = vmatpush1.msra.mxu0 0.0
    %2307 = vmatprep.subr.mxu0 0.0
    %2308 = vmatpush1.msra.mxu0 0.0
    %2309 = vmatprep.subr.mxu0 0.0
    %2310 = vmatpush1.msra.mxu0 0.0
    %2311 = vmatprep.subr.mxu0 0.0
    %2312 = vmatpush1.msra.mxu0 0.0
    %2313 = vmatprep.subr.mxu0 0.0
    %2314 = vmatpush1.msra.mxu0 0.0
    %2315 = vmatprep.subr.mxu0 0.0
    %2316 = vmatpush1.msra.mxu0 0.0
    %2317 = vmatprep.subr.mxu0 0.0
    %2318 = vmatpush1.msra.mxu0 0.0
    %2319 = vmatprep.subr.mxu0 0.0
    %2320 = vmatpush1.msra.mxu0 0.0
    %2321 = vmatprep.subr.mxu0 0.0
    %2322 = vmatpush1.msra.mxu0 0.0
    %2323 = vmatprep.subr.mxu0 0.0
    %2324 = vmatpush1.msra.mxu0 0.0
    %2325 = vmatprep.subr.mxu0 0.0
    %2326 = vmatpush1.msra.mxu0 0.0
    %2327 = vmatprep.mubr.f32.mxu0 0.0
    %2328 = vmatmul.mubr.f32.gmra.mrb[0].mxu0 %v2182
    %v2329 = vpop.f32.mrb[0].mxu0
    %v2330 = vadd.f32 %v2261, %v2329
    %v2331 = vpop.f32.mrb[0].mxu0
    %2332 = vdwg.mxu0
    %v2333 = vld [vmem:[%s9] sm:$0x3]
    %v2334 = vmul.f32 %v2330, 0.5
    %v2335 = vmul.f32 %v2334, 1.442695
    %v2336 = vpow.pop %v2335
    %v2337 = vmul.f32 %v2333, %v2336
    %v2338 = vadd.f32 %v2337, %v2251
    %v2339 = vld [vmem:[%s53] sm:$0xff]
    %v2340 = vld [vmem:[%s53 + $0x8] sm:$0xff]
    %v2341 = vld [vmem:[%s55] sm:$0x1]
    %v2343 = vlaneseq
    %v2344 = vshrl.u32 %v2343, 7
    %v2345 = vsub.s32 0, %v2344
    %v2346 = vrot.slane %v2341, %v2345
    %v2349 = vsel %vm308, %v2338, 0
    %2351 = vmatprep.subr.mxu0 0.0
    %2352 = vmatpush1.msra.mxu0 %v2339
    %2353 = vmatprep.subr.mxu0 0.0
    %2354 = vmatpush1.msra.mxu0 %v2340
    %2355 = vmatprep.subr.mxu0 0.0
    %2356 = vmatpush1.msra.mxu0 0.0
    %2357 = vmatprep.subr.mxu0 0.0
    %2358 = vmatpush1.msra.mxu0 0.0
    %2359 = vmatprep.subr.mxu0 0.0
    %2360 = vmatpush1.msra.mxu0 0.0
    %2361 = vmatprep.subr.mxu0 0.0
    %2362 = vmatpush1.msra.mxu0 0.0
    %2363 = vmatprep.subr.mxu0 0.0
    %2364 = vmatpush1.msra.mxu0 0.0
    %2365 = vmatprep.subr.mxu0 0.0
    %2366 = vmatpush1.msra.mxu0 0.0
    %2367 = vmatprep.subr.mxu0 0.0
    %2368 = vmatpush1.msra.mxu0 0.0
    %2369 = vmatprep.subr.mxu0 0.0
    %2370 = vmatpush1.msra.mxu0 0.0
    %2371 = vmatprep.subr.mxu0 0.0
    %2372 = vmatpush1.msra.mxu0 0.0
    %2373 = vmatprep.subr.mxu0 0.0
    %2374 = vmatpush1.msra.mxu0 0.0
    %2375 = vmatprep.subr.mxu0 0.0
    %2376 = vmatpush1.msra.mxu0 0.0
    %2377 = vmatprep.subr.mxu0 0.0
    %2378 = vmatpush1.msra.mxu0 0.0
    %2379 = vmatprep.subr.mxu0 0.0
    %2380 = vmatpush1.msra.mxu0 0.0
    %2381 = vmatprep.subr.mxu0 0.0
    %2382 = vmatpush1.msra.mxu0 0.0
    %2383 = vmatprep.subr.mxu0 0.0
    %2384 = vmatpush1.msra.mxu0 0.0
    %2385 = vmatprep.subr.mxu0 0.0
    %2386 = vmatpush1.msra.mxu0 0.0
    %2387 = vmatprep.subr.mxu0 0.0
    %2388 = vmatpush1.msra.mxu0 0.0
    %2389 = vmatprep.subr.mxu0 0.0
    %2390 = vmatpush1.msra.mxu0 0.0
    %2391 = vmatprep.subr.mxu0 0.0
    %2392 = vmatpush1.msra.mxu0 0.0
    %2393 = vmatprep.subr.mxu0 0.0
    %2394 = vmatpush1.msra.mxu0 0.0
    %2395 = vmatprep.subr.mxu0 0.0
    %2396 = vmatpush1.msra.mxu0 0.0
    %2397 = vmatprep.subr.mxu0 0.0
    %2398 = vmatpush1.msra.mxu0 0.0
    %2399 = vmatprep.subr.mxu0 0.0
    %2400 = vmatpush1.msra.mxu0 0.0
    %2401 = vmatprep.subr.mxu0 0.0
    %2402 = vmatpush1.msra.mxu0 0.0
    %2403 = vmatprep.subr.mxu0 0.0
    %2404 = vmatpush1.msra.mxu0 0.0
    %2405 = vmatprep.subr.mxu0 0.0
    %2406 = vmatpush1.msra.mxu0 0.0
    %2407 = vmatprep.subr.mxu0 0.0
    %2408 = vmatpush1.msra.mxu0 0.0
    %2409 = vmatprep.subr.mxu0 0.0
    %2410 = vmatpush1.msra.mxu0 0.0
    %2411 = vmatprep.subr.mxu0 0.0
    %2412 = vmatpush1.msra.mxu0 0.0
    %2413 = vmatprep.subr.mxu0 0.0
    %2414 = vmatpush1.msra.mxu0 0.0
    %2415 = vmatprep.mubr.f32.mxu0 0.0
    %2416 = vmatmul.mubr.f32.gmra.mrb[0].mxu0 %v2349
    %v2417 = vpop.f32.mrb[0].mxu0
    %v2418 = vadd.f32 %v2346, %v2417
    %v2419 = vpop.f32.mrb[0].mxu0
    %2420 = vdwg.mxu0
    %v2421 = vmul.f32 %v2418, 0.5
    %v2422 = vmul.f32 %v2418, 0.70710677
    %v2423 = vand.u32 2147483647, %v2422
    %v2424 = vmul.f32 %v2423, 0.3275911
    %v2425 = vadd.f32 %v2424, 1.0
    %v2426 = vrcp.pop %v2425
    %v2427 = vmul.f32 1.0, %v2426
    %v2428 = vmul.f32 %v2427, 1.0614054
    %v2429 = vadd.f32 %v2428, -1.4531521
    %v2430 = vmul.f32 %v2429, %v2427
    %v2431 = vadd.f32 %v2430, 1.4214138
    %v2432 = vmul.f32 %v2431, %v2427
    %v2433 = vadd.f32 %v2432, -0.28449672
    %v2434 = vmul.f32 %v2433, %v2427
    %v2435 = vadd.f32 %v2434, 0.2548296
    %v2436 = vmul.f32 %v2435, %v2427
    %v2437 = vsub.f32 0.0, %v2423
    %v2438 = vmul.f32 %v2437, %v2423
    %v2439 = vmul.f32 %v2438, 1.442695
    %v2440 = vpow.pop %v2439
    %v2441 = vmul.f32 %v2436, %v2440
    %v2442 = vsub.f32 1.0, %v2441
    %vm2443 = vcmp.ge.f32.partialorder %v2422, 0.0
    %v2444 = vsub.f32 0.0, %v2442
    %v2445 = vsel %vm2443, %v2442, %v2444
    %v2446 = vadd.f32 %v2445, 1.0
    %v2447 = vmul.f32 %v2421, %v2446
    %v2448 = vld [vmem:[%s57] sm:$0xff]
    %v2449 = vld [vmem:[%s57 + $0x8] sm:$0xff]
    %v2450 = vld [vmem:[%s59] sm:$0x1]
    %v2452 = vlaneseq
    %v2453 = vshrl.u32 %v2452, 7
    %v2454 = vsub.s32 0, %v2453
    %v2455 = vrot.slane %v2450, %v2454
    %v2458 = vsel %vm308, %v2447, 0
    %2460 = vmatprep.subr.mxu0 0.0
    %2461 = vmatpush1.msra.mxu0 %v2448
    %2462 = vmatprep.subr.mxu0 0.0
    %2463 = vmatpush1.msra.mxu0 %v2449
    %2464 = vmatprep.subr.mxu0 0.0
    %2465 = vmatpush1.msra.mxu0 0.0
    %2466 = vmatprep.subr.mxu0 0.0
    %2467 = vmatpush1.msra.mxu0 0.0
    %2468 = vmatprep.subr.mxu0 0.0
    %2469 = vmatpush1.msra.mxu0 0.0
    %2470 = vmatprep.subr.mxu0 0.0
    %2471 = vmatpush1.msra.mxu0 0.0
    %2472 = vmatprep.subr.mxu0 0.0
    %2473 = vmatpush1.msra.mxu0 0.0
    %2474 = vmatprep.subr.mxu0 0.0
    %2475 = vmatpush1.msra.mxu0 0.0
    %2476 = vmatprep.subr.mxu0 0.0
    %2477 = vmatpush1.msra.mxu0 0.0
    %2478 = vmatprep.subr.mxu0 0.0
    %2479 = vmatpush1.msra.mxu0 0.0
    %2480 = vmatprep.subr.mxu0 0.0
    %2481 = vmatpush1.msra.mxu0 0.0
    %2482 = vmatprep.subr.mxu0 0.0
    %2483 = vmatpush1.msra.mxu0 0.0
    %2484 = vmatprep.subr.mxu0 0.0
    %2485 = vmatpush1.msra.mxu0 0.0
    %2486 = vmatprep.subr.mxu0 0.0
    %2487 = vmatpush1.msra.mxu0 0.0
    %2488 = vmatprep.subr.mxu0 0.0
    %2489 = vmatpush1.msra.mxu0 0.0
    %2490 = vmatprep.subr.mxu0 0.0
    %2491 = vmatpush1.msra.mxu0 0.0
    %2492 = vmatprep.subr.mxu0 0.0
    %2493 = vmatpush1.msra.mxu0 0.0
    %2494 = vmatprep.subr.mxu0 0.0
    %2495 = vmatpush1.msra.mxu0 0.0
    %2496 = vmatprep.subr.mxu0 0.0
    %2497 = vmatpush1.msra.mxu0 0.0
    %2498 = vmatprep.subr.mxu0 0.0
    %2499 = vmatpush1.msra.mxu0 0.0
    %2500 = vmatprep.subr.mxu0 0.0
    %2501 = vmatpush1.msra.mxu0 0.0
    %2502 = vmatprep.subr.mxu0 0.0
    %2503 = vmatpush1.msra.mxu0 0.0
    %2504 = vmatprep.subr.mxu0 0.0
    %2505 = vmatpush1.msra.mxu0 0.0
    %2506 = vmatprep.subr.mxu0 0.0
    %2507 = vmatpush1.msra.mxu0 0.0
    %2508 = vmatprep.subr.mxu0 0.0
    %2509 = vmatpush1.msra.mxu0 0.0
    %2510 = vmatprep.subr.mxu0 0.0
    %2511 = vmatpush1.msra.mxu0 0.0
    %2512 = vmatprep.subr.mxu0 0.0
    %2513 = vmatpush1.msra.mxu0 0.0
    %2514 = vmatprep.subr.mxu0 0.0
    %2515 = vmatpush1.msra.mxu0 0.0
    %2516 = vmatprep.subr.mxu0 0.0
    %2517 = vmatpush1.msra.mxu0 0.0
    %2518 = vmatprep.subr.mxu0 0.0
    %2519 = vmatpush1.msra.mxu0 0.0
    %2520 = vmatprep.subr.mxu0 0.0
    %2521 = vmatpush1.msra.mxu0 0.0
    %2522 = vmatprep.subr.mxu0 0.0
    %2523 = vmatpush1.msra.mxu0 0.0
    %2524 = vmatprep.mubr.f32.mxu0 0.0
    %2525 = vmatmul.mubr.f32.gmra.mrb[0].mxu0 %v2458
    %v2526 = vpop.f32.mrb[0].mxu0
    %v2527 = vadd.f32 %v2455, %v2526
    %v2528 = vpop.f32.mrb[0].mxu0
    %2529 = vdwg.mxu0
    %v2530 = vmul.f32 %v2527, 0.5
    %v2531 = vmul.f32 %v2527, 0.70710677
    %v2532 = vand.u32 2147483647, %v2531
    %v2533 = vmul.f32 %v2532, 0.3275911
    %v2534 = vadd.f32 %v2533, 1.0
    %v2535 = vrcp.pop %v2534
    %v2536 = vmul.f32 1.0, %v2535
    %v2537 = vmul.f32 %v2536, 1.0614054
    %v2538 = vadd.f32 %v2537, -1.4531521
    %v2539 = vmul.f32 %v2538, %v2536
    %v2540 = vadd.f32 %v2539, 1.4214138
    %v2541 = vmul.f32 %v2540, %v2536
    %v2542 = vadd.f32 %v2541, -0.28449672
    %v2543 = vmul.f32 %v2542, %v2536
    %v2544 = vadd.f32 %v2543, 0.2548296
    %v2545 = vmul.f32 %v2544, %v2536
    %v2546 = vsub.f32 0.0, %v2532
    %v2547 = vmul.f32 %v2546, %v2532
    %v2548 = vmul.f32 %v2547, 1.442695
    %v2549 = vpow.pop %v2548
    %v2550 = vmul.f32 %v2545, %v2549
    %v2551 = vsub.f32 1.0, %v2550
    %vm2552 = vcmp.ge.f32.partialorder %v2531, 0.0
    %v2553 = vsub.f32 0.0, %v2551
    %v2554 = vsel %vm2552, %v2551, %v2553
    %v2555 = vadd.f32 %v2554, 1.0
    %v2556 = vmul.f32 %v2530, %v2555
    %v2557 = vlaneseq
    %v2558 = vshrl.u32 %v2557, 7
    %v2559 = vsub.s32 0, %v2558
    %v2560 = vrot.slane %v2556, %v2559
    %v2561 = vlaneseq
    %v2562 = vshrl.u32 %v2561, 7
    %v2563 = vsub.s32 1, %v2562
    %v2564 = vrot.slane %v2556, %v2563
    %v2565 = vld [vmem:[%s7] sm:$0x1]
    %vm2566 = vcmp.gt.f32.partialorder %v2565, 0.0
    %v2567 = vsel %vm2566, 1, 0
    %v2568 = vlaneseq
    %v2569 = vshrl.u32 %v2568, 7
    %v2570 = vsub.s32 0, %v2569
    %v2571 = vrot.slane %v2567, %v2570
    %vm2572 = vcmp.eq.s32.totalorder %v2571, 1
    %vm2573 = vmand %vm157, %vm2572
    %vm2574 = vmand %vm158, %vm2572
    %v2575 = vmul.f32 %v153, 8.0
    %v2576 = vmul.f32 %v154, 8.0
    %v2577 = vsub.f32 %v146, %v2575
    %v2578 = vsub.f32 %v147, %v2576
    %v2579 = vmul.f32 %v156, 8.0
    %v2580 = vsub.f32 %v150, %v2579
    %vm2581 = vcmp.le.f32.partialorder %v2580, %v2577
    %vm2582 = vcmp.le.f32.partialorder %v2580, %v2578
    %vm2583 = vmand %vm2573, %vm2581
    %vm2584 = vmand %vm2574, %vm2582
    %v2585 = vsel %vm2583, 0.0, -1e+09
    %v2586 = vsel %vm2584, 0.0, -1e+09
    %v2587 = vld [vmem:[%s3] sm:$0xff]
    %v2588 = vld [vmem:[%s3 + $0x8] sm:$0xff]
    %v2589 = vsel %vm172, %v2587, 0.0
    %2590 = vadd.xlane.f32.xlu0 %v2589
    %v2591 = vpop.xlane.xlu0 %2590
    %v2592 = vsel %vm172, %v2588, 0.0
    %2593 = vadd.xlane.f32.xlu0 %v2592
    %v2594 = vpop.xlane.xlu0 %2593
    %v2595 = vmul.f32 %v2591, %v179
    %v2596 = vmul.f32 %v2594, %v179
    %v2597 = vsub.f32 %v2587, %v2595
    %v2598 = vsub.f32 %v2588, %v2596
    %v2599 = vmul.f32 %v2597, %v2597
    %v2600 = vmul.f32 %v2598, %v2598
    %v2601 = vsel %vm172, %v2599, 0.0
    %2602 = vadd.xlane.f32.xlu0 %v2601
    %v2603 = vpop.xlane.xlu0 %2602
    %v2604 = vsel %vm172, %v2600, 0.0
    %2605 = vadd.xlane.f32.xlu0 %v2604
    %v2606 = vpop.xlane.xlu0 %2605
    %v2607 = vmul.f32 %v2603, %v179
    %v2608 = vmul.f32 %v2606, %v179
    %v2609 = vadd.f32 %v2607, 1e-06
    %v2610 = vadd.f32 %v2608, 1e-06
    %v2611 = vrsqrt.pop %v2609
    %v2612 = vrsqrt.pop %v2610
    %v2613 = vmul.f32 %v2597, %v2611
    %v2614 = vmul.f32 %v2598, %v2612
    %v2615 = vlaneseq
    %v2616 = vshrl.u32 %v2615, 7
    %v2617 = vsub.s32 2, %v2616
    %v2618 = vrot.slane %v141, %v2617
    %v2619 = vmul.f32 %v2613, %v2618
    %v2620 = vmul.f32 %v2614, %v2618
    %v2621 = vlaneseq
    %v2622 = vshrl.u32 %v2621, 7
    %v2623 = vsub.s32 3, %v2622
    %v2624 = vrot.slane %v141, %v2623
    %v2625 = vadd.f32 %v2619, %v2624
    %v2626 = vadd.f32 %v2620, %v2624
    %v2627 = vld [vmem:[%s39] sm:$0x7f]
    %v2628 = vld [vmem:[%s25] sm:$0xff]
    %v2629 = vld [vmem:[%s25 + $0x8] sm:$0xff]
    %v2630 = vld [vmem:[%s25 + $0x10] sm:$0xff]
    %v2631 = vld [vmem:[%s25 + $0x18] sm:$0xff]
    %v2632 = vld [vmem:[%s27] sm:$0xff]
    %v2633 = vld [vmem:[%s27 + $0x8] sm:$0xff]
    %v2634 = vld [vmem:[%s27 + $0x10] sm:$0xff]
    %v2635 = vld [vmem:[%s27 + $0x18] sm:$0xff]
    %v2637 = vsel %vm172, %v2625, 0
    %v2640 = vsel %vm172, %v2626, 0
    %2642 = vmatprep.subr.mxu0 0.0
    %2643 = vmatpush1.msra.mxu0 %v2628
    %2644 = vmatprep.subr.mxu0 0.0
    %2645 = vmatpush1.msra.mxu0 %v2629
    %2646 = vmatprep.subr.mxu0 0.0
    %2647 = vmatpush1.msra.mxu0 %v2630
    %2648 = vmatprep.subr.mxu0 0.0
    %2649 = vmatpush1.msra.mxu0 %v2631
    %2650 = vmatprep.subr.mxu0 0.0
    %2651 = vmatpush1.msra.mxu0 0.0
    %2652 = vmatprep.subr.mxu0 0.0
    %2653 = vmatpush1.msra.mxu0 0.0
    %2654 = vmatprep.subr.mxu0 0.0
    %2655 = vmatpush1.msra.mxu0 0.0
    %2656 = vmatprep.subr.mxu0 0.0
    %2657 = vmatpush1.msra.mxu0 0.0
    %2658 = vmatprep.subr.mxu0 0.0
    %2659 = vmatpush1.msra.mxu0 0.0
    %2660 = vmatprep.subr.mxu0 0.0
    %2661 = vmatpush1.msra.mxu0 0.0
    %2662 = vmatprep.subr.mxu0 0.0
    %2663 = vmatpush1.msra.mxu0 0.0
    %2664 = vmatprep.subr.mxu0 0.0
    %2665 = vmatpush1.msra.mxu0 0.0
    %2666 = vmatprep.subr.mxu0 0.0
    %2667 = vmatpush1.msra.mxu0 0.0
    %2668 = vmatprep.subr.mxu0 0.0
    %2669 = vmatpush1.msra.mxu0 0.0
    %2670 = vmatprep.subr.mxu0 0.0
    %2671 = vmatpush1.msra.mxu0 0.0
    %2672 = vmatprep.subr.mxu0 0.0
    %2673 = vmatpush1.msra.mxu0 0.0
    %2674 = vmatprep.subr.mxu0 0.0
    %2675 = vmatpush1.msra.mxu0 0.0
    %2676 = vmatprep.subr.mxu0 0.0
    %2677 = vmatpush1.msra.mxu0 0.0
    %2678 = vmatprep.subr.mxu0 0.0
    %2679 = vmatpush1.msra.mxu0 0.0
    %2680 = vmatprep.subr.mxu0 0.0
    %2681 = vmatpush1.msra.mxu0 0.0
    %2682 = vmatprep.subr.mxu0 0.0
    %2683 = vmatpush1.msra.mxu0 0.0
    %2684 = vmatprep.subr.mxu0 0.0
    %2685 = vmatpush1.msra.mxu0 0.0
    %2686 = vmatprep.subr.mxu0 0.0
    %2687 = vmatpush1.msra.mxu0 0.0
    %2688 = vmatprep.subr.mxu0 0.0
    %2689 = vmatpush1.msra.mxu0 0.0
    %2690 = vmatprep.subr.mxu0 0.0
    %2691 = vmatpush1.msra.mxu0 0.0
    %2692 = vmatprep.subr.mxu0 0.0
    %2693 = vmatpush1.msra.mxu0 0.0
    %2694 = vmatprep.subr.mxu0 0.0
    %2695 = vmatpush1.msra.mxu0 0.0
    %2696 = vmatprep.subr.mxu0 0.0
    %2697 = vmatpush1.msra.mxu0 0.0
    %2698 = vmatprep.subr.mxu0 0.0
    %2699 = vmatpush1.msra.mxu0 0.0
    %2700 = vmatprep.subr.mxu0 0.0
    %2701 = vmatpush1.msra.mxu0 0.0
    %2702 = vmatprep.subr.mxu0 0.0
    %2703 = vmatpush1.msra.mxu0 0.0
    %2704 = vmatprep.subr.mxu0 0.0
    %2705 = vmatpush1.msra.mxu0 0.0
    %2706 = vmatprep.mubr.f32.mxu0 0.0
    %2707 = vmatmul.mubr.f32.gmra.mrb[0].mxu0 %v2637
    %v2708 = vpop.f32.mrb[0].mxu0
    %v2709 = vadd.f32 0.0, %v2708
    %v2710 = vpop.f32.mrb[0].mxu0
    %2711 = vmatprep.mubr.f32.mxu0 0.0
    %2712 = vmatmul.mubr.f32.gmra.mrb[0].mxu0 %v2640
    %v2713 = vpop.f32.mrb[0].mxu0
    %v2714 = vadd.f32 0.0, %v2713
    %v2715 = vpop.f32.mrb[0].mxu0
    %2716 = vdwg.mxu0
    %2719 = vrot.lane.b32.xlu0 %v2709, 96
    %v2720 = vpop.permute.xlu0 %2719
    %2721 = vrot.lane.b32.xlu0 %v2714, 96
    %v2722 = vpop.permute.xlu0 %2721
    %v2723 = vsel %vm308, %v2709, 0
    %v2725 = vsel %vm308, %v2714, 0
    %v2727 = vsel %vm308, %v2720, 0
    %v2729 = vsel %vm308, %v2722, 0
    %2731 = vmatprep.subr.mxu0 0.0
    %2732 = vmatpush1.xpose.msra.mxu0 %v2727
    %2733 = vmatprep.subr.mxu0 0.0
    %2734 = vmatpush1.xpose.msra.mxu0 %v2729
    %2735 = vmatprep.subr.mxu0 0.0
    %2736 = vmatpush1.xpose.msra.mxu0 0.0
    %2737 = vmatprep.subr.mxu0 0.0
    %2738 = vmatpush1.xpose.msra.mxu0 0.0
    %2739 = vmatprep.subr.mxu0 0.0
    %2740 = vmatpush1.xpose.msra.mxu0 0.0
    %2741 = vmatprep.subr.mxu0 0.0
    %2742 = vmatpush1.xpose.msra.mxu0 0.0
    %2743 = vmatprep.subr.mxu0 0.0
    %2744 = vmatpush1.xpose.msra.mxu0 0.0
    %2745 = vmatprep.subr.mxu0 0.0
    %2746 = vmatpush1.xpose.msra.mxu0 0.0
    %2747 = vmatprep.subr.mxu0 0.0
    %2748 = vmatpush1.xpose.msra.mxu0 0.0
    %2749 = vmatprep.subr.mxu0 0.0
    %2750 = vmatpush1.xpose.msra.mxu0 0.0
    %2751 = vmatprep.subr.mxu0 0.0
    %2752 = vmatpush1.xpose.msra.mxu0 0.0
    %2753 = vmatprep.subr.mxu0 0.0
    %2754 = vmatpush1.xpose.msra.mxu0 0.0
    %2755 = vmatprep.subr.mxu0 0.0
    %2756 = vmatpush1.xpose.msra.mxu0 0.0
    %2757 = vmatprep.subr.mxu0 0.0
    %2758 = vmatpush1.xpose.msra.mxu0 0.0
    %2759 = vmatprep.subr.mxu0 0.0
    %2760 = vmatpush1.xpose.msra.mxu0 0.0
    %2761 = vmatprep.subr.mxu0 0.0
    %2762 = vmatpush1.xpose.msra.mxu0 0.0
    %2763 = vmatprep.subr.mxu0 0.0
    %2764 = vmatpush1.xpose.msra.mxu0 0.0
    %2765 = vmatprep.subr.mxu0 0.0
    %2766 = vmatpush1.xpose.msra.mxu0 0.0
    %2767 = vmatprep.subr.mxu0 0.0
    %2768 = vmatpush1.xpose.msra.mxu0 0.0
    %2769 = vmatprep.subr.mxu0 0.0
    %2770 = vmatpush1.xpose.msra.mxu0 0.0
    %2771 = vmatprep.subr.mxu0 0.0
    %2772 = vmatpush1.xpose.msra.mxu0 0.0
    %2773 = vmatprep.subr.mxu0 0.0
    %2774 = vmatpush1.xpose.msra.mxu0 0.0
    %2775 = vmatprep.subr.mxu0 0.0
    %2776 = vmatpush1.xpose.msra.mxu0 0.0
    %2777 = vmatprep.subr.mxu0 0.0
    %2778 = vmatpush1.xpose.msra.mxu0 0.0
    %2779 = vmatprep.subr.mxu0 0.0
    %2780 = vmatpush1.xpose.msra.mxu0 0.0
    %2781 = vmatprep.subr.mxu0 0.0
    %2782 = vmatpush1.xpose.msra.mxu0 0.0
    %2783 = vmatprep.subr.mxu0 0.0
    %2784 = vmatpush1.xpose.msra.mxu0 0.0
    %2785 = vmatprep.subr.mxu0 0.0
    %2786 = vmatpush1.xpose.msra.mxu0 0.0
    %2787 = vmatprep.subr.mxu0 0.0
    %2788 = vmatpush1.xpose.msra.mxu0 0.0
    %2789 = vmatprep.subr.mxu0 0.0
    %2790 = vmatpush1.xpose.msra.mxu0 0.0
    %2791 = vmatprep.subr.mxu0 0.0
    %2792 = vmatpush1.xpose.msra.mxu0 0.0
    %2793 = vmatprep.subr.mxu0 0.0
    %2794 = vmatpush1.xpose.msra.mxu0 0.0
    %2795 = vmatprep.mubr.f32.mxu0 0.0
    %2796 = vmatmul.mubr.f32.gmra.mrb[0].mxu0 %v2723
    %v2797 = vpop.f32.mrb[0].mxu0
    %v2798 = vadd.f32 %v2585, %v2797
    %v2799 = vpop.f32.mrb[0].mxu0
    %2800 = vmatprep.mubr.f32.mxu0 0.0
    %2801 = vmatmul.mubr.f32.gmra.mrb[0].mxu0 %v2725
    %v2802 = vpop.f32.mrb[0].mxu0
    %v2803 = vadd.f32 %v2586, %v2802
    %v2804 = vpop.f32.mrb[0].mxu0
    %2805 = vdwg.mxu0
    %v2806 = vsel %vm308, %v2798, -inf
    %2807 = vmax.xlane.f32.xlu0 %v2806
    %v2808 = vpop.xlane.xlu0 %2807
    %v2809 = vsel %vm308, %v2803, -inf
    %2810 = vmax.xlane.f32.xlu0 %v2809
    %v2811 = vpop.xlane.xlu0 %2810
    %v2812 = vsub.f32 %v2798, %v2808
    %v2813 = vsub.f32 %v2803, %v2811
    %v2814 = vmul.f32 %v2812, 1.442695
    %v2815 = vpow.pop %v2814
    %v2816 = vmul.f32 %v2813, 1.442695
    %v2817 = vpow.pop %v2816
    %2818 = vrot.lane.b32.xlu0 %v2709, 64
    %v2819 = vpop.permute.xlu0 %2818
    %2820 = vrot.lane.b32.xlu0 %v2714, 64
    %v2821 = vpop.permute.xlu0 %2820
    %v2825 = vsel %vm308, %v2815, 0
    %v2828 = vsel %vm308, %v2817, 0
    %2830 = vmatprep.subr.mxu0 0.0
    %2831 = vmatpush1.msra.mxu0 %v2819
    %2832 = vmatprep.subr.mxu0 0.0
    %2833 = vmatpush1.msra.mxu0 %v2821
    %2834 = vmatprep.subr.mxu0 0.0
    %2835 = vmatpush1.msra.mxu0 0.0
    %2836 = vmatprep.subr.mxu0 0.0
    %2837 = vmatpush1.msra.mxu0 0.0
    %2838 = vmatprep.subr.mxu0 0.0
    %2839 = vmatpush1.msra.mxu0 0.0
    %2840 = vmatprep.subr.mxu0 0.0
    %2841 = vmatpush1.msra.mxu0 0.0
    %2842 = vmatprep.subr.mxu0 0.0
    %2843 = vmatpush1.msra.mxu0 0.0
    %2844 = vmatprep.subr.mxu0 0.0
    %2845 = vmatpush1.msra.mxu0 0.0
    %2846 = vmatprep.subr.mxu0 0.0
    %2847 = vmatpush1.msra.mxu0 0.0
    %2848 = vmatprep.subr.mxu0 0.0
    %2849 = vmatpush1.msra.mxu0 0.0
    %2850 = vmatprep.subr.mxu0 0.0
    %2851 = vmatpush1.msra.mxu0 0.0
    %2852 = vmatprep.subr.mxu0 0.0
    %2853 = vmatpush1.msra.mxu0 0.0
    %2854 = vmatprep.subr.mxu0 0.0
    %2855 = vmatpush1.msra.mxu0 0.0
    %2856 = vmatprep.subr.mxu0 0.0
    %2857 = vmatpush1.msra.mxu0 0.0
    %2858 = vmatprep.subr.mxu0 0.0
    %2859 = vmatpush1.msra.mxu0 0.0
    %2860 = vmatprep.subr.mxu0 0.0
    %2861 = vmatpush1.msra.mxu0 0.0
    %2862 = vmatprep.subr.mxu0 0.0
    %2863 = vmatpush1.msra.mxu0 0.0
    %2864 = vmatprep.subr.mxu0 0.0
    %2865 = vmatpush1.msra.mxu0 0.0
    %2866 = vmatprep.subr.mxu0 0.0
    %2867 = vmatpush1.msra.mxu0 0.0
    %2868 = vmatprep.subr.mxu0 0.0
    %2869 = vmatpush1.msra.mxu0 0.0
    %2870 = vmatprep.subr.mxu0 0.0
    %2871 = vmatpush1.msra.mxu0 0.0
    %2872 = vmatprep.subr.mxu0 0.0
    %2873 = vmatpush1.msra.mxu0 0.0
    %2874 = vmatprep.subr.mxu0 0.0
    %2875 = vmatpush1.msra.mxu0 0.0
    %2876 = vmatprep.subr.mxu0 0.0
    %2877 = vmatpush1.msra.mxu0 0.0
    %2878 = vmatprep.subr.mxu0 0.0
    %2879 = vmatpush1.msra.mxu0 0.0
    %2880 = vmatprep.subr.mxu0 0.0
    %2881 = vmatpush1.msra.mxu0 0.0
    %2882 = vmatprep.subr.mxu0 0.0
    %2883 = vmatpush1.msra.mxu0 0.0
    %2884 = vmatprep.subr.mxu0 0.0
    %2885 = vmatpush1.msra.mxu0 0.0
    %2886 = vmatprep.subr.mxu0 0.0
    %2887 = vmatpush1.msra.mxu0 0.0
    %2888 = vmatprep.subr.mxu0 0.0
    %2889 = vmatpush1.msra.mxu0 0.0
    %2890 = vmatprep.subr.mxu0 0.0
    %2891 = vmatpush1.msra.mxu0 0.0
    %2892 = vmatprep.subr.mxu0 0.0
    %2893 = vmatpush1.msra.mxu0 0.0
    %2894 = vmatprep.mubr.f32.mxu0 0.0
    %2895 = vmatmul.mubr.f32.gmra.mrb[0].mxu0 %v2825
    %v2896 = vpop.f32.mrb[0].mxu0
    %v2897 = vadd.f32 0.0, %v2896
    %v2898 = vpop.f32.mrb[0].mxu0
    %2899 = vmatprep.mubr.f32.mxu0 0.0
    %2900 = vmatmul.mubr.f32.gmra.mrb[0].mxu0 %v2828
    %v2901 = vpop.f32.mrb[0].mxu0
    %v2902 = vadd.f32 0.0, %v2901
    %v2903 = vpop.f32.mrb[0].mxu0
    %2904 = vdwg.mxu0
    %v2905 = vsel %vm308, %v2815, 0.0
    %2906 = vadd.xlane.f32.xlu0 %v2905
    %v2907 = vpop.xlane.xlu0 %2906
    %v2908 = vsel %vm308, %v2817, 0.0
    %2909 = vadd.xlane.f32.xlu0 %v2908
    %v2910 = vpop.xlane.xlu0 %2909
    %v2911 = vrcp.pop %v2907
    %v2912 = vmul.f32 %v2897, %v2911
    %v2913 = vrcp.pop %v2910
    %v2914 = vmul.f32 %v2902, %v2913
    %2915 = vrot.lane.b32.xlu0 %v2709, 112
    %v2916 = vpop.permute.xlu0 %2915
    %2917 = vrot.lane.b32.xlu0 %v2714, 112
    %v2918 = vpop.permute.xlu0 %2917
    %2919 = vrot.lane.b32.xlu0 %v2709, 80
    %v2920 = vpop.permute.xlu0 %2919
    %2921 = vrot.lane.b32.xlu0 %v2714, 80
    %v2922 = vpop.permute.xlu0 %2921
    %v2923 = vsel %vm308, %v2916, 0
    %v2925 = vsel %vm308, %v2918, 0
    %v2927 = vsel %vm308, %v2920, 0
    %v2929 = vsel %vm308, %v2922, 0
    %2931 = vmatprep.subr.mxu0 0.0
    %2932 = vmatpush1.xpose.msra.mxu0 %v2927
    %2933 = vmatprep.subr.mxu0 0.0
    %2934 = vmatpush1.xpose.msra.mxu0 %v2929
    %2935 = vmatprep.subr.mxu0 0.0
    %2936 = vmatpush1.xpose.msra.mxu0 0.0
    %2937 = vmatprep.subr.mxu0 0.0
    %2938 = vmatpush1.xpose.msra.mxu0 0.0
    %2939 = vmatprep.subr.mxu0 0.0
    %2940 = vmatpush1.xpose.msra.mxu0 0.0
    %2941 = vmatprep.subr.mxu0 0.0
    %2942 = vmatpush1.xpose.msra.mxu0 0.0
    %2943 = vmatprep.subr.mxu0 0.0
    %2944 = vmatpush1.xpose.msra.mxu0 0.0
    %2945 = vmatprep.subr.mxu0 0.0
    %2946 = vmatpush1.xpose.msra.mxu0 0.0
    %2947 = vmatprep.subr.mxu0 0.0
    %2948 = vmatpush1.xpose.msra.mxu0 0.0
    %2949 = vmatprep.subr.mxu0 0.0
    %2950 = vmatpush1.xpose.msra.mxu0 0.0
    %2951 = vmatprep.subr.mxu0 0.0
    %2952 = vmatpush1.xpose.msra.mxu0 0.0
    %2953 = vmatprep.subr.mxu0 0.0
    %2954 = vmatpush1.xpose.msra.mxu0 0.0
    %2955 = vmatprep.subr.mxu0 0.0
    %2956 = vmatpush1.xpose.msra.mxu0 0.0
    %2957 = vmatprep.subr.mxu0 0.0
    %2958 = vmatpush1.xpose.msra.mxu0 0.0
    %2959 = vmatprep.subr.mxu0 0.0
    %2960 = vmatpush1.xpose.msra.mxu0 0.0
    %2961 = vmatprep.subr.mxu0 0.0
    %2962 = vmatpush1.xpose.msra.mxu0 0.0
    %2963 = vmatprep.subr.mxu0 0.0
    %2964 = vmatpush1.xpose.msra.mxu0 0.0
    %2965 = vmatprep.subr.mxu0 0.0
    %2966 = vmatpush1.xpose.msra.mxu0 0.0
    %2967 = vmatprep.subr.mxu0 0.0
    %2968 = vmatpush1.xpose.msra.mxu0 0.0
    %2969 = vmatprep.subr.mxu0 0.0
    %2970 = vmatpush1.xpose.msra.mxu0 0.0
    %2971 = vmatprep.subr.mxu0 0.0
    %2972 = vmatpush1.xpose.msra.mxu0 0.0
    %2973 = vmatprep.subr.mxu0 0.0
    %2974 = vmatpush1.xpose.msra.mxu0 0.0
    %2975 = vmatprep.subr.mxu0 0.0
    %2976 = vmatpush1.xpose.msra.mxu0 0.0
    %2977 = vmatprep.subr.mxu0 0.0
    %2978 = vmatpush1.xpose.msra.mxu0 0.0
    %2979 = vmatprep.subr.mxu0 0.0
    %2980 = vmatpush1.xpose.msra.mxu0 0.0
    %2981 = vmatprep.subr.mxu0 0.0
    %2982 = vmatpush1.xpose.msra.mxu0 0.0
    %2983 = vmatprep.subr.mxu0 0.0
    %2984 = vmatpush1.xpose.msra.mxu0 0.0
    %2985 = vmatprep.subr.mxu0 0.0
    %2986 = vmatpush1.xpose.msra.mxu0 0.0
    %2987 = vmatprep.subr.mxu0 0.0
    %2988 = vmatpush1.xpose.msra.mxu0 0.0
    %2989 = vmatprep.subr.mxu0 0.0
    %2990 = vmatpush1.xpose.msra.mxu0 0.0
    %2991 = vmatprep.subr.mxu0 0.0
    %2992 = vmatpush1.xpose.msra.mxu0 0.0
    %2993 = vmatprep.subr.mxu0 0.0
    %2994 = vmatpush1.xpose.msra.mxu0 0.0
    %2995 = vmatprep.mubr.f32.mxu0 0.0
    %2996 = vmatmul.mubr.f32.gmra.mrb[0].mxu0 %v2923
    %v2997 = vpop.f32.mrb[0].mxu0
    %v2998 = vadd.f32 %v2585, %v2997
    %v2999 = vpop.f32.mrb[0].mxu0
    %3000 = vmatprep.mubr.f32.mxu0 0.0
    %3001 = vmatmul.mubr.f32.gmra.mrb[0].mxu0 %v2925
    %v3002 = vpop.f32.mrb[0].mxu0
    %v3003 = vadd.f32 %v2586, %v3002
    %v3004 = vpop.f32.mrb[0].mxu0
    %3005 = vdwg.mxu0
    %v3006 = vsel %vm308, %v2998, -inf
    %3007 = vmax.xlane.f32.xlu0 %v3006
    %v3008 = vpop.xlane.xlu0 %3007
    %v3009 = vsel %vm308, %v3003, -inf
    %3010 = vmax.xlane.f32.xlu0 %v3009
    %v3011 = vpop.xlane.xlu0 %3010
    %v3012 = vsub.f32 %v2998, %v3008
    %v3013 = vsub.f32 %v3003, %v3011
    %v3014 = vmul.f32 %v3012, 1.442695
    %v3015 = vpow.pop %v3014
    %v3016 = vmul.f32 %v3013, 1.442695
    %v3017 = vpow.pop %v3016
    %3018 = vrot.lane.b32.xlu0 %v2709, 48
    %v3019 = vpop.permute.xlu0 %3018
    %3020 = vrot.lane.b32.xlu0 %v2714, 48
    %v3021 = vpop.permute.xlu0 %3020
    %v3025 = vsel %vm308, %v3015, 0
    %v3028 = vsel %vm308, %v3017, 0
    %3030 = vmatprep.subr.mxu0 0.0
    %3031 = vmatpush1.msra.mxu0 %v3019
    %3032 = vmatprep.subr.mxu0 0.0
    %3033 = vmatpush1.msra.mxu0 %v3021
    %3034 = vmatprep.subr.mxu0 0.0
    %3035 = vmatpush1.msra.mxu0 0.0
    %3036 = vmatprep.subr.mxu0 0.0
    %3037 = vmatpush1.msra.mxu0 0.0
    %3038 = vmatprep.subr.mxu0 0.0
    %3039 = vmatpush1.msra.mxu0 0.0
    %3040 = vmatprep.subr.mxu0 0.0
    %3041 = vmatpush1.msra.mxu0 0.0
    %3042 = vmatprep.subr.mxu0 0.0
    %3043 = vmatpush1.msra.mxu0 0.0
    %3044 = vmatprep.subr.mxu0 0.0
    %3045 = vmatpush1.msra.mxu0 0.0
    %3046 = vmatprep.subr.mxu0 0.0
    %3047 = vmatpush1.msra.mxu0 0.0
    %3048 = vmatprep.subr.mxu0 0.0
    %3049 = vmatpush1.msra.mxu0 0.0
    %3050 = vmatprep.subr.mxu0 0.0
    %3051 = vmatpush1.msra.mxu0 0.0
    %3052 = vmatprep.subr.mxu0 0.0
    %3053 = vmatpush1.msra.mxu0 0.0
    %3054 = vmatprep.subr.mxu0 0.0
    %3055 = vmatpush1.msra.mxu0 0.0
    %3056 = vmatprep.subr.mxu0 0.0
    %3057 = vmatpush1.msra.mxu0 0.0
    %3058 = vmatprep.subr.mxu0 0.0
    %3059 = vmatpush1.msra.mxu0 0.0
    %3060 = vmatprep.subr.mxu0 0.0
    %3061 = vmatpush1.msra.mxu0 0.0
    %3062 = vmatprep.subr.mxu0 0.0
    %3063 = vmatpush1.msra.mxu0 0.0
    %3064 = vmatprep.subr.mxu0 0.0
    %3065 = vmatpush1.msra.mxu0 0.0
    %3066 = vmatprep.subr.mxu0 0.0
    %3067 = vmatpush1.msra.mxu0 0.0
    %3068 = vmatprep.subr.mxu0 0.0
    %3069 = vmatpush1.msra.mxu0 0.0
    %3070 = vmatprep.subr.mxu0 0.0
    %3071 = vmatpush1.msra.mxu0 0.0
    %3072 = vmatprep.subr.mxu0 0.0
    %3073 = vmatpush1.msra.mxu0 0.0
    %3074 = vmatprep.subr.mxu0 0.0
    %3075 = vmatpush1.msra.mxu0 0.0
    %3076 = vmatprep.subr.mxu0 0.0
    %3077 = vmatpush1.msra.mxu0 0.0
    %3078 = vmatprep.subr.mxu0 0.0
    %3079 = vmatpush1.msra.mxu0 0.0
    %3080 = vmatprep.subr.mxu0 0.0
    %3081 = vmatpush1.msra.mxu0 0.0
    %3082 = vmatprep.subr.mxu0 0.0
    %3083 = vmatpush1.msra.mxu0 0.0
    %3084 = vmatprep.subr.mxu0 0.0
    %3085 = vmatpush1.msra.mxu0 0.0
    %3086 = vmatprep.subr.mxu0 0.0
    %3087 = vmatpush1.msra.mxu0 0.0
    %3088 = vmatprep.subr.mxu0 0.0
    %3089 = vmatpush1.msra.mxu0 0.0
    %3090 = vmatprep.subr.mxu0 0.0
    %3091 = vmatpush1.msra.mxu0 0.0
    %3092 = vmatprep.subr.mxu0 0.0
    %3093 = vmatpush1.msra.mxu0 0.0
    %3094 = vmatprep.mubr.f32.mxu0 0.0
    %3095 = vmatmul.mubr.f32.gmra.mrb[0].mxu0 %v3025
    %v3096 = vpop.f32.mrb[0].mxu0
    %v3097 = vadd.f32 0.0, %v3096
    %v3098 = vpop.f32.mrb[0].mxu0
    %3099 = vmatprep.mubr.f32.mxu0 0.0
    %3100 = vmatmul.mubr.f32.gmra.mrb[0].mxu0 %v3028
    %v3101 = vpop.f32.mrb[0].mxu0
    %v3102 = vadd.f32 0.0, %v3101
    %v3103 = vpop.f32.mrb[0].mxu0
    %3104 = vdwg.mxu0
    %v3105 = vsel %vm308, %v3015, 0.0
    %3106 = vadd.xlane.f32.xlu0 %v3105
    %v3107 = vpop.xlane.xlu0 %3106
    %v3108 = vsel %vm308, %v3017, 0.0
    %3109 = vadd.xlane.f32.xlu0 %v3108
    %v3110 = vpop.xlane.xlu0 %3109
    %v3111 = vrcp.pop %v3107
    %v3112 = vmul.f32 %v3097, %v3111
    %v3113 = vrcp.pop %v3110
    %v3114 = vmul.f32 %v3102, %v3113
    %v3116 = vsel %vm308, %v3112, 0
    %v3119 = vsel %vm308, %v3114, 0
    %3121 = vmatprep.subr.mxu0 0.0
    %3122 = vmatpush1.msra.mxu0 %v2634
    %3123 = vmatprep.subr.mxu0 0.0
    %3124 = vmatpush1.msra.mxu0 %v2635
    %3125 = vmatprep.subr.mxu0 0.0
    %3126 = vmatpush1.msra.mxu0 0.0
    %3127 = vmatprep.subr.mxu0 0.0
    %3128 = vmatpush1.msra.mxu0 0.0
    %3129 = vmatprep.subr.mxu0 0.0
    %3130 = vmatpush1.msra.mxu0 0.0
    %3131 = vmatprep.subr.mxu0 0.0
    %3132 = vmatpush1.msra.mxu0 0.0
    %3133 = vmatprep.subr.mxu0 0.0
    %3134 = vmatpush1.msra.mxu0 0.0
    %3135 = vmatprep.subr.mxu0 0.0
    %3136 = vmatpush1.msra.mxu0 0.0
    %3137 = vmatprep.subr.mxu0 0.0
    %3138 = vmatpush1.msra.mxu0 0.0
    %3139 = vmatprep.subr.mxu0 0.0
    %3140 = vmatpush1.msra.mxu0 0.0
    %3141 = vmatprep.subr.mxu0 0.0
    %3142 = vmatpush1.msra.mxu0 0.0
    %3143 = vmatprep.subr.mxu0 0.0
    %3144 = vmatpush1.msra.mxu0 0.0
    %3145 = vmatprep.subr.mxu0 0.0
    %3146 = vmatpush1.msra.mxu0 0.0
    %3147 = vmatprep.subr.mxu0 0.0
    %3148 = vmatpush1.msra.mxu0 0.0
    %3149 = vmatprep.subr.mxu0 0.0
    %3150 = vmatpush1.msra.mxu0 0.0
    %3151 = vmatprep.subr.mxu0 0.0
    %3152 = vmatpush1.msra.mxu0 0.0
    %3153 = vmatprep.subr.mxu0 0.0
    %3154 = vmatpush1.msra.mxu0 0.0
    %3155 = vmatprep.subr.mxu0 0.0
    %3156 = vmatpush1.msra.mxu0 0.0
    %3157 = vmatprep.subr.mxu0 0.0
    %3158 = vmatpush1.msra.mxu0 0.0
    %3159 = vmatprep.subr.mxu0 0.0
    %3160 = vmatpush1.msra.mxu0 0.0
    %3161 = vmatprep.subr.mxu0 0.0
    %3162 = vmatpush1.msra.mxu0 0.0
    %3163 = vmatprep.subr.mxu0 0.0
    %3164 = vmatpush1.msra.mxu0 0.0
    %3165 = vmatprep.subr.mxu0 0.0
    %3166 = vmatpush1.msra.mxu0 0.0
    %3167 = vmatprep.subr.mxu0 0.0
    %3168 = vmatpush1.msra.mxu0 0.0
    %3169 = vmatprep.subr.mxu0 0.0
    %3170 = vmatpush1.msra.mxu0 0.0
    %3171 = vmatprep.subr.mxu0 0.0
    %3172 = vmatpush1.msra.mxu0 0.0
    %3173 = vmatprep.subr.mxu0 0.0
    %3174 = vmatpush1.msra.mxu0 0.0
    %3175 = vmatprep.subr.mxu0 0.0
    %3176 = vmatpush1.msra.mxu0 0.0
    %3177 = vmatprep.subr.mxu0 0.0
    %3178 = vmatpush1.msra.mxu0 0.0
    %3179 = vmatprep.subr.mxu0 0.0
    %3180 = vmatpush1.msra.mxu0 0.0
    %3181 = vmatprep.subr.mxu0 0.0
    %3182 = vmatpush1.msra.mxu0 0.0
    %3183 = vmatprep.subr.mxu0 0.0
    %3184 = vmatpush1.msra.mxu0 0.0
    %3185 = vmatprep.mubr.f32.mxu0 0.0
    %3186 = vmatmul.mubr.f32.gmra.mrb[0].mxu0 %v3116
    %v3187 = vpop.f32.mrb[0].mxu0
    %v3188 = vadd.f32 0.0, %v3187
    %v3189 = vpop.f32.mrb[0].mxu0
    %3190 = vmatprep.mubr.f32.mxu0 0.0
    %3191 = vmatmul.mubr.f32.gmra.mrb[0].mxu0 %v3119
    %v3192 = vpop.f32.mrb[0].mxu0
    %v3193 = vadd.f32 0.0, %v3192
    %v3194 = vpop.f32.mrb[0].mxu0
    %3195 = vdwg.mxu0
    %v3197 = vsel %vm308, %v2912, 0
    %v3200 = vsel %vm308, %v2914, 0
    %3202 = vmatprep.subr.mxu0 0.0
    %3203 = vmatpush1.msra.mxu0 %v2632
    %3204 = vmatprep.subr.mxu0 0.0
    %3205 = vmatpush1.msra.mxu0 %v2633
    %3206 = vmatprep.subr.mxu0 0.0
    %3207 = vmatpush1.msra.mxu0 0.0
    %3208 = vmatprep.subr.mxu0 0.0
    %3209 = vmatpush1.msra.mxu0 0.0
    %3210 = vmatprep.subr.mxu0 0.0
    %3211 = vmatpush1.msra.mxu0 0.0
    %3212 = vmatprep.subr.mxu0 0.0
    %3213 = vmatpush1.msra.mxu0 0.0
    %3214 = vmatprep.subr.mxu0 0.0
    %3215 = vmatpush1.msra.mxu0 0.0
    %3216 = vmatprep.subr.mxu0 0.0
    %3217 = vmatpush1.msra.mxu0 0.0
    %3218 = vmatprep.subr.mxu0 0.0
    %3219 = vmatpush1.msra.mxu0 0.0
    %3220 = vmatprep.subr.mxu0 0.0
    %3221 = vmatpush1.msra.mxu0 0.0
    %3222 = vmatprep.subr.mxu0 0.0
    %3223 = vmatpush1.msra.mxu0 0.0
    %3224 = vmatprep.subr.mxu0 0.0
    %3225 = vmatpush1.msra.mxu0 0.0
    %3226 = vmatprep.subr.mxu0 0.0
    %3227 = vmatpush1.msra.mxu0 0.0
    %3228 = vmatprep.subr.mxu0 0.0
    %3229 = vmatpush1.msra.mxu0 0.0
    %3230 = vmatprep.subr.mxu0 0.0
    %3231 = vmatpush1.msra.mxu0 0.0
    %3232 = vmatprep.subr.mxu0 0.0
    %3233 = vmatpush1.msra.mxu0 0.0
    %3234 = vmatprep.subr.mxu0 0.0
    %3235 = vmatpush1.msra.mxu0 0.0
    %3236 = vmatprep.subr.mxu0 0.0
    %3237 = vmatpush1.msra.mxu0 0.0
    %3238 = vmatprep.subr.mxu0 0.0
    %3239 = vmatpush1.msra.mxu0 0.0
    %3240 = vmatprep.subr.mxu0 0.0
    %3241 = vmatpush1.msra.mxu0 0.0
    %3242 = vmatprep.subr.mxu0 0.0
    %3243 = vmatpush1.msra.mxu0 0.0
    %3244 = vmatprep.subr.mxu0 0.0
    %3245 = vmatpush1.msra.mxu0 0.0
    %3246 = vmatprep.subr.mxu0 0.0
    %3247 = vmatpush1.msra.mxu0 0.0
    %3248 = vmatprep.subr.mxu0 0.0
    %3249 = vmatpush1.msra.mxu0 0.0
    %3250 = vmatprep.subr.mxu0 0.0
    %3251 = vmatpush1.msra.mxu0 0.0
    %3252 = vmatprep.subr.mxu0 0.0
    %3253 = vmatpush1.msra.mxu0 0.0
    %3254 = vmatprep.subr.mxu0 0.0
    %3255 = vmatpush1.msra.mxu0 0.0
    %3256 = vmatprep.subr.mxu0 0.0
    %3257 = vmatpush1.msra.mxu0 0.0
    %3258 = vmatprep.subr.mxu0 0.0
    %3259 = vmatpush1.msra.mxu0 0.0
    %3260 = vmatprep.subr.mxu0 0.0
    %3261 = vmatpush1.msra.mxu0 0.0
    %3262 = vmatprep.subr.mxu0 0.0
    %3263 = vmatpush1.msra.mxu0 0.0
    %3264 = vmatprep.subr.mxu0 0.0
    %3265 = vmatpush1.msra.mxu0 0.0
    %3266 = vmatprep.mubr.f32.mxu0 0.0
    %3267 = vmatmul.mubr.f32.gmra.mrb[0].mxu0 %v3197
    %v3268 = vpop.f32.mrb[0].mxu0
    %v3269 = vadd.f32 %v3188, %v3268
    %v3270 = vpop.f32.mrb[0].mxu0
    %3271 = vmatprep.mubr.f32.mxu0 0.0
    %3272 = vmatmul.mubr.f32.gmra.mrb[0].mxu0 %v3200
    %v3273 = vpop.f32.mrb[0].mxu0
    %v3274 = vadd.f32 %v3193, %v3273
    %v3275 = vpop.f32.mrb[0].mxu0
    %3276 = vdwg.mxu0
    %v3277 = vadd.f32 %v3269, %v2625
    %v3278 = vadd.f32 %v3274, %v2626
    %v3279 = vsel %vm172, %v3277, 0.0
    %3280 = vadd.xlane.f32.xlu0 %v3279
    %v3281 = vpop.xlane.xlu0 %3280
    %v3282 = vsel %vm172, %v3278, 0.0
    %3283 = vadd.xlane.f32.xlu0 %v3282
    %v3284 = vpop.xlane.xlu0 %3283
    %v3285 = vmul.f32 %v3281, %v179
    %v3286 = vmul.f32 %v3284, %v179
    %v3287 = vsub.f32 %v3277, %v3285
    %v3288 = vsub.f32 %v3278, %v3286
    %v3289 = vmul.f32 %v3287, %v3287
    %v3290 = vmul.f32 %v3288, %v3288
    %v3291 = vsel %vm172, %v3289, 0.0
    %3292 = vadd.xlane.f32.xlu0 %v3291
    %v3293 = vpop.xlane.xlu0 %3292
    %v3294 = vsel %vm172, %v3290, 0.0
    %3295 = vadd.xlane.f32.xlu0 %v3294
    %v3296 = vpop.xlane.xlu0 %3295
    %v3297 = vmul.f32 %v3293, %v179
    %v3298 = vmul.f32 %v3296, %v179
    %v3299 = vadd.f32 %v3297, 1e-06
    %v3300 = vadd.f32 %v3298, 1e-06
    %v3301 = vrsqrt.pop %v3299
    %v3302 = vrsqrt.pop %v3300
    %v3303 = vmul.f32 %v3287, %v3301
    %v3304 = vmul.f32 %v3288, %v3302
    %v3305 = vlaneseq
    %v3306 = vshrl.u32 %v3305, 7
    %v3307 = vsub.s32 0, %v3306
    %v3308 = vrot.slane %v2627, %v3307
    %v3309 = vmul.f32 %v3303, %v3308
    %v3310 = vmul.f32 %v3304, %v3308
    %v3311 = vlaneseq
    %v3312 = vshrl.u32 %v3311, 7
    %v3313 = vsub.s32 1, %v3312
    %v3314 = vrot.slane %v2627, %v3313
    %v3315 = vadd.f32 %v3309, %v3314
    %v3316 = vadd.f32 %v3310, %v3314
    %v3317 = vld [vmem:[%s29] sm:$0xff]
    %v3318 = vld [vmem:[%s29 + $0x8] sm:$0xff]
    %v3319 = vld [vmem:[%s29 + $0x10] sm:$0xff]
    %v3320 = vld [vmem:[%s29 + $0x18] sm:$0xff]
    %v3322 = vsel %vm172, %v2560, 0
    %v3325 = vsel %vm172, %v2564, 0
    %3327 = vmatprep.subr.mxu0 0.0
    %3328 = vmatpush1.msra.mxu0 %v3317
    %3329 = vmatprep.subr.mxu0 0.0
    %3330 = vmatpush1.msra.mxu0 %v3318
    %3331 = vmatprep.subr.mxu0 0.0
    %3332 = vmatpush1.msra.mxu0 %v3319
    %3333 = vmatprep.subr.mxu0 0.0
    %3334 = vmatpush1.msra.mxu0 %v3320
    %3335 = vmatprep.subr.mxu0 0.0
    %3336 = vmatpush1.msra.mxu0 0.0
    %3337 = vmatprep.subr.mxu0 0.0
    %3338 = vmatpush1.msra.mxu0 0.0
    %3339 = vmatprep.subr.mxu0 0.0
    %3340 = vmatpush1.msra.mxu0 0.0
    %3341 = vmatprep.subr.mxu0 0.0
    %3342 = vmatpush1.msra.mxu0 0.0
    %3343 = vmatprep.subr.mxu0 0.0
    %3344 = vmatpush1.msra.mxu0 0.0
    %3345 = vmatprep.subr.mxu0 0.0
    %3346 = vmatpush1.msra.mxu0 0.0
    %3347 = vmatprep.subr.mxu0 0.0
    %3348 = vmatpush1.msra.mxu0 0.0
    %3349 = vmatprep.subr.mxu0 0.0
    %3350 = vmatpush1.msra.mxu0 0.0
    %3351 = vmatprep.subr.mxu0 0.0
    %3352 = vmatpush1.msra.mxu0 0.0
    %3353 = vmatprep.subr.mxu0 0.0
    %3354 = vmatpush1.msra.mxu0 0.0
    %3355 = vmatprep.subr.mxu0 0.0
    %3356 = vmatpush1.msra.mxu0 0.0
    %3357 = vmatprep.subr.mxu0 0.0
    %3358 = vmatpush1.msra.mxu0 0.0
    %3359 = vmatprep.subr.mxu0 0.0
    %3360 = vmatpush1.msra.mxu0 0.0
    %3361 = vmatprep.subr.mxu0 0.0
    %3362 = vmatpush1.msra.mxu0 0.0
    %3363 = vmatprep.subr.mxu0 0.0
    %3364 = vmatpush1.msra.mxu0 0.0
    %3365 = vmatprep.subr.mxu0 0.0
    %3366 = vmatpush1.msra.mxu0 0.0
    %3367 = vmatprep.subr.mxu0 0.0
    %3368 = vmatpush1.msra.mxu0 0.0
    %3369 = vmatprep.subr.mxu0 0.0
    %3370 = vmatpush1.msra.mxu0 0.0
    %3371 = vmatprep.subr.mxu0 0.0
    %3372 = vmatpush1.msra.mxu0 0.0
    %3373 = vmatprep.subr.mxu0 0.0
    %3374 = vmatpush1.msra.mxu0 0.0
    %3375 = vmatprep.subr.mxu0 0.0
    %3376 = vmatpush1.msra.mxu0 0.0
    %3377 = vmatprep.subr.mxu0 0.0
    %3378 = vmatpush1.msra.mxu0 0.0
    %3379 = vmatprep.subr.mxu0 0.0
    %3380 = vmatpush1.msra.mxu0 0.0
    %3381 = vmatprep.subr.mxu0 0.0
    %3382 = vmatpush1.msra.mxu0 0.0
    %3383 = vmatprep.subr.mxu0 0.0
    %3384 = vmatpush1.msra.mxu0 0.0
    %3385 = vmatprep.subr.mxu0 0.0
    %3386 = vmatpush1.msra.mxu0 0.0
    %3387 = vmatprep.subr.mxu0 0.0
    %3388 = vmatpush1.msra.mxu0 0.0
    %3389 = vmatprep.subr.mxu0 0.0
    %3390 = vmatpush1.msra.mxu0 0.0
    %3391 = vmatprep.mubr.f32.mxu0 0.0
    %3392 = vmatmul.mubr.f32.gmra.mrb[0].mxu0 %v3322
    %v3393 = vpop.f32.mrb[0].mxu0
    %v3394 = vadd.f32 0.0, %v3393
    %v3395 = vpop.f32.mrb[0].mxu0
    %3396 = vmatprep.mubr.f32.mxu0 0.0
    %3397 = vmatmul.mubr.f32.gmra.mrb[0].mxu0 %v3325
    %v3398 = vpop.f32.mrb[0].mxu0
    %v3399 = vadd.f32 0.0, %v3398
    %v3400 = vpop.f32.mrb[0].mxu0
    %3401 = vdwg.mxu0
    %v3402 = vld [vmem:[%s31] sm:$0xff]
    %v3403 = vld [vmem:[%s31 + $0x8] sm:$0xff]
    %v3404 = vld [vmem:[%s31 + $0x10] sm:$0xff]
    %v3405 = vld [vmem:[%s31 + $0x18] sm:$0xff]
    %v3407 = vsel %vm172, %v3394, 0
    %v3410 = vsel %vm172, %v3399, 0
    %3412 = vmatprep.subr.mxu0 0.0
    %3413 = vmatpush1.msra.mxu0 %v3402
    %3414 = vmatprep.subr.mxu0 0.0
    %3415 = vmatpush1.msra.mxu0 %v3403
    %3416 = vmatprep.subr.mxu0 0.0
    %3417 = vmatpush1.msra.mxu0 %v3404
    %3418 = vmatprep.subr.mxu0 0.0
    %3419 = vmatpush1.msra.mxu0 %v3405
    %3420 = vmatprep.subr.mxu0 0.0
    %3421 = vmatpush1.msra.mxu0 0.0
    %3422 = vmatprep.subr.mxu0 0.0
    %3423 = vmatpush1.msra.mxu0 0.0
    %3424 = vmatprep.subr.mxu0 0.0
    %3425 = vmatpush1.msra.mxu0 0.0
    %3426 = vmatprep.subr.mxu0 0.0
    %3427 = vmatpush1.msra.mxu0 0.0
    %3428 = vmatprep.subr.mxu0 0.0
    %3429 = vmatpush1.msra.mxu0 0.0
    %3430 = vmatprep.subr.mxu0 0.0
    %3431 = vmatpush1.msra.mxu0 0.0
    %3432 = vmatprep.subr.mxu0 0.0
    %3433 = vmatpush1.msra.mxu0 0.0
    %3434 = vmatprep.subr.mxu0 0.0
    %3435 = vmatpush1.msra.mxu0 0.0
    %3436 = vmatprep.subr.mxu0 0.0
    %3437 = vmatpush1.msra.mxu0 0.0
    %3438 = vmatprep.subr.mxu0 0.0
    %3439 = vmatpush1.msra.mxu0 0.0
    %3440 = vmatprep.subr.mxu0 0.0
    %3441 = vmatpush1.msra.mxu0 0.0
    %3442 = vmatprep.subr.mxu0 0.0
    %3443 = vmatpush1.msra.mxu0 0.0
    %3444 = vmatprep.subr.mxu0 0.0
    %3445 = vmatpush1.msra.mxu0 0.0
    %3446 = vmatprep.subr.mxu0 0.0
    %3447 = vmatpush1.msra.mxu0 0.0
    %3448 = vmatprep.subr.mxu0 0.0
    %3449 = vmatpush1.msra.mxu0 0.0
    %3450 = vmatprep.subr.mxu0 0.0
    %3451 = vmatpush1.msra.mxu0 0.0
    %3452 = vmatprep.subr.mxu0 0.0
    %3453 = vmatpush1.msra.mxu0 0.0
    %3454 = vmatprep.subr.mxu0 0.0
    %3455 = vmatpush1.msra.mxu0 0.0
    %3456 = vmatprep.subr.mxu0 0.0
    %3457 = vmatpush1.msra.mxu0 0.0
    %3458 = vmatprep.subr.mxu0 0.0
    %3459 = vmatpush1.msra.mxu0 0.0
    %3460 = vmatprep.subr.mxu0 0.0
    %3461 = vmatpush1.msra.mxu0 0.0
    %3462 = vmatprep.subr.mxu0 0.0
    %3463 = vmatpush1.msra.mxu0 0.0
    %3464 = vmatprep.subr.mxu0 0.0
    %3465 = vmatpush1.msra.mxu0 0.0
    %3466 = vmatprep.subr.mxu0 0.0
    %3467 = vmatpush1.msra.mxu0 0.0
    %3468 = vmatprep.subr.mxu0 0.0
    %3469 = vmatpush1.msra.mxu0 0.0
    %3470 = vmatprep.subr.mxu0 0.0
    %3471 = vmatpush1.msra.mxu0 0.0
    %3472 = vmatprep.subr.mxu0 0.0
    %3473 = vmatpush1.msra.mxu0 0.0
    %3474 = vmatprep.subr.mxu0 0.0
    %3475 = vmatpush1.msra.mxu0 0.0
    %3476 = vmatprep.mubr.f32.mxu0 0.0
    %3477 = vmatmul.mubr.f32.gmra.mrb[0].mxu0 %v3407
    %v3478 = vpop.f32.mrb[0].mxu0
    %v3479 = vadd.f32 0.0, %v3478
    %v3480 = vpop.f32.mrb[0].mxu0
    %3481 = vmatprep.mubr.f32.mxu0 0.0
    %3482 = vmatmul.mubr.f32.gmra.mrb[0].mxu0 %v3410
    %v3483 = vpop.f32.mrb[0].mxu0
    %v3484 = vadd.f32 0.0, %v3483
    %v3485 = vpop.f32.mrb[0].mxu0
    %3486 = vdwg.mxu0
    %v3487 = vadd.f32 %v3315, %v3479
    %v3488 = vadd.f32 %v3316, %v3484
    %v3489 = vsel %vm172, %v3487, 0.0
    %3490 = vadd.xlane.f32.xlu0 %v3489
    %v3491 = vpop.xlane.xlu0 %3490
    %v3492 = vsel %vm172, %v3488, 0.0
    %3493 = vadd.xlane.f32.xlu0 %v3492
    %v3494 = vpop.xlane.xlu0 %3493
    %v3495 = vmul.f32 %v3491, %v179
    %v3496 = vmul.f32 %v3494, %v179
    %v3497 = vsub.f32 %v3487, %v3495
    %v3498 = vsub.f32 %v3488, %v3496
    %v3499 = vmul.f32 %v3497, %v3497
    %v3500 = vmul.f32 %v3498, %v3498
    %v3501 = vsel %vm172, %v3499, 0.0
    %3502 = vadd.xlane.f32.xlu0 %v3501
    %v3503 = vpop.xlane.xlu0 %3502
    %v3504 = vsel %vm172, %v3500, 0.0
    %3505 = vadd.xlane.f32.xlu0 %v3504
    %v3506 = vpop.xlane.xlu0 %3505
    %v3507 = vmul.f32 %v3503, %v179
    %v3508 = vmul.f32 %v3506, %v179
    %v3509 = vadd.f32 %v3507, 1e-06
    %v3510 = vadd.f32 %v3508, 1e-06
    %v3511 = vrsqrt.pop %v3509
    %v3512 = vrsqrt.pop %v3510
    %v3513 = vmul.f32 %v3497, %v3511
    %v3514 = vmul.f32 %v3498, %v3512
    %v3515 = vlaneseq
    %v3516 = vshrl.u32 %v3515, 7
    %v3517 = vsub.s32 2, %v3516
    %v3518 = vrot.slane %v2627, %v3517
    %v3519 = vmul.f32 %v3513, %v3518
    %v3520 = vmul.f32 %v3514, %v3518
    %v3521 = vlaneseq
    %v3522 = vshrl.u32 %v3521, 7
    %v3523 = vsub.s32 3, %v3522
    %v3524 = vrot.slane %v2627, %v3523
    %v3525 = vadd.f32 %v3519, %v3524
    %v3526 = vadd.f32 %v3520, %v3524
    %v3527 = vld [vmem:[%s33] sm:$0xff]
    %v3528 = vld [vmem:[%s33 + $0x8] sm:$0xff]
    %v3529 = vld [vmem:[%s33 + $0x10] sm:$0xff]
    %v3530 = vld [vmem:[%s33 + $0x18] sm:$0xff]
    %v3531 = vld [vmem:[%s35] sm:$0x1]
    %v3533 = vlaneseq
    %v3534 = vshrl.u32 %v3533, 7
    %v3535 = vsub.s32 0, %v3534
    %v3536 = vrot.slane %v3531, %v3535
    %v3539 = vsel %vm172, %v3525, 0
    %v3542 = vsel %vm172, %v3526, 0
    %3544 = vmatprep.subr.mxu0 0.0
    %3545 = vmatpush1.msra.mxu0 %v3527
    %3546 = vmatprep.subr.mxu0 0.0
    %3547 = vmatpush1.msra.mxu0 %v3528
    %3548 = vmatprep.subr.mxu0 0.0
    %3549 = vmatpush1.msra.mxu0 %v3529
    %3550 = vmatprep.subr.mxu0 0.0
    %3551 = vmatpush1.msra.mxu0 %v3530
    %3552 = vmatprep.subr.mxu0 0.0
    %3553 = vmatpush1.msra.mxu0 0.0
    %3554 = vmatprep.subr.mxu0 0.0
    %3555 = vmatpush1.msra.mxu0 0.0
    %3556 = vmatprep.subr.mxu0 0.0
    %3557 = vmatpush1.msra.mxu0 0.0
    %3558 = vmatprep.subr.mxu0 0.0
    %3559 = vmatpush1.msra.mxu0 0.0
    %3560 = vmatprep.subr.mxu0 0.0
    %3561 = vmatpush1.msra.mxu0 0.0
    %3562 = vmatprep.subr.mxu0 0.0
    %3563 = vmatpush1.msra.mxu0 0.0
    %3564 = vmatprep.subr.mxu0 0.0
    %3565 = vmatpush1.msra.mxu0 0.0
    %3566 = vmatprep.subr.mxu0 0.0
    %3567 = vmatpush1.msra.mxu0 0.0
    %3568 = vmatprep.subr.mxu0 0.0
    %3569 = vmatpush1.msra.mxu0 0.0
    %3570 = vmatprep.subr.mxu0 0.0
    %3571 = vmatpush1.msra.mxu0 0.0
    %3572 = vmatprep.subr.mxu0 0.0
    %3573 = vmatpush1.msra.mxu0 0.0
    %3574 = vmatprep.subr.mxu0 0.0
    %3575 = vmatpush1.msra.mxu0 0.0
    %3576 = vmatprep.subr.mxu0 0.0
    %3577 = vmatpush1.msra.mxu0 0.0
    %3578 = vmatprep.subr.mxu0 0.0
    %3579 = vmatpush1.msra.mxu0 0.0
    %3580 = vmatprep.subr.mxu0 0.0
    %3581 = vmatpush1.msra.mxu0 0.0
    %3582 = vmatprep.subr.mxu0 0.0
    %3583 = vmatpush1.msra.mxu0 0.0
    %3584 = vmatprep.subr.mxu0 0.0
    %3585 = vmatpush1.msra.mxu0 0.0
    %3586 = vmatprep.subr.mxu0 0.0
    %3587 = vmatpush1.msra.mxu0 0.0
    %3588 = vmatprep.subr.mxu0 0.0
    %3589 = vmatpush1.msra.mxu0 0.0
    %3590 = vmatprep.subr.mxu0 0.0
    %3591 = vmatpush1.msra.mxu0 0.0
    %3592 = vmatprep.subr.mxu0 0.0
    %3593 = vmatpush1.msra.mxu0 0.0
    %3594 = vmatprep.subr.mxu0 0.0
    %3595 = vmatpush1.msra.mxu0 0.0
    %3596 = vmatprep.subr.mxu0 0.0
    %3597 = vmatpush1.msra.mxu0 0.0
    %3598 = vmatprep.subr.mxu0 0.0
    %3599 = vmatpush1.msra.mxu0 0.0
    %3600 = vmatprep.subr.mxu0 0.0
    %3601 = vmatpush1.msra.mxu0 0.0
    %3602 = vmatprep.subr.mxu0 0.0
    %3603 = vmatpush1.msra.mxu0 0.0
    %3604 = vmatprep.subr.mxu0 0.0
    %3605 = vmatpush1.msra.mxu0 0.0
    %3606 = vmatprep.subr.mxu0 0.0
    %3607 = vmatpush1.msra.mxu0 0.0
    %3608 = vmatprep.mubr.f32.mxu0 0.0
    %3609 = vmatmul.mubr.f32.gmra.mrb[0].mxu0 %v3539
    %v3610 = vpop.f32.mrb[0].mxu0
    %v3611 = vadd.f32 %v3536, %v3610
    %v3612 = vpop.f32.mrb[0].mxu0
    %3613 = vmatprep.mubr.f32.mxu0 0.0
    %3614 = vmatmul.mubr.f32.gmra.mrb[0].mxu0 %v3542
    %v3615 = vpop.f32.mrb[0].mxu0
    %v3616 = vadd.f32 %v3536, %v3615
    %v3617 = vpop.f32.mrb[0].mxu0
    %3618 = vdwg.mxu0
    %v3619 = vmax.f32 %v3611, 0.0
    %v3620 = vmax.f32 %v3616, 0.0
    %v3621 = vld [vmem:[%s37] sm:$0xff]
    %v3622 = vld [vmem:[%s37 + $0x8] sm:$0xff]
    %v3623 = vld [vmem:[%s37 + $0x10] sm:$0xff]
    %v3624 = vld [vmem:[%s37 + $0x18] sm:$0xff]
    %v3625 = vld [vmem:[%s37 + $0x20] sm:$0xff]
    %v3626 = vld [vmem:[%s37 + $0x28] sm:$0xff]
    %v3627 = vld [vmem:[%s37 + $0x30] sm:$0xff]
    %v3628 = vld [vmem:[%s37 + $0x38] sm:$0xff]
    %v3629 = vlaneseq
    %v3630 = vshrl.u32 %v3629, 7
    %v3631 = vsub.s32 4, %v3630
    %v3632 = vrot.slane %v2627, %v3631
    %v3634 = vsel %vm1009, %v3619, 0
    %v3637 = vsel %vm1009, %v3620, 0
    %3639 = vmatprep.subr.mxu0 0.0
    %3640 = vmatpush1.msra.mxu0 %v3621
    %3641 = vmatprep.subr.mxu0 0.0
    %3642 = vmatpush1.msra.mxu0 %v3622
    %3643 = vmatprep.subr.mxu0 0.0
    %3644 = vmatpush1.msra.mxu0 %v3623
    %3645 = vmatprep.subr.mxu0 0.0
    %3646 = vmatpush1.msra.mxu0 %v3624
    %3647 = vmatprep.subr.mxu0 0.0
    %3648 = vmatpush1.msra.mxu0 %v3625
    %3649 = vmatprep.subr.mxu0 0.0
    %3650 = vmatpush1.msra.mxu0 %v3626
    %3651 = vmatprep.subr.mxu0 0.0
    %3652 = vmatpush1.msra.mxu0 %v3627
    %3653 = vmatprep.subr.mxu0 0.0
    %3654 = vmatpush1.msra.mxu0 %v3628
    %3655 = vmatprep.subr.mxu0 0.0
    %3656 = vmatpush1.msra.mxu0 0.0
    %3657 = vmatprep.subr.mxu0 0.0
    %3658 = vmatpush1.msra.mxu0 0.0
    %3659 = vmatprep.subr.mxu0 0.0
    %3660 = vmatpush1.msra.mxu0 0.0
    %3661 = vmatprep.subr.mxu0 0.0
    %3662 = vmatpush1.msra.mxu0 0.0
    %3663 = vmatprep.subr.mxu0 0.0
    %3664 = vmatpush1.msra.mxu0 0.0
    %3665 = vmatprep.subr.mxu0 0.0
    %3666 = vmatpush1.msra.mxu0 0.0
    %3667 = vmatprep.subr.mxu0 0.0
    %3668 = vmatpush1.msra.mxu0 0.0
    %3669 = vmatprep.subr.mxu0 0.0
    %3670 = vmatpush1.msra.mxu0 0.0
    %3671 = vmatprep.subr.mxu0 0.0
    %3672 = vmatpush1.msra.mxu0 0.0
    %3673 = vmatprep.subr.mxu0 0.0
    %3674 = vmatpush1.msra.mxu0 0.0
    %3675 = vmatprep.subr.mxu0 0.0
    %3676 = vmatpush1.msra.mxu0 0.0
    %3677 = vmatprep.subr.mxu0 0.0
    %3678 = vmatpush1.msra.mxu0 0.0
    %3679 = vmatprep.subr.mxu0 0.0
    %3680 = vmatpush1.msra.mxu0 0.0
    %3681 = vmatprep.subr.mxu0 0.0
    %3682 = vmatpush1.msra.mxu0 0.0
    %3683 = vmatprep.subr.mxu0 0.0
    %3684 = vmatpush1.msra.mxu0 0.0
    %3685 = vmatprep.subr.mxu0 0.0
    %3686 = vmatpush1.msra.mxu0 0.0
    %3687 = vmatprep.subr.mxu0 0.0
    %3688 = vmatpush1.msra.mxu0 0.0
    %3689 = vmatprep.subr.mxu0 0.0
    %3690 = vmatpush1.msra.mxu0 0.0
    %3691 = vmatprep.subr.mxu0 0.0
    %3692 = vmatpush1.msra.mxu0 0.0
    %3693 = vmatprep.subr.mxu0 0.0
    %3694 = vmatpush1.msra.mxu0 0.0
    %3695 = vmatprep.subr.mxu0 0.0
    %3696 = vmatpush1.msra.mxu0 0.0
    %3697 = vmatprep.subr.mxu0 0.0
    %3698 = vmatpush1.msra.mxu0 0.0
    %3699 = vmatprep.subr.mxu0 0.0
    %3700 = vmatpush1.msra.mxu0 0.0
    %3701 = vmatprep.subr.mxu0 0.0
    %3702 = vmatpush1.msra.mxu0 0.0
    %3703 = vmatprep.mubr.f32.mxu0 0.0
    %3704 = vmatmul.mubr.f32.gmra.mrb[0].mxu0 %v3634
    %v3705 = vpop.f32.mrb[0].mxu0
    %v3706 = vadd.f32 %v3632, %v3705
    %v3707 = vpop.f32.mrb[0].mxu0
    %3708 = vmatprep.mubr.f32.mxu0 0.0
    %3709 = vmatmul.mubr.f32.gmra.mrb[0].mxu0 %v3637
    %v3710 = vpop.f32.mrb[0].mxu0
    %v3711 = vadd.f32 %v3632, %v3710
    %v3712 = vpop.f32.mrb[0].mxu0
    %3713 = vdwg.mxu0
    %v3714 = vadd.f32 %v3706, %v3525
    %v3715 = vadd.f32 %v3711, %v3526
    %v3716 = vsel %vm172, %v3714, 0.0
    %3717 = vadd.xlane.f32.xlu0 %v3716
    %v3718 = vpop.xlane.xlu0 %3717
    %v3719 = vsel %vm172, %v3715, 0.0
    %3720 = vadd.xlane.f32.xlu0 %v3719
    %v3721 = vpop.xlane.xlu0 %3720
    %v3722 = vmul.f32 %v3718, %v179
    %v3723 = vmul.f32 %v3721, %v179
    %v3724 = vsub.f32 %v3714, %v3722
    %v3725 = vsub.f32 %v3715, %v3723
    %v3726 = vmul.f32 %v3724, %v3724
    %v3727 = vmul.f32 %v3725, %v3725
    %v3728 = vsel %vm172, %v3726, 0.0
    %3729 = vadd.xlane.f32.xlu0 %v3728
    %v3730 = vpop.xlane.xlu0 %3729
    %v3731 = vsel %vm172, %v3727, 0.0
    %3732 = vadd.xlane.f32.xlu0 %v3731
    %v3733 = vpop.xlane.xlu0 %3732
    %v3734 = vmul.f32 %v3730, %v179
    %v3735 = vmul.f32 %v3733, %v179
    %v3736 = vadd.f32 %v3734, 1e-06
    %v3737 = vadd.f32 %v3735, 1e-06
    %v3738 = vrsqrt.pop %v3736
    %v3739 = vrsqrt.pop %v3737
    %v3740 = vmul.f32 %v3724, %v3738
    %v3741 = vmul.f32 %v3725, %v3739
    %v3742 = vlaneseq
    %v3743 = vshrl.u32 %v3742, 7
    %v3744 = vsub.s32 5, %v3743
    %v3745 = vrot.slane %v2627, %v3744
    %v3746 = vmul.f32 %v3740, %v3745
    %v3747 = vmul.f32 %v3741, %v3745
    %v3748 = vlaneseq
    %v3749 = vshrl.u32 %v3748, 7
    %v3750 = vsub.s32 6, %v3749
    %v3751 = vrot.slane %v2627, %v3750
    %v3752 = vadd.f32 %v3746, %v3751
    %v3753 = vadd.f32 %v3747, %v3751
    %s3754 = scalar_lea.vmem %s39, 8
    %v3755 = vld [vmem:[%s3754] sm:$0x7f]
    %s3756 = scalar_lea.vmem %s25, 32
    %v3757 = vld [vmem:[%s3756] sm:$0xff]
    %v3758 = vld [vmem:[%s3756 + $0x8] sm:$0xff]
    %v3759 = vld [vmem:[%s3756 + $0x10] sm:$0xff]
    %v3760 = vld [vmem:[%s3756 + $0x18] sm:$0xff]
    %s3761 = scalar_lea.vmem %s27, 32
    %v3762 = vld [vmem:[%s3761] sm:$0xff]
    %v3763 = vld [vmem:[%s3761 + $0x8] sm:$0xff]
    %v3764 = vld [vmem:[%s3761 + $0x10] sm:$0xff]
    %v3765 = vld [vmem:[%s3761 + $0x18] sm:$0xff]
    %v3767 = vsel %vm172, %v3752, 0
    %v3770 = vsel %vm172, %v3753, 0
    %3772 = vmatprep.subr.mxu0 0.0
    %3773 = vmatpush1.msra.mxu0 %v3757
    %3774 = vmatprep.subr.mxu0 0.0
    %3775 = vmatpush1.msra.mxu0 %v3758
    %3776 = vmatprep.subr.mxu0 0.0
    %3777 = vmatpush1.msra.mxu0 %v3759
    %3778 = vmatprep.subr.mxu0 0.0
    %3779 = vmatpush1.msra.mxu0 %v3760
    %3780 = vmatprep.subr.mxu0 0.0
    %3781 = vmatpush1.msra.mxu0 0.0
    %3782 = vmatprep.subr.mxu0 0.0
    %3783 = vmatpush1.msra.mxu0 0.0
    %3784 = vmatprep.subr.mxu0 0.0
    %3785 = vmatpush1.msra.mxu0 0.0
    %3786 = vmatprep.subr.mxu0 0.0
    %3787 = vmatpush1.msra.mxu0 0.0
    %3788 = vmatprep.subr.mxu0 0.0
    %3789 = vmatpush1.msra.mxu0 0.0
    %3790 = vmatprep.subr.mxu0 0.0
    %3791 = vmatpush1.msra.mxu0 0.0
    %3792 = vmatprep.subr.mxu0 0.0
    %3793 = vmatpush1.msra.mxu0 0.0
    %3794 = vmatprep.subr.mxu0 0.0
    %3795 = vmatpush1.msra.mxu0 0.0
    %3796 = vmatprep.subr.mxu0 0.0
    %3797 = vmatpush1.msra.mxu0 0.0
    %3798 = vmatprep.subr.mxu0 0.0
    %3799 = vmatpush1.msra.mxu0 0.0
    %3800 = vmatprep.subr.mxu0 0.0
    %3801 = vmatpush1.msra.mxu0 0.0
    %3802 = vmatprep.subr.mxu0 0.0
    %3803 = vmatpush1.msra.mxu0 0.0
    %3804 = vmatprep.subr.mxu0 0.0
    %3805 = vmatpush1.msra.mxu0 0.0
    %3806 = vmatprep.subr.mxu0 0.0
    %3807 = vmatpush1.msra.mxu0 0.0
    %3808 = vmatprep.subr.mxu0 0.0
    %3809 = vmatpush1.msra.mxu0 0.0
    %3810 = vmatprep.subr.mxu0 0.0
    %3811 = vmatpush1.msra.mxu0 0.0
    %3812 = vmatprep.subr.mxu0 0.0
    %3813 = vmatpush1.msra.mxu0 0.0
    %3814 = vmatprep.subr.mxu0 0.0
    %3815 = vmatpush1.msra.mxu0 0.0
    %3816 = vmatprep.subr.mxu0 0.0
    %3817 = vmatpush1.msra.mxu0 0.0
    %3818 = vmatprep.subr.mxu0 0.0
    %3819 = vmatpush1.msra.mxu0 0.0
    %3820 = vmatprep.subr.mxu0 0.0
    %3821 = vmatpush1.msra.mxu0 0.0
    %3822 = vmatprep.subr.mxu0 0.0
    %3823 = vmatpush1.msra.mxu0 0.0
    %3824 = vmatprep.subr.mxu0 0.0
    %3825 = vmatpush1.msra.mxu0 0.0
    %3826 = vmatprep.subr.mxu0 0.0
    %3827 = vmatpush1.msra.mxu0 0.0
    %3828 = vmatprep.subr.mxu0 0.0
    %3829 = vmatpush1.msra.mxu0 0.0
    %3830 = vmatprep.subr.mxu0 0.0
    %3831 = vmatpush1.msra.mxu0 0.0
    %3832 = vmatprep.subr.mxu0 0.0
    %3833 = vmatpush1.msra.mxu0 0.0
    %3834 = vmatprep.subr.mxu0 0.0
    %3835 = vmatpush1.msra.mxu0 0.0
    %3836 = vmatprep.mubr.f32.mxu0 0.0
    %3837 = vmatmul.mubr.f32.gmra.mrb[0].mxu0 %v3767
    %v3838 = vpop.f32.mrb[0].mxu0
    %v3839 = vadd.f32 0.0, %v3838
    %v3840 = vpop.f32.mrb[0].mxu0
    %3841 = vmatprep.mubr.f32.mxu0 0.0
    %3842 = vmatmul.mubr.f32.gmra.mrb[0].mxu0 %v3770
    %v3843 = vpop.f32.mrb[0].mxu0
    %v3844 = vadd.f32 0.0, %v3843
    %v3845 = vpop.f32.mrb[0].mxu0
    %3846 = vdwg.mxu0
    %3849 = vrot.lane.b32.xlu0 %v3839, 96
    %v3850 = vpop.permute.xlu0 %3849
    %3851 = vrot.lane.b32.xlu0 %v3844, 96
    %v3852 = vpop.permute.xlu0 %3851
    %v3853 = vsel %vm308, %v3839, 0
    %v3855 = vsel %vm308, %v3844, 0
    %v3857 = vsel %vm308, %v3850, 0
    %v3859 = vsel %vm308, %v3852, 0
    %3861 = vmatprep.subr.mxu0 0.0
    %3862 = vmatpush1.xpose.msra.mxu0 %v3857
    %3863 = vmatprep.subr.mxu0 0.0
    %3864 = vmatpush1.xpose.msra.mxu0 %v3859
    %3865 = vmatprep.subr.mxu0 0.0
    %3866 = vmatpush1.xpose.msra.mxu0 0.0
    %3867 = vmatprep.subr.mxu0 0.0
    %3868 = vmatpush1.xpose.msra.mxu0 0.0
    %3869 = vmatprep.subr.mxu0 0.0
    %3870 = vmatpush1.xpose.msra.mxu0 0.0
    %3871 = vmatprep.subr.mxu0 0.0
    %3872 = vmatpush1.xpose.msra.mxu0 0.0
    %3873 = vmatprep.subr.mxu0 0.0
    %3874 = vmatpush1.xpose.msra.mxu0 0.0
    %3875 = vmatprep.subr.mxu0 0.0
    %3876 = vmatpush1.xpose.msra.mxu0 0.0
    %3877 = vmatprep.subr.mxu0 0.0
    %3878 = vmatpush1.xpose.msra.mxu0 0.0
    %3879 = vmatprep.subr.mxu0 0.0
    %3880 = vmatpush1.xpose.msra.mxu0 0.0
    %3881 = vmatprep.subr.mxu0 0.0
    %3882 = vmatpush1.xpose.msra.mxu0 0.0
    %3883 = vmatprep.subr.mxu0 0.0
    %3884 = vmatpush1.xpose.msra.mxu0 0.0
    %3885 = vmatprep.subr.mxu0 0.0
    %3886 = vmatpush1.xpose.msra.mxu0 0.0
    %3887 = vmatprep.subr.mxu0 0.0
    %3888 = vmatpush1.xpose.msra.mxu0 0.0
    %3889 = vmatprep.subr.mxu0 0.0
    %3890 = vmatpush1.xpose.msra.mxu0 0.0
    %3891 = vmatprep.subr.mxu0 0.0
    %3892 = vmatpush1.xpose.msra.mxu0 0.0
    %3893 = vmatprep.subr.mxu0 0.0
    %3894 = vmatpush1.xpose.msra.mxu0 0.0
    %3895 = vmatprep.subr.mxu0 0.0
    %3896 = vmatpush1.xpose.msra.mxu0 0.0
    %3897 = vmatprep.subr.mxu0 0.0
    %3898 = vmatpush1.xpose.msra.mxu0 0.0
    %3899 = vmatprep.subr.mxu0 0.0
    %3900 = vmatpush1.xpose.msra.mxu0 0.0
    %3901 = vmatprep.subr.mxu0 0.0
    %3902 = vmatpush1.xpose.msra.mxu0 0.0
    %3903 = vmatprep.subr.mxu0 0.0
    %3904 = vmatpush1.xpose.msra.mxu0 0.0
    %3905 = vmatprep.subr.mxu0 0.0
    %3906 = vmatpush1.xpose.msra.mxu0 0.0
    %3907 = vmatprep.subr.mxu0 0.0
    %3908 = vmatpush1.xpose.msra.mxu0 0.0
    %3909 = vmatprep.subr.mxu0 0.0
    %3910 = vmatpush1.xpose.msra.mxu0 0.0
    %3911 = vmatprep.subr.mxu0 0.0
    %3912 = vmatpush1.xpose.msra.mxu0 0.0
    %3913 = vmatprep.subr.mxu0 0.0
    %3914 = vmatpush1.xpose.msra.mxu0 0.0
    %3915 = vmatprep.subr.mxu0 0.0
    %3916 = vmatpush1.xpose.msra.mxu0 0.0
    %3917 = vmatprep.subr.mxu0 0.0
    %3918 = vmatpush1.xpose.msra.mxu0 0.0
    %3919 = vmatprep.subr.mxu0 0.0
    %3920 = vmatpush1.xpose.msra.mxu0 0.0
    %3921 = vmatprep.subr.mxu0 0.0
    %3922 = vmatpush1.xpose.msra.mxu0 0.0
    %3923 = vmatprep.subr.mxu0 0.0
    %3924 = vmatpush1.xpose.msra.mxu0 0.0
    %3925 = vmatprep.mubr.f32.mxu0 0.0
    %3926 = vmatmul.mubr.f32.gmra.mrb[0].mxu0 %v3853
    %v3927 = vpop.f32.mrb[0].mxu0
    %v3928 = vadd.f32 %v2585, %v3927
    %v3929 = vpop.f32.mrb[0].mxu0
    %3930 = vmatprep.mubr.f32.mxu0 0.0
    %3931 = vmatmul.mubr.f32.gmra.mrb[0].mxu0 %v3855
    %v3932 = vpop.f32.mrb[0].mxu0
    %v3933 = vadd.f32 %v2586, %v3932
    %v3934 = vpop.f32.mrb[0].mxu0
    %3935 = vdwg.mxu0
    %v3936 = vsel %vm308, %v3928, -inf
    %3937 = vmax.xlane.f32.xlu0 %v3936
    %v3938 = vpop.xlane.xlu0 %3937
    %v3939 = vsel %vm308, %v3933, -inf
    %3940 = vmax.xlane.f32.xlu0 %v3939
    %v3941 = vpop.xlane.xlu0 %3940
    %v3942 = vsub.f32 %v3928, %v3938
    %v3943 = vsub.f32 %v3933, %v3941
    %v3944 = vmul.f32 %v3942, 1.442695
    %v3945 = vpow.pop %v3944
    %v3946 = vmul.f32 %v3943, 1.442695
    %v3947 = vpow.pop %v3946
    %3948 = vrot.lane.b32.xlu0 %v3839, 64
    %v3949 = vpop.permute.xlu0 %3948
    %3950 = vrot.lane.b32.xlu0 %v3844, 64
    %v3951 = vpop.permute.xlu0 %3950
    %v3955 = vsel %vm308, %v3945, 0
    %v3958 = vsel %vm308, %v3947, 0
    %3960 = vmatprep.subr.mxu0 0.0
    %3961 = vmatpush1.msra.mxu0 %v3949
    %3962 = vmatprep.subr.mxu0 0.0
    %3963 = vmatpush1.msra.mxu0 %v3951
    %3964 = vmatprep.subr.mxu0 0.0
    %3965 = vmatpush1.msra.mxu0 0.0
    %3966 = vmatprep.subr.mxu0 0.0
    %3967 = vmatpush1.msra.mxu0 0.0
    %3968 = vmatprep.subr.mxu0 0.0
    %3969 = vmatpush1.msra.mxu0 0.0
    %3970 = vmatprep.subr.mxu0 0.0
    %3971 = vmatpush1.msra.mxu0 0.0
    %3972 = vmatprep.subr.mxu0 0.0
    %3973 = vmatpush1.msra.mxu0 0.0
    %3974 = vmatprep.subr.mxu0 0.0
    %3975 = vmatpush1.msra.mxu0 0.0
    %3976 = vmatprep.subr.mxu0 0.0
    %3977 = vmatpush1.msra.mxu0 0.0
    %3978 = vmatprep.subr.mxu0 0.0
    %3979 = vmatpush1.msra.mxu0 0.0
    %3980 = vmatprep.subr.mxu0 0.0
    %3981 = vmatpush1.msra.mxu0 0.0
    %3982 = vmatprep.subr.mxu0 0.0
    %3983 = vmatpush1.msra.mxu0 0.0
    %3984 = vmatprep.subr.mxu0 0.0
    %3985 = vmatpush1.msra.mxu0 0.0
    %3986 = vmatprep.subr.mxu0 0.0
    %3987 = vmatpush1.msra.mxu0 0.0
    %3988 = vmatprep.subr.mxu0 0.0
    %3989 = vmatpush1.msra.mxu0 0.0
    %3990 = vmatprep.subr.mxu0 0.0
    %3991 = vmatpush1.msra.mxu0 0.0
    %3992 = vmatprep.subr.mxu0 0.0
    %3993 = vmatpush1.msra.mxu0 0.0
    %3994 = vmatprep.subr.mxu0 0.0
    %3995 = vmatpush1.msra.mxu0 0.0
    %3996 = vmatprep.subr.mxu0 0.0
    %3997 = vmatpush1.msra.mxu0 0.0
    %3998 = vmatprep.subr.mxu0 0.0
    %3999 = vmatpush1.msra.mxu0 0.0
    %4000 = vmatprep.subr.mxu0 0.0
    %4001 = vmatpush1.msra.mxu0 0.0
    %4002 = vmatprep.subr.mxu0 0.0
    %4003 = vmatpush1.msra.mxu0 0.0
    %4004 = vmatprep.subr.mxu0 0.0
    %4005 = vmatpush1.msra.mxu0 0.0
    %4006 = vmatprep.subr.mxu0 0.0
    %4007 = vmatpush1.msra.mxu0 0.0
    %4008 = vmatprep.subr.mxu0 0.0
    %4009 = vmatpush1.msra.mxu0 0.0
    %4010 = vmatprep.subr.mxu0 0.0
    %4011 = vmatpush1.msra.mxu0 0.0
    %4012 = vmatprep.subr.mxu0 0.0
    %4013 = vmatpush1.msra.mxu0 0.0
    %4014 = vmatprep.subr.mxu0 0.0
    %4015 = vmatpush1.msra.mxu0 0.0
    %4016 = vmatprep.subr.mxu0 0.0
    %4017 = vmatpush1.msra.mxu0 0.0
    %4018 = vmatprep.subr.mxu0 0.0
    %4019 = vmatpush1.msra.mxu0 0.0
    %4020 = vmatprep.subr.mxu0 0.0
    %4021 = vmatpush1.msra.mxu0 0.0
    %4022 = vmatprep.subr.mxu0 0.0
    %4023 = vmatpush1.msra.mxu0 0.0
    %4024 = vmatprep.mubr.f32.mxu0 0.0
    %4025 = vmatmul.mubr.f32.gmra.mrb[0].mxu0 %v3955
    %v4026 = vpop.f32.mrb[0].mxu0
    %v4027 = vadd.f32 0.0, %v4026
    %v4028 = vpop.f32.mrb[0].mxu0
    %4029 = vmatprep.mubr.f32.mxu0 0.0
    %4030 = vmatmul.mubr.f32.gmra.mrb[0].mxu0 %v3958
    %v4031 = vpop.f32.mrb[0].mxu0
    %v4032 = vadd.f32 0.0, %v4031
    %v4033 = vpop.f32.mrb[0].mxu0
    %4034 = vdwg.mxu0
    %v4035 = vsel %vm308, %v3945, 0.0
    %4036 = vadd.xlane.f32.xlu0 %v4035
    %v4037 = vpop.xlane.xlu0 %4036
    %v4038 = vsel %vm308, %v3947, 0.0
    %4039 = vadd.xlane.f32.xlu0 %v4038
    %v4040 = vpop.xlane.xlu0 %4039
    %v4041 = vrcp.pop %v4037
    %v4042 = vmul.f32 %v4027, %v4041
    %v4043 = vrcp.pop %v4040
    %v4044 = vmul.f32 %v4032, %v4043
    %4045 = vrot.lane.b32.xlu0 %v3839, 112
    %v4046 = vpop.permute.xlu0 %4045
    %4047 = vrot.lane.b32.xlu0 %v3844, 112
    %v4048 = vpop.permute.xlu0 %4047
    %4049 = vrot.lane.b32.xlu0 %v3839, 80
    %v4050 = vpop.permute.xlu0 %4049
    %4051 = vrot.lane.b32.xlu0 %v3844, 80
    %v4052 = vpop.permute.xlu0 %4051
    %v4053 = vsel %vm308, %v4046, 0
    %v4055 = vsel %vm308, %v4048, 0
    %v4057 = vsel %vm308, %v4050, 0
    %v4059 = vsel %vm308, %v4052, 0
    %4061 = vmatprep.subr.mxu0 0.0
    %4062 = vmatpush1.xpose.msra.mxu0 %v4057
    %4063 = vmatprep.subr.mxu0 0.0
    %4064 = vmatpush1.xpose.msra.mxu0 %v4059
    %4065 = vmatprep.subr.mxu0 0.0
    %4066 = vmatpush1.xpose.msra.mxu0 0.0
    %4067 = vmatprep.subr.mxu0 0.0
    %4068 = vmatpush1.xpose.msra.mxu0 0.0
    %4069 = vmatprep.subr.mxu0 0.0
    %4070 = vmatpush1.xpose.msra.mxu0 0.0
    %4071 = vmatprep.subr.mxu0 0.0
    %4072 = vmatpush1.xpose.msra.mxu0 0.0
    %4073 = vmatprep.subr.mxu0 0.0
    %4074 = vmatpush1.xpose.msra.mxu0 0.0
    %4075 = vmatprep.subr.mxu0 0.0
    %4076 = vmatpush1.xpose.msra.mxu0 0.0
    %4077 = vmatprep.subr.mxu0 0.0
    %4078 = vmatpush1.xpose.msra.mxu0 0.0
    %4079 = vmatprep.subr.mxu0 0.0
    %4080 = vmatpush1.xpose.msra.mxu0 0.0
    %4081 = vmatprep.subr.mxu0 0.0
    %4082 = vmatpush1.xpose.msra.mxu0 0.0
    %4083 = vmatprep.subr.mxu0 0.0
    %4084 = vmatpush1.xpose.msra.mxu0 0.0
    %4085 = vmatprep.subr.mxu0 0.0
    %4086 = vmatpush1.xpose.msra.mxu0 0.0
    %4087 = vmatprep.subr.mxu0 0.0
    %4088 = vmatpush1.xpose.msra.mxu0 0.0
    %4089 = vmatprep.subr.mxu0 0.0
    %4090 = vmatpush1.xpose.msra.mxu0 0.0
    %4091 = vmatprep.subr.mxu0 0.0
    %4092 = vmatpush1.xpose.msra.mxu0 0.0
    %4093 = vmatprep.subr.mxu0 0.0
    %4094 = vmatpush1.xpose.msra.mxu0 0.0
    %4095 = vmatprep.subr.mxu0 0.0
    %4096 = vmatpush1.xpose.msra.mxu0 0.0
    %4097 = vmatprep.subr.mxu0 0.0
    %4098 = vmatpush1.xpose.msra.mxu0 0.0
    %4099 = vmatprep.subr.mxu0 0.0
    %4100 = vmatpush1.xpose.msra.mxu0 0.0
    %4101 = vmatprep.subr.mxu0 0.0
    %4102 = vmatpush1.xpose.msra.mxu0 0.0
    %4103 = vmatprep.subr.mxu0 0.0
    %4104 = vmatpush1.xpose.msra.mxu0 0.0
    %4105 = vmatprep.subr.mxu0 0.0
    %4106 = vmatpush1.xpose.msra.mxu0 0.0
    %4107 = vmatprep.subr.mxu0 0.0
    %4108 = vmatpush1.xpose.msra.mxu0 0.0
    %4109 = vmatprep.subr.mxu0 0.0
    %4110 = vmatpush1.xpose.msra.mxu0 0.0
    %4111 = vmatprep.subr.mxu0 0.0
    %4112 = vmatpush1.xpose.msra.mxu0 0.0
    %4113 = vmatprep.subr.mxu0 0.0
    %4114 = vmatpush1.xpose.msra.mxu0 0.0
    %4115 = vmatprep.subr.mxu0 0.0
    %4116 = vmatpush1.xpose.msra.mxu0 0.0
    %4117 = vmatprep.subr.mxu0 0.0
    %4118 = vmatpush1.xpose.msra.mxu0 0.0
    %4119 = vmatprep.subr.mxu0 0.0
    %4120 = vmatpush1.xpose.msra.mxu0 0.0
    %4121 = vmatprep.subr.mxu0 0.0
    %4122 = vmatpush1.xpose.msra.mxu0 0.0
    %4123 = vmatprep.subr.mxu0 0.0
    %4124 = vmatpush1.xpose.msra.mxu0 0.0
    %4125 = vmatprep.mubr.f32.mxu0 0.0
    %4126 = vmatmul.mubr.f32.gmra.mrb[0].mxu0 %v4053
    %v4127 = vpop.f32.mrb[0].mxu0
    %v4128 = vadd.f32 %v2585, %v4127
    %v4129 = vpop.f32.mrb[0].mxu0
    %4130 = vmatprep.mubr.f32.mxu0 0.0
    %4131 = vmatmul.mubr.f32.gmra.mrb[0].mxu0 %v4055
    %v4132 = vpop.f32.mrb[0].mxu0
    %v4133 = vadd.f32 %v2586, %v4132
    %v4134 = vpop.f32.mrb[0].mxu0
    %4135 = vdwg.mxu0
    %v4136 = vsel %vm308, %v4128, -inf
    %4137 = vmax.xlane.f32.xlu0 %v4136
    %v4138 = vpop.xlane.xlu0 %4137
    %v4139 = vsel %vm308, %v4133, -inf
    %4140 = vmax.xlane.f32.xlu0 %v4139
    %v4141 = vpop.xlane.xlu0 %4140
    %v4142 = vsub.f32 %v4128, %v4138
    %v4143 = vsub.f32 %v4133, %v4141
    %v4144 = vmul.f32 %v4142, 1.442695
    %v4145 = vpow.pop %v4144
    %v4146 = vmul.f32 %v4143, 1.442695
    %v4147 = vpow.pop %v4146
    %4148 = vrot.lane.b32.xlu0 %v3839, 48
    %v4149 = vpop.permute.xlu0 %4148
    %4150 = vrot.lane.b32.xlu0 %v3844, 48
    %v4151 = vpop.permute.xlu0 %4150
    %v4155 = vsel %vm308, %v4145, 0
    %v4158 = vsel %vm308, %v4147, 0
    %4160 = vmatprep.subr.mxu0 0.0
    %4161 = vmatpush1.msra.mxu0 %v4149
    %4162 = vmatprep.subr.mxu0 0.0
    %4163 = vmatpush1.msra.mxu0 %v4151
    %4164 = vmatprep.subr.mxu0 0.0
    %4165 = vmatpush1.msra.mxu0 0.0
    %4166 = vmatprep.subr.mxu0 0.0
    %4167 = vmatpush1.msra.mxu0 0.0
    %4168 = vmatprep.subr.mxu0 0.0
    %4169 = vmatpush1.msra.mxu0 0.0
    %4170 = vmatprep.subr.mxu0 0.0
    %4171 = vmatpush1.msra.mxu0 0.0
    %4172 = vmatprep.subr.mxu0 0.0
    %4173 = vmatpush1.msra.mxu0 0.0
    %4174 = vmatprep.subr.mxu0 0.0
    %4175 = vmatpush1.msra.mxu0 0.0
    %4176 = vmatprep.subr.mxu0 0.0
    %4177 = vmatpush1.msra.mxu0 0.0
    %4178 = vmatprep.subr.mxu0 0.0
    %4179 = vmatpush1.msra.mxu0 0.0
    %4180 = vmatprep.subr.mxu0 0.0
    %4181 = vmatpush1.msra.mxu0 0.0
    %4182 = vmatprep.subr.mxu0 0.0
    %4183 = vmatpush1.msra.mxu0 0.0
    %4184 = vmatprep.subr.mxu0 0.0
    %4185 = vmatpush1.msra.mxu0 0.0
    %4186 = vmatprep.subr.mxu0 0.0
    %4187 = vmatpush1.msra.mxu0 0.0
    %4188 = vmatprep.subr.mxu0 0.0
    %4189 = vmatpush1.msra.mxu0 0.0
    %4190 = vmatprep.subr.mxu0 0.0
    %4191 = vmatpush1.msra.mxu0 0.0
    %4192 = vmatprep.subr.mxu0 0.0
    %4193 = vmatpush1.msra.mxu0 0.0
    %4194 = vmatprep.subr.mxu0 0.0
    %4195 = vmatpush1.msra.mxu0 0.0
    %4196 = vmatprep.subr.mxu0 0.0
    %4197 = vmatpush1.msra.mxu0 0.0
    %4198 = vmatprep.subr.mxu0 0.0
    %4199 = vmatpush1.msra.mxu0 0.0
    %4200 = vmatprep.subr.mxu0 0.0
    %4201 = vmatpush1.msra.mxu0 0.0
    %4202 = vmatprep.subr.mxu0 0.0
    %4203 = vmatpush1.msra.mxu0 0.0
    %4204 = vmatprep.subr.mxu0 0.0
    %4205 = vmatpush1.msra.mxu0 0.0
    %4206 = vmatprep.subr.mxu0 0.0
    %4207 = vmatpush1.msra.mxu0 0.0
    %4208 = vmatprep.subr.mxu0 0.0
    %4209 = vmatpush1.msra.mxu0 0.0
    %4210 = vmatprep.subr.mxu0 0.0
    %4211 = vmatpush1.msra.mxu0 0.0
    %4212 = vmatprep.subr.mxu0 0.0
    %4213 = vmatpush1.msra.mxu0 0.0
    %4214 = vmatprep.subr.mxu0 0.0
    %4215 = vmatpush1.msra.mxu0 0.0
    %4216 = vmatprep.subr.mxu0 0.0
    %4217 = vmatpush1.msra.mxu0 0.0
    %4218 = vmatprep.subr.mxu0 0.0
    %4219 = vmatpush1.msra.mxu0 0.0
    %4220 = vmatprep.subr.mxu0 0.0
    %4221 = vmatpush1.msra.mxu0 0.0
    %4222 = vmatprep.subr.mxu0 0.0
    %4223 = vmatpush1.msra.mxu0 0.0
    %4224 = vmatprep.mubr.f32.mxu0 0.0
    %4225 = vmatmul.mubr.f32.gmra.mrb[0].mxu0 %v4155
    %v4226 = vpop.f32.mrb[0].mxu0
    %v4227 = vadd.f32 0.0, %v4226
    %v4228 = vpop.f32.mrb[0].mxu0
    %4229 = vmatprep.mubr.f32.mxu0 0.0
    %4230 = vmatmul.mubr.f32.gmra.mrb[0].mxu0 %v4158
    %v4231 = vpop.f32.mrb[0].mxu0
    %v4232 = vadd.f32 0.0, %v4231
    %v4233 = vpop.f32.mrb[0].mxu0
    %4234 = vdwg.mxu0
    %v4235 = vsel %vm308, %v4145, 0.0
    %4236 = vadd.xlane.f32.xlu0 %v4235
    %v4237 = vpop.xlane.xlu0 %4236
    %v4238 = vsel %vm308, %v4147, 0.0
    %4239 = vadd.xlane.f32.xlu0 %v4238
    %v4240 = vpop.xlane.xlu0 %4239
    %v4241 = vrcp.pop %v4237
    %v4242 = vmul.f32 %v4227, %v4241
    %v4243 = vrcp.pop %v4240
    %v4244 = vmul.f32 %v4232, %v4243
    %v4246 = vsel %vm308, %v4242, 0
    %v4249 = vsel %vm308, %v4244, 0
    %4251 = vmatprep.subr.mxu0 0.0
    %4252 = vmatpush1.msra.mxu0 %v3764
    %4253 = vmatprep.subr.mxu0 0.0
    %4254 = vmatpush1.msra.mxu0 %v3765
    %4255 = vmatprep.subr.mxu0 0.0
    %4256 = vmatpush1.msra.mxu0 0.0
    %4257 = vmatprep.subr.mxu0 0.0
    %4258 = vmatpush1.msra.mxu0 0.0
    %4259 = vmatprep.subr.mxu0 0.0
    %4260 = vmatpush1.msra.mxu0 0.0
    %4261 = vmatprep.subr.mxu0 0.0
    %4262 = vmatpush1.msra.mxu0 0.0
    %4263 = vmatprep.subr.mxu0 0.0
    %4264 = vmatpush1.msra.mxu0 0.0
    %4265 = vmatprep.subr.mxu0 0.0
    %4266 = vmatpush1.msra.mxu0 0.0
    %4267 = vmatprep.subr.mxu0 0.0
    %4268 = vmatpush1.msra.mxu0 0.0
    %4269 = vmatprep.subr.mxu0 0.0
    %4270 = vmatpush1.msra.mxu0 0.0
    %4271 = vmatprep.subr.mxu0 0.0
    %4272 = vmatpush1.msra.mxu0 0.0
    %4273 = vmatprep.subr.mxu0 0.0
    %4274 = vmatpush1.msra.mxu0 0.0
    %4275 = vmatprep.subr.mxu0 0.0
    %4276 = vmatpush1.msra.mxu0 0.0
    %4277 = vmatprep.subr.mxu0 0.0
    %4278 = vmatpush1.msra.mxu0 0.0
    %4279 = vmatprep.subr.mxu0 0.0
    %4280 = vmatpush1.msra.mxu0 0.0
    %4281 = vmatprep.subr.mxu0 0.0
    %4282 = vmatpush1.msra.mxu0 0.0
    %4283 = vmatprep.subr.mxu0 0.0
    %4284 = vmatpush1.msra.mxu0 0.0
    %4285 = vmatprep.subr.mxu0 0.0
    %4286 = vmatpush1.msra.mxu0 0.0
    %4287 = vmatprep.subr.mxu0 0.0
    %4288 = vmatpush1.msra.mxu0 0.0
    %4289 = vmatprep.subr.mxu0 0.0
    %4290 = vmatpush1.msra.mxu0 0.0
    %4291 = vmatprep.subr.mxu0 0.0
    %4292 = vmatpush1.msra.mxu0 0.0
    %4293 = vmatprep.subr.mxu0 0.0
    %4294 = vmatpush1.msra.mxu0 0.0
    %4295 = vmatprep.subr.mxu0 0.0
    %4296 = vmatpush1.msra.mxu0 0.0
    %4297 = vmatprep.subr.mxu0 0.0
    %4298 = vmatpush1.msra.mxu0 0.0
    %4299 = vmatprep.subr.mxu0 0.0
    %4300 = vmatpush1.msra.mxu0 0.0
    %4301 = vmatprep.subr.mxu0 0.0
    %4302 = vmatpush1.msra.mxu0 0.0
    %4303 = vmatprep.subr.mxu0 0.0
    %4304 = vmatpush1.msra.mxu0 0.0
    %4305 = vmatprep.subr.mxu0 0.0
    %4306 = vmatpush1.msra.mxu0 0.0
    %4307 = vmatprep.subr.mxu0 0.0
    %4308 = vmatpush1.msra.mxu0 0.0
    %4309 = vmatprep.subr.mxu0 0.0
    %4310 = vmatpush1.msra.mxu0 0.0
    %4311 = vmatprep.subr.mxu0 0.0
    %4312 = vmatpush1.msra.mxu0 0.0
    %4313 = vmatprep.subr.mxu0 0.0
    %4314 = vmatpush1.msra.mxu0 0.0
    %4315 = vmatprep.mubr.f32.mxu0 0.0
    %4316 = vmatmul.mubr.f32.gmra.mrb[0].mxu0 %v4246
    %v4317 = vpop.f32.mrb[0].mxu0
    %v4318 = vadd.f32 0.0, %v4317
    %v4319 = vpop.f32.mrb[0].mxu0
    %4320 = vmatprep.mubr.f32.mxu0 0.0
    %4321 = vmatmul.mubr.f32.gmra.mrb[0].mxu0 %v4249
    %v4322 = vpop.f32.mrb[0].mxu0
    %v4323 = vadd.f32 0.0, %v4322
    %v4324 = vpop.f32.mrb[0].mxu0
    %4325 = vdwg.mxu0
    %v4327 = vsel %vm308, %v4042, 0
    %v4330 = vsel %vm308, %v4044, 0
    %4332 = vmatprep.subr.mxu0 0.0
    %4333 = vmatpush1.msra.mxu0 %v3762
    %4334 = vmatprep.subr.mxu0 0.0
    %4335 = vmatpush1.msra.mxu0 %v3763
    %4336 = vmatprep.subr.mxu0 0.0
    %4337 = vmatpush1.msra.mxu0 0.0
    %4338 = vmatprep.subr.mxu0 0.0
    %4339 = vmatpush1.msra.mxu0 0.0
    %4340 = vmatprep.subr.mxu0 0.0
    %4341 = vmatpush1.msra.mxu0 0.0
    %4342 = vmatprep.subr.mxu0 0.0
    %4343 = vmatpush1.msra.mxu0 0.0
    %4344 = vmatprep.subr.mxu0 0.0
    %4345 = vmatpush1.msra.mxu0 0.0
    %4346 = vmatprep.subr.mxu0 0.0
    %4347 = vmatpush1.msra.mxu0 0.0
    %4348 = vmatprep.subr.mxu0 0.0
    %4349 = vmatpush1.msra.mxu0 0.0
    %4350 = vmatprep.subr.mxu0 0.0
    %4351 = vmatpush1.msra.mxu0 0.0
    %4352 = vmatprep.subr.mxu0 0.0
    %4353 = vmatpush1.msra.mxu0 0.0
    %4354 = vmatprep.subr.mxu0 0.0
    %4355 = vmatpush1.msra.mxu0 0.0
    %4356 = vmatprep.subr.mxu0 0.0
    %4357 = vmatpush1.msra.mxu0 0.0
    %4358 = vmatprep.subr.mxu0 0.0
    %4359 = vmatpush1.msra.mxu0 0.0
    %4360 = vmatprep.subr.mxu0 0.0
    %4361 = vmatpush1.msra.mxu0 0.0
    %4362 = vmatprep.subr.mxu0 0.0
    %4363 = vmatpush1.msra.mxu0 0.0
    %4364 = vmatprep.subr.mxu0 0.0
    %4365 = vmatpush1.msra.mxu0 0.0
    %4366 = vmatprep.subr.mxu0 0.0
    %4367 = vmatpush1.msra.mxu0 0.0
    %4368 = vmatprep.subr.mxu0 0.0
    %4369 = vmatpush1.msra.mxu0 0.0
    %4370 = vmatprep.subr.mxu0 0.0
    %4371 = vmatpush1.msra.mxu0 0.0
    %4372 = vmatprep.subr.mxu0 0.0
    %4373 = vmatpush1.msra.mxu0 0.0
    %4374 = vmatprep.subr.mxu0 0.0
    %4375 = vmatpush1.msra.mxu0 0.0
    %4376 = vmatprep.subr.mxu0 0.0
    %4377 = vmatpush1.msra.mxu0 0.0
    %4378 = vmatprep.subr.mxu0 0.0
    %4379 = vmatpush1.msra.mxu0 0.0
    %4380 = vmatprep.subr.mxu0 0.0
    %4381 = vmatpush1.msra.mxu0 0.0
    %4382 = vmatprep.subr.mxu0 0.0
    %4383 = vmatpush1.msra.mxu0 0.0
    %4384 = vmatprep.subr.mxu0 0.0
    %4385 = vmatpush1.msra.mxu0 0.0
    %4386 = vmatprep.subr.mxu0 0.0
    %4387 = vmatpush1.msra.mxu0 0.0
    %4388 = vmatprep.subr.mxu0 0.0
    %4389 = vmatpush1.msra.mxu0 0.0
    %4390 = vmatprep.subr.mxu0 0.0
    %4391 = vmatpush1.msra.mxu0 0.0
    %4392 = vmatprep.subr.mxu0 0.0
    %4393 = vmatpush1.msra.mxu0 0.0
    %4394 = vmatprep.subr.mxu0 0.0
    %4395 = vmatpush1.msra.mxu0 0.0
    %4396 = vmatprep.mubr.f32.mxu0 0.0
    %4397 = vmatmul.mubr.f32.gmra.mrb[0].mxu0 %v4327
    %v4398 = vpop.f32.mrb[0].mxu0
    %v4399 = vadd.f32 %v4318, %v4398
    %v4400 = vpop.f32.mrb[0].mxu0
    %4401 = vmatprep.mubr.f32.mxu0 0.0
    %4402 = vmatmul.mubr.f32.gmra.mrb[0].mxu0 %v4330
    %v4403 = vpop.f32.mrb[0].mxu0
    %v4404 = vadd.f32 %v4323, %v4403
    %v4405 = vpop.f32.mrb[0].mxu0
    %4406 = vdwg.mxu0
    %v4407 = vadd.f32 %v4399, %v3752
    %v4408 = vadd.f32 %v4404, %v3753
    %v4409 = vsel %vm172, %v4407, 0.0
    %4410 = vadd.xlane.f32.xlu0 %v4409
    %v4411 = vpop.xlane.xlu0 %4410
    %v4412 = vsel %vm172, %v4408, 0.0
    %4413 = vadd.xlane.f32.xlu0 %v4412
    %v4414 = vpop.xlane.xlu0 %4413
    %v4415 = vmul.f32 %v4411, %v179
    %v4416 = vmul.f32 %v4414, %v179
    %v4417 = vsub.f32 %v4407, %v4415
    %v4418 = vsub.f32 %v4408, %v4416
    %v4419 = vmul.f32 %v4417, %v4417
    %v4420 = vmul.f32 %v4418, %v4418
    %v4421 = vsel %vm172, %v4419, 0.0
    %4422 = vadd.xlane.f32.xlu0 %v4421
    %v4423 = vpop.xlane.xlu0 %4422
    %v4424 = vsel %vm172, %v4420, 0.0
    %4425 = vadd.xlane.f32.xlu0 %v4424
    %v4426 = vpop.xlane.xlu0 %4425
    %v4427 = vmul.f32 %v4423, %v179
    %v4428 = vmul.f32 %v4426, %v179
    %v4429 = vadd.f32 %v4427, 1e-06
    %v4430 = vadd.f32 %v4428, 1e-06
    %v4431 = vrsqrt.pop %v4429
    %v4432 = vrsqrt.pop %v4430
    %v4433 = vmul.f32 %v4417, %v4431
    %v4434 = vmul.f32 %v4418, %v4432
    %v4435 = vlaneseq
    %v4436 = vshrl.u32 %v4435, 7
    %v4437 = vsub.s32 0, %v4436
    %v4438 = vrot.slane %v3755, %v4437
    %v4439 = vmul.f32 %v4433, %v4438
    %v4440 = vmul.f32 %v4434, %v4438
    %v4441 = vlaneseq
    %v4442 = vshrl.u32 %v4441, 7
    %v4443 = vsub.s32 1, %v4442
    %v4444 = vrot.slane %v3755, %v4443
    %v4445 = vadd.f32 %v4439, %v4444
    %v4446 = vadd.f32 %v4440, %v4444
    %s4447 = scalar_lea.vmem %s29, 32
    %v4448 = vld [vmem:[%s4447] sm:$0xff]
    %v4449 = vld [vmem:[%s4447 + $0x8] sm:$0xff]
    %v4450 = vld [vmem:[%s4447 + $0x10] sm:$0xff]
    %v4451 = vld [vmem:[%s4447 + $0x18] sm:$0xff]
    %4452 = vmatprep.subr.mxu0 0.0
    %4453 = vmatpush1.msra.mxu0 %v4448
    %4454 = vmatprep.subr.mxu0 0.0
    %4455 = vmatpush1.msra.mxu0 %v4449
    %4456 = vmatprep.subr.mxu0 0.0
    %4457 = vmatpush1.msra.mxu0 %v4450
    %4458 = vmatprep.subr.mxu0 0.0
    %4459 = vmatpush1.msra.mxu0 %v4451
    %4460 = vmatprep.subr.mxu0 0.0
    %4461 = vmatpush1.msra.mxu0 0.0
    %4462 = vmatprep.subr.mxu0 0.0
    %4463 = vmatpush1.msra.mxu0 0.0
    %4464 = vmatprep.subr.mxu0 0.0
    %4465 = vmatpush1.msra.mxu0 0.0
    %4466 = vmatprep.subr.mxu0 0.0
    %4467 = vmatpush1.msra.mxu0 0.0
    %4468 = vmatprep.subr.mxu0 0.0
    %4469 = vmatpush1.msra.mxu0 0.0
    %4470 = vmatprep.subr.mxu0 0.0
    %4471 = vmatpush1.msra.mxu0 0.0
    %4472 = vmatprep.subr.mxu0 0.0
    %4473 = vmatpush1.msra.mxu0 0.0
    %4474 = vmatprep.subr.mxu0 0.0
    %4475 = vmatpush1.msra.mxu0 0.0
    %4476 = vmatprep.subr.mxu0 0.0
    %4477 = vmatpush1.msra.mxu0 0.0
    %4478 = vmatprep.subr.mxu0 0.0
    %4479 = vmatpush1.msra.mxu0 0.0
    %4480 = vmatprep.subr.mxu0 0.0
    %4481 = vmatpush1.msra.mxu0 0.0
    %4482 = vmatprep.subr.mxu0 0.0
    %4483 = vmatpush1.msra.mxu0 0.0
    %4484 = vmatprep.subr.mxu0 0.0
    %4485 = vmatpush1.msra.mxu0 0.0
    %4486 = vmatprep.subr.mxu0 0.0
    %4487 = vmatpush1.msra.mxu0 0.0
    %4488 = vmatprep.subr.mxu0 0.0
    %4489 = vmatpush1.msra.mxu0 0.0
    %4490 = vmatprep.subr.mxu0 0.0
    %4491 = vmatpush1.msra.mxu0 0.0
    %4492 = vmatprep.subr.mxu0 0.0
    %4493 = vmatpush1.msra.mxu0 0.0
    %4494 = vmatprep.subr.mxu0 0.0
    %4495 = vmatpush1.msra.mxu0 0.0
    %4496 = vmatprep.subr.mxu0 0.0
    %4497 = vmatpush1.msra.mxu0 0.0
    %4498 = vmatprep.subr.mxu0 0.0
    %4499 = vmatpush1.msra.mxu0 0.0
    %4500 = vmatprep.subr.mxu0 0.0
    %4501 = vmatpush1.msra.mxu0 0.0
    %4502 = vmatprep.subr.mxu0 0.0
    %4503 = vmatpush1.msra.mxu0 0.0
    %4504 = vmatprep.subr.mxu0 0.0
    %4505 = vmatpush1.msra.mxu0 0.0
    %4506 = vmatprep.subr.mxu0 0.0
    %4507 = vmatpush1.msra.mxu0 0.0
    %4508 = vmatprep.subr.mxu0 0.0
    %4509 = vmatpush1.msra.mxu0 0.0
    %4510 = vmatprep.subr.mxu0 0.0
    %4511 = vmatpush1.msra.mxu0 0.0
    %4512 = vmatprep.subr.mxu0 0.0
    %4513 = vmatpush1.msra.mxu0 0.0
    %4514 = vmatprep.subr.mxu0 0.0
    %4515 = vmatpush1.msra.mxu0 0.0
    %4516 = vmatprep.mubr.f32.mxu0 0.0
    %4517 = vmatmul.mubr.f32.gmra.mrb[0].mxu0 %v3322
    %v4518 = vpop.f32.mrb[0].mxu0
    %v4519 = vadd.f32 0.0, %v4518
    %v4520 = vpop.f32.mrb[0].mxu0
    %4521 = vmatprep.mubr.f32.mxu0 0.0
    %4522 = vmatmul.mubr.f32.gmra.mrb[0].mxu0 %v3325
    %v4523 = vpop.f32.mrb[0].mxu0
    %v4524 = vadd.f32 0.0, %v4523
    %v4525 = vpop.f32.mrb[0].mxu0
    %4526 = vdwg.mxu0
    %s4527 = scalar_lea.vmem %s31, 32
    %v4528 = vld [vmem:[%s4527] sm:$0xff]
    %v4529 = vld [vmem:[%s4527 + $0x8] sm:$0xff]
    %v4530 = vld [vmem:[%s4527 + $0x10] sm:$0xff]
    %v4531 = vld [vmem:[%s4527 + $0x18] sm:$0xff]
    %v4533 = vsel %vm172, %v4519, 0
    %v4536 = vsel %vm172, %v4524, 0
    %4538 = vmatprep.subr.mxu0 0.0
    %4539 = vmatpush1.msra.mxu0 %v4528
    %4540 = vmatprep.subr.mxu0 0.0
    %4541 = vmatpush1.msra.mxu0 %v4529
    %4542 = vmatprep.subr.mxu0 0.0
    %4543 = vmatpush1.msra.mxu0 %v4530
    %4544 = vmatprep.subr.mxu0 0.0
    %4545 = vmatpush1.msra.mxu0 %v4531
    %4546 = vmatprep.subr.mxu0 0.0
    %4547 = vmatpush1.msra.mxu0 0.0
    %4548 = vmatprep.subr.mxu0 0.0
    %4549 = vmatpush1.msra.mxu0 0.0
    %4550 = vmatprep.subr.mxu0 0.0
    %4551 = vmatpush1.msra.mxu0 0.0
    %4552 = vmatprep.subr.mxu0 0.0
    %4553 = vmatpush1.msra.mxu0 0.0
    %4554 = vmatprep.subr.mxu0 0.0
    %4555 = vmatpush1.msra.mxu0 0.0
    %4556 = vmatprep.subr.mxu0 0.0
    %4557 = vmatpush1.msra.mxu0 0.0
    %4558 = vmatprep.subr.mxu0 0.0
    %4559 = vmatpush1.msra.mxu0 0.0
    %4560 = vmatprep.subr.mxu0 0.0
    %4561 = vmatpush1.msra.mxu0 0.0
    %4562 = vmatprep.subr.mxu0 0.0
    %4563 = vmatpush1.msra.mxu0 0.0
    %4564 = vmatprep.subr.mxu0 0.0
    %4565 = vmatpush1.msra.mxu0 0.0
    %4566 = vmatprep.subr.mxu0 0.0
    %4567 = vmatpush1.msra.mxu0 0.0
    %4568 = vmatprep.subr.mxu0 0.0
    %4569 = vmatpush1.msra.mxu0 0.0
    %4570 = vmatprep.subr.mxu0 0.0
    %4571 = vmatpush1.msra.mxu0 0.0
    %4572 = vmatprep.subr.mxu0 0.0
    %4573 = vmatpush1.msra.mxu0 0.0
    %4574 = vmatprep.subr.mxu0 0.0
    %4575 = vmatpush1.msra.mxu0 0.0
    %4576 = vmatprep.subr.mxu0 0.0
    %4577 = vmatpush1.msra.mxu0 0.0
    %4578 = vmatprep.subr.mxu0 0.0
    %4579 = vmatpush1.msra.mxu0 0.0
    %4580 = vmatprep.subr.mxu0 0.0
    %4581 = vmatpush1.msra.mxu0 0.0
    %4582 = vmatprep.subr.mxu0 0.0
    %4583 = vmatpush1.msra.mxu0 0.0
    %4584 = vmatprep.subr.mxu0 0.0
    %4585 = vmatpush1.msra.mxu0 0.0
    %4586 = vmatprep.subr.mxu0 0.0
    %4587 = vmatpush1.msra.mxu0 0.0
    %4588 = vmatprep.subr.mxu0 0.0
    %4589 = vmatpush1.msra.mxu0 0.0
    %4590 = vmatprep.subr.mxu0 0.0
    %4591 = vmatpush1.msra.mxu0 0.0
    %4592 = vmatprep.subr.mxu0 0.0
    %4593 = vmatpush1.msra.mxu0 0.0
    %4594 = vmatprep.subr.mxu0 0.0
    %4595 = vmatpush1.msra.mxu0 0.0
    %4596 = vmatprep.subr.mxu0 0.0
    %4597 = vmatpush1.msra.mxu0 0.0
    %4598 = vmatprep.subr.mxu0 0.0
    %4599 = vmatpush1.msra.mxu0 0.0
    %4600 = vmatprep.subr.mxu0 0.0
    %4601 = vmatpush1.msra.mxu0 0.0
    %4602 = vmatprep.mubr.f32.mxu0 0.0
    %4603 = vmatmul.mubr.f32.gmra.mrb[0].mxu0 %v4533
    %v4604 = vpop.f32.mrb[0].mxu0
    %v4605 = vadd.f32 0.0, %v4604
    %v4606 = vpop.f32.mrb[0].mxu0
    %4607 = vmatprep.mubr.f32.mxu0 0.0
    %4608 = vmatmul.mubr.f32.gmra.mrb[0].mxu0 %v4536
    %v4609 = vpop.f32.mrb[0].mxu0
    %v4610 = vadd.f32 0.0, %v4609
    %v4611 = vpop.f32.mrb[0].mxu0
    %4612 = vdwg.mxu0
    %v4613 = vadd.f32 %v4445, %v4605
    %v4614 = vadd.f32 %v4446, %v4610
    %v4615 = vsel %vm172, %v4613, 0.0
    %4616 = vadd.xlane.f32.xlu0 %v4615
    %v4617 = vpop.xlane.xlu0 %4616
    %v4618 = vsel %vm172, %v4614, 0.0
    %4619 = vadd.xlane.f32.xlu0 %v4618
    %v4620 = vpop.xlane.xlu0 %4619
    %v4621 = vmul.f32 %v4617, %v179
    %v4622 = vmul.f32 %v4620, %v179
    %v4623 = vsub.f32 %v4613, %v4621
    %v4624 = vsub.f32 %v4614, %v4622
    %v4625 = vmul.f32 %v4623, %v4623
    %v4626 = vmul.f32 %v4624, %v4624
    %v4627 = vsel %vm172, %v4625, 0.0
    %4628 = vadd.xlane.f32.xlu0 %v4627
    %v4629 = vpop.xlane.xlu0 %4628
    %v4630 = vsel %vm172, %v4626, 0.0
    %4631 = vadd.xlane.f32.xlu0 %v4630
    %v4632 = vpop.xlane.xlu0 %4631
    %v4633 = vmul.f32 %v4629, %v179
    %v4634 = vmul.f32 %v4632, %v179
    %v4635 = vadd.f32 %v4633, 1e-06
    %v4636 = vadd.f32 %v4634, 1e-06
    %v4637 = vrsqrt.pop %v4635
    %v4638 = vrsqrt.pop %v4636
    %v4639 = vmul.f32 %v4623, %v4637
    %v4640 = vmul.f32 %v4624, %v4638
    %v4641 = vlaneseq
    %v4642 = vshrl.u32 %v4641, 7
    %v4643 = vsub.s32 2, %v4642
    %v4644 = vrot.slane %v3755, %v4643
    %v4645 = vmul.f32 %v4639, %v4644
    %v4646 = vmul.f32 %v4640, %v4644
    %v4647 = vlaneseq
    %v4648 = vshrl.u32 %v4647, 7
    %v4649 = vsub.s32 3, %v4648
    %v4650 = vrot.slane %v3755, %v4649
    %v4651 = vadd.f32 %v4645, %v4650
    %v4652 = vadd.f32 %v4646, %v4650
    %s4653 = scalar_lea.vmem %s33, 32
    %v4654 = vld [vmem:[%s4653] sm:$0xff]
    %v4655 = vld [vmem:[%s4653 + $0x8] sm:$0xff]
    %v4656 = vld [vmem:[%s4653 + $0x10] sm:$0xff]
    %v4657 = vld [vmem:[%s4653 + $0x18] sm:$0xff]
    %s4658 = scalar_lea.vmem %s35, 1
    %v4659 = vld [vmem:[%s4658] sm:$0x1]
    %v4661 = vlaneseq
    %v4662 = vshrl.u32 %v4661, 7
    %v4663 = vsub.s32 0, %v4662
    %v4664 = vrot.slane %v4659, %v4663
    %v4667 = vsel %vm172, %v4651, 0
    %v4670 = vsel %vm172, %v4652, 0
    %4672 = vmatprep.subr.mxu0 0.0
    %4673 = vmatpush1.msra.mxu0 %v4654
    %4674 = vmatprep.subr.mxu0 0.0
    %4675 = vmatpush1.msra.mxu0 %v4655
    %4676 = vmatprep.subr.mxu0 0.0
    %4677 = vmatpush1.msra.mxu0 %v4656
    %4678 = vmatprep.subr.mxu0 0.0
    %4679 = vmatpush1.msra.mxu0 %v4657
    %4680 = vmatprep.subr.mxu0 0.0
    %4681 = vmatpush1.msra.mxu0 0.0
    %4682 = vmatprep.subr.mxu0 0.0
    %4683 = vmatpush1.msra.mxu0 0.0
    %4684 = vmatprep.subr.mxu0 0.0
    %4685 = vmatpush1.msra.mxu0 0.0
    %4686 = vmatprep.subr.mxu0 0.0
    %4687 = vmatpush1.msra.mxu0 0.0
    %4688 = vmatprep.subr.mxu0 0.0
    %4689 = vmatpush1.msra.mxu0 0.0
    %4690 = vmatprep.subr.mxu0 0.0
    %4691 = vmatpush1.msra.mxu0 0.0
    %4692 = vmatprep.subr.mxu0 0.0
    %4693 = vmatpush1.msra.mxu0 0.0
    %4694 = vmatprep.subr.mxu0 0.0
    %4695 = vmatpush1.msra.mxu0 0.0
    %4696 = vmatprep.subr.mxu0 0.0
    %4697 = vmatpush1.msra.mxu0 0.0
    %4698 = vmatprep.subr.mxu0 0.0
    %4699 = vmatpush1.msra.mxu0 0.0
    %4700 = vmatprep.subr.mxu0 0.0
    %4701 = vmatpush1.msra.mxu0 0.0
    %4702 = vmatprep.subr.mxu0 0.0
    %4703 = vmatpush1.msra.mxu0 0.0
    %4704 = vmatprep.subr.mxu0 0.0
    %4705 = vmatpush1.msra.mxu0 0.0
    %4706 = vmatprep.subr.mxu0 0.0
    %4707 = vmatpush1.msra.mxu0 0.0
    %4708 = vmatprep.subr.mxu0 0.0
    %4709 = vmatpush1.msra.mxu0 0.0
    %4710 = vmatprep.subr.mxu0 0.0
    %4711 = vmatpush1.msra.mxu0 0.0
    %4712 = vmatprep.subr.mxu0 0.0
    %4713 = vmatpush1.msra.mxu0 0.0
    %4714 = vmatprep.subr.mxu0 0.0
    %4715 = vmatpush1.msra.mxu0 0.0
    %4716 = vmatprep.subr.mxu0 0.0
    %4717 = vmatpush1.msra.mxu0 0.0
    %4718 = vmatprep.subr.mxu0 0.0
    %4719 = vmatpush1.msra.mxu0 0.0
    %4720 = vmatprep.subr.mxu0 0.0
    %4721 = vmatpush1.msra.mxu0 0.0
    %4722 = vmatprep.subr.mxu0 0.0
    %4723 = vmatpush1.msra.mxu0 0.0
    %4724 = vmatprep.subr.mxu0 0.0
    %4725 = vmatpush1.msra.mxu0 0.0
    %4726 = vmatprep.subr.mxu0 0.0
    %4727 = vmatpush1.msra.mxu0 0.0
    %4728 = vmatprep.subr.mxu0 0.0
    %4729 = vmatpush1.msra.mxu0 0.0
    %4730 = vmatprep.subr.mxu0 0.0
    %4731 = vmatpush1.msra.mxu0 0.0
    %4732 = vmatprep.subr.mxu0 0.0
    %4733 = vmatpush1.msra.mxu0 0.0
    %4734 = vmatprep.subr.mxu0 0.0
    %4735 = vmatpush1.msra.mxu0 0.0
    %4736 = vmatprep.mubr.f32.mxu0 0.0
    %4737 = vmatmul.mubr.f32.gmra.mrb[0].mxu0 %v4667
    %v4738 = vpop.f32.mrb[0].mxu0
    %v4739 = vadd.f32 %v4664, %v4738
    %v4740 = vpop.f32.mrb[0].mxu0
    %4741 = vmatprep.mubr.f32.mxu0 0.0
    %4742 = vmatmul.mubr.f32.gmra.mrb[0].mxu0 %v4670
    %v4743 = vpop.f32.mrb[0].mxu0
    %v4744 = vadd.f32 %v4664, %v4743
    %v4745 = vpop.f32.mrb[0].mxu0
    %4746 = vdwg.mxu0
    %v4747 = vmax.f32 %v4739, 0.0
    %v4748 = vmax.f32 %v4744, 0.0
    %s4749 = scalar_lea.vmem %s37, 64
    %v4750 = vld [vmem:[%s4749] sm:$0xff]
    %v4751 = vld [vmem:[%s4749 + $0x8] sm:$0xff]
    %v4752 = vld [vmem:[%s4749 + $0x10] sm:$0xff]
    %v4753 = vld [vmem:[%s4749 + $0x18] sm:$0xff]
    %v4754 = vld [vmem:[%s4749 + $0x20] sm:$0xff]
    %v4755 = vld [vmem:[%s4749 + $0x28] sm:$0xff]
    %v4756 = vld [vmem:[%s4749 + $0x30] sm:$0xff]
    %v4757 = vld [vmem:[%s4749 + $0x38] sm:$0xff]
    %v4758 = vlaneseq
    %v4759 = vshrl.u32 %v4758, 7
    %v4760 = vsub.s32 4, %v4759
    %v4761 = vrot.slane %v3755, %v4760
    %v4763 = vsel %vm1009, %v4747, 0
    %v4766 = vsel %vm1009, %v4748, 0
    %4768 = vmatprep.subr.mxu0 0.0
    %4769 = vmatpush1.msra.mxu0 %v4750
    %4770 = vmatprep.subr.mxu0 0.0
    %4771 = vmatpush1.msra.mxu0 %v4751
    %4772 = vmatprep.subr.mxu0 0.0
    %4773 = vmatpush1.msra.mxu0 %v4752
    %4774 = vmatprep.subr.mxu0 0.0
    %4775 = vmatpush1.msra.mxu0 %v4753
    %4776 = vmatprep.subr.mxu0 0.0
    %4777 = vmatpush1.msra.mxu0 %v4754
    %4778 = vmatprep.subr.mxu0 0.0
    %4779 = vmatpush1.msra.mxu0 %v4755
    %4780 = vmatprep.subr.mxu0 0.0
    %4781 = vmatpush1.msra.mxu0 %v4756
    %4782 = vmatprep.subr.mxu0 0.0
    %4783 = vmatpush1.msra.mxu0 %v4757
    %4784 = vmatprep.subr.mxu0 0.0
    %4785 = vmatpush1.msra.mxu0 0.0
    %4786 = vmatprep.subr.mxu0 0.0
    %4787 = vmatpush1.msra.mxu0 0.0
    %4788 = vmatprep.subr.mxu0 0.0
    %4789 = vmatpush1.msra.mxu0 0.0
    %4790 = vmatprep.subr.mxu0 0.0
    %4791 = vmatpush1.msra.mxu0 0.0
    %4792 = vmatprep.subr.mxu0 0.0
    %4793 = vmatpush1.msra.mxu0 0.0
    %4794 = vmatprep.subr.mxu0 0.0
    %4795 = vmatpush1.msra.mxu0 0.0
    %4796 = vmatprep.subr.mxu0 0.0
    %4797 = vmatpush1.msra.mxu0 0.0
    %4798 = vmatprep.subr.mxu0 0.0
    %4799 = vmatpush1.msra.mxu0 0.0
    %4800 = vmatprep.subr.mxu0 0.0
    %4801 = vmatpush1.msra.mxu0 0.0
    %4802 = vmatprep.subr.mxu0 0.0
    %4803 = vmatpush1.msra.mxu0 0.0
    %4804 = vmatprep.subr.mxu0 0.0
    %4805 = vmatpush1.msra.mxu0 0.0
    %4806 = vmatprep.subr.mxu0 0.0
    %4807 = vmatpush1.msra.mxu0 0.0
    %4808 = vmatprep.subr.mxu0 0.0
    %4809 = vmatpush1.msra.mxu0 0.0
    %4810 = vmatprep.subr.mxu0 0.0
    %4811 = vmatpush1.msra.mxu0 0.0
    %4812 = vmatprep.subr.mxu0 0.0
    %4813 = vmatpush1.msra.mxu0 0.0
    %4814 = vmatprep.subr.mxu0 0.0
    %4815 = vmatpush1.msra.mxu0 0.0
    %4816 = vmatprep.subr.mxu0 0.0
    %4817 = vmatpush1.msra.mxu0 0.0
    %4818 = vmatprep.subr.mxu0 0.0
    %4819 = vmatpush1.msra.mxu0 0.0
    %4820 = vmatprep.subr.mxu0 0.0
    %4821 = vmatpush1.msra.mxu0 0.0
    %4822 = vmatprep.subr.mxu0 0.0
    %4823 = vmatpush1.msra.mxu0 0.0
    %4824 = vmatprep.subr.mxu0 0.0
    %4825 = vmatpush1.msra.mxu0 0.0
    %4826 = vmatprep.subr.mxu0 0.0
    %4827 = vmatpush1.msra.mxu0 0.0
    %4828 = vmatprep.subr.mxu0 0.0
    %4829 = vmatpush1.msra.mxu0 0.0
    %4830 = vmatprep.subr.mxu0 0.0
    %4831 = vmatpush1.msra.mxu0 0.0
    %4832 = vmatprep.mubr.f32.mxu0 0.0
    %4833 = vmatmul.mubr.f32.gmra.mrb[0].mxu0 %v4763
    %v4834 = vpop.f32.mrb[0].mxu0
    %v4835 = vadd.f32 %v4761, %v4834
    %v4836 = vpop.f32.mrb[0].mxu0
    %4837 = vmatprep.mubr.f32.mxu0 0.0
    %4838 = vmatmul.mubr.f32.gmra.mrb[0].mxu0 %v4766
    %v4839 = vpop.f32.mrb[0].mxu0
    %v4840 = vadd.f32 %v4761, %v4839
    %v4841 = vpop.f32.mrb[0].mxu0
    %4842 = vdwg.mxu0
    %v4843 = vadd.f32 %v4835, %v4651
    %v4844 = vadd.f32 %v4840, %v4652
    %v4845 = vsel %vm172, %v4843, 0.0
    %4846 = vadd.xlane.f32.xlu0 %v4845
    %v4847 = vpop.xlane.xlu0 %4846
    %v4848 = vsel %vm172, %v4844, 0.0
    %4849 = vadd.xlane.f32.xlu0 %v4848
    %v4850 = vpop.xlane.xlu0 %4849
    %v4851 = vmul.f32 %v4847, %v179
    %v4852 = vmul.f32 %v4850, %v179
    %v4853 = vsub.f32 %v4843, %v4851
    %v4854 = vsub.f32 %v4844, %v4852
    %v4855 = vmul.f32 %v4853, %v4853
    %v4856 = vmul.f32 %v4854, %v4854
    %v4857 = vsel %vm172, %v4855, 0.0
    %4858 = vadd.xlane.f32.xlu0 %v4857
    %v4859 = vpop.xlane.xlu0 %4858
    %v4860 = vsel %vm172, %v4856, 0.0
    %4861 = vadd.xlane.f32.xlu0 %v4860
    %v4862 = vpop.xlane.xlu0 %4861
    %v4863 = vmul.f32 %v4859, %v179
    %v4864 = vmul.f32 %v4862, %v179
    %v4865 = vadd.f32 %v4863, 1e-06
    %v4866 = vadd.f32 %v4864, 1e-06
    %v4867 = vrsqrt.pop %v4865
    %v4868 = vrsqrt.pop %v4866
    %v4869 = vmul.f32 %v4853, %v4867
    %v4870 = vmul.f32 %v4854, %v4868
    %v4871 = vlaneseq
    %v4872 = vshrl.u32 %v4871, 7
    %v4873 = vsub.s32 5, %v4872
    %v4874 = vrot.slane %v3755, %v4873
    %v4875 = vmul.f32 %v4869, %v4874
    %v4876 = vmul.f32 %v4870, %v4874
    %v4877 = vlaneseq
    %v4878 = vshrl.u32 %v4877, 7
    %v4879 = vsub.s32 6, %v4878
    %v4880 = vrot.slane %v3755, %v4879
    %v4881 = vadd.f32 %v4875, %v4880
    %v4882 = vadd.f32 %v4876, %v4880
    %4883 = vst.msk [vmem:[#allocation4] sm:$0xff] %vm172, %v4881
    %4884 = vst.msk [vmem:[#allocation4 + $0x8] sm:$0xff] %vm172, %v4882
    %v4885 = vld [vmem:[%s61] sm:$0xff]
    %v4886 = vld [vmem:[%s61 + $0x8] sm:$0xff]
    %v4887 = vld [vmem:[%s61 + $0x10] sm:$0xff]
    %v4888 = vld [vmem:[%s61 + $0x18] sm:$0xff]
    %v4889 = vld [vmem:[%s63] sm:$0x1]
    %v4891 = vlaneseq
    %v4892 = vshrl.u32 %v4891, 7
    %v4893 = vsub.s32 0, %v4892
    %v4894 = vrot.slane %v4889, %v4893
    %v4897 = vsel %vm172, %v4881, 0
    %v4900 = vsel %vm172, %v4882, 0
    %4902 = vmatprep.subr.mxu0 0.0
    %4903 = vmatpush1.msra.mxu0 %v4885
    %4904 = vmatprep.subr.mxu0 0.0
    %4905 = vmatpush1.msra.mxu0 %v4886
    %4906 = vmatprep.subr.mxu0 0.0
    %4907 = vmatpush1.msra.mxu0 %v4887
    %4908 = vmatprep.subr.mxu0 0.0
    %4909 = vmatpush1.msra.mxu0 %v4888
    %4910 = vmatprep.subr.mxu0 0.0
    %4911 = vmatpush1.msra.mxu0 0.0
    %4912 = vmatprep.subr.mxu0 0.0
    %4913 = vmatpush1.msra.mxu0 0.0
    %4914 = vmatprep.subr.mxu0 0.0
    %4915 = vmatpush1.msra.mxu0 0.0
    %4916 = vmatprep.subr.mxu0 0.0
    %4917 = vmatpush1.msra.mxu0 0.0
    %4918 = vmatprep.subr.mxu0 0.0
    %4919 = vmatpush1.msra.mxu0 0.0
    %4920 = vmatprep.subr.mxu0 0.0
    %4921 = vmatpush1.msra.mxu0 0.0
    %4922 = vmatprep.subr.mxu0 0.0
    %4923 = vmatpush1.msra.mxu0 0.0
    %4924 = vmatprep.subr.mxu0 0.0
    %4925 = vmatpush1.msra.mxu0 0.0
    %4926 = vmatprep.subr.mxu0 0.0
    %4927 = vmatpush1.msra.mxu0 0.0
    %4928 = vmatprep.subr.mxu0 0.0
    %4929 = vmatpush1.msra.mxu0 0.0
    %4930 = vmatprep.subr.mxu0 0.0
    %4931 = vmatpush1.msra.mxu0 0.0
    %4932 = vmatprep.subr.mxu0 0.0
    %4933 = vmatpush1.msra.mxu0 0.0
    %4934 = vmatprep.subr.mxu0 0.0
    %4935 = vmatpush1.msra.mxu0 0.0
    %4936 = vmatprep.subr.mxu0 0.0
    %4937 = vmatpush1.msra.mxu0 0.0
    %4938 = vmatprep.subr.mxu0 0.0
    %4939 = vmatpush1.msra.mxu0 0.0
    %4940 = vmatprep.subr.mxu0 0.0
    %4941 = vmatpush1.msra.mxu0 0.0
    %4942 = vmatprep.subr.mxu0 0.0
    %4943 = vmatpush1.msra.mxu0 0.0
    %4944 = vmatprep.subr.mxu0 0.0
    %4945 = vmatpush1.msra.mxu0 0.0
    %4946 = vmatprep.subr.mxu0 0.0
    %4947 = vmatpush1.msra.mxu0 0.0
    %4948 = vmatprep.subr.mxu0 0.0
    %4949 = vmatpush1.msra.mxu0 0.0
    %4950 = vmatprep.subr.mxu0 0.0
    %4951 = vmatpush1.msra.mxu0 0.0
    %4952 = vmatprep.subr.mxu0 0.0
    %4953 = vmatpush1.msra.mxu0 0.0
    %4954 = vmatprep.subr.mxu0 0.0
    %4955 = vmatpush1.msra.mxu0 0.0
    %4956 = vmatprep.subr.mxu0 0.0
    %4957 = vmatpush1.msra.mxu0 0.0
    %4958 = vmatprep.subr.mxu0 0.0
    %4959 = vmatpush1.msra.mxu0 0.0
    %4960 = vmatprep.subr.mxu0 0.0
    %4961 = vmatpush1.msra.mxu0 0.0
    %4962 = vmatprep.subr.mxu0 0.0
    %4963 = vmatpush1.msra.mxu0 0.0
    %4964 = vmatprep.subr.mxu0 0.0
    %4965 = vmatpush1.msra.mxu0 0.0
    %4966 = vmatprep.mubr.f32.mxu0 0.0
    %4967 = vmatmul.mubr.f32.gmra.mrb[0].mxu0 %v4897
    %v4968 = vpop.f32.mrb[0].mxu0
    %v4969 = vadd.f32 %v4894, %v4968
    %v4970 = vpop.f32.mrb[0].mxu0
    %4971 = vmatprep.mubr.f32.mxu0 0.0
    %4972 = vmatmul.mubr.f32.gmra.mrb[0].mxu0 %v4900
    %v4973 = vpop.f32.mrb[0].mxu0
    %v4974 = vadd.f32 %v4894, %v4973
    %v4975 = vpop.f32.mrb[0].mxu0
    %4976 = vdwg.mxu0
    %4977 = vmax.xlane.f32.xlu0 %v4969
    %v4978 = vpop.xlane.xlu0 %4977
    %4979 = vmax.xlane.f32.xlu0 %v4974
    %v4980 = vpop.xlane.xlu0 %4979
    %v4981 = vsub.f32 %v4969, %v4978
    %v4982 = vsub.f32 %v4974, %v4980
    %v4983 = vmul.f32 %v4981, 1.442695
    %v4984 = vpow.pop %v4983
    %v4985 = vmul.f32 %v4982, 1.442695
    %v4986 = vpow.pop %v4985
    %4987 = vadd.xlane.f32.xlu0 %v4984
    %v4988 = vpop.xlane.xlu0 %4987
    %4989 = vadd.xlane.f32.xlu0 %v4986
    %v4990 = vpop.xlane.xlu0 %4989
    %v4991 = vlog2.pop %v4988
    %v4992 = vmul.f32 %v4991, 0.6931472
    %v4993 = vlog2.pop %v4990
    %v4994 = vmul.f32 %v4993, 0.6931472
    %v4995 = vsub.f32 %v4981, %v4992
    %v4996 = vsub.f32 %v4982, %v4994
    %4997 = vst [vmem:[#allocation6] sm:$0xff] %v4995
    %4998 = vst [vmem:[#allocation6 + $0x8] sm:$0xff] %v4996
    // Predicated region
    $region130: #{_lambda_.1} parent=1 // pred_check
      _
    $region131: #{_lambda_.1} parent=1 // pred_check_branch
      %5000 = sbr.rel (0) target = $region133
    $region132: #{_lambda_.1} parent=1 // pred_region
      %s5002 = ssub.s32 256, 256
      %5003 = vsyncadd [#allocation3], %s5002
      %s5004 = sshll.u32 [#allocation2], 4
      %s5005 = int_to_ptr.vmem [resolvable:$true] %s5004
      %5010 = dma.vmem_to_hbm [thread:$0]  %s5005, 256, %s65, [#allocation3], 128, 128, 8
    $region133: #{_lambda_.1} parent=1 // pred_fallthru
      _
    // Predicated region
    $region134: #{_lambda_.1} parent=1 // pred_check
      _
    $region135: #{_lambda_.1} parent=1 // pred_check_branch
      %5012 = sbr.rel (0) target = $region137
    $region136: #{_lambda_.1} parent=1 // pred_region
      %s5014 = ssub.s32 256, 256
      %5015 = vsyncadd [#allocation5], %s5014
      %s5016 = sshll.u32 [#allocation4], 4
      %s5017 = int_to_ptr.vmem [resolvable:$true] %s5016
      %5022 = dma.vmem_to_hbm [thread:$0]  %s5017, 256, %s67, [#allocation5], 128, 128, 8
    $region137: #{_lambda_.1} parent=1 // pred_fallthru
      _
    // Predicated region
    $region138: #{_lambda_.1} parent=1 // pred_check
      _
    $region139: #{_lambda_.1} parent=1 // pred_check_branch
      %5024 = sbr.rel (0) target = $region141
    $region140: #{_lambda_.1} parent=1 // pred_region
      %s5026 = ssub.s32 256, 256
      %5027 = vsyncadd [#allocation5], %s5026
      %s5028 = sshll.u32 [#allocation6], 4
      %s5029 = int_to_ptr.vmem [resolvable:$true] %s5028
      %5034 = dma.vmem_to_hbm [thread:$0]  %s5029, 256, %s69, [#allocation5], 128, 128, 8
    $region141: #{_lambda_.1} parent=1 // pred_fallthru
      _
    // Predicated region
    $region142: #{_lambda_.1} parent=1 // pred_check
      _
    $region143: #{_lambda_.1} parent=1 // pred_check_branch
      %5036 = sbr.rel (0) target = $region145
    $region144: #{_lambda_.1} parent=1 // pred_region
      %5037 = dma.done [#allocation3], 256
    $region145: #{_lambda_.1} parent=1 // pred_fallthru
      _
    // Predicated region
    $region146: #{_lambda_.1} parent=1 // pred_check
      _
    $region147: #{_lambda_.1} parent=1 // pred_check_branch
      %5039 = sbr.rel (0) target = $region149
    $region148: #{_lambda_.1} parent=1 // pred_region
      %5040 = dma.done [#allocation5], 256
    $region149: #{_lambda_.1} parent=1 // pred_fallthru
      _
    // Predicated region
    $region150: #{_lambda_.1} parent=1 // pred_check
      _
    $region151: #{_lambda_.1} parent=1 // pred_check_branch
      %5042 = sbr.rel (0) target = $region153
    $region152: #{_lambda_.1} parent=1 // pred_region
      %5043 = dma.done [#allocation5], 256
    $region153: #{_lambda_.1} parent=1 // pred_fallthru
      _
    %5044 = vsyncpa [#allocation3], 1
    %5045 = vsyncpa [#allocation5], 1

</llo_original>
